<compile_context>
chip_gen: v7x
topology: tpu7x:2x2x1
jax: 0.10.0
libtpu: 0.0.40
codegen_flags: <defaults>
</compile_context>

<pallas_src>
import math

import jax
import jax.numpy as jnp
from jax.experimental import pallas as pl
from jax.experimental.pallas import tpu as pltpu

# ---------------- small config consistent with the module defaults ----------------
FEAT_DIM = 4
D_MODEL = 16
N_HEADS = 4
NUM_LAYERS = 3
DIM_FF = 64
NUM_CLASSES = 1
NUM_CATEGORIES = 12
CAT_EMBED_DIM = 8
WATER_FRAC_DIM = 1
ELEV_DIM = 1
COMBINED_CONT_EMB = 16
MAX_LEN = 8            # sequence length (small test size)
BATCH = 2

EMB = D_MODEL + COMBINED_CONT_EMB                 # 32: transformer width
HEAD_DIM = EMB // N_HEADS                         # 8
SCALE_DM = D_MODEL - CAT_EMBED_DIM - WATER_FRAC_DIM - ELEV_DIM   # "self.d_model" = 6
LN_EPS = 1e-5


# ---------------------------------------------------------------------------------
# Pallas kernel: full transformer encoder (3 layers) + output head, one invocation
# ---------------------------------------------------------------------------------
def _layer_norm(x2d, w, b):
    # x2d: (N, E), w/b: (1, E); matches nn.LayerNorm (biased variance, eps=1e-5)
    mu = jnp.mean(x2d, axis=-1, keepdims=True)
    xc = x2d - mu
    var = jnp.mean(xc * xc, axis=-1, keepdims=True)
    inv = jax.lax.rsqrt(var + LN_EPS)
    return xc * inv * w + b


def sweformer_kernel(x_ref, bias_ref, keep_ref,
                     wqkv_ref, bqkv_ref, wo_ref, bo_ref,
                     ln1w_ref, ln1b_ref,
                     w1_ref, b1_ref, w2_ref, b2_ref,
                     ln2w_ref, ln2b_ref,
                     wout_ref, bout_ref,
                     out_ref,
                     attn_scr):
    """x: (B,L,E), bias: (B,1,L) additive key-padding mask, keep: (B,L,1),
    per-layer weights stacked on a leading NUM_LAYERS axis, out: (B,C).
    attn_scr: VMEM scratch slab (B,L,E) for per-head attention outputs."""
    B, L, E = x_ref.shape
    H = N_HEADS
    hd = E // H
    C = out_ref.shape[1]

    bias3 = bias_ref[...]                            # (B, 1, L)
    x2d = x_ref[...].reshape(B * L, E)               # row index = b*L + l

    for layer in range(NUM_LAYERS):                  # static unroll (3 layers)
        # -------- multi-head self-attention --------
        # Fused QKV projection (single MXU push). 1/sqrt(hd) already folded into
        # the Q columns of wqkv/bqkv on the host.
        qkv = jnp.dot(x2d, wqkv_ref[layer],
                      preferred_element_type=jnp.float32) + bqkv_ref[layer]  # (B*L, 3E)
        qkv3 = qkv.reshape(B, L, 3 * E)

        for h in range(H):                           # static unroll, batched over B
            q_h = qkv3[:, :, h * hd:(h + 1) * hd]                    # (B, L, hd)
            k_h = qkv3[:, :, E + h * hd:E + (h + 1) * hd]
            v_h = qkv3[:, :, 2 * E + h * hd:2 * E + (h + 1) * hd]
            s = jnp.einsum('bqd,bkd->bqk', q_h, k_h,
                           preferred_element_type=jnp.float32) + bias3   # (B, L, L)
            m = jnp.max(s, axis=-1, keepdims=True)
            p = jnp.exp(s - m)
            pn = p * pl.reciprocal(jnp.sum(p, axis=-1, keepdims=True), approx=True)
            o_h = jnp.einsum('bqk,bkd->bqd', pn, v_h,
                             preferred_element_type=jnp.float32)         # (B, L, hd)
            # write per-head result into the scratch slab at a static column offset
            attn_scr[:, :, h * hd:(h + 1) * hd] = o_h

        attn = jnp.dot(attn_scr[...].reshape(B * L, E), wo_ref[layer],
                       preferred_element_type=jnp.float32) + bo_ref[layer]

        # residual + LayerNorm1
        x2d = _layer_norm(x2d + attn, ln1w_ref[layer], ln1b_ref[layer])

        # -------- feed-forward --------
        h1 = jnp.maximum(jnp.dot(x2d, w1_ref[layer],
                                 preferred_element_type=jnp.float32) + b1_ref[layer], 0.0)
        h2 = jnp.dot(h1, w2_ref[layer],
                     preferred_element_type=jnp.float32) + b2_ref[layer]
        x2d = _layer_norm(x2d + h2, ln2w_ref[layer], ln2b_ref[layer])

    # -------- fused output head: relu -> pad mask -> flatten -> Linear -> relu --------
    masked = jnp.maximum(x2d.reshape(B, L, E), 0.0) * keep_ref[...]      # (B, L, E)
    for c in range(C):                                                   # NUM_CLASSES == 1
        w_le = wout_ref[c]                                               # (L, E)
        red = jnp.sum(masked * w_le[None, :, :], axis=-1)                # (B, L)
        val = jnp.sum(red, axis=-1, keepdims=True)                       # (B, 1)
        out_ref[:, c:c + 1] = jnp.maximum(val + bout_ref[:, c:c + 1], 0.0)


# ---------------------------------------------------------------------------------
# Wrapper
# ---------------------------------------------------------------------------------
def swe_former_forward(params, X, categorical_input, continuous_input,
                       elevation_input, padding_masks):
    """Tiny pure-JAX glue (embedding lookup, input projections, concat, mask prep)
    around ONE fused Pallas kernel (3 encoder layers + output head)."""
    B, L, _ = X.shape
    E = EMB

    # ----- input embedding / projections (tiny, host-side XLA) -----
    cat_emb = params['cat_embed'][categorical_input]                        # (B, 8)
    combined = jnp.concatenate(
        [cat_emb, continuous_input[:, None], elevation_input[:, None]], axis=-1)  # (B, 10)
    combined_continuous = combined @ params['wc_t'] + params['bc']          # (B, 16)

    inp = (X @ params['wp_t'] + params['bp']) * math.sqrt(SCALE_DM)         # (B, L, 16)
    inp1 = inp + params['pe'][None, :L, :]                                  # learnable pos-enc
    cc_exp = jnp.broadcast_to(combined_continuous[:, None, :],
                              (B, L, COMBINED_CONT_EMB))                    # (B, L, 16)
    combined_inp = jnp.concatenate([inp1, cc_exp], axis=-1).astype(jnp.float32)  # (B, L, 32)

    # key_padding_mask: True -> masked (additive -1e30 before softmax, fp32-safe)
    attn_bias = jnp.where(padding_masks, -1e30, 0.0).astype(jnp.float32)[:, None, :]  # (B,1,L)
    keep = (~padding_masks).astype(jnp.float32)[:, :, None]                           # (B,L,1)

    # fold 1/sqrt(head_dim) into the Q slice of the in-projection weight + bias
    qscale = jnp.concatenate([jnp.full((E,), 1.0 / math.sqrt(HEAD_DIM), jnp.float32),
                              jnp.ones((2 * E,), jnp.float32)])
    wqkv = params['wqkv_t'] * qscale                                        # (NL, E, 3E)
    bqkv = params['bqkv'] * qscale                                          # (NL, 1, 3E)

    # output-head weight as (C, L, E): row c is an (L, E) slab matching the
    # row-major flatten of the (B, L, E) activation.
    w_out3 = jnp.transpose(params['w_out']).reshape(NUM_CLASSES, L, E)

    operands = (combined_inp, attn_bias, keep,
                wqkv, bqkv, params['wo_t'], params['bo'],
                params['ln1_w'], params['ln1_b'],
                params['w1_t'], params['b1'], params['w2_t'], params['b2'],
                params['ln2_w'], params['ln2_b'],
                w_out3, params['b_out'])

    out = pl.pallas_call(
        sweformer_kernel,
        out_shape=jax.ShapeDtypeStruct((B, NUM_CLASSES), jnp.float32),
        in_specs=[pl.BlockSpec(memory_space=pltpu.MemorySpace.VMEM) for _ in operands],
        out_specs=pl.BlockSpec(memory_space=pltpu.MemorySpace.VMEM),
        scratch_shapes=[pltpu.VMEM((B, L, E), jnp.float32)],
    )(*operands)

    return jnp.squeeze(out)                                                 # (B,)


# ---------------------------------------------------------------------------------
# Deterministic parameter initialization (synthetic weights)
# ---------------------------------------------------------------------------------
def init_params(key):
    ks = jax.random.split(key, 16)
    s = 0.05
    E, FF, NL = EMB, DIM_FF, NUM_LAYERS
    p = {
        'cat_embed': jax.random.normal(ks[0], (NUM_CATEGORIES, CAT_EMBED_DIM)) * s,
        'wc_t': jax.random.normal(ks[1], (CAT_EMBED_DIM + 2, COMBINED_CONT_EMB)) * s,
        'bc':   jax.random.normal(ks[2], (COMBINED_CONT_EMB,)) * s,
        'wp_t': jax.random.normal(ks[3], (FEAT_DIM, D_MODEL)) * s,
        'bp':   jax.random.normal(ks[4], (D_MODEL,)) * s,
        'pe':   jax.random.uniform(ks[5], (MAX_LEN, D_MODEL), minval=-0.02, maxval=0.02),
        # stacked per-layer transformer weights (pre-transposed: in_features x out_features)
        'wqkv_t': jax.random.normal(ks[6], (NL, E, 3 * E)) * s,
        'bqkv':   jax.random.normal(ks[7], (NL, 1, 3 * E)) * s,
        'wo_t':   jax.random.normal(ks[8], (NL, E, E)) * s,
        'bo':     jax.random.normal(ks[9], (NL, 1, E)) * s,
        'ln1_w':  jnp.ones((NL, 1, E), jnp.float32),
        'ln1_b':  jnp.zeros((NL, 1, E), jnp.float32),
        'w1_t':   jax.random.normal(ks[10], (NL, E, FF)) * s,
        'b1':     jax.random.normal(ks[11], (NL, 1, FF)) * s,
        'w2_t':   jax.random.normal(ks[12], (NL, FF, E)) * s,
        'b2':     jax.random.normal(ks[13], (NL, 1, E)) * s,
        'ln2_w':  jnp.ones((NL, 1, E), jnp.float32),
        'ln2_b':  jnp.zeros((NL, 1, E), jnp.float32),
        # output head (output_concat_switch=False): Linear(E*MAX_LEN -> 1) + ReLU
        'w_out': jax.random.normal(ks[14], (MAX_LEN * E, NUM_CLASSES)) * s,
        'b_out': jax.random.normal(ks[15], (1, NUM_CLASSES)) * s,
    }
    return p


# ---------------------------------------------------------------------------------
if __name__ == "__main__":
    root = jax.random.PRNGKey(0)
    k_param, kx, kc, ke, kcat = jax.random.split(root, 5)

    params = init_params(k_param)

    X = jax.random.normal(kx, (BATCH, MAX_LEN, FEAT_DIM), jnp.float32)
    categorical_input = jax.random.randint(kcat, (BATCH,), 0, NUM_CATEGORIES)
    continuous_input = jax.random.normal(kc, (BATCH,), jnp.float32)
    elevation_input = jax.random.normal(ke, (BATCH,), jnp.float32)
    lengths = jnp.array([6, MAX_LEN], dtype=jnp.int32)
    padding_masks = jnp.arange(MAX_LEN)[None, :] >= lengths[:, None]        # (B, L) bool

    fwd = jax.jit(swe_former_forward)
    out = fwd(params, X, categorical_input, continuous_input,
              elevation_input, padding_masks)
    jax.block_until_ready(out)
    assert out.shape == (BATCH,)
    print("KERNEL_OK")
</pallas_src>

<mosaic_0001>
module attributes {stable_mosaic.version = 11 : i64} {
  func.func @sweformer_kernel(%arg0: memref<2x8x32xf32, #tpu.memory_space<vmem>>, %arg1: memref<2x1x8xf32, #tpu.memory_space<vmem>>, %arg2: memref<2x8x1xf32, #tpu.memory_space<vmem>>, %arg3: memref<3x32x96xf32, #tpu.memory_space<vmem>>, %arg4: memref<3x1x96xf32, #tpu.memory_space<vmem>>, %arg5: memref<3x32x32xf32, #tpu.memory_space<vmem>>, %arg6: memref<3x1x32xf32, #tpu.memory_space<vmem>>, %arg7: memref<3x1x32xf32, #tpu.memory_space<vmem>>, %arg8: memref<3x1x32xf32, #tpu.memory_space<vmem>>, %arg9: memref<3x32x64xf32, #tpu.memory_space<vmem>>, %arg10: memref<3x1x64xf32, #tpu.memory_space<vmem>>, %arg11: memref<3x64x32xf32, #tpu.memory_space<vmem>>, %arg12: memref<3x1x32xf32, #tpu.memory_space<vmem>>, %arg13: memref<3x1x32xf32, #tpu.memory_space<vmem>>, %arg14: memref<3x1x32xf32, #tpu.memory_space<vmem>>, %arg15: memref<1x8x32xf32, #tpu.memory_space<vmem>>, %arg16: memref<1x1xf32, #tpu.memory_space<vmem>>, %arg17: memref<2x1xf32, #tpu.memory_space<vmem>>, %arg18: memref<2x8x32xf32, #tpu.memory_space<vmem>>) attributes {dimension_semantics = [], scalar_prefetch = 0 : i64, scratch_operands = 1 : i64, tpu.core_type = #tpu.core_type<tc>} {
    %c0 = arith.constant 0 : index
    %c0_0 = arith.constant 0 : index
    %c0_1 = arith.constant 0 : index
    %0 = vector.load %arg1[%c0, %c0_0, %c0_1] : memref<2x1x8xf32, #tpu.memory_space<vmem>>, vector<2x1x8xf32>
    %c0_2 = arith.constant 0 : index
    %c0_3 = arith.constant 0 : index
    %c0_4 = arith.constant 0 : index
    %1 = vector.load %arg0[%c0_2, %c0_3, %c0_4] : memref<2x8x32xf32, #tpu.memory_space<vmem>>, vector<2x8x32xf32>
    %2 = vector.shape_cast %1 : vector<2x8x32xf32> to vector<16x32xf32>
    %c0_5 = arith.constant 0 : index
    %c0_6 = arith.constant 0 : index
    %c0_7 = arith.constant 0 : index
    %3 = vector.load %arg3[%c0_5, %c0_6, %c0_7] : memref<3x32x96xf32, #tpu.memory_space<vmem>>, vector<1x32x96xf32>
    %4 = vector.shape_cast %3 : vector<1x32x96xf32> to vector<32x96xf32>
    %cst = arith.constant dense<0.000000e+00> : vector<16x96xf32>
    %5 = tpu.matmul %2, %4, %cst {dimension_numbers = #tpu.dot_dimension_numbers<[1], [0], [0], [1], [0, 0, 1, 1], [], []>} : vector<16x32xf32>, vector<32x96xf32>, vector<16x96xf32> -> vector<16x96xf32>
    %c0_8 = arith.constant 0 : index
    %c0_9 = arith.constant 0 : index
    %c0_10 = arith.constant 0 : index
    %6 = vector.load %arg4[%c0_8, %c0_9, %c0_10] : memref<3x1x96xf32, #tpu.memory_space<vmem>>, vector<1x1x96xf32>
    %7 = vector.shape_cast %6 : vector<1x1x96xf32> to vector<1x96xf32>
    %8 = vector.broadcast %7 : vector<1x96xf32> to vector<16x96xf32>
    %9 = arith.addf %5, %8 : vector<16x96xf32>
    %10 = vector.shape_cast %9 : vector<16x96xf32> to vector<2x8x96xf32>
    %11 = vector.extract_strided_slice %10 {offsets = [0, 0, 0], sizes = [2, 8, 8], strides = [1, 1, 1]} : vector<2x8x96xf32> to vector<2x8x8xf32>
    %12 = vector.extract_strided_slice %10 {offsets = [0, 0, 32], sizes = [2, 8, 8], strides = [1, 1, 1]} : vector<2x8x96xf32> to vector<2x8x8xf32>
    %13 = vector.extract_strided_slice %10 {offsets = [0, 0, 64], sizes = [2, 8, 8], strides = [1, 1, 1]} : vector<2x8x96xf32> to vector<2x8x8xf32>
    "tpu.trace_start"() <{level = 10 : i32, message = "bqd,bkd->bqk"}> : () -> ()
    %cst_11 = arith.constant dense<0.000000e+00> : vector<2x8x8xf32>
    %14 = tpu.matmul %11, %12, %cst_11 {dimension_numbers = #tpu.dot_dimension_numbers<[2], [2], [1], [1], [0, 0, 0, 1, 1, 1], [0], [0]>} : vector<2x8x8xf32>, vector<2x8x8xf32>, vector<2x8x8xf32> -> vector<2x8x8xf32>
    "tpu.trace_stop"() : () -> ()
    %15 = vector.broadcast %0 : vector<2x1x8xf32> to vector<2x8x8xf32>
    %16 = arith.addf %14, %15 : vector<2x8x8xf32>
    %cst_12 = arith.constant dense<0xFF800000> : vector<2x8xf32>
    %17 = vector.multi_reduction <maximumf>, %16, %cst_12 [2] : vector<2x8x8xf32> to vector<2x8xf32>
    %18 = vector.shape_cast %17 : vector<2x8xf32> to vector<2x8x1xf32>
    %19 = vector.broadcast %18 : vector<2x8x1xf32> to vector<2x8x8xf32>
    %20 = arith.subf %16, %19 : vector<2x8x8xf32>
    %21 = math.exp %20 : vector<2x8x8xf32>
    %cst_13 = arith.constant dense<0.000000e+00> : vector<2x8xf32>
    %22 = vector.multi_reduction <add>, %21, %cst_13 [2] : vector<2x8x8xf32> to vector<2x8xf32>
    %23 = vector.shape_cast %22 : vector<2x8xf32> to vector<2x8x1xf32>
    %24 = tpu.reciprocal %23 {approx = true} : vector<2x8x1xf32> -> vector<2x8x1xf32>
    %25 = vector.broadcast %24 : vector<2x8x1xf32> to vector<2x8x8xf32>
    %26 = arith.mulf %21, %25 : vector<2x8x8xf32>
    "tpu.trace_start"() <{level = 10 : i32, message = "bqk,bkd->bqd"}> : () -> ()
    %cst_14 = arith.constant dense<0.000000e+00> : vector<2x8x8xf32>
    %27 = tpu.matmul %26, %13, %cst_14 {dimension_numbers = #tpu.dot_dimension_numbers<[2], [1], [1], [2], [0, 0, 0, 1, 1, 2], [0], [0]>} : vector<2x8x8xf32>, vector<2x8x8xf32>, vector<2x8x8xf32> -> vector<2x8x8xf32>
    "tpu.trace_stop"() : () -> ()
    %c0_15 = arith.constant 0 : index
    %c0_16 = arith.constant 0 : index
    %c0_17 = arith.constant 0 : index
    %28 = vector.load %arg18[%c0_15, %c0_16, %c0_17] : memref<2x8x32xf32, #tpu.memory_space<vmem>>, vector<2x8x8xf32>
    tpu.vector_store %arg18[%c0_15, %c0_16, %c0_17], %27 {strides = array<i32>} : memref<2x8x32xf32, #tpu.memory_space<vmem>>, vector<2x8x8xf32>,
    %29 = vector.extract_strided_slice %10 {offsets = [0, 0, 8], sizes = [2, 8, 8], strides = [1, 1, 1]} : vector<2x8x96xf32> to vector<2x8x8xf32>
    %30 = vector.extract_strided_slice %10 {offsets = [0, 0, 40], sizes = [2, 8, 8], strides = [1, 1, 1]} : vector<2x8x96xf32> to vector<2x8x8xf32>
    %31 = vector.extract_strided_slice %10 {offsets = [0, 0, 72], sizes = [2, 8, 8], strides = [1, 1, 1]} : vector<2x8x96xf32> to vector<2x8x8xf32>
    "tpu.trace_start"() <{level = 10 : i32, message = "bqd,bkd->bqk"}> : () -> ()
    %cst_18 = arith.constant dense<0.000000e+00> : vector<2x8x8xf32>
    %32 = tpu.matmul %29, %30, %cst_18 {dimension_numbers = #tpu.dot_dimension_numbers<[2], [2], [1], [1], [0, 0, 0, 1, 1, 1], [0], [0]>} : vector<2x8x8xf32>, vector<2x8x8xf32>, vector<2x8x8xf32> -> vector<2x8x8xf32>
    "tpu.trace_stop"() : () -> ()
    %33 = vector.broadcast %0 : vector<2x1x8xf32> to vector<2x8x8xf32>
    %34 = arith.addf %32, %33 : vector<2x8x8xf32>
    %cst_19 = arith.constant dense<0xFF800000> : vector<2x8xf32>
    %35 = vector.multi_reduction <maximumf>, %34, %cst_19 [2] : vector<2x8x8xf32> to vector<2x8xf32>
    %36 = vector.shape_cast %35 : vector<2x8xf32> to vector<2x8x1xf32>
    %37 = vector.broadcast %36 : vector<2x8x1xf32> to vector<2x8x8xf32>
    %38 = arith.subf %34, %37 : vector<2x8x8xf32>
    %39 = math.exp %38 : vector<2x8x8xf32>
    %cst_20 = arith.constant dense<0.000000e+00> : vector<2x8xf32>
    %40 = vector.multi_reduction <add>, %39, %cst_20 [2] : vector<2x8x8xf32> to vector<2x8xf32>
    %41 = vector.shape_cast %40 : vector<2x8xf32> to vector<2x8x1xf32>
    %42 = tpu.reciprocal %41 {approx = true} : vector<2x8x1xf32> -> vector<2x8x1xf32>
    %43 = vector.broadcast %42 : vector<2x8x1xf32> to vector<2x8x8xf32>
    %44 = arith.mulf %39, %43 : vector<2x8x8xf32>
    "tpu.trace_start"() <{level = 10 : i32, message = "bqk,bkd->bqd"}> : () -> ()
    %cst_21 = arith.constant dense<0.000000e+00> : vector<2x8x8xf32>
    %45 = tpu.matmul %44, %31, %cst_21 {dimension_numbers = #tpu.dot_dimension_numbers<[2], [1], [1], [2], [0, 0, 0, 1, 1, 2], [0], [0]>} : vector<2x8x8xf32>, vector<2x8x8xf32>, vector<2x8x8xf32> -> vector<2x8x8xf32>
    "tpu.trace_stop"() : () -> ()
    %c0_22 = arith.constant 0 : index
    %c0_23 = arith.constant 0 : index
    %c8 = arith.constant 8 : index
    %46 = vector.load %arg18[%c0_22, %c0_23, %c8] : memref<2x8x32xf32, #tpu.memory_space<vmem>>, vector<2x8x8xf32>
    tpu.vector_store %arg18[%c0_22, %c0_23, %c8], %45 {strides = array<i32>} : memref<2x8x32xf32, #tpu.memory_space<vmem>>, vector<2x8x8xf32>,
    %47 = vector.extract_strided_slice %10 {offsets = [0, 0, 16], sizes = [2, 8, 8], strides = [1, 1, 1]} : vector<2x8x96xf32> to vector<2x8x8xf32>
    %48 = vector.extract_strided_slice %10 {offsets = [0, 0, 48], sizes = [2, 8, 8], strides = [1, 1, 1]} : vector<2x8x96xf32> to vector<2x8x8xf32>
    %49 = vector.extract_strided_slice %10 {offsets = [0, 0, 80], sizes = [2, 8, 8], strides = [1, 1, 1]} : vector<2x8x96xf32> to vector<2x8x8xf32>
    "tpu.trace_start"() <{level = 10 : i32, message = "bqd,bkd->bqk"}> : () -> ()
    %cst_24 = arith.constant dense<0.000000e+00> : vector<2x8x8xf32>
    %50 = tpu.matmul %47, %48, %cst_24 {dimension_numbers = #tpu.dot_dimension_numbers<[2], [2], [1], [1], [0, 0, 0, 1, 1, 1], [0], [0]>} : vector<2x8x8xf32>, vector<2x8x8xf32>, vector<2x8x8xf32> -> vector<2x8x8xf32>
    "tpu.trace_stop"() : () -> ()
    %51 = vector.broadcast %0 : vector<2x1x8xf32> to vector<2x8x8xf32>
    %52 = arith.addf %50, %51 : vector<2x8x8xf32>
    %cst_25 = arith.constant dense<0xFF800000> : vector<2x8xf32>
    %53 = vector.multi_reduction <maximumf>, %52, %cst_25 [2] : vector<2x8x8xf32> to vector<2x8xf32>
    %54 = vector.shape_cast %53 : vector<2x8xf32> to vector<2x8x1xf32>
    %55 = vector.broadcast %54 : vector<2x8x1xf32> to vector<2x8x8xf32>
    %56 = arith.subf %52, %55 : vector<2x8x8xf32>
    %57 = math.exp %56 : vector<2x8x8xf32>
    %cst_26 = arith.constant dense<0.000000e+00> : vector<2x8xf32>
    %58 = vector.multi_reduction <add>, %57, %cst_26 [2] : vector<2x8x8xf32> to vector<2x8xf32>
    %59 = vector.shape_cast %58 : vector<2x8xf32> to vector<2x8x1xf32>
    %60 = tpu.reciprocal %59 {approx = true} : vector<2x8x1xf32> -> vector<2x8x1xf32>
    %61 = vector.broadcast %60 : vector<2x8x1xf32> to vector<2x8x8xf32>
    %62 = arith.mulf %57, %61 : vector<2x8x8xf32>
    "tpu.trace_start"() <{level = 10 : i32, message = "bqk,bkd->bqd"}> : () -> ()
    %cst_27 = arith.constant dense<0.000000e+00> : vector<2x8x8xf32>
    %63 = tpu.matmul %62, %49, %cst_27 {dimension_numbers = #tpu.dot_dimension_numbers<[2], [1], [1], [2], [0, 0, 0, 1, 1, 2], [0], [0]>} : vector<2x8x8xf32>, vector<2x8x8xf32>, vector<2x8x8xf32> -> vector<2x8x8xf32>
    "tpu.trace_stop"() : () -> ()
    %c0_28 = arith.constant 0 : index
    %c0_29 = arith.constant 0 : index
    %c16 = arith.constant 16 : index
    %64 = vector.load %arg18[%c0_28, %c0_29, %c16] : memref<2x8x32xf32, #tpu.memory_space<vmem>>, vector<2x8x8xf32>
    tpu.vector_store %arg18[%c0_28, %c0_29, %c16], %63 {strides = array<i32>} : memref<2x8x32xf32, #tpu.memory_space<vmem>>, vector<2x8x8xf32>,
    %65 = vector.extract_strided_slice %10 {offsets = [0, 0, 24], sizes = [2, 8, 8], strides = [1, 1, 1]} : vector<2x8x96xf32> to vector<2x8x8xf32>
    %66 = vector.extract_strided_slice %10 {offsets = [0, 0, 56], sizes = [2, 8, 8], strides = [1, 1, 1]} : vector<2x8x96xf32> to vector<2x8x8xf32>
    %67 = vector.extract_strided_slice %10 {offsets = [0, 0, 88], sizes = [2, 8, 8], strides = [1, 1, 1]} : vector<2x8x96xf32> to vector<2x8x8xf32>
    "tpu.trace_start"() <{level = 10 : i32, message = "bqd,bkd->bqk"}> : () -> ()
    %cst_30 = arith.constant dense<0.000000e+00> : vector<2x8x8xf32>
    %68 = tpu.matmul %65, %66, %cst_30 {dimension_numbers = #tpu.dot_dimension_numbers<[2], [2], [1], [1], [0, 0, 0, 1, 1, 1], [0], [0]>} : vector<2x8x8xf32>, vector<2x8x8xf32>, vector<2x8x8xf32> -> vector<2x8x8xf32>
    "tpu.trace_stop"() : () -> ()
    %69 = vector.broadcast %0 : vector<2x1x8xf32> to vector<2x8x8xf32>
    %70 = arith.addf %68, %69 : vector<2x8x8xf32>
    %cst_31 = arith.constant dense<0xFF800000> : vector<2x8xf32>
    %71 = vector.multi_reduction <maximumf>, %70, %cst_31 [2] : vector<2x8x8xf32> to vector<2x8xf32>
    %72 = vector.shape_cast %71 : vector<2x8xf32> to vector<2x8x1xf32>
    %73 = vector.broadcast %72 : vector<2x8x1xf32> to vector<2x8x8xf32>
    %74 = arith.subf %70, %73 : vector<2x8x8xf32>
    %75 = math.exp %74 : vector<2x8x8xf32>
    %cst_32 = arith.constant dense<0.000000e+00> : vector<2x8xf32>
    %76 = vector.multi_reduction <add>, %75, %cst_32 [2] : vector<2x8x8xf32> to vector<2x8xf32>
    %77 = vector.shape_cast %76 : vector<2x8xf32> to vector<2x8x1xf32>
    %78 = tpu.reciprocal %77 {approx = true} : vector<2x8x1xf32> -> vector<2x8x1xf32>
    %79 = vector.broadcast %78 : vector<2x8x1xf32> to vector<2x8x8xf32>
    %80 = arith.mulf %75, %79 : vector<2x8x8xf32>
    "tpu.trace_start"() <{level = 10 : i32, message = "bqk,bkd->bqd"}> : () -> ()
    %cst_33 = arith.constant dense<0.000000e+00> : vector<2x8x8xf32>
    %81 = tpu.matmul %80, %67, %cst_33 {dimension_numbers = #tpu.dot_dimension_numbers<[2], [1], [1], [2], [0, 0, 0, 1, 1, 2], [0], [0]>} : vector<2x8x8xf32>, vector<2x8x8xf32>, vector<2x8x8xf32> -> vector<2x8x8xf32>
    "tpu.trace_stop"() : () -> ()
    %c0_34 = arith.constant 0 : index
    %c0_35 = arith.constant 0 : index
    %c24 = arith.constant 24 : index
    %82 = vector.load %arg18[%c0_34, %c0_35, %c24] : memref<2x8x32xf32, #tpu.memory_space<vmem>>, vector<2x8x8xf32>
    tpu.vector_store %arg18[%c0_34, %c0_35, %c24], %81 {strides = array<i32>} : memref<2x8x32xf32, #tpu.memory_space<vmem>>, vector<2x8x8xf32>,
    %c0_36 = arith.constant 0 : index
    %c0_37 = arith.constant 0 : index
    %c0_38 = arith.constant 0 : index
    %83 = vector.load %arg18[%c0_36, %c0_37, %c0_38] : memref<2x8x32xf32, #tpu.memory_space<vmem>>, vector<2x8x32xf32>
    %84 = vector.shape_cast %83 : vector<2x8x32xf32> to vector<16x32xf32>
    %c0_39 = arith.constant 0 : index
    %c0_40 = arith.constant 0 : index
    %c0_41 = arith.constant 0 : index
    %85 = vector.load %arg5[%c0_39, %c0_40, %c0_41] : memref<3x32x32xf32, #tpu.memory_space<vmem>>, vector<1x32x32xf32>
    %86 = vector.shape_cast %85 : vector<1x32x32xf32> to vector<32x32xf32>
    %cst_42 = arith.constant dense<0.000000e+00> : vector<16x32xf32>
    %87 = tpu.matmul %84, %86, %cst_42 {dimension_numbers = #tpu.dot_dimension_numbers<[1], [0], [0], [1], [0, 0, 1, 1], [], []>} : vector<16x32xf32>, vector<32x32xf32>, vector<16x32xf32> -> vector<16x32xf32>
    %c0_43 = arith.constant 0 : index
    %c0_44 = arith.constant 0 : index
    %c0_45 = arith.constant 0 : index
    %88 = vector.load %arg6[%c0_43, %c0_44, %c0_45] : memref<3x1x32xf32, #tpu.memory_space<vmem>>, vector<1x1x32xf32>
    %89 = vector.shape_cast %88 : vector<1x1x32xf32> to vector<1x32xf32>
    %90 = vector.broadcast %89 : vector<1x32xf32> to vector<16x32xf32>
    %91 = arith.addf %87, %90 : vector<16x32xf32>
    %92 = arith.addf %2, %91 : vector<16x32xf32>
    %c0_46 = arith.constant 0 : index
    %c0_47 = arith.constant 0 : index
    %c0_48 = arith.constant 0 : index
    %93 = vector.load %arg7[%c0_46, %c0_47, %c0_48] : memref<3x1x32xf32, #tpu.memory_space<vmem>>, vector<1x1x32xf32>
    %94 = vector.shape_cast %93 : vector<1x1x32xf32> to vector<1x32xf32>
    %c0_49 = arith.constant 0 : index
    %c0_50 = arith.constant 0 : index
    %c0_51 = arith.constant 0 : index
    %95 = vector.load %arg8[%c0_49, %c0_50, %c0_51] : memref<3x1x32xf32, #tpu.memory_space<vmem>>, vector<1x1x32xf32>
    %96 = vector.shape_cast %95 : vector<1x1x32xf32> to vector<1x32xf32>
    %cst_52 = arith.constant dense<0.000000e+00> : vector<16xf32>
    %97 = vector.multi_reduction <add>, %92, %cst_52 [1] : vector<16x32xf32> to vector<16xf32>
    %98 = vector.shape_cast %97 : vector<16xf32> to vector<16x1xf32>
    %cst_53 = arith.constant 3.200000e+01 : f32
    %99 = vector.broadcast %cst_53 : f32 to vector<16x1xf32>
    %100 = arith.divf %98, %99 : vector<16x1xf32>
    %101 = vector.broadcast %100 : vector<16x1xf32> to vector<16x32xf32>
    %102 = arith.subf %92, %101 : vector<16x32xf32>
    %103 = arith.mulf %102, %102 : vector<16x32xf32>
    %cst_54 = arith.constant dense<0.000000e+00> : vector<16xf32>
    %104 = vector.multi_reduction <add>, %103, %cst_54 [1] : vector<16x32xf32> to vector<16xf32>
    %105 = vector.shape_cast %104 : vector<16xf32> to vector<16x1xf32>
    %cst_55 = arith.constant 3.200000e+01 : f32
    %106 = vector.broadcast %cst_55 : f32 to vector<16x1xf32>
    %107 = arith.divf %105, %106 : vector<16x1xf32>
    %cst_56 = arith.constant 9.99999974E-6 : f32
    %108 = vector.broadcast %cst_56 : f32 to vector<16x1xf32>
    %109 = arith.addf %107, %108 : vector<16x1xf32>
    %110 = math.rsqrt %109 : vector<16x1xf32>
    %111 = vector.broadcast %110 : vector<16x1xf32> to vector<16x32xf32>
    %112 = arith.mulf %102, %111 : vector<16x32xf32>
    %113 = vector.broadcast %94 : vector<1x32xf32> to vector<16x32xf32>
    %114 = arith.mulf %112, %113 : vector<16x32xf32>
    %115 = vector.broadcast %96 : vector<1x32xf32> to vector<16x32xf32>
    %116 = arith.addf %114, %115 : vector<16x32xf32>
    %c0_57 = arith.constant 0 : index
    %c0_58 = arith.constant 0 : index
    %c0_59 = arith.constant 0 : index
    %117 = vector.load %arg9[%c0_57, %c0_58, %c0_59] : memref<3x32x64xf32, #tpu.memory_space<vmem>>, vector<1x32x64xf32>
    %118 = vector.shape_cast %117 : vector<1x32x64xf32> to vector<32x64xf32>
    %cst_60 = arith.constant dense<0.000000e+00> : vector<16x64xf32>
    %119 = tpu.matmul %116, %118, %cst_60 {dimension_numbers = #tpu.dot_dimension_numbers<[1], [0], [0], [1], [0, 0, 1, 1], [], []>} : vector<16x32xf32>, vector<32x64xf32>, vector<16x64xf32> -> vector<16x64xf32>
    %c0_61 = arith.constant 0 : index
    %c0_62 = arith.constant 0 : index
    %c0_63 = arith.constant 0 : index
    %120 = vector.load %arg10[%c0_61, %c0_62, %c0_63] : memref<3x1x64xf32, #tpu.memory_space<vmem>>, vector<1x1x64xf32>
    %121 = vector.shape_cast %120 : vector<1x1x64xf32> to vector<1x64xf32>
    %122 = vector.broadcast %121 : vector<1x64xf32> to vector<16x64xf32>
    %123 = arith.addf %119, %122 : vector<16x64xf32>
    %cst_64 = arith.constant 0.000000e+00 : f32
    %124 = vector.broadcast %cst_64 : f32 to vector<16x64xf32>
    %125 = arith.maximumf %123, %124 : vector<16x64xf32>
    %c0_65 = arith.constant 0 : index
    %c0_66 = arith.constant 0 : index
    %c0_67 = arith.constant 0 : index
    %126 = vector.load %arg11[%c0_65, %c0_66, %c0_67] : memref<3x64x32xf32, #tpu.memory_space<vmem>>, vector<1x64x32xf32>
    %127 = vector.shape_cast %126 : vector<1x64x32xf32> to vector<64x32xf32>
    %cst_68 = arith.constant dense<0.000000e+00> : vector<16x32xf32>
    %128 = tpu.matmul %125, %127, %cst_68 {dimension_numbers = #tpu.dot_dimension_numbers<[1], [0], [0], [1], [0, 0, 1, 1], [], []>} : vector<16x64xf32>, vector<64x32xf32>, vector<16x32xf32> -> vector<16x32xf32>
    %c0_69 = arith.constant 0 : index
    %c0_70 = arith.constant 0 : index
    %c0_71 = arith.constant 0 : index
    %129 = vector.load %arg12[%c0_69, %c0_70, %c0_71] : memref<3x1x32xf32, #tpu.memory_space<vmem>>, vector<1x1x32xf32>
    %130 = vector.shape_cast %129 : vector<1x1x32xf32> to vector<1x32xf32>
    %131 = vector.broadcast %130 : vector<1x32xf32> to vector<16x32xf32>
    %132 = arith.addf %128, %131 : vector<16x32xf32>
    %133 = arith.addf %116, %132 : vector<16x32xf32>
    %c0_72 = arith.constant 0 : index
    %c0_73 = arith.constant 0 : index
    %c0_74 = arith.constant 0 : index
    %134 = vector.load %arg13[%c0_72, %c0_73, %c0_74] : memref<3x1x32xf32, #tpu.memory_space<vmem>>, vector<1x1x32xf32>
    %135 = vector.shape_cast %134 : vector<1x1x32xf32> to vector<1x32xf32>
    %c0_75 = arith.constant 0 : index
    %c0_76 = arith.constant 0 : index
    %c0_77 = arith.constant 0 : index
    %136 = vector.load %arg14[%c0_75, %c0_76, %c0_77] : memref<3x1x32xf32, #tpu.memory_space<vmem>>, vector<1x1x32xf32>
    %137 = vector.shape_cast %136 : vector<1x1x32xf32> to vector<1x32xf32>
    %cst_78 = arith.constant dense<0.000000e+00> : vector<16xf32>
    %138 = vector.multi_reduction <add>, %133, %cst_78 [1] : vector<16x32xf32> to vector<16xf32>
    %139 = vector.shape_cast %138 : vector<16xf32> to vector<16x1xf32>
    %cst_79 = arith.constant 3.200000e+01 : f32
    %140 = vector.broadcast %cst_79 : f32 to vector<16x1xf32>
    %141 = arith.divf %139, %140 : vector<16x1xf32>
    %142 = vector.broadcast %141 : vector<16x1xf32> to vector<16x32xf32>
    %143 = arith.subf %133, %142 : vector<16x32xf32>
    %144 = arith.mulf %143, %143 : vector<16x32xf32>
    %cst_80 = arith.constant dense<0.000000e+00> : vector<16xf32>
    %145 = vector.multi_reduction <add>, %144, %cst_80 [1] : vector<16x32xf32> to vector<16xf32>
    %146 = vector.shape_cast %145 : vector<16xf32> to vector<16x1xf32>
    %cst_81 = arith.constant 3.200000e+01 : f32
    %147 = vector.broadcast %cst_81 : f32 to vector<16x1xf32>
    %148 = arith.divf %146, %147 : vector<16x1xf32>
    %cst_82 = arith.constant 9.99999974E-6 : f32
    %149 = vector.broadcast %cst_82 : f32 to vector<16x1xf32>
    %150 = arith.addf %148, %149 : vector<16x1xf32>
    %151 = math.rsqrt %150 : vector<16x1xf32>
    %152 = vector.broadcast %151 : vector<16x1xf32> to vector<16x32xf32>
    %153 = arith.mulf %143, %152 : vector<16x32xf32>
    %154 = vector.broadcast %135 : vector<1x32xf32> to vector<16x32xf32>
    %155 = arith.mulf %153, %154 : vector<16x32xf32>
    %156 = vector.broadcast %137 : vector<1x32xf32> to vector<16x32xf32>
    %157 = arith.addf %155, %156 : vector<16x32xf32>
    %c1 = arith.constant 1 : index
    %c0_83 = arith.constant 0 : index
    %c0_84 = arith.constant 0 : index
    %158 = vector.load %arg3[%c1, %c0_83, %c0_84] : memref<3x32x96xf32, #tpu.memory_space<vmem>>, vector<1x32x96xf32>
    %159 = vector.shape_cast %158 : vector<1x32x96xf32> to vector<32x96xf32>
    %cst_85 = arith.constant dense<0.000000e+00> : vector<16x96xf32>
    %160 = tpu.matmul %157, %159, %cst_85 {dimension_numbers = #tpu.dot_dimension_numbers<[1], [0], [0], [1], [0, 0, 1, 1], [], []>} : vector<16x32xf32>, vector<32x96xf32>, vector<16x96xf32> -> vector<16x96xf32>
    %c1_86 = arith.constant 1 : index
    %c0_87 = arith.constant 0 : index
    %c0_88 = arith.constant 0 : index
    %161 = vector.load %arg4[%c1_86, %c0_87, %c0_88] : memref<3x1x96xf32, #tpu.memory_space<vmem>>, vector<1x1x96xf32>
    %162 = vector.shape_cast %161 : vector<1x1x96xf32> to vector<1x96xf32>
    %163 = vector.broadcast %162 : vector<1x96xf32> to vector<16x96xf32>
    %164 = arith.addf %160, %163 : vector<16x96xf32>
    %165 = vector.shape_cast %164 : vector<16x96xf32> to vector<2x8x96xf32>
    %166 = vector.extract_strided_slice %165 {offsets = [0, 0, 0], sizes = [2, 8, 8], strides = [1, 1, 1]} : vector<2x8x96xf32> to vector<2x8x8xf32>
    %167 = vector.extract_strided_slice %165 {offsets = [0, 0, 32], sizes = [2, 8, 8], strides = [1, 1, 1]} : vector<2x8x96xf32> to vector<2x8x8xf32>
    %168 = vector.extract_strided_slice %165 {offsets = [0, 0, 64], sizes = [2, 8, 8], strides = [1, 1, 1]} : vector<2x8x96xf32> to vector<2x8x8xf32>
    "tpu.trace_start"() <{level = 10 : i32, message = "bqd,bkd->bqk"}> : () -> ()
    %cst_89 = arith.constant dense<0.000000e+00> : vector<2x8x8xf32>
    %169 = tpu.matmul %166, %167, %cst_89 {dimension_numbers = #tpu.dot_dimension_numbers<[2], [2], [1], [1], [0, 0, 0, 1, 1, 1], [0], [0]>} : vector<2x8x8xf32>, vector<2x8x8xf32>, vector<2x8x8xf32> -> vector<2x8x8xf32>
    "tpu.trace_stop"() : () -> ()
    %170 = vector.broadcast %0 : vector<2x1x8xf32> to vector<2x8x8xf32>
    %171 = arith.addf %169, %170 : vector<2x8x8xf32>
    %cst_90 = arith.constant dense<0xFF800000> : vector<2x8xf32>
    %172 = vector.multi_reduction <maximumf>, %171, %cst_90 [2] : vector<2x8x8xf32> to vector<2x8xf32>
    %173 = vector.shape_cast %172 : vector<2x8xf32> to vector<2x8x1xf32>
    %174 = vector.broadcast %173 : vector<2x8x1xf32> to vector<2x8x8xf32>
    %175 = arith.subf %171, %174 : vector<2x8x8xf32>
    %176 = math.exp %175 : vector<2x8x8xf32>
    %cst_91 = arith.constant dense<0.000000e+00> : vector<2x8xf32>
    %177 = vector.multi_reduction <add>, %176, %cst_91 [2] : vector<2x8x8xf32> to vector<2x8xf32>
    %178 = vector.shape_cast %177 : vector<2x8xf32> to vector<2x8x1xf32>
    %179 = tpu.reciprocal %178 {approx = true} : vector<2x8x1xf32> -> vector<2x8x1xf32>
    %180 = vector.broadcast %179 : vector<2x8x1xf32> to vector<2x8x8xf32>
    %181 = arith.mulf %176, %180 : vector<2x8x8xf32>
    "tpu.trace_start"() <{level = 10 : i32, message = "bqk,bkd->bqd"}> : () -> ()
    %cst_92 = arith.constant dense<0.000000e+00> : vector<2x8x8xf32>
    %182 = tpu.matmul %181, %168, %cst_92 {dimension_numbers = #tpu.dot_dimension_numbers<[2], [1], [1], [2], [0, 0, 0, 1, 1, 2], [0], [0]>} : vector<2x8x8xf32>, vector<2x8x8xf32>, vector<2x8x8xf32> -> vector<2x8x8xf32>
    "tpu.trace_stop"() : () -> ()
    %c0_93 = arith.constant 0 : index
    %c0_94 = arith.constant 0 : index
    %c0_95 = arith.constant 0 : index
    %183 = vector.load %arg18[%c0_93, %c0_94, %c0_95] : memref<2x8x32xf32, #tpu.memory_space<vmem>>, vector<2x8x8xf32>
    tpu.vector_store %arg18[%c0_93, %c0_94, %c0_95], %182 {strides = array<i32>} : memref<2x8x32xf32, #tpu.memory_space<vmem>>, vector<2x8x8xf32>,
    %184 = vector.extract_strided_slice %165 {offsets = [0, 0, 8], sizes = [2, 8, 8], strides = [1, 1, 1]} : vector<2x8x96xf32> to vector<2x8x8xf32>
    %185 = vector.extract_strided_slice %165 {offsets = [0, 0, 40], sizes = [2, 8, 8], strides = [1, 1, 1]} : vector<2x8x96xf32> to vector<2x8x8xf32>
    %186 = vector.extract_strided_slice %165 {offsets = [0, 0, 72], sizes = [2, 8, 8], strides = [1, 1, 1]} : vector<2x8x96xf32> to vector<2x8x8xf32>
    "tpu.trace_start"() <{level = 10 : i32, message = "bqd,bkd->bqk"}> : () -> ()
    %cst_96 = arith.constant dense<0.000000e+00> : vector<2x8x8xf32>
    %187 = tpu.matmul %184, %185, %cst_96 {dimension_numbers = #tpu.dot_dimension_numbers<[2], [2], [1], [1], [0, 0, 0, 1, 1, 1], [0], [0]>} : vector<2x8x8xf32>, vector<2x8x8xf32>, vector<2x8x8xf32> -> vector<2x8x8xf32>
    "tpu.trace_stop"() : () -> ()
    %188 = vector.broadcast %0 : vector<2x1x8xf32> to vector<2x8x8xf32>
    %189 = arith.addf %187, %188 : vector<2x8x8xf32>
    %cst_97 = arith.constant dense<0xFF800000> : vector<2x8xf32>
    %190 = vector.multi_reduction <maximumf>, %189, %cst_97 [2] : vector<2x8x8xf32> to vector<2x8xf32>
    %191 = vector.shape_cast %190 : vector<2x8xf32> to vector<2x8x1xf32>
    %192 = vector.broadcast %191 : vector<2x8x1xf32> to vector<2x8x8xf32>
    %193 = arith.subf %189, %192 : vector<2x8x8xf32>
    %194 = math.exp %193 : vector<2x8x8xf32>
    %cst_98 = arith.constant dense<0.000000e+00> : vector<2x8xf32>
    %195 = vector.multi_reduction <add>, %194, %cst_98 [2] : vector<2x8x8xf32> to vector<2x8xf32>
    %196 = vector.shape_cast %195 : vector<2x8xf32> to vector<2x8x1xf32>
    %197 = tpu.reciprocal %196 {approx = true} : vector<2x8x1xf32> -> vector<2x8x1xf32>
    %198 = vector.broadcast %197 : vector<2x8x1xf32> to vector<2x8x8xf32>
    %199 = arith.mulf %194, %198 : vector<2x8x8xf32>
    "tpu.trace_start"() <{level = 10 : i32, message = "bqk,bkd->bqd"}> : () -> ()
    %cst_99 = arith.constant dense<0.000000e+00> : vector<2x8x8xf32>
    %200 = tpu.matmul %199, %186, %cst_99 {dimension_numbers = #tpu.dot_dimension_numbers<[2], [1], [1], [2], [0, 0, 0, 1, 1, 2], [0], [0]>} : vector<2x8x8xf32>, vector<2x8x8xf32>, vector<2x8x8xf32> -> vector<2x8x8xf32>
    "tpu.trace_stop"() : () -> ()
    %c0_100 = arith.constant 0 : index
    %c0_101 = arith.constant 0 : index
    %c8_102 = arith.constant 8 : index
    %201 = vector.load %arg18[%c0_100, %c0_101, %c8_102] : memref<2x8x32xf32, #tpu.memory_space<vmem>>, vector<2x8x8xf32>
    tpu.vector_store %arg18[%c0_100, %c0_101, %c8_102], %200 {strides = array<i32>} : memref<2x8x32xf32, #tpu.memory_space<vmem>>, vector<2x8x8xf32>,
    %202 = vector.extract_strided_slice %165 {offsets = [0, 0, 16], sizes = [2, 8, 8], strides = [1, 1, 1]} : vector<2x8x96xf32> to vector<2x8x8xf32>
    %203 = vector.extract_strided_slice %165 {offsets = [0, 0, 48], sizes = [2, 8, 8], strides = [1, 1, 1]} : vector<2x8x96xf32> to vector<2x8x8xf32>
    %204 = vector.extract_strided_slice %165 {offsets = [0, 0, 80], sizes = [2, 8, 8], strides = [1, 1, 1]} : vector<2x8x96xf32> to vector<2x8x8xf32>
    "tpu.trace_start"() <{level = 10 : i32, message = "bqd,bkd->bqk"}> : () -> ()
    %cst_103 = arith.constant dense<0.000000e+00> : vector<2x8x8xf32>
    %205 = tpu.matmul %202, %203, %cst_103 {dimension_numbers = #tpu.dot_dimension_numbers<[2], [2], [1], [1], [0, 0, 0, 1, 1, 1], [0], [0]>} : vector<2x8x8xf32>, vector<2x8x8xf32>, vector<2x8x8xf32> -> vector<2x8x8xf32>
    "tpu.trace_stop"() : () -> ()
    %206 = vector.broadcast %0 : vector<2x1x8xf32> to vector<2x8x8xf32>
    %207 = arith.addf %205, %206 : vector<2x8x8xf32>
    %cst_104 = arith.constant dense<0xFF800000> : vector<2x8xf32>
    %208 = vector.multi_reduction <maximumf>, %207, %cst_104 [2] : vector<2x8x8xf32> to vector<2x8xf32>
    %209 = vector.shape_cast %208 : vector<2x8xf32> to vector<2x8x1xf32>
    %210 = vector.broadcast %209 : vector<2x8x1xf32> to vector<2x8x8xf32>
    %211 = arith.subf %207, %210 : vector<2x8x8xf32>
    %212 = math.exp %211 : vector<2x8x8xf32>
    %cst_105 = arith.constant dense<0.000000e+00> : vector<2x8xf32>
    %213 = vector.multi_reduction <add>, %212, %cst_105 [2] : vector<2x8x8xf32> to vector<2x8xf32>
    %214 = vector.shape_cast %213 : vector<2x8xf32> to vector<2x8x1xf32>
    %215 = tpu.reciprocal %214 {approx = true} : vector<2x8x1xf32> -> vector<2x8x1xf32>
    %216 = vector.broadcast %215 : vector<2x8x1xf32> to vector<2x8x8xf32>
    %217 = arith.mulf %212, %216 : vector<2x8x8xf32>
    "tpu.trace_start"() <{level = 10 : i32, message = "bqk,bkd->bqd"}> : () -> ()
    %cst_106 = arith.constant dense<0.000000e+00> : vector<2x8x8xf32>
    %218 = tpu.matmul %217, %204, %cst_106 {dimension_numbers = #tpu.dot_dimension_numbers<[2], [1], [1], [2], [0, 0, 0, 1, 1, 2], [0], [0]>} : vector<2x8x8xf32>, vector<2x8x8xf32>, vector<2x8x8xf32> -> vector<2x8x8xf32>
    "tpu.trace_stop"() : () -> ()
    %c0_107 = arith.constant 0 : index
    %c0_108 = arith.constant 0 : index
    %c16_109 = arith.constant 16 : index
    %219 = vector.load %arg18[%c0_107, %c0_108, %c16_109] : memref<2x8x32xf32, #tpu.memory_space<vmem>>, vector<2x8x8xf32>
    tpu.vector_store %arg18[%c0_107, %c0_108, %c16_109], %218 {strides = array<i32>} : memref<2x8x32xf32, #tpu.memory_space<vmem>>, vector<2x8x8xf32>,
    %220 = vector.extract_strided_slice %165 {offsets = [0, 0, 24], sizes = [2, 8, 8], strides = [1, 1, 1]} : vector<2x8x96xf32> to vector<2x8x8xf32>
    %221 = vector.extract_strided_slice %165 {offsets = [0, 0, 56], sizes = [2, 8, 8], strides = [1, 1, 1]} : vector<2x8x96xf32> to vector<2x8x8xf32>
    %222 = vector.extract_strided_slice %165 {offsets = [0, 0, 88], sizes = [2, 8, 8], strides = [1, 1, 1]} : vector<2x8x96xf32> to vector<2x8x8xf32>
    "tpu.trace_start"() <{level = 10 : i32, message = "bqd,bkd->bqk"}> : () -> ()
    %cst_110 = arith.constant dense<0.000000e+00> : vector<2x8x8xf32>
    %223 = tpu.matmul %220, %221, %cst_110 {dimension_numbers = #tpu.dot_dimension_numbers<[2], [2], [1], [1], [0, 0, 0, 1, 1, 1], [0], [0]>} : vector<2x8x8xf32>, vector<2x8x8xf32>, vector<2x8x8xf32> -> vector<2x8x8xf32>
    "tpu.trace_stop"() : () -> ()
    %224 = vector.broadcast %0 : vector<2x1x8xf32> to vector<2x8x8xf32>
    %225 = arith.addf %223, %224 : vector<2x8x8xf32>
    %cst_111 = arith.constant dense<0xFF800000> : vector<2x8xf32>
    %226 = vector.multi_reduction <maximumf>, %225, %cst_111 [2] : vector<2x8x8xf32> to vector<2x8xf32>
    %227 = vector.shape_cast %226 : vector<2x8xf32> to vector<2x8x1xf32>
    %228 = vector.broadcast %227 : vector<2x8x1xf32> to vector<2x8x8xf32>
    %229 = arith.subf %225, %228 : vector<2x8x8xf32>
    %230 = math.exp %229 : vector<2x8x8xf32>
    %cst_112 = arith.constant dense<0.000000e+00> : vector<2x8xf32>
    %231 = vector.multi_reduction <add>, %230, %cst_112 [2] : vector<2x8x8xf32> to vector<2x8xf32>
    %232 = vector.shape_cast %231 : vector<2x8xf32> to vector<2x8x1xf32>
    %233 = tpu.reciprocal %232 {approx = true} : vector<2x8x1xf32> -> vector<2x8x1xf32>
    %234 = vector.broadcast %233 : vector<2x8x1xf32> to vector<2x8x8xf32>
    %235 = arith.mulf %230, %234 : vector<2x8x8xf32>
    "tpu.trace_start"() <{level = 10 : i32, message = "bqk,bkd->bqd"}> : () -> ()
    %cst_113 = arith.constant dense<0.000000e+00> : vector<2x8x8xf32>
    %236 = tpu.matmul %235, %222, %cst_113 {dimension_numbers = #tpu.dot_dimension_numbers<[2], [1], [1], [2], [0, 0, 0, 1, 1, 2], [0], [0]>} : vector<2x8x8xf32>, vector<2x8x8xf32>, vector<2x8x8xf32> -> vector<2x8x8xf32>
    "tpu.trace_stop"() : () -> ()
    %c0_114 = arith.constant 0 : index
    %c0_115 = arith.constant 0 : index
    %c24_116 = arith.constant 24 : index
    %237 = vector.load %arg18[%c0_114, %c0_115, %c24_116] : memref<2x8x32xf32, #tpu.memory_space<vmem>>, vector<2x8x8xf32>
    tpu.vector_store %arg18[%c0_114, %c0_115, %c24_116], %236 {strides = array<i32>} : memref<2x8x32xf32, #tpu.memory_space<vmem>>, vector<2x8x8xf32>,
    %c0_117 = arith.constant 0 : index
    %c0_118 = arith.constant 0 : index
    %c0_119 = arith.constant 0 : index
    %238 = vector.load %arg18[%c0_117, %c0_118, %c0_119] : memref<2x8x32xf32, #tpu.memory_space<vmem>>, vector<2x8x32xf32>
    %239 = vector.shape_cast %238 : vector<2x8x32xf32> to vector<16x32xf32>
    %c1_120 = arith.constant 1 : index
    %c0_121 = arith.constant 0 : index
    %c0_122 = arith.constant 0 : index
    %240 = vector.load %arg5[%c1_120, %c0_121, %c0_122] : memref<3x32x32xf32, #tpu.memory_space<vmem>>, vector<1x32x32xf32>
    %241 = vector.shape_cast %240 : vector<1x32x32xf32> to vector<32x32xf32>
    %cst_123 = arith.constant dense<0.000000e+00> : vector<16x32xf32>
    %242 = tpu.matmul %239, %241, %cst_123 {dimension_numbers = #tpu.dot_dimension_numbers<[1], [0], [0], [1], [0, 0, 1, 1], [], []>} : vector<16x32xf32>, vector<32x32xf32>, vector<16x32xf32> -> vector<16x32xf32>
    %c1_124 = arith.constant 1 : index
    %c0_125 = arith.constant 0 : index
    %c0_126 = arith.constant 0 : index
    %243 = vector.load %arg6[%c1_124, %c0_125, %c0_126] : memref<3x1x32xf32, #tpu.memory_space<vmem>>, vector<1x1x32xf32>
    %244 = vector.shape_cast %243 : vector<1x1x32xf32> to vector<1x32xf32>
    %245 = vector.broadcast %244 : vector<1x32xf32> to vector<16x32xf32>
    %246 = arith.addf %242, %245 : vector<16x32xf32>
    %247 = arith.addf %157, %246 : vector<16x32xf32>
    %c1_127 = arith.constant 1 : index
    %c0_128 = arith.constant 0 : index
    %c0_129 = arith.constant 0 : index
    %248 = vector.load %arg7[%c1_127, %c0_128, %c0_129] : memref<3x1x32xf32, #tpu.memory_space<vmem>>, vector<1x1x32xf32>
    %249 = vector.shape_cast %248 : vector<1x1x32xf32> to vector<1x32xf32>
    %c1_130 = arith.constant 1 : index
    %c0_131 = arith.constant 0 : index
    %c0_132 = arith.constant 0 : index
    %250 = vector.load %arg8[%c1_130, %c0_131, %c0_132] : memref<3x1x32xf32, #tpu.memory_space<vmem>>, vector<1x1x32xf32>
    %251 = vector.shape_cast %250 : vector<1x1x32xf32> to vector<1x32xf32>
    %cst_133 = arith.constant dense<0.000000e+00> : vector<16xf32>
    %252 = vector.multi_reduction <add>, %247, %cst_133 [1] : vector<16x32xf32> to vector<16xf32>
    %253 = vector.shape_cast %252 : vector<16xf32> to vector<16x1xf32>
    %cst_134 = arith.constant 3.200000e+01 : f32
    %254 = vector.broadcast %cst_134 : f32 to vector<16x1xf32>
    %255 = arith.divf %253, %254 : vector<16x1xf32>
    %256 = vector.broadcast %255 : vector<16x1xf32> to vector<16x32xf32>
    %257 = arith.subf %247, %256 : vector<16x32xf32>
    %258 = arith.mulf %257, %257 : vector<16x32xf32>
    %cst_135 = arith.constant dense<0.000000e+00> : vector<16xf32>
    %259 = vector.multi_reduction <add>, %258, %cst_135 [1] : vector<16x32xf32> to vector<16xf32>
    %260 = vector.shape_cast %259 : vector<16xf32> to vector<16x1xf32>
    %cst_136 = arith.constant 3.200000e+01 : f32
    %261 = vector.broadcast %cst_136 : f32 to vector<16x1xf32>
    %262 = arith.divf %260, %261 : vector<16x1xf32>
    %cst_137 = arith.constant 9.99999974E-6 : f32
    %263 = vector.broadcast %cst_137 : f32 to vector<16x1xf32>
    %264 = arith.addf %262, %263 : vector<16x1xf32>
    %265 = math.rsqrt %264 : vector<16x1xf32>
    %266 = vector.broadcast %265 : vector<16x1xf32> to vector<16x32xf32>
    %267 = arith.mulf %257, %266 : vector<16x32xf32>
    %268 = vector.broadcast %249 : vector<1x32xf32> to vector<16x32xf32>
    %269 = arith.mulf %267, %268 : vector<16x32xf32>
    %270 = vector.broadcast %251 : vector<1x32xf32> to vector<16x32xf32>
    %271 = arith.addf %269, %270 : vector<16x32xf32>
    %c1_138 = arith.constant 1 : index
    %c0_139 = arith.constant 0 : index
    %c0_140 = arith.constant 0 : index
    %272 = vector.load %arg9[%c1_138, %c0_139, %c0_140] : memref<3x32x64xf32, #tpu.memory_space<vmem>>, vector<1x32x64xf32>
    %273 = vector.shape_cast %272 : vector<1x32x64xf32> to vector<32x64xf32>
    %cst_141 = arith.constant dense<0.000000e+00> : vector<16x64xf32>
    %274 = tpu.matmul %271, %273, %cst_141 {dimension_numbers = #tpu.dot_dimension_numbers<[1], [0], [0], [1], [0, 0, 1, 1], [], []>} : vector<16x32xf32>, vector<32x64xf32>, vector<16x64xf32> -> vector<16x64xf32>
    %c1_142 = arith.constant 1 : index
    %c0_143 = arith.constant 0 : index
    %c0_144 = arith.constant 0 : index
    %275 = vector.load %arg10[%c1_142, %c0_143, %c0_144] : memref<3x1x64xf32, #tpu.memory_space<vmem>>, vector<1x1x64xf32>
    %276 = vector.shape_cast %275 : vector<1x1x64xf32> to vector<1x64xf32>
    %277 = vector.broadcast %276 : vector<1x64xf32> to vector<16x64xf32>
    %278 = arith.addf %274, %277 : vector<16x64xf32>
    %cst_145 = arith.constant 0.000000e+00 : f32
    %279 = vector.broadcast %cst_145 : f32 to vector<16x64xf32>
    %280 = arith.maximumf %278, %279 : vector<16x64xf32>
    %c1_146 = arith.constant 1 : index
    %c0_147 = arith.constant 0 : index
    %c0_148 = arith.constant 0 : index
    %281 = vector.load %arg11[%c1_146, %c0_147, %c0_148] : memref<3x64x32xf32, #tpu.memory_space<vmem>>, vector<1x64x32xf32>
    %282 = vector.shape_cast %281 : vector<1x64x32xf32> to vector<64x32xf32>
    %cst_149 = arith.constant dense<0.000000e+00> : vector<16x32xf32>
    %283 = tpu.matmul %280, %282, %cst_149 {dimension_numbers = #tpu.dot_dimension_numbers<[1], [0], [0], [1], [0, 0, 1, 1], [], []>} : vector<16x64xf32>, vector<64x32xf32>, vector<16x32xf32> -> vector<16x32xf32>
    %c1_150 = arith.constant 1 : index
    %c0_151 = arith.constant 0 : index
    %c0_152 = arith.constant 0 : index
    %284 = vector.load %arg12[%c1_150, %c0_151, %c0_152] : memref<3x1x32xf32, #tpu.memory_space<vmem>>, vector<1x1x32xf32>
    %285 = vector.shape_cast %284 : vector<1x1x32xf32> to vector<1x32xf32>
    %286 = vector.broadcast %285 : vector<1x32xf32> to vector<16x32xf32>
    %287 = arith.addf %283, %286 : vector<16x32xf32>
    %288 = arith.addf %271, %287 : vector<16x32xf32>
    %c1_153 = arith.constant 1 : index
    %c0_154 = arith.constant 0 : index
    %c0_155 = arith.constant 0 : index
    %289 = vector.load %arg13[%c1_153, %c0_154, %c0_155] : memref<3x1x32xf32, #tpu.memory_space<vmem>>, vector<1x1x32xf32>
    %290 = vector.shape_cast %289 : vector<1x1x32xf32> to vector<1x32xf32>
    %c1_156 = arith.constant 1 : index
    %c0_157 = arith.constant 0 : index
    %c0_158 = arith.constant 0 : index
    %291 = vector.load %arg14[%c1_156, %c0_157, %c0_158] : memref<3x1x32xf32, #tpu.memory_space<vmem>>, vector<1x1x32xf32>
    %292 = vector.shape_cast %291 : vector<1x1x32xf32> to vector<1x32xf32>
    %cst_159 = arith.constant dense<0.000000e+00> : vector<16xf32>
    %293 = vector.multi_reduction <add>, %288, %cst_159 [1] : vector<16x32xf32> to vector<16xf32>
    %294 = vector.shape_cast %293 : vector<16xf32> to vector<16x1xf32>
    %cst_160 = arith.constant 3.200000e+01 : f32
    %295 = vector.broadcast %cst_160 : f32 to vector<16x1xf32>
    %296 = arith.divf %294, %295 : vector<16x1xf32>
    %297 = vector.broadcast %296 : vector<16x1xf32> to vector<16x32xf32>
    %298 = arith.subf %288, %297 : vector<16x32xf32>
    %299 = arith.mulf %298, %298 : vector<16x32xf32>
    %cst_161 = arith.constant dense<0.000000e+00> : vector<16xf32>
    %300 = vector.multi_reduction <add>, %299, %cst_161 [1] : vector<16x32xf32> to vector<16xf32>
    %301 = vector.shape_cast %300 : vector<16xf32> to vector<16x1xf32>
    %cst_162 = arith.constant 3.200000e+01 : f32
    %302 = vector.broadcast %cst_162 : f32 to vector<16x1xf32>
    %303 = arith.divf %301, %302 : vector<16x1xf32>
    %cst_163 = arith.constant 9.99999974E-6 : f32
    %304 = vector.broadcast %cst_163 : f32 to vector<16x1xf32>
    %305 = arith.addf %303, %304 : vector<16x1xf32>
    %306 = math.rsqrt %305 : vector<16x1xf32>
    %307 = vector.broadcast %306 : vector<16x1xf32> to vector<16x32xf32>
    %308 = arith.mulf %298, %307 : vector<16x32xf32>
    %309 = vector.broadcast %290 : vector<1x32xf32> to vector<16x32xf32>
    %310 = arith.mulf %308, %309 : vector<16x32xf32>
    %311 = vector.broadcast %292 : vector<1x32xf32> to vector<16x32xf32>
    %312 = arith.addf %310, %311 : vector<16x32xf32>
    %c2 = arith.constant 2 : index
    %c0_164 = arith.constant 0 : index
    %c0_165 = arith.constant 0 : index
    %313 = vector.load %arg3[%c2, %c0_164, %c0_165] : memref<3x32x96xf32, #tpu.memory_space<vmem>>, vector<1x32x96xf32>
    %314 = vector.shape_cast %313 : vector<1x32x96xf32> to vector<32x96xf32>
    %cst_166 = arith.constant dense<0.000000e+00> : vector<16x96xf32>
    %315 = tpu.matmul %312, %314, %cst_166 {dimension_numbers = #tpu.dot_dimension_numbers<[1], [0], [0], [1], [0, 0, 1, 1], [], []>} : vector<16x32xf32>, vector<32x96xf32>, vector<16x96xf32> -> vector<16x96xf32>
    %c2_167 = arith.constant 2 : index
    %c0_168 = arith.constant 0 : index
    %c0_169 = arith.constant 0 : index
    %316 = vector.load %arg4[%c2_167, %c0_168, %c0_169] : memref<3x1x96xf32, #tpu.memory_space<vmem>>, vector<1x1x96xf32>
    %317 = vector.shape_cast %316 : vector<1x1x96xf32> to vector<1x96xf32>
    %318 = vector.broadcast %317 : vector<1x96xf32> to vector<16x96xf32>
    %319 = arith.addf %315, %318 : vector<16x96xf32>
    %320 = vector.shape_cast %319 : vector<16x96xf32> to vector<2x8x96xf32>
    %321 = vector.extract_strided_slice %320 {offsets = [0, 0, 0], sizes = [2, 8, 8], strides = [1, 1, 1]} : vector<2x8x96xf32> to vector<2x8x8xf32>
    %322 = vector.extract_strided_slice %320 {offsets = [0, 0, 32], sizes = [2, 8, 8], strides = [1, 1, 1]} : vector<2x8x96xf32> to vector<2x8x8xf32>
    %323 = vector.extract_strided_slice %320 {offsets = [0, 0, 64], sizes = [2, 8, 8], strides = [1, 1, 1]} : vector<2x8x96xf32> to vector<2x8x8xf32>
    "tpu.trace_start"() <{level = 10 : i32, message = "bqd,bkd->bqk"}> : () -> ()
    %cst_170 = arith.constant dense<0.000000e+00> : vector<2x8x8xf32>
    %324 = tpu.matmul %321, %322, %cst_170 {dimension_numbers = #tpu.dot_dimension_numbers<[2], [2], [1], [1], [0, 0, 0, 1, 1, 1], [0], [0]>} : vector<2x8x8xf32>, vector<2x8x8xf32>, vector<2x8x8xf32> -> vector<2x8x8xf32>
    "tpu.trace_stop"() : () -> ()
    %325 = vector.broadcast %0 : vector<2x1x8xf32> to vector<2x8x8xf32>
    %326 = arith.addf %324, %325 : vector<2x8x8xf32>
    %cst_171 = arith.constant dense<0xFF800000> : vector<2x8xf32>
    %327 = vector.multi_reduction <maximumf>, %326, %cst_171 [2] : vector<2x8x8xf32> to vector<2x8xf32>
    %328 = vector.shape_cast %327 : vector<2x8xf32> to vector<2x8x1xf32>
    %329 = vector.broadcast %328 : vector<2x8x1xf32> to vector<2x8x8xf32>
    %330 = arith.subf %326, %329 : vector<2x8x8xf32>
    %331 = math.exp %330 : vector<2x8x8xf32>
    %cst_172 = arith.constant dense<0.000000e+00> : vector<2x8xf32>
    %332 = vector.multi_reduction <add>, %331, %cst_172 [2] : vector<2x8x8xf32> to vector<2x8xf32>
    %333 = vector.shape_cast %332 : vector<2x8xf32> to vector<2x8x1xf32>
    %334 = tpu.reciprocal %333 {approx = true} : vector<2x8x1xf32> -> vector<2x8x1xf32>
    %335 = vector.broadcast %334 : vector<2x8x1xf32> to vector<2x8x8xf32>
    %336 = arith.mulf %331, %335 : vector<2x8x8xf32>
    "tpu.trace_start"() <{level = 10 : i32, message = "bqk,bkd->bqd"}> : () -> ()
    %cst_173 = arith.constant dense<0.000000e+00> : vector<2x8x8xf32>
    %337 = tpu.matmul %336, %323, %cst_173 {dimension_numbers = #tpu.dot_dimension_numbers<[2], [1], [1], [2], [0, 0, 0, 1, 1, 2], [0], [0]>} : vector<2x8x8xf32>, vector<2x8x8xf32>, vector<2x8x8xf32> -> vector<2x8x8xf32>
    "tpu.trace_stop"() : () -> ()
    %c0_174 = arith.constant 0 : index
    %c0_175 = arith.constant 0 : index
    %c0_176 = arith.constant 0 : index
    %338 = vector.load %arg18[%c0_174, %c0_175, %c0_176] : memref<2x8x32xf32, #tpu.memory_space<vmem>>, vector<2x8x8xf32>
    tpu.vector_store %arg18[%c0_174, %c0_175, %c0_176], %337 {strides = array<i32>} : memref<2x8x32xf32, #tpu.memory_space<vmem>>, vector<2x8x8xf32>,
    %339 = vector.extract_strided_slice %320 {offsets = [0, 0, 8], sizes = [2, 8, 8], strides = [1, 1, 1]} : vector<2x8x96xf32> to vector<2x8x8xf32>
    %340 = vector.extract_strided_slice %320 {offsets = [0, 0, 40], sizes = [2, 8, 8], strides = [1, 1, 1]} : vector<2x8x96xf32> to vector<2x8x8xf32>
    %341 = vector.extract_strided_slice %320 {offsets = [0, 0, 72], sizes = [2, 8, 8], strides = [1, 1, 1]} : vector<2x8x96xf32> to vector<2x8x8xf32>
    "tpu.trace_start"() <{level = 10 : i32, message = "bqd,bkd->bqk"}> : () -> ()
    %cst_177 = arith.constant dense<0.000000e+00> : vector<2x8x8xf32>
    %342 = tpu.matmul %339, %340, %cst_177 {dimension_numbers = #tpu.dot_dimension_numbers<[2], [2], [1], [1], [0, 0, 0, 1, 1, 1], [0], [0]>} : vector<2x8x8xf32>, vector<2x8x8xf32>, vector<2x8x8xf32> -> vector<2x8x8xf32>
    "tpu.trace_stop"() : () -> ()
    %343 = vector.broadcast %0 : vector<2x1x8xf32> to vector<2x8x8xf32>
    %344 = arith.addf %342, %343 : vector<2x8x8xf32>
    %cst_178 = arith.constant dense<0xFF800000> : vector<2x8xf32>
    %345 = vector.multi_reduction <maximumf>, %344, %cst_178 [2] : vector<2x8x8xf32> to vector<2x8xf32>
    %346 = vector.shape_cast %345 : vector<2x8xf32> to vector<2x8x1xf32>
    %347 = vector.broadcast %346 : vector<2x8x1xf32> to vector<2x8x8xf32>
    %348 = arith.subf %344, %347 : vector<2x8x8xf32>
    %349 = math.exp %348 : vector<2x8x8xf32>
    %cst_179 = arith.constant dense<0.000000e+00> : vector<2x8xf32>
    %350 = vector.multi_reduction <add>, %349, %cst_179 [2] : vector<2x8x8xf32> to vector<2x8xf32>
    %351 = vector.shape_cast %350 : vector<2x8xf32> to vector<2x8x1xf32>
    %352 = tpu.reciprocal %351 {approx = true} : vector<2x8x1xf32> -> vector<2x8x1xf32>
    %353 = vector.broadcast %352 : vector<2x8x1xf32> to vector<2x8x8xf32>
    %354 = arith.mulf %349, %353 : vector<2x8x8xf32>
    "tpu.trace_start"() <{level = 10 : i32, message = "bqk,bkd->bqd"}> : () -> ()
    %cst_180 = arith.constant dense<0.000000e+00> : vector<2x8x8xf32>
    %355 = tpu.matmul %354, %341, %cst_180 {dimension_numbers = #tpu.dot_dimension_numbers<[2], [1], [1], [2], [0, 0, 0, 1, 1, 2], [0], [0]>} : vector<2x8x8xf32>, vector<2x8x8xf32>, vector<2x8x8xf32> -> vector<2x8x8xf32>
    "tpu.trace_stop"() : () -> ()
    %c0_181 = arith.constant 0 : index
    %c0_182 = arith.constant 0 : index
    %c8_183 = arith.constant 8 : index
    %356 = vector.load %arg18[%c0_181, %c0_182, %c8_183] : memref<2x8x32xf32, #tpu.memory_space<vmem>>, vector<2x8x8xf32>
    tpu.vector_store %arg18[%c0_181, %c0_182, %c8_183], %355 {strides = array<i32>} : memref<2x8x32xf32, #tpu.memory_space<vmem>>, vector<2x8x8xf32>,
    %357 = vector.extract_strided_slice %320 {offsets = [0, 0, 16], sizes = [2, 8, 8], strides = [1, 1, 1]} : vector<2x8x96xf32> to vector<2x8x8xf32>
    %358 = vector.extract_strided_slice %320 {offsets = [0, 0, 48], sizes = [2, 8, 8], strides = [1, 1, 1]} : vector<2x8x96xf32> to vector<2x8x8xf32>
    %359 = vector.extract_strided_slice %320 {offsets = [0, 0, 80], sizes = [2, 8, 8], strides = [1, 1, 1]} : vector<2x8x96xf32> to vector<2x8x8xf32>
    "tpu.trace_start"() <{level = 10 : i32, message = "bqd,bkd->bqk"}> : () -> ()
    %cst_184 = arith.constant dense<0.000000e+00> : vector<2x8x8xf32>
    %360 = tpu.matmul %357, %358, %cst_184 {dimension_numbers = #tpu.dot_dimension_numbers<[2], [2], [1], [1], [0, 0, 0, 1, 1, 1], [0], [0]>} : vector<2x8x8xf32>, vector<2x8x8xf32>, vector<2x8x8xf32> -> vector<2x8x8xf32>
    "tpu.trace_stop"() : () -> ()
    %361 = vector.broadcast %0 : vector<2x1x8xf32> to vector<2x8x8xf32>
    %362 = arith.addf %360, %361 : vector<2x8x8xf32>
    %cst_185 = arith.constant dense<0xFF800000> : vector<2x8xf32>
    %363 = vector.multi_reduction <maximumf>, %362, %cst_185 [2] : vector<2x8x8xf32> to vector<2x8xf32>
    %364 = vector.shape_cast %363 : vector<2x8xf32> to vector<2x8x1xf32>
    %365 = vector.broadcast %364 : vector<2x8x1xf32> to vector<2x8x8xf32>
    %366 = arith.subf %362, %365 : vector<2x8x8xf32>
    %367 = math.exp %366 : vector<2x8x8xf32>
    %cst_186 = arith.constant dense<0.000000e+00> : vector<2x8xf32>
    %368 = vector.multi_reduction <add>, %367, %cst_186 [2] : vector<2x8x8xf32> to vector<2x8xf32>
    %369 = vector.shape_cast %368 : vector<2x8xf32> to vector<2x8x1xf32>
    %370 = tpu.reciprocal %369 {approx = true} : vector<2x8x1xf32> -> vector<2x8x1xf32>
    %371 = vector.broadcast %370 : vector<2x8x1xf32> to vector<2x8x8xf32>
    %372 = arith.mulf %367, %371 : vector<2x8x8xf32>
    "tpu.trace_start"() <{level = 10 : i32, message = "bqk,bkd->bqd"}> : () -> ()
    %cst_187 = arith.constant dense<0.000000e+00> : vector<2x8x8xf32>
    %373 = tpu.matmul %372, %359, %cst_187 {dimension_numbers = #tpu.dot_dimension_numbers<[2], [1], [1], [2], [0, 0, 0, 1, 1, 2], [0], [0]>} : vector<2x8x8xf32>, vector<2x8x8xf32>, vector<2x8x8xf32> -> vector<2x8x8xf32>
    "tpu.trace_stop"() : () -> ()
    %c0_188 = arith.constant 0 : index
    %c0_189 = arith.constant 0 : index
    %c16_190 = arith.constant 16 : index
    %374 = vector.load %arg18[%c0_188, %c0_189, %c16_190] : memref<2x8x32xf32, #tpu.memory_space<vmem>>, vector<2x8x8xf32>
    tpu.vector_store %arg18[%c0_188, %c0_189, %c16_190], %373 {strides = array<i32>} : memref<2x8x32xf32, #tpu.memory_space<vmem>>, vector<2x8x8xf32>,
    %375 = vector.extract_strided_slice %320 {offsets = [0, 0, 24], sizes = [2, 8, 8], strides = [1, 1, 1]} : vector<2x8x96xf32> to vector<2x8x8xf32>
    %376 = vector.extract_strided_slice %320 {offsets = [0, 0, 56], sizes = [2, 8, 8], strides = [1, 1, 1]} : vector<2x8x96xf32> to vector<2x8x8xf32>
    %377 = vector.extract_strided_slice %320 {offsets = [0, 0, 88], sizes = [2, 8, 8], strides = [1, 1, 1]} : vector<2x8x96xf32> to vector<2x8x8xf32>
    "tpu.trace_start"() <{level = 10 : i32, message = "bqd,bkd->bqk"}> : () -> ()
    %cst_191 = arith.constant dense<0.000000e+00> : vector<2x8x8xf32>
    %378 = tpu.matmul %375, %376, %cst_191 {dimension_numbers = #tpu.dot_dimension_numbers<[2], [2], [1], [1], [0, 0, 0, 1, 1, 1], [0], [0]>} : vector<2x8x8xf32>, vector<2x8x8xf32>, vector<2x8x8xf32> -> vector<2x8x8xf32>
    "tpu.trace_stop"() : () -> ()
    %379 = vector.broadcast %0 : vector<2x1x8xf32> to vector<2x8x8xf32>
    %380 = arith.addf %378, %379 : vector<2x8x8xf32>
    %cst_192 = arith.constant dense<0xFF800000> : vector<2x8xf32>
    %381 = vector.multi_reduction <maximumf>, %380, %cst_192 [2] : vector<2x8x8xf32> to vector<2x8xf32>
    %382 = vector.shape_cast %381 : vector<2x8xf32> to vector<2x8x1xf32>
    %383 = vector.broadcast %382 : vector<2x8x1xf32> to vector<2x8x8xf32>
    %384 = arith.subf %380, %383 : vector<2x8x8xf32>
    %385 = math.exp %384 : vector<2x8x8xf32>
    %cst_193 = arith.constant dense<0.000000e+00> : vector<2x8xf32>
    %386 = vector.multi_reduction <add>, %385, %cst_193 [2] : vector<2x8x8xf32> to vector<2x8xf32>
    %387 = vector.shape_cast %386 : vector<2x8xf32> to vector<2x8x1xf32>
    %388 = tpu.reciprocal %387 {approx = true} : vector<2x8x1xf32> -> vector<2x8x1xf32>
    %389 = vector.broadcast %388 : vector<2x8x1xf32> to vector<2x8x8xf32>
    %390 = arith.mulf %385, %389 : vector<2x8x8xf32>
    "tpu.trace_start"() <{level = 10 : i32, message = "bqk,bkd->bqd"}> : () -> ()
    %cst_194 = arith.constant dense<0.000000e+00> : vector<2x8x8xf32>
    %391 = tpu.matmul %390, %377, %cst_194 {dimension_numbers = #tpu.dot_dimension_numbers<[2], [1], [1], [2], [0, 0, 0, 1, 1, 2], [0], [0]>} : vector<2x8x8xf32>, vector<2x8x8xf32>, vector<2x8x8xf32> -> vector<2x8x8xf32>
    "tpu.trace_stop"() : () -> ()
    %c0_195 = arith.constant 0 : index
    %c0_196 = arith.constant 0 : index
    %c24_197 = arith.constant 24 : index
    %392 = vector.load %arg18[%c0_195, %c0_196, %c24_197] : memref<2x8x32xf32, #tpu.memory_space<vmem>>, vector<2x8x8xf32>
    tpu.vector_store %arg18[%c0_195, %c0_196, %c24_197], %391 {strides = array<i32>} : memref<2x8x32xf32, #tpu.memory_space<vmem>>, vector<2x8x8xf32>,
    %c0_198 = arith.constant 0 : index
    %c0_199 = arith.constant 0 : index
    %c0_200 = arith.constant 0 : index
    %393 = vector.load %arg18[%c0_198, %c0_199, %c0_200] : memref<2x8x32xf32, #tpu.memory_space<vmem>>, vector<2x8x32xf32>
    %394 = vector.shape_cast %393 : vector<2x8x32xf32> to vector<16x32xf32>
    %c2_201 = arith.constant 2 : index
    %c0_202 = arith.constant 0 : index
    %c0_203 = arith.constant 0 : index
    %395 = vector.load %arg5[%c2_201, %c0_202, %c0_203] : memref<3x32x32xf32, #tpu.memory_space<vmem>>, vector<1x32x32xf32>
    %396 = vector.shape_cast %395 : vector<1x32x32xf32> to vector<32x32xf32>
    %cst_204 = arith.constant dense<0.000000e+00> : vector<16x32xf32>
    %397 = tpu.matmul %394, %396, %cst_204 {dimension_numbers = #tpu.dot_dimension_numbers<[1], [0], [0], [1], [0, 0, 1, 1], [], []>} : vector<16x32xf32>, vector<32x32xf32>, vector<16x32xf32> -> vector<16x32xf32>
    %c2_205 = arith.constant 2 : index
    %c0_206 = arith.constant 0 : index
    %c0_207 = arith.constant 0 : index
    %398 = vector.load %arg6[%c2_205, %c0_206, %c0_207] : memref<3x1x32xf32, #tpu.memory_space<vmem>>, vector<1x1x32xf32>
    %399 = vector.shape_cast %398 : vector<1x1x32xf32> to vector<1x32xf32>
    %400 = vector.broadcast %399 : vector<1x32xf32> to vector<16x32xf32>
    %401 = arith.addf %397, %400 : vector<16x32xf32>
    %402 = arith.addf %312, %401 : vector<16x32xf32>
    %c2_208 = arith.constant 2 : index
    %c0_209 = arith.constant 0 : index
    %c0_210 = arith.constant 0 : index
    %403 = vector.load %arg7[%c2_208, %c0_209, %c0_210] : memref<3x1x32xf32, #tpu.memory_space<vmem>>, vector<1x1x32xf32>
    %404 = vector.shape_cast %403 : vector<1x1x32xf32> to vector<1x32xf32>
    %c2_211 = arith.constant 2 : index
    %c0_212 = arith.constant 0 : index
    %c0_213 = arith.constant 0 : index
    %405 = vector.load %arg8[%c2_211, %c0_212, %c0_213] : memref<3x1x32xf32, #tpu.memory_space<vmem>>, vector<1x1x32xf32>
    %406 = vector.shape_cast %405 : vector<1x1x32xf32> to vector<1x32xf32>
    %cst_214 = arith.constant dense<0.000000e+00> : vector<16xf32>
    %407 = vector.multi_reduction <add>, %402, %cst_214 [1] : vector<16x32xf32> to vector<16xf32>
    %408 = vector.shape_cast %407 : vector<16xf32> to vector<16x1xf32>
    %cst_215 = arith.constant 3.200000e+01 : f32
    %409 = vector.broadcast %cst_215 : f32 to vector<16x1xf32>
    %410 = arith.divf %408, %409 : vector<16x1xf32>
    %411 = vector.broadcast %410 : vector<16x1xf32> to vector<16x32xf32>
    %412 = arith.subf %402, %411 : vector<16x32xf32>
    %413 = arith.mulf %412, %412 : vector<16x32xf32>
    %cst_216 = arith.constant dense<0.000000e+00> : vector<16xf32>
    %414 = vector.multi_reduction <add>, %413, %cst_216 [1] : vector<16x32xf32> to vector<16xf32>
    %415 = vector.shape_cast %414 : vector<16xf32> to vector<16x1xf32>
    %cst_217 = arith.constant 3.200000e+01 : f32
    %416 = vector.broadcast %cst_217 : f32 to vector<16x1xf32>
    %417 = arith.divf %415, %416 : vector<16x1xf32>
    %cst_218 = arith.constant 9.99999974E-6 : f32
    %418 = vector.broadcast %cst_218 : f32 to vector<16x1xf32>
    %419 = arith.addf %417, %418 : vector<16x1xf32>
    %420 = math.rsqrt %419 : vector<16x1xf32>
    %421 = vector.broadcast %420 : vector<16x1xf32> to vector<16x32xf32>
    %422 = arith.mulf %412, %421 : vector<16x32xf32>
    %423 = vector.broadcast %404 : vector<1x32xf32> to vector<16x32xf32>
    %424 = arith.mulf %422, %423 : vector<16x32xf32>
    %425 = vector.broadcast %406 : vector<1x32xf32> to vector<16x32xf32>
    %426 = arith.addf %424, %425 : vector<16x32xf32>
    %c2_219 = arith.constant 2 : index
    %c0_220 = arith.constant 0 : index
    %c0_221 = arith.constant 0 : index
    %427 = vector.load %arg9[%c2_219, %c0_220, %c0_221] : memref<3x32x64xf32, #tpu.memory_space<vmem>>, vector<1x32x64xf32>
    %428 = vector.shape_cast %427 : vector<1x32x64xf32> to vector<32x64xf32>
    %cst_222 = arith.constant dense<0.000000e+00> : vector<16x64xf32>
    %429 = tpu.matmul %426, %428, %cst_222 {dimension_numbers = #tpu.dot_dimension_numbers<[1], [0], [0], [1], [0, 0, 1, 1], [], []>} : vector<16x32xf32>, vector<32x64xf32>, vector<16x64xf32> -> vector<16x64xf32>
    %c2_223 = arith.constant 2 : index
    %c0_224 = arith.constant 0 : index
    %c0_225 = arith.constant 0 : index
    %430 = vector.load %arg10[%c2_223, %c0_224, %c0_225] : memref<3x1x64xf32, #tpu.memory_space<vmem>>, vector<1x1x64xf32>
    %431 = vector.shape_cast %430 : vector<1x1x64xf32> to vector<1x64xf32>
    %432 = vector.broadcast %431 : vector<1x64xf32> to vector<16x64xf32>
    %433 = arith.addf %429, %432 : vector<16x64xf32>
    %cst_226 = arith.constant 0.000000e+00 : f32
    %434 = vector.broadcast %cst_226 : f32 to vector<16x64xf32>
    %435 = arith.maximumf %433, %434 : vector<16x64xf32>
    %c2_227 = arith.constant 2 : index
    %c0_228 = arith.constant 0 : index
    %c0_229 = arith.constant 0 : index
    %436 = vector.load %arg11[%c2_227, %c0_228, %c0_229] : memref<3x64x32xf32, #tpu.memory_space<vmem>>, vector<1x64x32xf32>
    %437 = vector.shape_cast %436 : vector<1x64x32xf32> to vector<64x32xf32>
    %cst_230 = arith.constant dense<0.000000e+00> : vector<16x32xf32>
    %438 = tpu.matmul %435, %437, %cst_230 {dimension_numbers = #tpu.dot_dimension_numbers<[1], [0], [0], [1], [0, 0, 1, 1], [], []>} : vector<16x64xf32>, vector<64x32xf32>, vector<16x32xf32> -> vector<16x32xf32>
    %c2_231 = arith.constant 2 : index
    %c0_232 = arith.constant 0 : index
    %c0_233 = arith.constant 0 : index
    %439 = vector.load %arg12[%c2_231, %c0_232, %c0_233] : memref<3x1x32xf32, #tpu.memory_space<vmem>>, vector<1x1x32xf32>
    %440 = vector.shape_cast %439 : vector<1x1x32xf32> to vector<1x32xf32>
    %441 = vector.broadcast %440 : vector<1x32xf32> to vector<16x32xf32>
    %442 = arith.addf %438, %441 : vector<16x32xf32>
    %443 = arith.addf %426, %442 : vector<16x32xf32>
    %c2_234 = arith.constant 2 : index
    %c0_235 = arith.constant 0 : index
    %c0_236 = arith.constant 0 : index
    %444 = vector.load %arg13[%c2_234, %c0_235, %c0_236] : memref<3x1x32xf32, #tpu.memory_space<vmem>>, vector<1x1x32xf32>
    %445 = vector.shape_cast %444 : vector<1x1x32xf32> to vector<1x32xf32>
    %c2_237 = arith.constant 2 : index
    %c0_238 = arith.constant 0 : index
    %c0_239 = arith.constant 0 : index
    %446 = vector.load %arg14[%c2_237, %c0_238, %c0_239] : memref<3x1x32xf32, #tpu.memory_space<vmem>>, vector<1x1x32xf32>
    %447 = vector.shape_cast %446 : vector<1x1x32xf32> to vector<1x32xf32>
    %cst_240 = arith.constant dense<0.000000e+00> : vector<16xf32>
    %448 = vector.multi_reduction <add>, %443, %cst_240 [1] : vector<16x32xf32> to vector<16xf32>
    %449 = vector.shape_cast %448 : vector<16xf32> to vector<16x1xf32>
    %cst_241 = arith.constant 3.200000e+01 : f32
    %450 = vector.broadcast %cst_241 : f32 to vector<16x1xf32>
    %451 = arith.divf %449, %450 : vector<16x1xf32>
    %452 = vector.broadcast %451 : vector<16x1xf32> to vector<16x32xf32>
    %453 = arith.subf %443, %452 : vector<16x32xf32>
    %454 = arith.mulf %453, %453 : vector<16x32xf32>
    %cst_242 = arith.constant dense<0.000000e+00> : vector<16xf32>
    %455 = vector.multi_reduction <add>, %454, %cst_242 [1] : vector<16x32xf32> to vector<16xf32>
    %456 = vector.shape_cast %455 : vector<16xf32> to vector<16x1xf32>
    %cst_243 = arith.constant 3.200000e+01 : f32
    %457 = vector.broadcast %cst_243 : f32 to vector<16x1xf32>
    %458 = arith.divf %456, %457 : vector<16x1xf32>
    %cst_244 = arith.constant 9.99999974E-6 : f32
    %459 = vector.broadcast %cst_244 : f32 to vector<16x1xf32>
    %460 = arith.addf %458, %459 : vector<16x1xf32>
    %461 = math.rsqrt %460 : vector<16x1xf32>
    %462 = vector.broadcast %461 : vector<16x1xf32> to vector<16x32xf32>
    %463 = arith.mulf %453, %462 : vector<16x32xf32>
    %464 = vector.broadcast %445 : vector<1x32xf32> to vector<16x32xf32>
    %465 = arith.mulf %463, %464 : vector<16x32xf32>
    %466 = vector.broadcast %447 : vector<1x32xf32> to vector<16x32xf32>
    %467 = arith.addf %465, %466 : vector<16x32xf32>
    %468 = vector.shape_cast %467 : vector<16x32xf32> to vector<2x8x32xf32>
    %cst_245 = arith.constant 0.000000e+00 : f32
    %469 = vector.broadcast %cst_245 : f32 to vector<2x8x32xf32>
    %470 = arith.maximumf %468, %469 : vector<2x8x32xf32>
    %c0_246 = arith.constant 0 : index
    %c0_247 = arith.constant 0 : index
    %c0_248 = arith.constant 0 : index
    %471 = vector.load %arg2[%c0_246, %c0_247, %c0_248] : memref<2x8x1xf32, #tpu.memory_space<vmem>>, vector<2x8x1xf32>
    %472 = vector.broadcast %471 : vector<2x8x1xf32> to vector<2x8x32xf32>
    %473 = arith.mulf %470, %472 : vector<2x8x32xf32>
    %c0_249 = arith.constant 0 : index
    %c0_250 = arith.constant 0 : index
    %c0_251 = arith.constant 0 : index
    %474 = vector.load %arg15[%c0_249, %c0_250, %c0_251] : memref<1x8x32xf32, #tpu.memory_space<vmem>>, vector<1x8x32xf32>
    %475 = vector.shape_cast %474 : vector<1x8x32xf32> to vector<8x32xf32>
    %476 = vector.shape_cast %475 : vector<8x32xf32> to vector<1x8x32xf32>
    %477 = vector.broadcast %476 : vector<1x8x32xf32> to vector<2x8x32xf32>
    %478 = arith.mulf %473, %477 : vector<2x8x32xf32>
    %cst_252 = arith.constant dense<0.000000e+00> : vector<2x8xf32>
    %479 = vector.multi_reduction <add>, %478, %cst_252 [2] : vector<2x8x32xf32> to vector<2x8xf32>
    %cst_253 = arith.constant dense<0.000000e+00> : vector<2xf32>
    %480 = vector.multi_reduction <add>, %479, %cst_253 [1] : vector<2x8xf32> to vector<2xf32>
    %481 = vector.shape_cast %480 : vector<2xf32> to vector<2x1xf32>
    %c0_254 = arith.constant 0 : index
    %c0_255 = arith.constant 0 : index
    %482 = vector.load %arg16[%c0_254, %c0_255] : memref<1x1xf32, #tpu.memory_space<vmem>>, vector<1x1xf32>
    %483 = vector.broadcast %482 : vector<1x1xf32> to vector<2x1xf32>
    %484 = arith.addf %481, %483 : vector<2x1xf32>
    %cst_256 = arith.constant 0.000000e+00 : f32
    %485 = vector.broadcast %cst_256 : f32 to vector<2x1xf32>
    %486 = arith.maximumf %484, %485 : vector<2x1xf32>
    %c0_257 = arith.constant 0 : index
    %c0_258 = arith.constant 0 : index
    %487 = vector.load %arg17[%c0_257, %c0_258] : memref<2x1xf32, #tpu.memory_space<vmem>>, vector<2x1xf32>
    tpu.vector_store %arg17[%c0_257, %c0_258], %486 {strides = array<i32>} : memref<2x1xf32, #tpu.memory_space<vmem>>, vector<2x1xf32>,
    return
  }
}

</mosaic_0001>

<llo_original>
// kernel: swe_former_forward.1
$region0: #{swe_former_forward.1}
  #allocation0 [shape = 'u32[]', space=smem, size = 0x4, offset = 0x4, fixed_abs, tag = 'smem constant byte address 0x4 - core index']
  #allocation1 [shape = 'u32[144,128]{1,0:T(1,128)}', space=vmem, size = 0x12000, scoped, tag = 'internal scratch']
  #allocation2 [shape = 'f32[2,8,32]{2,1,0:T(8,128)}', space=vmem, size = 0x2000, scoped, tag = 'scratch operand']
  #allocation3 [shape = 'f32[1,1]{1,0:T(1,128)S(1)}', space=vmem, size = 0x200, scoped, tag = 'scoped memory for swe_former_forward.1']
  %s0 = inlined_call_operand.vmem [shape: f32[2,8,32], index: 0, kind: input, shape index: {}]
  %s1 = inlined_call_operand.vmem [shape: f32[2,1,8], index: 1, kind: input, shape index: {}]
  %s2 = inlined_call_operand.vmem [shape: f32[2,8,1], index: 2, kind: input, shape index: {}]
  %s3 = inlined_call_operand.vmem [shape: f32[3,32,96], index: 3, kind: input, shape index: {}]
  %s4 = inlined_call_operand.vmem [shape: f32[3,1,96], index: 4, kind: input, shape index: {}]
  %s5 = inlined_call_operand.vmem [shape: f32[3,32,32], index: 5, kind: input, shape index: {}]
  %s6 = inlined_call_operand.vmem [shape: f32[3,1,32], index: 6, kind: input, shape index: {}]
  %s7 = inlined_call_operand.vmem [shape: f32[3,1,32], index: 7, kind: input, shape index: {}]
  %s8 = inlined_call_operand.vmem [shape: f32[3,1,32], index: 8, kind: input, shape index: {}]
  %s9 = inlined_call_operand.vmem [shape: f32[3,32,64], index: 9, kind: input, shape index: {}]
  %s10 = inlined_call_operand.vmem [shape: f32[3,1,64], index: 10, kind: input, shape index: {}]
  %s11 = inlined_call_operand.vmem [shape: f32[3,64,32], index: 11, kind: input, shape index: {}]
  %s12 = inlined_call_operand.vmem [shape: f32[3,1,32], index: 12, kind: input, shape index: {}]
  %s13 = inlined_call_operand.vmem [shape: f32[3,1,32], index: 13, kind: input, shape index: {}]
  %s14 = inlined_call_operand.vmem [shape: f32[3,1,32], index: 14, kind: input, shape index: {}]
  %s15 = inlined_call_operand.vmem [shape: f32[1,8,32], index: 15, kind: input, shape index: {}]
  %s16 = inlined_call_operand.<no memory space> [shape: f32[1,1], index: 16, kind: input, shape index: {}]
  %s17 = inlined_call_operand.vmem [shape: f32[2,1], index: 17, kind: output, shape index: {}]
  %s18 = sld [smem:[#allocation0]]
  $region78: #{swe_former_forward.1} parent=0
    _
  %s20 = ssub.s32 1, %s18
  %s21 = scalar_select 0, %s20, %s18
  %v22 = vstv %s16
  %23 = vst [vmem:[#allocation3] sm:$0x1] %v22
  // Predicated region
  $region2: #{swe_former_forward.1} parent=0 // pred_check
    _
  $region3: #{swe_former_forward.1} parent=0 // pred_check_branch
    %25 = sbr.rel (0) target = $region5
  $region4: #{swe_former_forward.1} parent=0 // pred_region
    _
  $region5: #{swe_former_forward.1} parent=0 // pred_fallthru
    _
  // Predicated region
  $region6: #{swe_former_forward.1} parent=0 // pred_check
    _
  $region7: #{swe_former_forward.1} parent=0 // pred_check_branch
    %27 = sbr.rel (0) target = $region9
  $region8: #{swe_former_forward.1} parent=0 // pred_region
    _
  $region9: #{swe_former_forward.1} parent=0 // pred_fallthru
    _
  // Predicated region
  $region10: #{swe_former_forward.1} parent=0 // pred_check
    _
  $region11: #{swe_former_forward.1} parent=0 // pred_check_branch
    %29 = sbr.rel (0) target = $region13
  $region12: #{swe_former_forward.1} parent=0 // pred_region
    _
  $region13: #{swe_former_forward.1} parent=0 // pred_fallthru
    _
  // Predicated region
  $region14: #{swe_former_forward.1} parent=0 // pred_check
    _
  $region15: #{swe_former_forward.1} parent=0 // pred_check_branch
    %31 = sbr.rel (0) target = $region17
  $region16: #{swe_former_forward.1} parent=0 // pred_region
    _
  $region17: #{swe_former_forward.1} parent=0 // pred_fallthru
    _
  // Predicated region
  $region18: #{swe_former_forward.1} parent=0 // pred_check
    _
  $region19: #{swe_former_forward.1} parent=0 // pred_check_branch
    %33 = sbr.rel (0) target = $region21
  $region20: #{swe_former_forward.1} parent=0 // pred_region
    _
  $region21: #{swe_former_forward.1} parent=0 // pred_fallthru
    _
  // Predicated region
  $region22: #{swe_former_forward.1} parent=0 // pred_check
    _
  $region23: #{swe_former_forward.1} parent=0 // pred_check_branch
    %35 = sbr.rel (0) target = $region25
  $region24: #{swe_former_forward.1} parent=0 // pred_region
    _
  $region25: #{swe_former_forward.1} parent=0 // pred_fallthru
    _
  // Predicated region
  $region26: #{swe_former_forward.1} parent=0 // pred_check
    _
  $region27: #{swe_former_forward.1} parent=0 // pred_check_branch
    %37 = sbr.rel (0) target = $region29
  $region28: #{swe_former_forward.1} parent=0 // pred_region
    _
  $region29: #{swe_former_forward.1} parent=0 // pred_fallthru
    _
  // Predicated region
  $region30: #{swe_former_forward.1} parent=0 // pred_check
    _
  $region31: #{swe_former_forward.1} parent=0 // pred_check_branch
    %39 = sbr.rel (0) target = $region33
  $region32: #{swe_former_forward.1} parent=0 // pred_region
    _
  $region33: #{swe_former_forward.1} parent=0 // pred_fallthru
    _
  // Predicated region
  $region34: #{swe_former_forward.1} parent=0 // pred_check
    _
  $region35: #{swe_former_forward.1} parent=0 // pred_check_branch
    %41 = sbr.rel (0) target = $region37
  $region36: #{swe_former_forward.1} parent=0 // pred_region
    _
  $region37: #{swe_former_forward.1} parent=0 // pred_fallthru
    _
  // Predicated region
  $region38: #{swe_former_forward.1} parent=0 // pred_check
    _
  $region39: #{swe_former_forward.1} parent=0 // pred_check_branch
    %43 = sbr.rel (0) target = $region41
  $region40: #{swe_former_forward.1} parent=0 // pred_region
    _
  $region41: #{swe_former_forward.1} parent=0 // pred_fallthru
    _
  // Predicated region
  $region42: #{swe_former_forward.1} parent=0 // pred_check
    _
  $region43: #{swe_former_forward.1} parent=0 // pred_check_branch
    %45 = sbr.rel (0) target = $region45
  $region44: #{swe_former_forward.1} parent=0 // pred_region
    _
  $region45: #{swe_former_forward.1} parent=0 // pred_fallthru
    _
  // Predicated region
  $region46: #{swe_former_forward.1} parent=0 // pred_check
    _
  $region47: #{swe_former_forward.1} parent=0 // pred_check_branch
    %47 = sbr.rel (0) target = $region49
  $region48: #{swe_former_forward.1} parent=0 // pred_region
    _
  $region49: #{swe_former_forward.1} parent=0 // pred_fallthru
    _
  // Predicated region
  $region50: #{swe_former_forward.1} parent=0 // pred_check
    _
  $region51: #{swe_former_forward.1} parent=0 // pred_check_branch
    %49 = sbr.rel (0) target = $region53
  $region52: #{swe_former_forward.1} parent=0 // pred_region
    _
  $region53: #{swe_former_forward.1} parent=0 // pred_fallthru
    _
  // Predicated region
  $region54: #{swe_former_forward.1} parent=0 // pred_check
    _
  $region55: #{swe_former_forward.1} parent=0 // pred_check_branch
    %51 = sbr.rel (0) target = $region57
  $region56: #{swe_former_forward.1} parent=0 // pred_region
    _
  $region57: #{swe_former_forward.1} parent=0 // pred_fallthru
    _
  // Predicated region
  $region58: #{swe_former_forward.1} parent=0 // pred_check
    _
  $region59: #{swe_former_forward.1} parent=0 // pred_check_branch
    %53 = sbr.rel (0) target = $region61
  $region60: #{swe_former_forward.1} parent=0 // pred_region
    _
  $region61: #{swe_former_forward.1} parent=0 // pred_fallthru
    _
  // Predicated region
  $region62: #{swe_former_forward.1} parent=0 // pred_check
    _
  $region63: #{swe_former_forward.1} parent=0 // pred_check_branch
    %55 = sbr.rel (0) target = $region65
  $region64: #{swe_former_forward.1} parent=0 // pred_region
    _
  $region65: #{swe_former_forward.1} parent=0 // pred_fallthru
    _
  // Predicated region
  $region66: #{swe_former_forward.1} parent=0 // pred_check
    _
  $region67: #{swe_former_forward.1} parent=0 // pred_check_branch
    %57 = sbr.rel (0) target = $region69
  $region68: #{swe_former_forward.1} parent=0 // pred_region
    _
  $region69: #{swe_former_forward.1} parent=0 // pred_fallthru
    _
  %v58 = vld [vmem:[%s1] sm:$0x1]
  %v59 = vld [vmem:[%s1 + $0x1] sm:$0x1]
  %v60 = vld [vmem:[%s0] sm:$0xff]
  %v61 = vld [vmem:[%s0 + $0x8] sm:$0xff]
  %v62 = vld [vmem:[%s3] sm:$0xff]
  %v63 = vld [vmem:[%s3 + $0x8] sm:$0xff]
  %v64 = vld [vmem:[%s3 + $0x10] sm:$0xff]
  %v65 = vld [vmem:[%s3 + $0x18] sm:$0xff]
  %v66 = vld [vmem:[%s4] sm:$0x1]
  %v68 = vlaneseq
  %v69 = vshrl.u32 %v68, 7
  %v70 = vsub.s32 0, %v69
  %v71 = vrot.slane %v66, %v70
  %vm73 = vcmask 261120
  %v75 = vsel %vm73, %v60, 0
  %v78 = vsel %vm73, %v61, 0
  %80 = vmatprep.subr.mxu0 0.0
  %81 = vmatpush1.msra.mxu0 %v62
  %82 = vmatprep.subr.mxu0 0.0
  %83 = vmatpush1.msra.mxu0 %v63
  %84 = vmatprep.subr.mxu0 0.0
  %85 = vmatpush1.msra.mxu0 %v64
  %86 = vmatprep.subr.mxu0 0.0
  %87 = vmatpush1.msra.mxu0 %v65
  %88 = vmatprep.subr.mxu0 0.0
  %89 = vmatpush1.msra.mxu0 0.0
  %90 = vmatprep.subr.mxu0 0.0
  %91 = vmatpush1.msra.mxu0 0.0
  %92 = vmatprep.subr.mxu0 0.0
  %93 = vmatpush1.msra.mxu0 0.0
  %94 = vmatprep.subr.mxu0 0.0
  %95 = vmatpush1.msra.mxu0 0.0
  %96 = vmatprep.subr.mxu0 0.0
  %97 = vmatpush1.msra.mxu0 0.0
  %98 = vmatprep.subr.mxu0 0.0
  %99 = vmatpush1.msra.mxu0 0.0
  %100 = vmatprep.subr.mxu0 0.0
  %101 = vmatpush1.msra.mxu0 0.0
  %102 = vmatprep.subr.mxu0 0.0
  %103 = vmatpush1.msra.mxu0 0.0
  %104 = vmatprep.subr.mxu0 0.0
  %105 = vmatpush1.msra.mxu0 0.0
  %106 = vmatprep.subr.mxu0 0.0
  %107 = vmatpush1.msra.mxu0 0.0
  %108 = vmatprep.subr.mxu0 0.0
  %109 = vmatpush1.msra.mxu0 0.0
  %110 = vmatprep.subr.mxu0 0.0
  %111 = vmatpush1.msra.mxu0 0.0
  %112 = vmatprep.subr.mxu0 0.0
  %113 = vmatpush1.msra.mxu0 0.0
  %114 = vmatprep.subr.mxu0 0.0
  %115 = vmatpush1.msra.mxu0 0.0
  %116 = vmatprep.subr.mxu0 0.0
  %117 = vmatpush1.msra.mxu0 0.0
  %118 = vmatprep.subr.mxu0 0.0
  %119 = vmatpush1.msra.mxu0 0.0
  %120 = vmatprep.subr.mxu0 0.0
  %121 = vmatpush1.msra.mxu0 0.0
  %122 = vmatprep.subr.mxu0 0.0
  %123 = vmatpush1.msra.mxu0 0.0
  %124 = vmatprep.subr.mxu0 0.0
  %125 = vmatpush1.msra.mxu0 0.0
  %126 = vmatprep.subr.mxu0 0.0
  %127 = vmatpush1.msra.mxu0 0.0
  %128 = vmatprep.subr.mxu0 0.0
  %129 = vmatpush1.msra.mxu0 0.0
  %130 = vmatprep.subr.mxu0 0.0
  %131 = vmatpush1.msra.mxu0 0.0
  %132 = vmatprep.subr.mxu0 0.0
  %133 = vmatpush1.msra.mxu0 0.0
  %134 = vmatprep.subr.mxu0 0.0
  %135 = vmatpush1.msra.mxu0 0.0
  %136 = vmatprep.subr.mxu0 0.0
  %137 = vmatpush1.msra.mxu0 0.0
  %138 = vmatprep.subr.mxu0 0.0
  %139 = vmatpush1.msra.mxu0 0.0
  %140 = vmatprep.subr.mxu0 0.0
  %141 = vmatpush1.msra.mxu0 0.0
  %142 = vmatprep.subr.mxu0 0.0
  %143 = vmatpush1.msra.mxu0 0.0
  %144 = vmatprep.mubr.f32.mxu0 0.0
  %145 = vmatmul.mubr.f32.gmra.mrb[0].mxu0 %v75
  %v146 = vpop.f32.mrb[0].mxu0
  %v147 = vadd.f32 %v71, %v146
  %v148 = vpop.f32.mrb[0].mxu0
  %149 = vmatprep.mubr.f32.mxu0 0.0
  %150 = vmatmul.mubr.f32.gmra.mrb[0].mxu0 %v78
  %v151 = vpop.f32.mrb[0].mxu0
  %v152 = vadd.f32 %v71, %v151
  %v153 = vpop.f32.mrb[0].mxu0
  %154 = vdwg.mxu0
  %v157 = vlaneseq
  %v158 = vshrl.u32 %v157, 7
  %v159 = vsub.s32 0, %v158
  %v160 = vrot.slane %v58, %v159
  %v161 = vlaneseq
  %v162 = vshrl.u32 %v161, 7
  %v163 = vsub.s32 0, %v162
  %v164 = vrot.slane %v59, %v163
  %168 = vrot.lane.b32.xlu0 %v147, 96
  %v169 = vpop.permute.xlu0 %168
  %vm170 = vcmask 64512
  %v171 = vsel %vm170, %v147, 0
  %v173 = vsel %vm170, %v169, 0
  %175 = vmatprep.subr.mxu0 0.0
  %176 = vmatpush1.xpose.msra.mxu0 %v173
  %177 = vmatprep.subr.mxu0 0.0
  %178 = vmatpush1.xpose.msra.mxu0 0.0
  %179 = vmatprep.subr.mxu0 0.0
  %180 = vmatpush1.xpose.msra.mxu0 0.0
  %181 = vmatprep.subr.mxu0 0.0
  %182 = vmatpush1.xpose.msra.mxu0 0.0
  %183 = vmatprep.subr.mxu0 0.0
  %184 = vmatpush1.xpose.msra.mxu0 0.0
  %185 = vmatprep.subr.mxu0 0.0
  %186 = vmatpush1.xpose.msra.mxu0 0.0
  %187 = vmatprep.subr.mxu0 0.0
  %188 = vmatpush1.xpose.msra.mxu0 0.0
  %189 = vmatprep.subr.mxu0 0.0
  %190 = vmatpush1.xpose.msra.mxu0 0.0
  %191 = vmatprep.subr.mxu0 0.0
  %192 = vmatpush1.xpose.msra.mxu0 0.0
  %193 = vmatprep.subr.mxu0 0.0
  %194 = vmatpush1.xpose.msra.mxu0 0.0
  %195 = vmatprep.subr.mxu0 0.0
  %196 = vmatpush1.xpose.msra.mxu0 0.0
  %197 = vmatprep.subr.mxu0 0.0
  %198 = vmatpush1.xpose.msra.mxu0 0.0
  %199 = vmatprep.subr.mxu0 0.0
  %200 = vmatpush1.xpose.msra.mxu0 0.0
  %201 = vmatprep.subr.mxu0 0.0
  %202 = vmatpush1.xpose.msra.mxu0 0.0
  %203 = vmatprep.subr.mxu0 0.0
  %204 = vmatpush1.xpose.msra.mxu0 0.0
  %205 = vmatprep.subr.mxu0 0.0
  %206 = vmatpush1.xpose.msra.mxu0 0.0
  %207 = vmatprep.subr.mxu0 0.0
  %208 = vmatpush1.xpose.msra.mxu0 0.0
  %209 = vmatprep.subr.mxu0 0.0
  %210 = vmatpush1.xpose.msra.mxu0 0.0
  %211 = vmatprep.subr.mxu0 0.0
  %212 = vmatpush1.xpose.msra.mxu0 0.0
  %213 = vmatprep.subr.mxu0 0.0
  %214 = vmatpush1.xpose.msra.mxu0 0.0
  %215 = vmatprep.subr.mxu0 0.0
  %216 = vmatpush1.xpose.msra.mxu0 0.0
  %217 = vmatprep.subr.mxu0 0.0
  %218 = vmatpush1.xpose.msra.mxu0 0.0
  %219 = vmatprep.subr.mxu0 0.0
  %220 = vmatpush1.xpose.msra.mxu0 0.0
  %221 = vmatprep.subr.mxu0 0.0
  %222 = vmatpush1.xpose.msra.mxu0 0.0
  %223 = vmatprep.subr.mxu0 0.0
  %224 = vmatpush1.xpose.msra.mxu0 0.0
  %225 = vmatprep.subr.mxu0 0.0
  %226 = vmatpush1.xpose.msra.mxu0 0.0
  %227 = vmatprep.subr.mxu0 0.0
  %228 = vmatpush1.xpose.msra.mxu0 0.0
  %229 = vmatprep.subr.mxu0 0.0
  %230 = vmatpush1.xpose.msra.mxu0 0.0
  %231 = vmatprep.subr.mxu0 0.0
  %232 = vmatpush1.xpose.msra.mxu0 0.0
  %233 = vmatprep.subr.mxu0 0.0
  %234 = vmatpush1.xpose.msra.mxu0 0.0
  %235 = vmatprep.subr.mxu0 0.0
  %236 = vmatpush1.xpose.msra.mxu0 0.0
  %237 = vmatprep.subr.mxu0 0.0
  %238 = vmatpush1.xpose.msra.mxu0 0.0
  %239 = vmatprep.mubr.f32.mxu0 0.0
  %240 = vmatmul.mubr.f32.gmra.mrb[0].mxu0 %v171
  %v241 = vpop.f32.mrb[0].mxu0
  %v242 = vadd.f32 %v160, %v241
  %v243 = vpop.f32.mrb[0].mxu0
  %244 = vdwg.mxu0
  %246 = vrot.lane.b32.xlu0 %v152, 96
  %v247 = vpop.permute.xlu0 %246
  %v248 = vsel %vm170, %v152, 0
  %v250 = vsel %vm170, %v247, 0
  %252 = vmatprep.subr.mxu0 0.0
  %253 = vmatpush1.xpose.msra.mxu0 %v250
  %254 = vmatprep.subr.mxu0 0.0
  %255 = vmatpush1.xpose.msra.mxu0 0.0
  %256 = vmatprep.subr.mxu0 0.0
  %257 = vmatpush1.xpose.msra.mxu0 0.0
  %258 = vmatprep.subr.mxu0 0.0
  %259 = vmatpush1.xpose.msra.mxu0 0.0
  %260 = vmatprep.subr.mxu0 0.0
  %261 = vmatpush1.xpose.msra.mxu0 0.0
  %262 = vmatprep.subr.mxu0 0.0
  %263 = vmatpush1.xpose.msra.mxu0 0.0
  %264 = vmatprep.subr.mxu0 0.0
  %265 = vmatpush1.xpose.msra.mxu0 0.0
  %266 = vmatprep.subr.mxu0 0.0
  %267 = vmatpush1.xpose.msra.mxu0 0.0
  %268 = vmatprep.subr.mxu0 0.0
  %269 = vmatpush1.xpose.msra.mxu0 0.0
  %270 = vmatprep.subr.mxu0 0.0
  %271 = vmatpush1.xpose.msra.mxu0 0.0
  %272 = vmatprep.subr.mxu0 0.0
  %273 = vmatpush1.xpose.msra.mxu0 0.0
  %274 = vmatprep.subr.mxu0 0.0
  %275 = vmatpush1.xpose.msra.mxu0 0.0
  %276 = vmatprep.subr.mxu0 0.0
  %277 = vmatpush1.xpose.msra.mxu0 0.0
  %278 = vmatprep.subr.mxu0 0.0
  %279 = vmatpush1.xpose.msra.mxu0 0.0
  %280 = vmatprep.subr.mxu0 0.0
  %281 = vmatpush1.xpose.msra.mxu0 0.0
  %282 = vmatprep.subr.mxu0 0.0
  %283 = vmatpush1.xpose.msra.mxu0 0.0
  %284 = vmatprep.subr.mxu0 0.0
  %285 = vmatpush1.xpose.msra.mxu0 0.0
  %286 = vmatprep.subr.mxu0 0.0
  %287 = vmatpush1.xpose.msra.mxu0 0.0
  %288 = vmatprep.subr.mxu0 0.0
  %289 = vmatpush1.xpose.msra.mxu0 0.0
  %290 = vmatprep.subr.mxu0 0.0
  %291 = vmatpush1.xpose.msra.mxu0 0.0
  %292 = vmatprep.subr.mxu0 0.0
  %293 = vmatpush1.xpose.msra.mxu0 0.0
  %294 = vmatprep.subr.mxu0 0.0
  %295 = vmatpush1.xpose.msra.mxu0 0.0
  %296 = vmatprep.subr.mxu0 0.0
  %297 = vmatpush1.xpose.msra.mxu0 0.0
  %298 = vmatprep.subr.mxu0 0.0
  %299 = vmatpush1.xpose.msra.mxu0 0.0
  %300 = vmatprep.subr.mxu0 0.0
  %301 = vmatpush1.xpose.msra.mxu0 0.0
  %302 = vmatprep.subr.mxu0 0.0
  %303 = vmatpush1.xpose.msra.mxu0 0.0
  %304 = vmatprep.subr.mxu0 0.0
  %305 = vmatpush1.xpose.msra.mxu0 0.0
  %306 = vmatprep.subr.mxu0 0.0
  %307 = vmatpush1.xpose.msra.mxu0 0.0
  %308 = vmatprep.subr.mxu0 0.0
  %309 = vmatpush1.xpose.msra.mxu0 0.0
  %310 = vmatprep.subr.mxu0 0.0
  %311 = vmatpush1.xpose.msra.mxu0 0.0
  %312 = vmatprep.subr.mxu0 0.0
  %313 = vmatpush1.xpose.msra.mxu0 0.0
  %314 = vmatprep.subr.mxu0 0.0
  %315 = vmatpush1.xpose.msra.mxu0 0.0
  %316 = vmatprep.mubr.f32.mxu0 0.0
  %317 = vmatmul.mubr.f32.gmra.mrb[0].mxu0 %v248
  %v318 = vpop.f32.mrb[0].mxu0
  %v319 = vadd.f32 %v164, %v318
  %v320 = vpop.f32.mrb[0].mxu0
  %321 = vdwg.mxu0
  %v322 = vsel %vm170, %v242, -inf
  %323 = vmax.xlane.f32.xlu0 %v322
  %v324 = vpop.xlane.xlu0 %323
  %v325 = vsel %vm170, %v319, -inf
  %326 = vmax.xlane.f32.xlu0 %v325
  %v327 = vpop.xlane.xlu0 %326
  %v328 = vsub.f32 %v242, %v324
  %v329 = vsub.f32 %v319, %v327
  %v330 = vmul.f32 %v328, 1.442695
  %v331 = vpow.pop %v330
  %v332 = vmul.f32 %v329, 1.442695
  %v333 = vpow.pop %v332
  %v334 = vsel %vm170, %v331, 0.0
  %335 = vadd.xlane.f32.xlu0 %v334
  %v336 = vpop.xlane.xlu0 %335
  %v337 = vsel %vm170, %v333, 0.0
  %338 = vadd.xlane.f32.xlu0 %v337
  %v339 = vpop.xlane.xlu0 %338
  %v340 = vrcp.pop %v336
  %v341 = vrcp.pop %v339
  %v342 = vmul.f32 %v331, %v340
  %v343 = vmul.f32 %v333, %v341
  %344 = vrot.lane.b32.xlu0 %v147, 64
  %v345 = vpop.permute.xlu0 %344
  %v348 = vsel %vm170, %v342, 0
  %350 = vmatprep.subr.mxu0 0.0
  %351 = vmatpush1.msra.mxu0 %v345
  %352 = vmatprep.subr.mxu0 0.0
  %353 = vmatpush1.msra.mxu0 0.0
  %354 = vmatprep.subr.mxu0 0.0
  %355 = vmatpush1.msra.mxu0 0.0
  %356 = vmatprep.subr.mxu0 0.0
  %357 = vmatpush1.msra.mxu0 0.0
  %358 = vmatprep.subr.mxu0 0.0
  %359 = vmatpush1.msra.mxu0 0.0
  %360 = vmatprep.subr.mxu0 0.0
  %361 = vmatpush1.msra.mxu0 0.0
  %362 = vmatprep.subr.mxu0 0.0
  %363 = vmatpush1.msra.mxu0 0.0
  %364 = vmatprep.subr.mxu0 0.0
  %365 = vmatpush1.msra.mxu0 0.0
  %366 = vmatprep.subr.mxu0 0.0
  %367 = vmatpush1.msra.mxu0 0.0
  %368 = vmatprep.subr.mxu0 0.0
  %369 = vmatpush1.msra.mxu0 0.0
  %370 = vmatprep.subr.mxu0 0.0
  %371 = vmatpush1.msra.mxu0 0.0
  %372 = vmatprep.subr.mxu0 0.0
  %373 = vmatpush1.msra.mxu0 0.0
  %374 = vmatprep.subr.mxu0 0.0
  %375 = vmatpush1.msra.mxu0 0.0
  %376 = vmatprep.subr.mxu0 0.0
  %377 = vmatpush1.msra.mxu0 0.0
  %378 = vmatprep.subr.mxu0 0.0
  %379 = vmatpush1.msra.mxu0 0.0
  %380 = vmatprep.subr.mxu0 0.0
  %381 = vmatpush1.msra.mxu0 0.0
  %382 = vmatprep.subr.mxu0 0.0
  %383 = vmatpush1.msra.mxu0 0.0
  %384 = vmatprep.subr.mxu0 0.0
  %385 = vmatpush1.msra.mxu0 0.0
  %386 = vmatprep.subr.mxu0 0.0
  %387 = vmatpush1.msra.mxu0 0.0
  %388 = vmatprep.subr.mxu0 0.0
  %389 = vmatpush1.msra.mxu0 0.0
  %390 = vmatprep.subr.mxu0 0.0
  %391 = vmatpush1.msra.mxu0 0.0
  %392 = vmatprep.subr.mxu0 0.0
  %393 = vmatpush1.msra.mxu0 0.0
  %394 = vmatprep.subr.mxu0 0.0
  %395 = vmatpush1.msra.mxu0 0.0
  %396 = vmatprep.subr.mxu0 0.0
  %397 = vmatpush1.msra.mxu0 0.0
  %398 = vmatprep.subr.mxu0 0.0
  %399 = vmatpush1.msra.mxu0 0.0
  %400 = vmatprep.subr.mxu0 0.0
  %401 = vmatpush1.msra.mxu0 0.0
  %402 = vmatprep.subr.mxu0 0.0
  %403 = vmatpush1.msra.mxu0 0.0
  %404 = vmatprep.subr.mxu0 0.0
  %405 = vmatpush1.msra.mxu0 0.0
  %406 = vmatprep.subr.mxu0 0.0
  %407 = vmatpush1.msra.mxu0 0.0
  %408 = vmatprep.subr.mxu0 0.0
  %409 = vmatpush1.msra.mxu0 0.0
  %410 = vmatprep.subr.mxu0 0.0
  %411 = vmatpush1.msra.mxu0 0.0
  %412 = vmatprep.subr.mxu0 0.0
  %413 = vmatpush1.msra.mxu0 0.0
  %414 = vmatprep.mubr.f32.mxu0 0.0
  %415 = vmatmul.mubr.f32.gmra.mrb[0].mxu0 %v348
  %v416 = vpop.f32.mrb[0].mxu0
  %v417 = vadd.f32 0.0, %v416
  %v418 = vpop.f32.mrb[0].mxu0
  %419 = vdwg.mxu0
  %420 = vrot.lane.b32.xlu0 %v152, 64
  %v421 = vpop.permute.xlu0 %420
  %v424 = vsel %vm170, %v343, 0
  %426 = vmatprep.subr.mxu0 0.0
  %427 = vmatpush1.msra.mxu0 %v421
  %428 = vmatprep.subr.mxu0 0.0
  %429 = vmatpush1.msra.mxu0 0.0
  %430 = vmatprep.subr.mxu0 0.0
  %431 = vmatpush1.msra.mxu0 0.0
  %432 = vmatprep.subr.mxu0 0.0
  %433 = vmatpush1.msra.mxu0 0.0
  %434 = vmatprep.subr.mxu0 0.0
  %435 = vmatpush1.msra.mxu0 0.0
  %436 = vmatprep.subr.mxu0 0.0
  %437 = vmatpush1.msra.mxu0 0.0
  %438 = vmatprep.subr.mxu0 0.0
  %439 = vmatpush1.msra.mxu0 0.0
  %440 = vmatprep.subr.mxu0 0.0
  %441 = vmatpush1.msra.mxu0 0.0
  %442 = vmatprep.subr.mxu0 0.0
  %443 = vmatpush1.msra.mxu0 0.0
  %444 = vmatprep.subr.mxu0 0.0
  %445 = vmatpush1.msra.mxu0 0.0
  %446 = vmatprep.subr.mxu0 0.0
  %447 = vmatpush1.msra.mxu0 0.0
  %448 = vmatprep.subr.mxu0 0.0
  %449 = vmatpush1.msra.mxu0 0.0
  %450 = vmatprep.subr.mxu0 0.0
  %451 = vmatpush1.msra.mxu0 0.0
  %452 = vmatprep.subr.mxu0 0.0
  %453 = vmatpush1.msra.mxu0 0.0
  %454 = vmatprep.subr.mxu0 0.0
  %455 = vmatpush1.msra.mxu0 0.0
  %456 = vmatprep.subr.mxu0 0.0
  %457 = vmatpush1.msra.mxu0 0.0
  %458 = vmatprep.subr.mxu0 0.0
  %459 = vmatpush1.msra.mxu0 0.0
  %460 = vmatprep.subr.mxu0 0.0
  %461 = vmatpush1.msra.mxu0 0.0
  %462 = vmatprep.subr.mxu0 0.0
  %463 = vmatpush1.msra.mxu0 0.0
  %464 = vmatprep.subr.mxu0 0.0
  %465 = vmatpush1.msra.mxu0 0.0
  %466 = vmatprep.subr.mxu0 0.0
  %467 = vmatpush1.msra.mxu0 0.0
  %468 = vmatprep.subr.mxu0 0.0
  %469 = vmatpush1.msra.mxu0 0.0
  %470 = vmatprep.subr.mxu0 0.0
  %471 = vmatpush1.msra.mxu0 0.0
  %472 = vmatprep.subr.mxu0 0.0
  %473 = vmatpush1.msra.mxu0 0.0
  %474 = vmatprep.subr.mxu0 0.0
  %475 = vmatpush1.msra.mxu0 0.0
  %476 = vmatprep.subr.mxu0 0.0
  %477 = vmatpush1.msra.mxu0 0.0
  %478 = vmatprep.subr.mxu0 0.0
  %479 = vmatpush1.msra.mxu0 0.0
  %480 = vmatprep.subr.mxu0 0.0
  %481 = vmatpush1.msra.mxu0 0.0
  %482 = vmatprep.subr.mxu0 0.0
  %483 = vmatpush1.msra.mxu0 0.0
  %484 = vmatprep.subr.mxu0 0.0
  %485 = vmatpush1.msra.mxu0 0.0
  %486 = vmatprep.subr.mxu0 0.0
  %487 = vmatpush1.msra.mxu0 0.0
  %488 = vmatprep.subr.mxu0 0.0
  %489 = vmatpush1.msra.mxu0 0.0
  %490 = vmatprep.mubr.f32.mxu0 0.0
  %491 = vmatmul.mubr.f32.gmra.mrb[0].mxu0 %v424
  %v492 = vpop.f32.mrb[0].mxu0
  %v493 = vadd.f32 0.0, %v492
  %v494 = vpop.f32.mrb[0].mxu0
  %495 = vdwg.mxu0
  %496 = vst.msk [vmem:[#allocation2] sm:$0xff] %vm170, %v417
  %497 = vst.msk [vmem:[#allocation2 + $0x8] sm:$0xff] %vm170, %v493
  %498 = vrot.lane.b32.xlu0 %v147, 120
  %v499 = vpop.permute.xlu0 %498
  %500 = vrot.lane.b32.xlu0 %v147, 88
  %v501 = vpop.permute.xlu0 %500
  %v502 = vsel %vm170, %v499, 0
  %v504 = vsel %vm170, %v501, 0
  %506 = vmatprep.subr.mxu0 0.0
  %507 = vmatpush1.xpose.msra.mxu0 %v504
  %508 = vmatprep.subr.mxu0 0.0
  %509 = vmatpush1.xpose.msra.mxu0 0.0
  %510 = vmatprep.subr.mxu0 0.0
  %511 = vmatpush1.xpose.msra.mxu0 0.0
  %512 = vmatprep.subr.mxu0 0.0
  %513 = vmatpush1.xpose.msra.mxu0 0.0
  %514 = vmatprep.subr.mxu0 0.0
  %515 = vmatpush1.xpose.msra.mxu0 0.0
  %516 = vmatprep.subr.mxu0 0.0
  %517 = vmatpush1.xpose.msra.mxu0 0.0
  %518 = vmatprep.subr.mxu0 0.0
  %519 = vmatpush1.xpose.msra.mxu0 0.0
  %520 = vmatprep.subr.mxu0 0.0
  %521 = vmatpush1.xpose.msra.mxu0 0.0
  %522 = vmatprep.subr.mxu0 0.0
  %523 = vmatpush1.xpose.msra.mxu0 0.0
  %524 = vmatprep.subr.mxu0 0.0
  %525 = vmatpush1.xpose.msra.mxu0 0.0
  %526 = vmatprep.subr.mxu0 0.0
  %527 = vmatpush1.xpose.msra.mxu0 0.0
  %528 = vmatprep.subr.mxu0 0.0
  %529 = vmatpush1.xpose.msra.mxu0 0.0
  %530 = vmatprep.subr.mxu0 0.0
  %531 = vmatpush1.xpose.msra.mxu0 0.0
  %532 = vmatprep.subr.mxu0 0.0
  %533 = vmatpush1.xpose.msra.mxu0 0.0
  %534 = vmatprep.subr.mxu0 0.0
  %535 = vmatpush1.xpose.msra.mxu0 0.0
  %536 = vmatprep.subr.mxu0 0.0
  %537 = vmatpush1.xpose.msra.mxu0 0.0
  %538 = vmatprep.subr.mxu0 0.0
  %539 = vmatpush1.xpose.msra.mxu0 0.0
  %540 = vmatprep.subr.mxu0 0.0
  %541 = vmatpush1.xpose.msra.mxu0 0.0
  %542 = vmatprep.subr.mxu0 0.0
  %543 = vmatpush1.xpose.msra.mxu0 0.0
  %544 = vmatprep.subr.mxu0 0.0
  %545 = vmatpush1.xpose.msra.mxu0 0.0
  %546 = vmatprep.subr.mxu0 0.0
  %547 = vmatpush1.xpose.msra.mxu0 0.0
  %548 = vmatprep.subr.mxu0 0.0
  %549 = vmatpush1.xpose.msra.mxu0 0.0
  %550 = vmatprep.subr.mxu0 0.0
  %551 = vmatpush1.xpose.msra.mxu0 0.0
  %552 = vmatprep.subr.mxu0 0.0
  %553 = vmatpush1.xpose.msra.mxu0 0.0
  %554 = vmatprep.subr.mxu0 0.0
  %555 = vmatpush1.xpose.msra.mxu0 0.0
  %556 = vmatprep.subr.mxu0 0.0
  %557 = vmatpush1.xpose.msra.mxu0 0.0
  %558 = vmatprep.subr.mxu0 0.0
  %559 = vmatpush1.xpose.msra.mxu0 0.0
  %560 = vmatprep.subr.mxu0 0.0
  %561 = vmatpush1.xpose.msra.mxu0 0.0
  %562 = vmatprep.subr.mxu0 0.0
  %563 = vmatpush1.xpose.msra.mxu0 0.0
  %564 = vmatprep.subr.mxu0 0.0
  %565 = vmatpush1.xpose.msra.mxu0 0.0
  %566 = vmatprep.subr.mxu0 0.0
  %567 = vmatpush1.xpose.msra.mxu0 0.0
  %568 = vmatprep.subr.mxu0 0.0
  %569 = vmatpush1.xpose.msra.mxu0 0.0
  %570 = vmatprep.mubr.f32.mxu0 0.0
  %571 = vmatmul.mubr.f32.gmra.mrb[0].mxu0 %v502
  %v572 = vpop.f32.mrb[0].mxu0
  %v573 = vadd.f32 %v160, %v572
  %v574 = vpop.f32.mrb[0].mxu0
  %575 = vdwg.mxu0
  %576 = vrot.lane.b32.xlu0 %v152, 120
  %v577 = vpop.permute.xlu0 %576
  %578 = vrot.lane.b32.xlu0 %v152, 88
  %v579 = vpop.permute.xlu0 %578
  %v580 = vsel %vm170, %v577, 0
  %v582 = vsel %vm170, %v579, 0
  %584 = vmatprep.subr.mxu0 0.0
  %585 = vmatpush1.xpose.msra.mxu0 %v582
  %586 = vmatprep.subr.mxu0 0.0
  %587 = vmatpush1.xpose.msra.mxu0 0.0
  %588 = vmatprep.subr.mxu0 0.0
  %589 = vmatpush1.xpose.msra.mxu0 0.0
  %590 = vmatprep.subr.mxu0 0.0
  %591 = vmatpush1.xpose.msra.mxu0 0.0
  %592 = vmatprep.subr.mxu0 0.0
  %593 = vmatpush1.xpose.msra.mxu0 0.0
  %594 = vmatprep.subr.mxu0 0.0
  %595 = vmatpush1.xpose.msra.mxu0 0.0
  %596 = vmatprep.subr.mxu0 0.0
  %597 = vmatpush1.xpose.msra.mxu0 0.0
  %598 = vmatprep.subr.mxu0 0.0
  %599 = vmatpush1.xpose.msra.mxu0 0.0
  %600 = vmatprep.subr.mxu0 0.0
  %601 = vmatpush1.xpose.msra.mxu0 0.0
  %602 = vmatprep.subr.mxu0 0.0
  %603 = vmatpush1.xpose.msra.mxu0 0.0
  %604 = vmatprep.subr.mxu0 0.0
  %605 = vmatpush1.xpose.msra.mxu0 0.0
  %606 = vmatprep.subr.mxu0 0.0
  %607 = vmatpush1.xpose.msra.mxu0 0.0
  %608 = vmatprep.subr.mxu0 0.0
  %609 = vmatpush1.xpose.msra.mxu0 0.0
  %610 = vmatprep.subr.mxu0 0.0
  %611 = vmatpush1.xpose.msra.mxu0 0.0
  %612 = vmatprep.subr.mxu0 0.0
  %613 = vmatpush1.xpose.msra.mxu0 0.0
  %614 = vmatprep.subr.mxu0 0.0
  %615 = vmatpush1.xpose.msra.mxu0 0.0
  %616 = vmatprep.subr.mxu0 0.0
  %617 = vmatpush1.xpose.msra.mxu0 0.0
  %618 = vmatprep.subr.mxu0 0.0
  %619 = vmatpush1.xpose.msra.mxu0 0.0
  %620 = vmatprep.subr.mxu0 0.0
  %621 = vmatpush1.xpose.msra.mxu0 0.0
  %622 = vmatprep.subr.mxu0 0.0
  %623 = vmatpush1.xpose.msra.mxu0 0.0
  %624 = vmatprep.subr.mxu0 0.0
  %625 = vmatpush1.xpose.msra.mxu0 0.0
  %626 = vmatprep.subr.mxu0 0.0
  %627 = vmatpush1.xpose.msra.mxu0 0.0
  %628 = vmatprep.subr.mxu0 0.0
  %629 = vmatpush1.xpose.msra.mxu0 0.0
  %630 = vmatprep.subr.mxu0 0.0
  %631 = vmatpush1.xpose.msra.mxu0 0.0
  %632 = vmatprep.subr.mxu0 0.0
  %633 = vmatpush1.xpose.msra.mxu0 0.0
  %634 = vmatprep.subr.mxu0 0.0
  %635 = vmatpush1.xpose.msra.mxu0 0.0
  %636 = vmatprep.subr.mxu0 0.0
  %637 = vmatpush1.xpose.msra.mxu0 0.0
  %638 = vmatprep.subr.mxu0 0.0
  %639 = vmatpush1.xpose.msra.mxu0 0.0
  %640 = vmatprep.subr.mxu0 0.0
  %641 = vmatpush1.xpose.msra.mxu0 0.0
  %642 = vmatprep.subr.mxu0 0.0
  %643 = vmatpush1.xpose.msra.mxu0 0.0
  %644 = vmatprep.subr.mxu0 0.0
  %645 = vmatpush1.xpose.msra.mxu0 0.0
  %646 = vmatprep.subr.mxu0 0.0
  %647 = vmatpush1.xpose.msra.mxu0 0.0
  %648 = vmatprep.mubr.f32.mxu0 0.0
  %649 = vmatmul.mubr.f32.gmra.mrb[0].mxu0 %v580
  %v650 = vpop.f32.mrb[0].mxu0
  %v651 = vadd.f32 %v164, %v650
  %v652 = vpop.f32.mrb[0].mxu0
  %653 = vdwg.mxu0
  %v654 = vsel %vm170, %v573, -inf
  %655 = vmax.xlane.f32.xlu0 %v654
  %v656 = vpop.xlane.xlu0 %655
  %v657 = vsel %vm170, %v651, -inf
  %658 = vmax.xlane.f32.xlu0 %v657
  %v659 = vpop.xlane.xlu0 %658
  %v660 = vsub.f32 %v573, %v656
  %v661 = vsub.f32 %v651, %v659
  %v662 = vmul.f32 %v660, 1.442695
  %v663 = vpow.pop %v662
  %v664 = vmul.f32 %v661, 1.442695
  %v665 = vpow.pop %v664
  %v666 = vsel %vm170, %v663, 0.0
  %667 = vadd.xlane.f32.xlu0 %v666
  %v668 = vpop.xlane.xlu0 %667
  %v669 = vsel %vm170, %v665, 0.0
  %670 = vadd.xlane.f32.xlu0 %v669
  %v671 = vpop.xlane.xlu0 %670
  %v672 = vrcp.pop %v668
  %v673 = vrcp.pop %v671
  %v674 = vmul.f32 %v663, %v672
  %v675 = vmul.f32 %v665, %v673
  %676 = vrot.lane.b32.xlu0 %v147, 56
  %v677 = vpop.permute.xlu0 %676
  %v680 = vsel %vm170, %v674, 0
  %682 = vmatprep.subr.mxu0 0.0
  %683 = vmatpush1.msra.mxu0 %v677
  %684 = vmatprep.subr.mxu0 0.0
  %685 = vmatpush1.msra.mxu0 0.0
  %686 = vmatprep.subr.mxu0 0.0
  %687 = vmatpush1.msra.mxu0 0.0
  %688 = vmatprep.subr.mxu0 0.0
  %689 = vmatpush1.msra.mxu0 0.0
  %690 = vmatprep.subr.mxu0 0.0
  %691 = vmatpush1.msra.mxu0 0.0
  %692 = vmatprep.subr.mxu0 0.0
  %693 = vmatpush1.msra.mxu0 0.0
  %694 = vmatprep.subr.mxu0 0.0
  %695 = vmatpush1.msra.mxu0 0.0
  %696 = vmatprep.subr.mxu0 0.0
  %697 = vmatpush1.msra.mxu0 0.0
  %698 = vmatprep.subr.mxu0 0.0
  %699 = vmatpush1.msra.mxu0 0.0
  %700 = vmatprep.subr.mxu0 0.0
  %701 = vmatpush1.msra.mxu0 0.0
  %702 = vmatprep.subr.mxu0 0.0
  %703 = vmatpush1.msra.mxu0 0.0
  %704 = vmatprep.subr.mxu0 0.0
  %705 = vmatpush1.msra.mxu0 0.0
  %706 = vmatprep.subr.mxu0 0.0
  %707 = vmatpush1.msra.mxu0 0.0
  %708 = vmatprep.subr.mxu0 0.0
  %709 = vmatpush1.msra.mxu0 0.0
  %710 = vmatprep.subr.mxu0 0.0
  %711 = vmatpush1.msra.mxu0 0.0
  %712 = vmatprep.subr.mxu0 0.0
  %713 = vmatpush1.msra.mxu0 0.0
  %714 = vmatprep.subr.mxu0 0.0
  %715 = vmatpush1.msra.mxu0 0.0
  %716 = vmatprep.subr.mxu0 0.0
  %717 = vmatpush1.msra.mxu0 0.0
  %718 = vmatprep.subr.mxu0 0.0
  %719 = vmatpush1.msra.mxu0 0.0
  %720 = vmatprep.subr.mxu0 0.0
  %721 = vmatpush1.msra.mxu0 0.0
  %722 = vmatprep.subr.mxu0 0.0
  %723 = vmatpush1.msra.mxu0 0.0
  %724 = vmatprep.subr.mxu0 0.0
  %725 = vmatpush1.msra.mxu0 0.0
  %726 = vmatprep.subr.mxu0 0.0
  %727 = vmatpush1.msra.mxu0 0.0
  %728 = vmatprep.subr.mxu0 0.0
  %729 = vmatpush1.msra.mxu0 0.0
  %730 = vmatprep.subr.mxu0 0.0
  %731 = vmatpush1.msra.mxu0 0.0
  %732 = vmatprep.subr.mxu0 0.0
  %733 = vmatpush1.msra.mxu0 0.0
  %734 = vmatprep.subr.mxu0 0.0
  %735 = vmatpush1.msra.mxu0 0.0
  %736 = vmatprep.subr.mxu0 0.0
  %737 = vmatpush1.msra.mxu0 0.0
  %738 = vmatprep.subr.mxu0 0.0
  %739 = vmatpush1.msra.mxu0 0.0
  %740 = vmatprep.subr.mxu0 0.0
  %741 = vmatpush1.msra.mxu0 0.0
  %742 = vmatprep.subr.mxu0 0.0
  %743 = vmatpush1.msra.mxu0 0.0
  %744 = vmatprep.subr.mxu0 0.0
  %745 = vmatpush1.msra.mxu0 0.0
  %746 = vmatprep.mubr.f32.mxu0 0.0
  %747 = vmatmul.mubr.f32.gmra.mrb[0].mxu0 %v680
  %v748 = vpop.f32.mrb[0].mxu0
  %v749 = vadd.f32 0.0, %v748
  %v750 = vpop.f32.mrb[0].mxu0
  %751 = vdwg.mxu0
  %752 = vrot.lane.b32.xlu0 %v152, 56
  %v753 = vpop.permute.xlu0 %752
  %v756 = vsel %vm170, %v675, 0
  %758 = vmatprep.subr.mxu0 0.0
  %759 = vmatpush1.msra.mxu0 %v753
  %760 = vmatprep.subr.mxu0 0.0
  %761 = vmatpush1.msra.mxu0 0.0
  %762 = vmatprep.subr.mxu0 0.0
  %763 = vmatpush1.msra.mxu0 0.0
  %764 = vmatprep.subr.mxu0 0.0
  %765 = vmatpush1.msra.mxu0 0.0
  %766 = vmatprep.subr.mxu0 0.0
  %767 = vmatpush1.msra.mxu0 0.0
  %768 = vmatprep.subr.mxu0 0.0
  %769 = vmatpush1.msra.mxu0 0.0
  %770 = vmatprep.subr.mxu0 0.0
  %771 = vmatpush1.msra.mxu0 0.0
  %772 = vmatprep.subr.mxu0 0.0
  %773 = vmatpush1.msra.mxu0 0.0
  %774 = vmatprep.subr.mxu0 0.0
  %775 = vmatpush1.msra.mxu0 0.0
  %776 = vmatprep.subr.mxu0 0.0
  %777 = vmatpush1.msra.mxu0 0.0
  %778 = vmatprep.subr.mxu0 0.0
  %779 = vmatpush1.msra.mxu0 0.0
  %780 = vmatprep.subr.mxu0 0.0
  %781 = vmatpush1.msra.mxu0 0.0
  %782 = vmatprep.subr.mxu0 0.0
  %783 = vmatpush1.msra.mxu0 0.0
  %784 = vmatprep.subr.mxu0 0.0
  %785 = vmatpush1.msra.mxu0 0.0
  %786 = vmatprep.subr.mxu0 0.0
  %787 = vmatpush1.msra.mxu0 0.0
  %788 = vmatprep.subr.mxu0 0.0
  %789 = vmatpush1.msra.mxu0 0.0
  %790 = vmatprep.subr.mxu0 0.0
  %791 = vmatpush1.msra.mxu0 0.0
  %792 = vmatprep.subr.mxu0 0.0
  %793 = vmatpush1.msra.mxu0 0.0
  %794 = vmatprep.subr.mxu0 0.0
  %795 = vmatpush1.msra.mxu0 0.0
  %796 = vmatprep.subr.mxu0 0.0
  %797 = vmatpush1.msra.mxu0 0.0
  %798 = vmatprep.subr.mxu0 0.0
  %799 = vmatpush1.msra.mxu0 0.0
  %800 = vmatprep.subr.mxu0 0.0
  %801 = vmatpush1.msra.mxu0 0.0
  %802 = vmatprep.subr.mxu0 0.0
  %803 = vmatpush1.msra.mxu0 0.0
  %804 = vmatprep.subr.mxu0 0.0
  %805 = vmatpush1.msra.mxu0 0.0
  %806 = vmatprep.subr.mxu0 0.0
  %807 = vmatpush1.msra.mxu0 0.0
  %808 = vmatprep.subr.mxu0 0.0
  %809 = vmatpush1.msra.mxu0 0.0
  %810 = vmatprep.subr.mxu0 0.0
  %811 = vmatpush1.msra.mxu0 0.0
  %812 = vmatprep.subr.mxu0 0.0
  %813 = vmatpush1.msra.mxu0 0.0
  %814 = vmatprep.subr.mxu0 0.0
  %815 = vmatpush1.msra.mxu0 0.0
  %816 = vmatprep.subr.mxu0 0.0
  %817 = vmatpush1.msra.mxu0 0.0
  %818 = vmatprep.subr.mxu0 0.0
  %819 = vmatpush1.msra.mxu0 0.0
  %820 = vmatprep.subr.mxu0 0.0
  %821 = vmatpush1.msra.mxu0 0.0
  %822 = vmatprep.mubr.f32.mxu0 0.0
  %823 = vmatmul.mubr.f32.gmra.mrb[0].mxu0 %v756
  %v824 = vpop.f32.mrb[0].mxu0
  %v825 = vadd.f32 0.0, %v824
  %v826 = vpop.f32.mrb[0].mxu0
  %827 = vdwg.mxu0
  %830 = vrot.lane.b32.xlu0 %v749, 8
  %v831 = vpop.permute.xlu0 %830
  %832 = vrot.lane.b32.xlu0 %v825, 8
  %v833 = vpop.permute.xlu0 %832
  %vm836 = vcmask 130112
  %837 = vst.msk [vmem:[#allocation2] sm:$0xff] %vm836, %v831
  %838 = vst.msk [vmem:[#allocation2 + $0x8] sm:$0xff] %vm836, %v833
  %839 = vrot.lane.b32.xlu0 %v147, 112
  %v840 = vpop.permute.xlu0 %839
  %841 = vrot.lane.b32.xlu0 %v147, 80
  %v842 = vpop.permute.xlu0 %841
  %v843 = vsel %vm170, %v840, 0
  %v845 = vsel %vm170, %v842, 0
  %847 = vmatprep.subr.mxu0 0.0
  %848 = vmatpush1.xpose.msra.mxu0 %v845
  %849 = vmatprep.subr.mxu0 0.0
  %850 = vmatpush1.xpose.msra.mxu0 0.0
  %851 = vmatprep.subr.mxu0 0.0
  %852 = vmatpush1.xpose.msra.mxu0 0.0
  %853 = vmatprep.subr.mxu0 0.0
  %854 = vmatpush1.xpose.msra.mxu0 0.0
  %855 = vmatprep.subr.mxu0 0.0
  %856 = vmatpush1.xpose.msra.mxu0 0.0
  %857 = vmatprep.subr.mxu0 0.0
  %858 = vmatpush1.xpose.msra.mxu0 0.0
  %859 = vmatprep.subr.mxu0 0.0
  %860 = vmatpush1.xpose.msra.mxu0 0.0
  %861 = vmatprep.subr.mxu0 0.0
  %862 = vmatpush1.xpose.msra.mxu0 0.0
  %863 = vmatprep.subr.mxu0 0.0
  %864 = vmatpush1.xpose.msra.mxu0 0.0
  %865 = vmatprep.subr.mxu0 0.0
  %866 = vmatpush1.xpose.msra.mxu0 0.0
  %867 = vmatprep.subr.mxu0 0.0
  %868 = vmatpush1.xpose.msra.mxu0 0.0
  %869 = vmatprep.subr.mxu0 0.0
  %870 = vmatpush1.xpose.msra.mxu0 0.0
  %871 = vmatprep.subr.mxu0 0.0
  %872 = vmatpush1.xpose.msra.mxu0 0.0
  %873 = vmatprep.subr.mxu0 0.0
  %874 = vmatpush1.xpose.msra.mxu0 0.0
  %875 = vmatprep.subr.mxu0 0.0
  %876 = vmatpush1.xpose.msra.mxu0 0.0
  %877 = vmatprep.subr.mxu0 0.0
  %878 = vmatpush1.xpose.msra.mxu0 0.0
  %879 = vmatprep.subr.mxu0 0.0
  %880 = vmatpush1.xpose.msra.mxu0 0.0
  %881 = vmatprep.subr.mxu0 0.0
  %882 = vmatpush1.xpose.msra.mxu0 0.0
  %883 = vmatprep.subr.mxu0 0.0
  %884 = vmatpush1.xpose.msra.mxu0 0.0
  %885 = vmatprep.subr.mxu0 0.0
  %886 = vmatpush1.xpose.msra.mxu0 0.0
  %887 = vmatprep.subr.mxu0 0.0
  %888 = vmatpush1.xpose.msra.mxu0 0.0
  %889 = vmatprep.subr.mxu0 0.0
  %890 = vmatpush1.xpose.msra.mxu0 0.0
  %891 = vmatprep.subr.mxu0 0.0
  %892 = vmatpush1.xpose.msra.mxu0 0.0
  %893 = vmatprep.subr.mxu0 0.0
  %894 = vmatpush1.xpose.msra.mxu0 0.0
  %895 = vmatprep.subr.mxu0 0.0
  %896 = vmatpush1.xpose.msra.mxu0 0.0
  %897 = vmatprep.subr.mxu0 0.0
  %898 = vmatpush1.xpose.msra.mxu0 0.0
  %899 = vmatprep.subr.mxu0 0.0
  %900 = vmatpush1.xpose.msra.mxu0 0.0
  %901 = vmatprep.subr.mxu0 0.0
  %902 = vmatpush1.xpose.msra.mxu0 0.0
  %903 = vmatprep.subr.mxu0 0.0
  %904 = vmatpush1.xpose.msra.mxu0 0.0
  %905 = vmatprep.subr.mxu0 0.0
  %906 = vmatpush1.xpose.msra.mxu0 0.0
  %907 = vmatprep.subr.mxu0 0.0
  %908 = vmatpush1.xpose.msra.mxu0 0.0
  %909 = vmatprep.subr.mxu0 0.0
  %910 = vmatpush1.xpose.msra.mxu0 0.0
  %911 = vmatprep.mubr.f32.mxu0 0.0
  %912 = vmatmul.mubr.f32.gmra.mrb[0].mxu0 %v843
  %v913 = vpop.f32.mrb[0].mxu0
  %v914 = vadd.f32 %v160, %v913
  %v915 = vpop.f32.mrb[0].mxu0
  %916 = vdwg.mxu0
  %917 = vrot.lane.b32.xlu0 %v152, 112
  %v918 = vpop.permute.xlu0 %917
  %919 = vrot.lane.b32.xlu0 %v152, 80
  %v920 = vpop.permute.xlu0 %919
  %v921 = vsel %vm170, %v918, 0
  %v923 = vsel %vm170, %v920, 0
  %925 = vmatprep.subr.mxu0 0.0
  %926 = vmatpush1.xpose.msra.mxu0 %v923
  %927 = vmatprep.subr.mxu0 0.0
  %928 = vmatpush1.xpose.msra.mxu0 0.0
  %929 = vmatprep.subr.mxu0 0.0
  %930 = vmatpush1.xpose.msra.mxu0 0.0
  %931 = vmatprep.subr.mxu0 0.0
  %932 = vmatpush1.xpose.msra.mxu0 0.0
  %933 = vmatprep.subr.mxu0 0.0
  %934 = vmatpush1.xpose.msra.mxu0 0.0
  %935 = vmatprep.subr.mxu0 0.0
  %936 = vmatpush1.xpose.msra.mxu0 0.0
  %937 = vmatprep.subr.mxu0 0.0
  %938 = vmatpush1.xpose.msra.mxu0 0.0
  %939 = vmatprep.subr.mxu0 0.0
  %940 = vmatpush1.xpose.msra.mxu0 0.0
  %941 = vmatprep.subr.mxu0 0.0
  %942 = vmatpush1.xpose.msra.mxu0 0.0
  %943 = vmatprep.subr.mxu0 0.0
  %944 = vmatpush1.xpose.msra.mxu0 0.0
  %945 = vmatprep.subr.mxu0 0.0
  %946 = vmatpush1.xpose.msra.mxu0 0.0
  %947 = vmatprep.subr.mxu0 0.0
  %948 = vmatpush1.xpose.msra.mxu0 0.0
  %949 = vmatprep.subr.mxu0 0.0
  %950 = vmatpush1.xpose.msra.mxu0 0.0
  %951 = vmatprep.subr.mxu0 0.0
  %952 = vmatpush1.xpose.msra.mxu0 0.0
  %953 = vmatprep.subr.mxu0 0.0
  %954 = vmatpush1.xpose.msra.mxu0 0.0
  %955 = vmatprep.subr.mxu0 0.0
  %956 = vmatpush1.xpose.msra.mxu0 0.0
  %957 = vmatprep.subr.mxu0 0.0
  %958 = vmatpush1.xpose.msra.mxu0 0.0
  %959 = vmatprep.subr.mxu0 0.0
  %960 = vmatpush1.xpose.msra.mxu0 0.0
  %961 = vmatprep.subr.mxu0 0.0
  %962 = vmatpush1.xpose.msra.mxu0 0.0
  %963 = vmatprep.subr.mxu0 0.0
  %964 = vmatpush1.xpose.msra.mxu0 0.0
  %965 = vmatprep.subr.mxu0 0.0
  %966 = vmatpush1.xpose.msra.mxu0 0.0
  %967 = vmatprep.subr.mxu0 0.0
  %968 = vmatpush1.xpose.msra.mxu0 0.0
  %969 = vmatprep.subr.mxu0 0.0
  %970 = vmatpush1.xpose.msra.mxu0 0.0
  %971 = vmatprep.subr.mxu0 0.0
  %972 = vmatpush1.xpose.msra.mxu0 0.0
  %973 = vmatprep.subr.mxu0 0.0
  %974 = vmatpush1.xpose.msra.mxu0 0.0
  %975 = vmatprep.subr.mxu0 0.0
  %976 = vmatpush1.xpose.msra.mxu0 0.0
  %977 = vmatprep.subr.mxu0 0.0
  %978 = vmatpush1.xpose.msra.mxu0 0.0
  %979 = vmatprep.subr.mxu0 0.0
  %980 = vmatpush1.xpose.msra.mxu0 0.0
  %981 = vmatprep.subr.mxu0 0.0
  %982 = vmatpush1.xpose.msra.mxu0 0.0
  %983 = vmatprep.subr.mxu0 0.0
  %984 = vmatpush1.xpose.msra.mxu0 0.0
  %985 = vmatprep.subr.mxu0 0.0
  %986 = vmatpush1.xpose.msra.mxu0 0.0
  %987 = vmatprep.subr.mxu0 0.0
  %988 = vmatpush1.xpose.msra.mxu0 0.0
  %989 = vmatprep.mubr.f32.mxu0 0.0
  %990 = vmatmul.mubr.f32.gmra.mrb[0].mxu0 %v921
  %v991 = vpop.f32.mrb[0].mxu0
  %v992 = vadd.f32 %v164, %v991
  %v993 = vpop.f32.mrb[0].mxu0
  %994 = vdwg.mxu0
  %v995 = vsel %vm170, %v914, -inf
  %996 = vmax.xlane.f32.xlu0 %v995
  %v997 = vpop.xlane.xlu0 %996
  %v998 = vsel %vm170, %v992, -inf
  %999 = vmax.xlane.f32.xlu0 %v998
  %v1000 = vpop.xlane.xlu0 %999
  %v1001 = vsub.f32 %v914, %v997
  %v1002 = vsub.f32 %v992, %v1000
  %v1003 = vmul.f32 %v1001, 1.442695
  %v1004 = vpow.pop %v1003
  %v1005 = vmul.f32 %v1002, 1.442695
  %v1006 = vpow.pop %v1005
  %v1007 = vsel %vm170, %v1004, 0.0
  %1008 = vadd.xlane.f32.xlu0 %v1007
  %v1009 = vpop.xlane.xlu0 %1008
  %v1010 = vsel %vm170, %v1006, 0.0
  %1011 = vadd.xlane.f32.xlu0 %v1010
  %v1012 = vpop.xlane.xlu0 %1011
  %v1013 = vrcp.pop %v1009
  %v1014 = vrcp.pop %v1012
  %v1015 = vmul.f32 %v1004, %v1013
  %v1016 = vmul.f32 %v1006, %v1014
  %1017 = vrot.lane.b32.xlu0 %v147, 48
  %v1018 = vpop.permute.xlu0 %1017
  %v1021 = vsel %vm170, %v1015, 0
  %1023 = vmatprep.subr.mxu0 0.0
  %1024 = vmatpush1.msra.mxu0 %v1018
  %1025 = vmatprep.subr.mxu0 0.0
  %1026 = vmatpush1.msra.mxu0 0.0
  %1027 = vmatprep.subr.mxu0 0.0
  %1028 = vmatpush1.msra.mxu0 0.0
  %1029 = vmatprep.subr.mxu0 0.0
  %1030 = vmatpush1.msra.mxu0 0.0
  %1031 = vmatprep.subr.mxu0 0.0
  %1032 = vmatpush1.msra.mxu0 0.0
  %1033 = vmatprep.subr.mxu0 0.0
  %1034 = vmatpush1.msra.mxu0 0.0
  %1035 = vmatprep.subr.mxu0 0.0
  %1036 = vmatpush1.msra.mxu0 0.0
  %1037 = vmatprep.subr.mxu0 0.0
  %1038 = vmatpush1.msra.mxu0 0.0
  %1039 = vmatprep.subr.mxu0 0.0
  %1040 = vmatpush1.msra.mxu0 0.0
  %1041 = vmatprep.subr.mxu0 0.0
  %1042 = vmatpush1.msra.mxu0 0.0
  %1043 = vmatprep.subr.mxu0 0.0
  %1044 = vmatpush1.msra.mxu0 0.0
  %1045 = vmatprep.subr.mxu0 0.0
  %1046 = vmatpush1.msra.mxu0 0.0
  %1047 = vmatprep.subr.mxu0 0.0
  %1048 = vmatpush1.msra.mxu0 0.0
  %1049 = vmatprep.subr.mxu0 0.0
  %1050 = vmatpush1.msra.mxu0 0.0
  %1051 = vmatprep.subr.mxu0 0.0
  %1052 = vmatpush1.msra.mxu0 0.0
  %1053 = vmatprep.subr.mxu0 0.0
  %1054 = vmatpush1.msra.mxu0 0.0
  %1055 = vmatprep.subr.mxu0 0.0
  %1056 = vmatpush1.msra.mxu0 0.0
  %1057 = vmatprep.subr.mxu0 0.0
  %1058 = vmatpush1.msra.mxu0 0.0
  %1059 = vmatprep.subr.mxu0 0.0
  %1060 = vmatpush1.msra.mxu0 0.0
  %1061 = vmatprep.subr.mxu0 0.0
  %1062 = vmatpush1.msra.mxu0 0.0
  %1063 = vmatprep.subr.mxu0 0.0
  %1064 = vmatpush1.msra.mxu0 0.0
  %1065 = vmatprep.subr.mxu0 0.0
  %1066 = vmatpush1.msra.mxu0 0.0
  %1067 = vmatprep.subr.mxu0 0.0
  %1068 = vmatpush1.msra.mxu0 0.0
  %1069 = vmatprep.subr.mxu0 0.0
  %1070 = vmatpush1.msra.mxu0 0.0
  %1071 = vmatprep.subr.mxu0 0.0
  %1072 = vmatpush1.msra.mxu0 0.0
  %1073 = vmatprep.subr.mxu0 0.0
  %1074 = vmatpush1.msra.mxu0 0.0
  %1075 = vmatprep.subr.mxu0 0.0
  %1076 = vmatpush1.msra.mxu0 0.0
  %1077 = vmatprep.subr.mxu0 0.0
  %1078 = vmatpush1.msra.mxu0 0.0
  %1079 = vmatprep.subr.mxu0 0.0
  %1080 = vmatpush1.msra.mxu0 0.0
  %1081 = vmatprep.subr.mxu0 0.0
  %1082 = vmatpush1.msra.mxu0 0.0
  %1083 = vmatprep.subr.mxu0 0.0
  %1084 = vmatpush1.msra.mxu0 0.0
  %1085 = vmatprep.subr.mxu0 0.0
  %1086 = vmatpush1.msra.mxu0 0.0
  %1087 = vmatprep.mubr.f32.mxu0 0.0
  %1088 = vmatmul.mubr.f32.gmra.mrb[0].mxu0 %v1021
  %v1089 = vpop.f32.mrb[0].mxu0
  %v1090 = vadd.f32 0.0, %v1089
  %v1091 = vpop.f32.mrb[0].mxu0
  %1092 = vdwg.mxu0
  %1093 = vrot.lane.b32.xlu0 %v152, 48
  %v1094 = vpop.permute.xlu0 %1093
  %v1097 = vsel %vm170, %v1016, 0
  %1099 = vmatprep.subr.mxu0 0.0
  %1100 = vmatpush1.msra.mxu0 %v1094
  %1101 = vmatprep.subr.mxu0 0.0
  %1102 = vmatpush1.msra.mxu0 0.0
  %1103 = vmatprep.subr.mxu0 0.0
  %1104 = vmatpush1.msra.mxu0 0.0
  %1105 = vmatprep.subr.mxu0 0.0
  %1106 = vmatpush1.msra.mxu0 0.0
  %1107 = vmatprep.subr.mxu0 0.0
  %1108 = vmatpush1.msra.mxu0 0.0
  %1109 = vmatprep.subr.mxu0 0.0
  %1110 = vmatpush1.msra.mxu0 0.0
  %1111 = vmatprep.subr.mxu0 0.0
  %1112 = vmatpush1.msra.mxu0 0.0
  %1113 = vmatprep.subr.mxu0 0.0
  %1114 = vmatpush1.msra.mxu0 0.0
  %1115 = vmatprep.subr.mxu0 0.0
  %1116 = vmatpush1.msra.mxu0 0.0
  %1117 = vmatprep.subr.mxu0 0.0
  %1118 = vmatpush1.msra.mxu0 0.0
  %1119 = vmatprep.subr.mxu0 0.0
  %1120 = vmatpush1.msra.mxu0 0.0
  %1121 = vmatprep.subr.mxu0 0.0
  %1122 = vmatpush1.msra.mxu0 0.0
  %1123 = vmatprep.subr.mxu0 0.0
  %1124 = vmatpush1.msra.mxu0 0.0
  %1125 = vmatprep.subr.mxu0 0.0
  %1126 = vmatpush1.msra.mxu0 0.0
  %1127 = vmatprep.subr.mxu0 0.0
  %1128 = vmatpush1.msra.mxu0 0.0
  %1129 = vmatprep.subr.mxu0 0.0
  %1130 = vmatpush1.msra.mxu0 0.0
  %1131 = vmatprep.subr.mxu0 0.0
  %1132 = vmatpush1.msra.mxu0 0.0
  %1133 = vmatprep.subr.mxu0 0.0
  %1134 = vmatpush1.msra.mxu0 0.0
  %1135 = vmatprep.subr.mxu0 0.0
  %1136 = vmatpush1.msra.mxu0 0.0
  %1137 = vmatprep.subr.mxu0 0.0
  %1138 = vmatpush1.msra.mxu0 0.0
  %1139 = vmatprep.subr.mxu0 0.0
  %1140 = vmatpush1.msra.mxu0 0.0
  %1141 = vmatprep.subr.mxu0 0.0
  %1142 = vmatpush1.msra.mxu0 0.0
  %1143 = vmatprep.subr.mxu0 0.0
  %1144 = vmatpush1.msra.mxu0 0.0
  %1145 = vmatprep.subr.mxu0 0.0
  %1146 = vmatpush1.msra.mxu0 0.0
  %1147 = vmatprep.subr.mxu0 0.0
  %1148 = vmatpush1.msra.mxu0 0.0
  %1149 = vmatprep.subr.mxu0 0.0
  %1150 = vmatpush1.msra.mxu0 0.0
  %1151 = vmatprep.subr.mxu0 0.0
  %1152 = vmatpush1.msra.mxu0 0.0
  %1153 = vmatprep.subr.mxu0 0.0
  %1154 = vmatpush1.msra.mxu0 0.0
  %1155 = vmatprep.subr.mxu0 0.0
  %1156 = vmatpush1.msra.mxu0 0.0
  %1157 = vmatprep.subr.mxu0 0.0
  %1158 = vmatpush1.msra.mxu0 0.0
  %1159 = vmatprep.subr.mxu0 0.0
  %1160 = vmatpush1.msra.mxu0 0.0
  %1161 = vmatprep.subr.mxu0 0.0
  %1162 = vmatpush1.msra.mxu0 0.0
  %1163 = vmatprep.mubr.f32.mxu0 0.0
  %1164 = vmatmul.mubr.f32.gmra.mrb[0].mxu0 %v1097
  %v1165 = vpop.f32.mrb[0].mxu0
  %v1166 = vadd.f32 0.0, %v1165
  %v1167 = vpop.f32.mrb[0].mxu0
  %1168 = vdwg.mxu0
  %1171 = vrot.lane.b32.xlu0 %v1090, 16
  %v1172 = vpop.permute.xlu0 %1171
  %1173 = vrot.lane.b32.xlu0 %v1166, 16
  %v1174 = vpop.permute.xlu0 %1173
  %vm1177 = vcmask 195712
  %1178 = vst.msk [vmem:[#allocation2] sm:$0xff] %vm1177, %v1172
  %1179 = vst.msk [vmem:[#allocation2 + $0x8] sm:$0xff] %vm1177, %v1174
  %1180 = vrot.lane.b32.xlu0 %v147, 104
  %v1181 = vpop.permute.xlu0 %1180
  %1182 = vrot.lane.b32.xlu0 %v147, 72
  %v1183 = vpop.permute.xlu0 %1182
  %v1184 = vsel %vm170, %v1181, 0
  %v1186 = vsel %vm170, %v1183, 0
  %1188 = vmatprep.subr.mxu0 0.0
  %1189 = vmatpush1.xpose.msra.mxu0 %v1186
  %1190 = vmatprep.subr.mxu0 0.0
  %1191 = vmatpush1.xpose.msra.mxu0 0.0
  %1192 = vmatprep.subr.mxu0 0.0
  %1193 = vmatpush1.xpose.msra.mxu0 0.0
  %1194 = vmatprep.subr.mxu0 0.0
  %1195 = vmatpush1.xpose.msra.mxu0 0.0
  %1196 = vmatprep.subr.mxu0 0.0
  %1197 = vmatpush1.xpose.msra.mxu0 0.0
  %1198 = vmatprep.subr.mxu0 0.0
  %1199 = vmatpush1.xpose.msra.mxu0 0.0
  %1200 = vmatprep.subr.mxu0 0.0
  %1201 = vmatpush1.xpose.msra.mxu0 0.0
  %1202 = vmatprep.subr.mxu0 0.0
  %1203 = vmatpush1.xpose.msra.mxu0 0.0
  %1204 = vmatprep.subr.mxu0 0.0
  %1205 = vmatpush1.xpose.msra.mxu0 0.0
  %1206 = vmatprep.subr.mxu0 0.0
  %1207 = vmatpush1.xpose.msra.mxu0 0.0
  %1208 = vmatprep.subr.mxu0 0.0
  %1209 = vmatpush1.xpose.msra.mxu0 0.0
  %1210 = vmatprep.subr.mxu0 0.0
  %1211 = vmatpush1.xpose.msra.mxu0 0.0
  %1212 = vmatprep.subr.mxu0 0.0
  %1213 = vmatpush1.xpose.msra.mxu0 0.0
  %1214 = vmatprep.subr.mxu0 0.0
  %1215 = vmatpush1.xpose.msra.mxu0 0.0
  %1216 = vmatprep.subr.mxu0 0.0
  %1217 = vmatpush1.xpose.msra.mxu0 0.0
  %1218 = vmatprep.subr.mxu0 0.0
  %1219 = vmatpush1.xpose.msra.mxu0 0.0
  %1220 = vmatprep.subr.mxu0 0.0
  %1221 = vmatpush1.xpose.msra.mxu0 0.0
  %1222 = vmatprep.subr.mxu0 0.0
  %1223 = vmatpush1.xpose.msra.mxu0 0.0
  %1224 = vmatprep.subr.mxu0 0.0
  %1225 = vmatpush1.xpose.msra.mxu0 0.0
  %1226 = vmatprep.subr.mxu0 0.0
  %1227 = vmatpush1.xpose.msra.mxu0 0.0
  %1228 = vmatprep.subr.mxu0 0.0
  %1229 = vmatpush1.xpose.msra.mxu0 0.0
  %1230 = vmatprep.subr.mxu0 0.0
  %1231 = vmatpush1.xpose.msra.mxu0 0.0
  %1232 = vmatprep.subr.mxu0 0.0
  %1233 = vmatpush1.xpose.msra.mxu0 0.0
  %1234 = vmatprep.subr.mxu0 0.0
  %1235 = vmatpush1.xpose.msra.mxu0 0.0
  %1236 = vmatprep.subr.mxu0 0.0
  %1237 = vmatpush1.xpose.msra.mxu0 0.0
  %1238 = vmatprep.subr.mxu0 0.0
  %1239 = vmatpush1.xpose.msra.mxu0 0.0
  %1240 = vmatprep.subr.mxu0 0.0
  %1241 = vmatpush1.xpose.msra.mxu0 0.0
  %1242 = vmatprep.subr.mxu0 0.0
  %1243 = vmatpush1.xpose.msra.mxu0 0.0
  %1244 = vmatprep.subr.mxu0 0.0
  %1245 = vmatpush1.xpose.msra.mxu0 0.0
  %1246 = vmatprep.subr.mxu0 0.0
  %1247 = vmatpush1.xpose.msra.mxu0 0.0
  %1248 = vmatprep.subr.mxu0 0.0
  %1249 = vmatpush1.xpose.msra.mxu0 0.0
  %1250 = vmatprep.subr.mxu0 0.0
  %1251 = vmatpush1.xpose.msra.mxu0 0.0
  %1252 = vmatprep.mubr.f32.mxu0 0.0
  %1253 = vmatmul.mubr.f32.gmra.mrb[0].mxu0 %v1184
  %v1254 = vpop.f32.mrb[0].mxu0
  %v1255 = vadd.f32 %v160, %v1254
  %v1256 = vpop.f32.mrb[0].mxu0
  %1257 = vdwg.mxu0
  %1258 = vrot.lane.b32.xlu0 %v152, 104
  %v1259 = vpop.permute.xlu0 %1258
  %1260 = vrot.lane.b32.xlu0 %v152, 72
  %v1261 = vpop.permute.xlu0 %1260
  %v1262 = vsel %vm170, %v1259, 0
  %v1264 = vsel %vm170, %v1261, 0
  %1266 = vmatprep.subr.mxu0 0.0
  %1267 = vmatpush1.xpose.msra.mxu0 %v1264
  %1268 = vmatprep.subr.mxu0 0.0
  %1269 = vmatpush1.xpose.msra.mxu0 0.0
  %1270 = vmatprep.subr.mxu0 0.0
  %1271 = vmatpush1.xpose.msra.mxu0 0.0
  %1272 = vmatprep.subr.mxu0 0.0
  %1273 = vmatpush1.xpose.msra.mxu0 0.0
  %1274 = vmatprep.subr.mxu0 0.0
  %1275 = vmatpush1.xpose.msra.mxu0 0.0
  %1276 = vmatprep.subr.mxu0 0.0
  %1277 = vmatpush1.xpose.msra.mxu0 0.0
  %1278 = vmatprep.subr.mxu0 0.0
  %1279 = vmatpush1.xpose.msra.mxu0 0.0
  %1280 = vmatprep.subr.mxu0 0.0
  %1281 = vmatpush1.xpose.msra.mxu0 0.0
  %1282 = vmatprep.subr.mxu0 0.0
  %1283 = vmatpush1.xpose.msra.mxu0 0.0
  %1284 = vmatprep.subr.mxu0 0.0
  %1285 = vmatpush1.xpose.msra.mxu0 0.0
  %1286 = vmatprep.subr.mxu0 0.0
  %1287 = vmatpush1.xpose.msra.mxu0 0.0
  %1288 = vmatprep.subr.mxu0 0.0
  %1289 = vmatpush1.xpose.msra.mxu0 0.0
  %1290 = vmatprep.subr.mxu0 0.0
  %1291 = vmatpush1.xpose.msra.mxu0 0.0
  %1292 = vmatprep.subr.mxu0 0.0
  %1293 = vmatpush1.xpose.msra.mxu0 0.0
  %1294 = vmatprep.subr.mxu0 0.0
  %1295 = vmatpush1.xpose.msra.mxu0 0.0
  %1296 = vmatprep.subr.mxu0 0.0
  %1297 = vmatpush1.xpose.msra.mxu0 0.0
  %1298 = vmatprep.subr.mxu0 0.0
  %1299 = vmatpush1.xpose.msra.mxu0 0.0
  %1300 = vmatprep.subr.mxu0 0.0
  %1301 = vmatpush1.xpose.msra.mxu0 0.0
  %1302 = vmatprep.subr.mxu0 0.0
  %1303 = vmatpush1.xpose.msra.mxu0 0.0
  %1304 = vmatprep.subr.mxu0 0.0
  %1305 = vmatpush1.xpose.msra.mxu0 0.0
  %1306 = vmatprep.subr.mxu0 0.0
  %1307 = vmatpush1.xpose.msra.mxu0 0.0
  %1308 = vmatprep.subr.mxu0 0.0
  %1309 = vmatpush1.xpose.msra.mxu0 0.0
  %1310 = vmatprep.subr.mxu0 0.0
  %1311 = vmatpush1.xpose.msra.mxu0 0.0
  %1312 = vmatprep.subr.mxu0 0.0
  %1313 = vmatpush1.xpose.msra.mxu0 0.0
  %1314 = vmatprep.subr.mxu0 0.0
  %1315 = vmatpush1.xpose.msra.mxu0 0.0
  %1316 = vmatprep.subr.mxu0 0.0
  %1317 = vmatpush1.xpose.msra.mxu0 0.0
  %1318 = vmatprep.subr.mxu0 0.0
  %1319 = vmatpush1.xpose.msra.mxu0 0.0
  %1320 = vmatprep.subr.mxu0 0.0
  %1321 = vmatpush1.xpose.msra.mxu0 0.0
  %1322 = vmatprep.subr.mxu0 0.0
  %1323 = vmatpush1.xpose.msra.mxu0 0.0
  %1324 = vmatprep.subr.mxu0 0.0
  %1325 = vmatpush1.xpose.msra.mxu0 0.0
  %1326 = vmatprep.subr.mxu0 0.0
  %1327 = vmatpush1.xpose.msra.mxu0 0.0
  %1328 = vmatprep.subr.mxu0 0.0
  %1329 = vmatpush1.xpose.msra.mxu0 0.0
  %1330 = vmatprep.mubr.f32.mxu0 0.0
  %1331 = vmatmul.mubr.f32.gmra.mrb[0].mxu0 %v1262
  %v1332 = vpop.f32.mrb[0].mxu0
  %v1333 = vadd.f32 %v164, %v1332
  %v1334 = vpop.f32.mrb[0].mxu0
  %1335 = vdwg.mxu0
  %v1336 = vsel %vm170, %v1255, -inf
  %1337 = vmax.xlane.f32.xlu0 %v1336
  %v1338 = vpop.xlane.xlu0 %1337
  %v1339 = vsel %vm170, %v1333, -inf
  %1340 = vmax.xlane.f32.xlu0 %v1339
  %v1341 = vpop.xlane.xlu0 %1340
  %v1342 = vsub.f32 %v1255, %v1338
  %v1343 = vsub.f32 %v1333, %v1341
  %v1344 = vmul.f32 %v1342, 1.442695
  %v1345 = vpow.pop %v1344
  %v1346 = vmul.f32 %v1343, 1.442695
  %v1347 = vpow.pop %v1346
  %v1348 = vsel %vm170, %v1345, 0.0
  %1349 = vadd.xlane.f32.xlu0 %v1348
  %v1350 = vpop.xlane.xlu0 %1349
  %v1351 = vsel %vm170, %v1347, 0.0
  %1352 = vadd.xlane.f32.xlu0 %v1351
  %v1353 = vpop.xlane.xlu0 %1352
  %v1354 = vrcp.pop %v1350
  %v1355 = vrcp.pop %v1353
  %v1356 = vmul.f32 %v1345, %v1354
  %v1357 = vmul.f32 %v1347, %v1355
  %1358 = vrot.lane.b32.xlu0 %v147, 40
  %v1359 = vpop.permute.xlu0 %1358
  %v1362 = vsel %vm170, %v1356, 0
  %1364 = vmatprep.subr.mxu0 0.0
  %1365 = vmatpush1.msra.mxu0 %v1359
  %1366 = vmatprep.subr.mxu0 0.0
  %1367 = vmatpush1.msra.mxu0 0.0
  %1368 = vmatprep.subr.mxu0 0.0
  %1369 = vmatpush1.msra.mxu0 0.0
  %1370 = vmatprep.subr.mxu0 0.0
  %1371 = vmatpush1.msra.mxu0 0.0
  %1372 = vmatprep.subr.mxu0 0.0
  %1373 = vmatpush1.msra.mxu0 0.0
  %1374 = vmatprep.subr.mxu0 0.0
  %1375 = vmatpush1.msra.mxu0 0.0
  %1376 = vmatprep.subr.mxu0 0.0
  %1377 = vmatpush1.msra.mxu0 0.0
  %1378 = vmatprep.subr.mxu0 0.0
  %1379 = vmatpush1.msra.mxu0 0.0
  %1380 = vmatprep.subr.mxu0 0.0
  %1381 = vmatpush1.msra.mxu0 0.0
  %1382 = vmatprep.subr.mxu0 0.0
  %1383 = vmatpush1.msra.mxu0 0.0
  %1384 = vmatprep.subr.mxu0 0.0
  %1385 = vmatpush1.msra.mxu0 0.0
  %1386 = vmatprep.subr.mxu0 0.0
  %1387 = vmatpush1.msra.mxu0 0.0
  %1388 = vmatprep.subr.mxu0 0.0
  %1389 = vmatpush1.msra.mxu0 0.0
  %1390 = vmatprep.subr.mxu0 0.0
  %1391 = vmatpush1.msra.mxu0 0.0
  %1392 = vmatprep.subr.mxu0 0.0
  %1393 = vmatpush1.msra.mxu0 0.0
  %1394 = vmatprep.subr.mxu0 0.0
  %1395 = vmatpush1.msra.mxu0 0.0
  %1396 = vmatprep.subr.mxu0 0.0
  %1397 = vmatpush1.msra.mxu0 0.0
  %1398 = vmatprep.subr.mxu0 0.0
  %1399 = vmatpush1.msra.mxu0 0.0
  %1400 = vmatprep.subr.mxu0 0.0
  %1401 = vmatpush1.msra.mxu0 0.0
  %1402 = vmatprep.subr.mxu0 0.0
  %1403 = vmatpush1.msra.mxu0 0.0
  %1404 = vmatprep.subr.mxu0 0.0
  %1405 = vmatpush1.msra.mxu0 0.0
  %1406 = vmatprep.subr.mxu0 0.0
  %1407 = vmatpush1.msra.mxu0 0.0
  %1408 = vmatprep.subr.mxu0 0.0
  %1409 = vmatpush1.msra.mxu0 0.0
  %1410 = vmatprep.subr.mxu0 0.0
  %1411 = vmatpush1.msra.mxu0 0.0
  %1412 = vmatprep.subr.mxu0 0.0
  %1413 = vmatpush1.msra.mxu0 0.0
  %1414 = vmatprep.subr.mxu0 0.0
  %1415 = vmatpush1.msra.mxu0 0.0
  %1416 = vmatprep.subr.mxu0 0.0
  %1417 = vmatpush1.msra.mxu0 0.0
  %1418 = vmatprep.subr.mxu0 0.0
  %1419 = vmatpush1.msra.mxu0 0.0
  %1420 = vmatprep.subr.mxu0 0.0
  %1421 = vmatpush1.msra.mxu0 0.0
  %1422 = vmatprep.subr.mxu0 0.0
  %1423 = vmatpush1.msra.mxu0 0.0
  %1424 = vmatprep.subr.mxu0 0.0
  %1425 = vmatpush1.msra.mxu0 0.0
  %1426 = vmatprep.subr.mxu0 0.0
  %1427 = vmatpush1.msra.mxu0 0.0
  %1428 = vmatprep.mubr.f32.mxu0 0.0
  %1429 = vmatmul.mubr.f32.gmra.mrb[0].mxu0 %v1362
  %v1430 = vpop.f32.mrb[0].mxu0
  %v1431 = vadd.f32 0.0, %v1430
  %v1432 = vpop.f32.mrb[0].mxu0
  %1433 = vdwg.mxu0
  %1434 = vrot.lane.b32.xlu0 %v152, 40
  %v1435 = vpop.permute.xlu0 %1434
  %v1438 = vsel %vm170, %v1357, 0
  %1440 = vmatprep.subr.mxu0 0.0
  %1441 = vmatpush1.msra.mxu0 %v1435
  %1442 = vmatprep.subr.mxu0 0.0
  %1443 = vmatpush1.msra.mxu0 0.0
  %1444 = vmatprep.subr.mxu0 0.0
  %1445 = vmatpush1.msra.mxu0 0.0
  %1446 = vmatprep.subr.mxu0 0.0
  %1447 = vmatpush1.msra.mxu0 0.0
  %1448 = vmatprep.subr.mxu0 0.0
  %1449 = vmatpush1.msra.mxu0 0.0
  %1450 = vmatprep.subr.mxu0 0.0
  %1451 = vmatpush1.msra.mxu0 0.0
  %1452 = vmatprep.subr.mxu0 0.0
  %1453 = vmatpush1.msra.mxu0 0.0
  %1454 = vmatprep.subr.mxu0 0.0
  %1455 = vmatpush1.msra.mxu0 0.0
  %1456 = vmatprep.subr.mxu0 0.0
  %1457 = vmatpush1.msra.mxu0 0.0
  %1458 = vmatprep.subr.mxu0 0.0
  %1459 = vmatpush1.msra.mxu0 0.0
  %1460 = vmatprep.subr.mxu0 0.0
  %1461 = vmatpush1.msra.mxu0 0.0
  %1462 = vmatprep.subr.mxu0 0.0
  %1463 = vmatpush1.msra.mxu0 0.0
  %1464 = vmatprep.subr.mxu0 0.0
  %1465 = vmatpush1.msra.mxu0 0.0
  %1466 = vmatprep.subr.mxu0 0.0
  %1467 = vmatpush1.msra.mxu0 0.0
  %1468 = vmatprep.subr.mxu0 0.0
  %1469 = vmatpush1.msra.mxu0 0.0
  %1470 = vmatprep.subr.mxu0 0.0
  %1471 = vmatpush1.msra.mxu0 0.0
  %1472 = vmatprep.subr.mxu0 0.0
  %1473 = vmatpush1.msra.mxu0 0.0
  %1474 = vmatprep.subr.mxu0 0.0
  %1475 = vmatpush1.msra.mxu0 0.0
  %1476 = vmatprep.subr.mxu0 0.0
  %1477 = vmatpush1.msra.mxu0 0.0
  %1478 = vmatprep.subr.mxu0 0.0
  %1479 = vmatpush1.msra.mxu0 0.0
  %1480 = vmatprep.subr.mxu0 0.0
  %1481 = vmatpush1.msra.mxu0 0.0
  %1482 = vmatprep.subr.mxu0 0.0
  %1483 = vmatpush1.msra.mxu0 0.0
  %1484 = vmatprep.subr.mxu0 0.0
  %1485 = vmatpush1.msra.mxu0 0.0
  %1486 = vmatprep.subr.mxu0 0.0
  %1487 = vmatpush1.msra.mxu0 0.0
  %1488 = vmatprep.subr.mxu0 0.0
  %1489 = vmatpush1.msra.mxu0 0.0
  %1490 = vmatprep.subr.mxu0 0.0
  %1491 = vmatpush1.msra.mxu0 0.0
  %1492 = vmatprep.subr.mxu0 0.0
  %1493 = vmatpush1.msra.mxu0 0.0
  %1494 = vmatprep.subr.mxu0 0.0
  %1495 = vmatpush1.msra.mxu0 0.0
  %1496 = vmatprep.subr.mxu0 0.0
  %1497 = vmatpush1.msra.mxu0 0.0
  %1498 = vmatprep.subr.mxu0 0.0
  %1499 = vmatpush1.msra.mxu0 0.0
  %1500 = vmatprep.subr.mxu0 0.0
  %1501 = vmatpush1.msra.mxu0 0.0
  %1502 = vmatprep.subr.mxu0 0.0
  %1503 = vmatpush1.msra.mxu0 0.0
  %1504 = vmatprep.mubr.f32.mxu0 0.0
  %1505 = vmatmul.mubr.f32.gmra.mrb[0].mxu0 %v1438
  %v1506 = vpop.f32.mrb[0].mxu0
  %v1507 = vadd.f32 0.0, %v1506
  %v1508 = vpop.f32.mrb[0].mxu0
  %1509 = vdwg.mxu0
  %1512 = vrot.lane.b32.xlu0 %v1431, 24
  %v1513 = vpop.permute.xlu0 %1512
  %1514 = vrot.lane.b32.xlu0 %v1507, 24
  %v1515 = vpop.permute.xlu0 %1514
  %vm1518 = vcmask 261312
  %1519 = vst.msk [vmem:[#allocation2] sm:$0xff] %vm1518, %v1513
  %1520 = vst.msk [vmem:[#allocation2 + $0x8] sm:$0xff] %vm1518, %v1515
  %v1521 = vld [vmem:[#allocation2] sm:$0xff]
  %v1522 = vld [vmem:[#allocation2 + $0x8] sm:$0xff]
  %v1523 = vld [vmem:[%s5] sm:$0xff]
  %v1524 = vld [vmem:[%s5 + $0x8] sm:$0xff]
  %v1525 = vld [vmem:[%s5 + $0x10] sm:$0xff]
  %v1526 = vld [vmem:[%s5 + $0x18] sm:$0xff]
  %v1527 = vld [vmem:[%s6] sm:$0x1]
  %v1529 = vlaneseq
  %v1530 = vshrl.u32 %v1529, 7
  %v1531 = vsub.s32 0, %v1530
  %v1532 = vrot.slane %v1527, %v1531
  %v1535 = vsel %vm73, %v1521, 0
  %v1538 = vsel %vm73, %v1522, 0
  %1540 = vmatprep.subr.mxu0 0.0
  %1541 = vmatpush1.msra.mxu0 %v1523
  %1542 = vmatprep.subr.mxu0 0.0
  %1543 = vmatpush1.msra.mxu0 %v1524
  %1544 = vmatprep.subr.mxu0 0.0
  %1545 = vmatpush1.msra.mxu0 %v1525
  %1546 = vmatprep.subr.mxu0 0.0
  %1547 = vmatpush1.msra.mxu0 %v1526
  %1548 = vmatprep.subr.mxu0 0.0
  %1549 = vmatpush1.msra.mxu0 0.0
  %1550 = vmatprep.subr.mxu0 0.0
  %1551 = vmatpush1.msra.mxu0 0.0
  %1552 = vmatprep.subr.mxu0 0.0
  %1553 = vmatpush1.msra.mxu0 0.0
  %1554 = vmatprep.subr.mxu0 0.0
  %1555 = vmatpush1.msra.mxu0 0.0
  %1556 = vmatprep.subr.mxu0 0.0
  %1557 = vmatpush1.msra.mxu0 0.0
  %1558 = vmatprep.subr.mxu0 0.0
  %1559 = vmatpush1.msra.mxu0 0.0
  %1560 = vmatprep.subr.mxu0 0.0
  %1561 = vmatpush1.msra.mxu0 0.0
  %1562 = vmatprep.subr.mxu0 0.0
  %1563 = vmatpush1.msra.mxu0 0.0
  %1564 = vmatprep.subr.mxu0 0.0
  %1565 = vmatpush1.msra.mxu0 0.0
  %1566 = vmatprep.subr.mxu0 0.0
  %1567 = vmatpush1.msra.mxu0 0.0
  %1568 = vmatprep.subr.mxu0 0.0
  %1569 = vmatpush1.msra.mxu0 0.0
  %1570 = vmatprep.subr.mxu0 0.0
  %1571 = vmatpush1.msra.mxu0 0.0
  %1572 = vmatprep.subr.mxu0 0.0
  %1573 = vmatpush1.msra.mxu0 0.0
  %1574 = vmatprep.subr.mxu0 0.0
  %1575 = vmatpush1.msra.mxu0 0.0
  %1576 = vmatprep.subr.mxu0 0.0
  %1577 = vmatpush1.msra.mxu0 0.0
  %1578 = vmatprep.subr.mxu0 0.0
  %1579 = vmatpush1.msra.mxu0 0.0
  %1580 = vmatprep.subr.mxu0 0.0
  %1581 = vmatpush1.msra.mxu0 0.0
  %1582 = vmatprep.subr.mxu0 0.0
  %1583 = vmatpush1.msra.mxu0 0.0
  %1584 = vmatprep.subr.mxu0 0.0
  %1585 = vmatpush1.msra.mxu0 0.0
  %1586 = vmatprep.subr.mxu0 0.0
  %1587 = vmatpush1.msra.mxu0 0.0
  %1588 = vmatprep.subr.mxu0 0.0
  %1589 = vmatpush1.msra.mxu0 0.0
  %1590 = vmatprep.subr.mxu0 0.0
  %1591 = vmatpush1.msra.mxu0 0.0
  %1592 = vmatprep.subr.mxu0 0.0
  %1593 = vmatpush1.msra.mxu0 0.0
  %1594 = vmatprep.subr.mxu0 0.0
  %1595 = vmatpush1.msra.mxu0 0.0
  %1596 = vmatprep.subr.mxu0 0.0
  %1597 = vmatpush1.msra.mxu0 0.0
  %1598 = vmatprep.subr.mxu0 0.0
  %1599 = vmatpush1.msra.mxu0 0.0
  %1600 = vmatprep.subr.mxu0 0.0
  %1601 = vmatpush1.msra.mxu0 0.0
  %1602 = vmatprep.subr.mxu0 0.0
  %1603 = vmatpush1.msra.mxu0 0.0
  %1604 = vmatprep.mubr.f32.mxu0 0.0
  %1605 = vmatmul.mubr.f32.gmra.mrb[0].mxu0 %v1535
  %v1606 = vpop.f32.mrb[0].mxu0
  %v1607 = vadd.f32 %v1532, %v1606
  %v1608 = vpop.f32.mrb[0].mxu0
  %1609 = vmatprep.mubr.f32.mxu0 0.0
  %1610 = vmatmul.mubr.f32.gmra.mrb[0].mxu0 %v1538
  %v1611 = vpop.f32.mrb[0].mxu0
  %v1612 = vadd.f32 %v1532, %v1611
  %v1613 = vpop.f32.mrb[0].mxu0
  %1614 = vdwg.mxu0
  %v1615 = vadd.f32 %v60, %v1607
  %v1616 = vadd.f32 %v61, %v1612
  %v1617 = vld [vmem:[%s7] sm:$0x1]
  %v1618 = vld [vmem:[%s8] sm:$0x1]
  %v1619 = vsel %vm73, %v1615, 0.0
  %1620 = vadd.xlane.f32.xlu0 %v1619
  %v1621 = vpop.xlane.xlu0 %1620
  %v1622 = vsel %vm73, %v1616, 0.0
  %1623 = vadd.xlane.f32.xlu0 %v1622
  %v1624 = vpop.xlane.xlu0 %1623
  %v1625 = vrcp.pop 32.0
  %v1626 = vmul.f32 %v1621, %v1625
  %v1627 = vmul.f32 %v1624, %v1625
  %v1628 = vsub.f32 %v1615, %v1626
  %v1629 = vsub.f32 %v1616, %v1627
  %v1630 = vmul.f32 %v1628, %v1628
  %v1631 = vmul.f32 %v1629, %v1629
  %v1632 = vsel %vm73, %v1630, 0.0
  %1633 = vadd.xlane.f32.xlu0 %v1632
  %v1634 = vpop.xlane.xlu0 %1633
  %v1635 = vsel %vm73, %v1631, 0.0
  %1636 = vadd.xlane.f32.xlu0 %v1635
  %v1637 = vpop.xlane.xlu0 %1636
  %v1638 = vmul.f32 %v1634, %v1625
  %v1639 = vmul.f32 %v1637, %v1625
  %v1640 = vadd.f32 %v1638, 1e-05
  %v1641 = vadd.f32 %v1639, 1e-05
  %v1642 = vrsqrt.pop %v1640
  %v1643 = vrsqrt.pop %v1641
  %v1644 = vmul.f32 %v1628, %v1642
  %v1645 = vmul.f32 %v1629, %v1643
  %v1647 = vlaneseq
  %v1648 = vshrl.u32 %v1647, 7
  %v1649 = vsub.s32 0, %v1648
  %v1650 = vrot.slane %v1617, %v1649
  %v1652 = vmul.f32 %v1644, %v1650
  %v1653 = vmul.f32 %v1645, %v1650
  %v1655 = vlaneseq
  %v1656 = vshrl.u32 %v1655, 7
  %v1657 = vsub.s32 0, %v1656
  %v1658 = vrot.slane %v1618, %v1657
  %v1660 = vadd.f32 %v1652, %v1658
  %v1661 = vadd.f32 %v1653, %v1658
  %v1662 = vld [vmem:[%s9] sm:$0xff]
  %v1663 = vld [vmem:[%s9 + $0x8] sm:$0xff]
  %v1664 = vld [vmem:[%s9 + $0x10] sm:$0xff]
  %v1665 = vld [vmem:[%s9 + $0x18] sm:$0xff]
  %v1666 = vld [vmem:[%s10] sm:$0x1]
  %v1668 = vlaneseq
  %v1669 = vshrl.u32 %v1668, 7
  %v1670 = vsub.s32 0, %v1669
  %v1671 = vrot.slane %v1666, %v1670
  %v1674 = vsel %vm73, %v1660, 0
  %v1677 = vsel %vm73, %v1661, 0
  %1679 = vmatprep.subr.mxu0 0.0
  %1680 = vmatpush1.msra.mxu0 %v1662
  %1681 = vmatprep.subr.mxu0 0.0
  %1682 = vmatpush1.msra.mxu0 %v1663
  %1683 = vmatprep.subr.mxu0 0.0
  %1684 = vmatpush1.msra.mxu0 %v1664
  %1685 = vmatprep.subr.mxu0 0.0
  %1686 = vmatpush1.msra.mxu0 %v1665
  %1687 = vmatprep.subr.mxu0 0.0
  %1688 = vmatpush1.msra.mxu0 0.0
  %1689 = vmatprep.subr.mxu0 0.0
  %1690 = vmatpush1.msra.mxu0 0.0
  %1691 = vmatprep.subr.mxu0 0.0
  %1692 = vmatpush1.msra.mxu0 0.0
  %1693 = vmatprep.subr.mxu0 0.0
  %1694 = vmatpush1.msra.mxu0 0.0
  %1695 = vmatprep.subr.mxu0 0.0
  %1696 = vmatpush1.msra.mxu0 0.0
  %1697 = vmatprep.subr.mxu0 0.0
  %1698 = vmatpush1.msra.mxu0 0.0
  %1699 = vmatprep.subr.mxu0 0.0
  %1700 = vmatpush1.msra.mxu0 0.0
  %1701 = vmatprep.subr.mxu0 0.0
  %1702 = vmatpush1.msra.mxu0 0.0
  %1703 = vmatprep.subr.mxu0 0.0
  %1704 = vmatpush1.msra.mxu0 0.0
  %1705 = vmatprep.subr.mxu0 0.0
  %1706 = vmatpush1.msra.mxu0 0.0
  %1707 = vmatprep.subr.mxu0 0.0
  %1708 = vmatpush1.msra.mxu0 0.0
  %1709 = vmatprep.subr.mxu0 0.0
  %1710 = vmatpush1.msra.mxu0 0.0
  %1711 = vmatprep.subr.mxu0 0.0
  %1712 = vmatpush1.msra.mxu0 0.0
  %1713 = vmatprep.subr.mxu0 0.0
  %1714 = vmatpush1.msra.mxu0 0.0
  %1715 = vmatprep.subr.mxu0 0.0
  %1716 = vmatpush1.msra.mxu0 0.0
  %1717 = vmatprep.subr.mxu0 0.0
  %1718 = vmatpush1.msra.mxu0 0.0
  %1719 = vmatprep.subr.mxu0 0.0
  %1720 = vmatpush1.msra.mxu0 0.0
  %1721 = vmatprep.subr.mxu0 0.0
  %1722 = vmatpush1.msra.mxu0 0.0
  %1723 = vmatprep.subr.mxu0 0.0
  %1724 = vmatpush1.msra.mxu0 0.0
  %1725 = vmatprep.subr.mxu0 0.0
  %1726 = vmatpush1.msra.mxu0 0.0
  %1727 = vmatprep.subr.mxu0 0.0
  %1728 = vmatpush1.msra.mxu0 0.0
  %1729 = vmatprep.subr.mxu0 0.0
  %1730 = vmatpush1.msra.mxu0 0.0
  %1731 = vmatprep.subr.mxu0 0.0
  %1732 = vmatpush1.msra.mxu0 0.0
  %1733 = vmatprep.subr.mxu0 0.0
  %1734 = vmatpush1.msra.mxu0 0.0
  %1735 = vmatprep.subr.mxu0 0.0
  %1736 = vmatpush1.msra.mxu0 0.0
  %1737 = vmatprep.subr.mxu0 0.0
  %1738 = vmatpush1.msra.mxu0 0.0
  %1739 = vmatprep.subr.mxu0 0.0
  %1740 = vmatpush1.msra.mxu0 0.0
  %1741 = vmatprep.subr.mxu0 0.0
  %1742 = vmatpush1.msra.mxu0 0.0
  %1743 = vmatprep.mubr.f32.mxu0 0.0
  %1744 = vmatmul.mubr.f32.gmra.mrb[0].mxu0 %v1674
  %v1745 = vpop.f32.mrb[0].mxu0
  %v1746 = vadd.f32 %v1671, %v1745
  %v1747 = vpop.f32.mrb[0].mxu0
  %1748 = vmatprep.mubr.f32.mxu0 0.0
  %1749 = vmatmul.mubr.f32.gmra.mrb[0].mxu0 %v1677
  %v1750 = vpop.f32.mrb[0].mxu0
  %v1751 = vadd.f32 %v1671, %v1750
  %v1752 = vpop.f32.mrb[0].mxu0
  %1753 = vdwg.mxu0
  %v1754 = vmax.f32 %v1746, 0.0
  %v1755 = vmax.f32 %v1751, 0.0
  %v1756 = vld [vmem:[%s11] sm:$0xff]
  %v1757 = vld [vmem:[%s11 + $0x8] sm:$0xff]
  %v1758 = vld [vmem:[%s11 + $0x10] sm:$0xff]
  %v1759 = vld [vmem:[%s11 + $0x18] sm:$0xff]
  %v1760 = vld [vmem:[%s11 + $0x20] sm:$0xff]
  %v1761 = vld [vmem:[%s11 + $0x28] sm:$0xff]
  %v1762 = vld [vmem:[%s11 + $0x30] sm:$0xff]
  %v1763 = vld [vmem:[%s11 + $0x38] sm:$0xff]
  %v1764 = vld [vmem:[%s12] sm:$0x1]
  %v1766 = vlaneseq
  %v1767 = vshrl.u32 %v1766, 7
  %v1768 = vsub.s32 0, %v1767
  %v1769 = vrot.slane %v1764, %v1768
  %vm1771 = vcmask 523264
  %v1773 = vsel %vm1771, %v1754, 0
  %v1776 = vsel %vm1771, %v1755, 0
  %1778 = vmatprep.subr.mxu0 0.0
  %1779 = vmatpush1.msra.mxu0 %v1756
  %1780 = vmatprep.subr.mxu0 0.0
  %1781 = vmatpush1.msra.mxu0 %v1757
  %1782 = vmatprep.subr.mxu0 0.0
  %1783 = vmatpush1.msra.mxu0 %v1758
  %1784 = vmatprep.subr.mxu0 0.0
  %1785 = vmatpush1.msra.mxu0 %v1759
  %1786 = vmatprep.subr.mxu0 0.0
  %1787 = vmatpush1.msra.mxu0 %v1760
  %1788 = vmatprep.subr.mxu0 0.0
  %1789 = vmatpush1.msra.mxu0 %v1761
  %1790 = vmatprep.subr.mxu0 0.0
  %1791 = vmatpush1.msra.mxu0 %v1762
  %1792 = vmatprep.subr.mxu0 0.0
  %1793 = vmatpush1.msra.mxu0 %v1763
  %1794 = vmatprep.subr.mxu0 0.0
  %1795 = vmatpush1.msra.mxu0 0.0
  %1796 = vmatprep.subr.mxu0 0.0
  %1797 = vmatpush1.msra.mxu0 0.0
  %1798 = vmatprep.subr.mxu0 0.0
  %1799 = vmatpush1.msra.mxu0 0.0
  %1800 = vmatprep.subr.mxu0 0.0
  %1801 = vmatpush1.msra.mxu0 0.0
  %1802 = vmatprep.subr.mxu0 0.0
  %1803 = vmatpush1.msra.mxu0 0.0
  %1804 = vmatprep.subr.mxu0 0.0
  %1805 = vmatpush1.msra.mxu0 0.0
  %1806 = vmatprep.subr.mxu0 0.0
  %1807 = vmatpush1.msra.mxu0 0.0
  %1808 = vmatprep.subr.mxu0 0.0
  %1809 = vmatpush1.msra.mxu0 0.0
  %1810 = vmatprep.subr.mxu0 0.0
  %1811 = vmatpush1.msra.mxu0 0.0
  %1812 = vmatprep.subr.mxu0 0.0
  %1813 = vmatpush1.msra.mxu0 0.0
  %1814 = vmatprep.subr.mxu0 0.0
  %1815 = vmatpush1.msra.mxu0 0.0
  %1816 = vmatprep.subr.mxu0 0.0
  %1817 = vmatpush1.msra.mxu0 0.0
  %1818 = vmatprep.subr.mxu0 0.0
  %1819 = vmatpush1.msra.mxu0 0.0
  %1820 = vmatprep.subr.mxu0 0.0
  %1821 = vmatpush1.msra.mxu0 0.0
  %1822 = vmatprep.subr.mxu0 0.0
  %1823 = vmatpush1.msra.mxu0 0.0
  %1824 = vmatprep.subr.mxu0 0.0
  %1825 = vmatpush1.msra.mxu0 0.0
  %1826 = vmatprep.subr.mxu0 0.0
  %1827 = vmatpush1.msra.mxu0 0.0
  %1828 = vmatprep.subr.mxu0 0.0
  %1829 = vmatpush1.msra.mxu0 0.0
  %1830 = vmatprep.subr.mxu0 0.0
  %1831 = vmatpush1.msra.mxu0 0.0
  %1832 = vmatprep.subr.mxu0 0.0
  %1833 = vmatpush1.msra.mxu0 0.0
  %1834 = vmatprep.subr.mxu0 0.0
  %1835 = vmatpush1.msra.mxu0 0.0
  %1836 = vmatprep.subr.mxu0 0.0
  %1837 = vmatpush1.msra.mxu0 0.0
  %1838 = vmatprep.subr.mxu0 0.0
  %1839 = vmatpush1.msra.mxu0 0.0
  %1840 = vmatprep.subr.mxu0 0.0
  %1841 = vmatpush1.msra.mxu0 0.0
  %1842 = vmatprep.mubr.f32.mxu0 0.0
  %1843 = vmatmul.mubr.f32.gmra.mrb[0].mxu0 %v1773
  %v1844 = vpop.f32.mrb[0].mxu0
  %v1845 = vadd.f32 %v1769, %v1844
  %v1846 = vpop.f32.mrb[0].mxu0
  %1847 = vmatprep.mubr.f32.mxu0 0.0
  %1848 = vmatmul.mubr.f32.gmra.mrb[0].mxu0 %v1776
  %v1849 = vpop.f32.mrb[0].mxu0
  %v1850 = vadd.f32 %v1769, %v1849
  %v1851 = vpop.f32.mrb[0].mxu0
  %1852 = vdwg.mxu0
  %v1853 = vadd.f32 %v1660, %v1845
  %v1854 = vadd.f32 %v1661, %v1850
  %v1855 = vld [vmem:[%s13] sm:$0x1]
  %v1856 = vld [vmem:[%s14] sm:$0x1]
  %v1857 = vsel %vm73, %v1853, 0.0
  %1858 = vadd.xlane.f32.xlu0 %v1857
  %v1859 = vpop.xlane.xlu0 %1858
  %v1860 = vsel %vm73, %v1854, 0.0
  %1861 = vadd.xlane.f32.xlu0 %v1860
  %v1862 = vpop.xlane.xlu0 %1861
  %v1863 = vmul.f32 %v1859, %v1625
  %v1864 = vmul.f32 %v1862, %v1625
  %v1865 = vsub.f32 %v1853, %v1863
  %v1866 = vsub.f32 %v1854, %v1864
  %v1867 = vmul.f32 %v1865, %v1865
  %v1868 = vmul.f32 %v1866, %v1866
  %v1869 = vsel %vm73, %v1867, 0.0
  %1870 = vadd.xlane.f32.xlu0 %v1869
  %v1871 = vpop.xlane.xlu0 %1870
  %v1872 = vsel %vm73, %v1868, 0.0
  %1873 = vadd.xlane.f32.xlu0 %v1872
  %v1874 = vpop.xlane.xlu0 %1873
  %v1875 = vmul.f32 %v1871, %v1625
  %v1876 = vmul.f32 %v1874, %v1625
  %v1877 = vadd.f32 %v1875, 1e-05
  %v1878 = vadd.f32 %v1876, 1e-05
  %v1879 = vrsqrt.pop %v1877
  %v1880 = vrsqrt.pop %v1878
  %v1881 = vmul.f32 %v1865, %v1879
  %v1882 = vmul.f32 %v1866, %v1880
  %v1884 = vlaneseq
  %v1885 = vshrl.u32 %v1884, 7
  %v1886 = vsub.s32 0, %v1885
  %v1887 = vrot.slane %v1855, %v1886
  %v1889 = vmul.f32 %v1881, %v1887
  %v1890 = vmul.f32 %v1882, %v1887
  %v1892 = vlaneseq
  %v1893 = vshrl.u32 %v1892, 7
  %v1894 = vsub.s32 0, %v1893
  %v1895 = vrot.slane %v1856, %v1894
  %v1897 = vadd.f32 %v1889, %v1895
  %v1898 = vadd.f32 %v1890, %v1895
  %s1899 = scalar_lea.vmem %s3, 32
  %v1900 = vld [vmem:[%s1899] sm:$0xff]
  %v1901 = vld [vmem:[%s1899 + $0x8] sm:$0xff]
  %v1902 = vld [vmem:[%s1899 + $0x10] sm:$0xff]
  %v1903 = vld [vmem:[%s1899 + $0x18] sm:$0xff]
  %s1904 = scalar_lea.vmem %s4, 1
  %v1905 = vld [vmem:[%s1904] sm:$0x1]
  %v1907 = vlaneseq
  %v1908 = vshrl.u32 %v1907, 7
  %v1909 = vsub.s32 0, %v1908
  %v1910 = vrot.slane %v1905, %v1909
  %v1913 = vsel %vm73, %v1897, 0
  %v1916 = vsel %vm73, %v1898, 0
  %1918 = vmatprep.subr.mxu0 0.0
  %1919 = vmatpush1.msra.mxu0 %v1900
  %1920 = vmatprep.subr.mxu0 0.0
  %1921 = vmatpush1.msra.mxu0 %v1901
  %1922 = vmatprep.subr.mxu0 0.0
  %1923 = vmatpush1.msra.mxu0 %v1902
  %1924 = vmatprep.subr.mxu0 0.0
  %1925 = vmatpush1.msra.mxu0 %v1903
  %1926 = vmatprep.subr.mxu0 0.0
  %1927 = vmatpush1.msra.mxu0 0.0
  %1928 = vmatprep.subr.mxu0 0.0
  %1929 = vmatpush1.msra.mxu0 0.0
  %1930 = vmatprep.subr.mxu0 0.0
  %1931 = vmatpush1.msra.mxu0 0.0
  %1932 = vmatprep.subr.mxu0 0.0
  %1933 = vmatpush1.msra.mxu0 0.0
  %1934 = vmatprep.subr.mxu0 0.0
  %1935 = vmatpush1.msra.mxu0 0.0
  %1936 = vmatprep.subr.mxu0 0.0
  %1937 = vmatpush1.msra.mxu0 0.0
  %1938 = vmatprep.subr.mxu0 0.0
  %1939 = vmatpush1.msra.mxu0 0.0
  %1940 = vmatprep.subr.mxu0 0.0
  %1941 = vmatpush1.msra.mxu0 0.0
  %1942 = vmatprep.subr.mxu0 0.0
  %1943 = vmatpush1.msra.mxu0 0.0
  %1944 = vmatprep.subr.mxu0 0.0
  %1945 = vmatpush1.msra.mxu0 0.0
  %1946 = vmatprep.subr.mxu0 0.0
  %1947 = vmatpush1.msra.mxu0 0.0
  %1948 = vmatprep.subr.mxu0 0.0
  %1949 = vmatpush1.msra.mxu0 0.0
  %1950 = vmatprep.subr.mxu0 0.0
  %1951 = vmatpush1.msra.mxu0 0.0
  %1952 = vmatprep.subr.mxu0 0.0
  %1953 = vmatpush1.msra.mxu0 0.0
  %1954 = vmatprep.subr.mxu0 0.0
  %1955 = vmatpush1.msra.mxu0 0.0
  %1956 = vmatprep.subr.mxu0 0.0
  %1957 = vmatpush1.msra.mxu0 0.0
  %1958 = vmatprep.subr.mxu0 0.0
  %1959 = vmatpush1.msra.mxu0 0.0
  %1960 = vmatprep.subr.mxu0 0.0
  %1961 = vmatpush1.msra.mxu0 0.0
  %1962 = vmatprep.subr.mxu0 0.0
  %1963 = vmatpush1.msra.mxu0 0.0
  %1964 = vmatprep.subr.mxu0 0.0
  %1965 = vmatpush1.msra.mxu0 0.0
  %1966 = vmatprep.subr.mxu0 0.0
  %1967 = vmatpush1.msra.mxu0 0.0
  %1968 = vmatprep.subr.mxu0 0.0
  %1969 = vmatpush1.msra.mxu0 0.0
  %1970 = vmatprep.subr.mxu0 0.0
  %1971 = vmatpush1.msra.mxu0 0.0
  %1972 = vmatprep.subr.mxu0 0.0
  %1973 = vmatpush1.msra.mxu0 0.0
  %1974 = vmatprep.subr.mxu0 0.0
  %1975 = vmatpush1.msra.mxu0 0.0
  %1976 = vmatprep.subr.mxu0 0.0
  %1977 = vmatpush1.msra.mxu0 0.0
  %1978 = vmatprep.subr.mxu0 0.0
  %1979 = vmatpush1.msra.mxu0 0.0
  %1980 = vmatprep.subr.mxu0 0.0
  %1981 = vmatpush1.msra.mxu0 0.0
  %1982 = vmatprep.mubr.f32.mxu0 0.0
  %1983 = vmatmul.mubr.f32.gmra.mrb[0].mxu0 %v1913
  %v1984 = vpop.f32.mrb[0].mxu0
  %v1985 = vadd.f32 %v1910, %v1984
  %v1986 = vpop.f32.mrb[0].mxu0
  %1987 = vmatprep.mubr.f32.mxu0 0.0
  %1988 = vmatmul.mubr.f32.gmra.mrb[0].mxu0 %v1916
  %v1989 = vpop.f32.mrb[0].mxu0
  %v1990 = vadd.f32 %v1910, %v1989
  %v1991 = vpop.f32.mrb[0].mxu0
  %1992 = vdwg.mxu0
  %1994 = vrot.lane.b32.xlu0 %v1985, 96
  %v1995 = vpop.permute.xlu0 %1994
  %v1996 = vsel %vm170, %v1985, 0
  %v1998 = vsel %vm170, %v1995, 0
  %2000 = vmatprep.subr.mxu0 0.0
  %2001 = vmatpush1.xpose.msra.mxu0 %v1998
  %2002 = vmatprep.subr.mxu0 0.0
  %2003 = vmatpush1.xpose.msra.mxu0 0.0
  %2004 = vmatprep.subr.mxu0 0.0
  %2005 = vmatpush1.xpose.msra.mxu0 0.0
  %2006 = vmatprep.subr.mxu0 0.0
  %2007 = vmatpush1.xpose.msra.mxu0 0.0
  %2008 = vmatprep.subr.mxu0 0.0
  %2009 = vmatpush1.xpose.msra.mxu0 0.0
  %2010 = vmatprep.subr.mxu0 0.0
  %2011 = vmatpush1.xpose.msra.mxu0 0.0
  %2012 = vmatprep.subr.mxu0 0.0
  %2013 = vmatpush1.xpose.msra.mxu0 0.0
  %2014 = vmatprep.subr.mxu0 0.0
  %2015 = vmatpush1.xpose.msra.mxu0 0.0
  %2016 = vmatprep.subr.mxu0 0.0
  %2017 = vmatpush1.xpose.msra.mxu0 0.0
  %2018 = vmatprep.subr.mxu0 0.0
  %2019 = vmatpush1.xpose.msra.mxu0 0.0
  %2020 = vmatprep.subr.mxu0 0.0
  %2021 = vmatpush1.xpose.msra.mxu0 0.0
  %2022 = vmatprep.subr.mxu0 0.0
  %2023 = vmatpush1.xpose.msra.mxu0 0.0
  %2024 = vmatprep.subr.mxu0 0.0
  %2025 = vmatpush1.xpose.msra.mxu0 0.0
  %2026 = vmatprep.subr.mxu0 0.0
  %2027 = vmatpush1.xpose.msra.mxu0 0.0
  %2028 = vmatprep.subr.mxu0 0.0
  %2029 = vmatpush1.xpose.msra.mxu0 0.0
  %2030 = vmatprep.subr.mxu0 0.0
  %2031 = vmatpush1.xpose.msra.mxu0 0.0
  %2032 = vmatprep.subr.mxu0 0.0
  %2033 = vmatpush1.xpose.msra.mxu0 0.0
  %2034 = vmatprep.subr.mxu0 0.0
  %2035 = vmatpush1.xpose.msra.mxu0 0.0
  %2036 = vmatprep.subr.mxu0 0.0
  %2037 = vmatpush1.xpose.msra.mxu0 0.0
  %2038 = vmatprep.subr.mxu0 0.0
  %2039 = vmatpush1.xpose.msra.mxu0 0.0
  %2040 = vmatprep.subr.mxu0 0.0
  %2041 = vmatpush1.xpose.msra.mxu0 0.0
  %2042 = vmatprep.subr.mxu0 0.0
  %2043 = vmatpush1.xpose.msra.mxu0 0.0
  %2044 = vmatprep.subr.mxu0 0.0
  %2045 = vmatpush1.xpose.msra.mxu0 0.0
  %2046 = vmatprep.subr.mxu0 0.0
  %2047 = vmatpush1.xpose.msra.mxu0 0.0
  %2048 = vmatprep.subr.mxu0 0.0
  %2049 = vmatpush1.xpose.msra.mxu0 0.0
  %2050 = vmatprep.subr.mxu0 0.0
  %2051 = vmatpush1.xpose.msra.mxu0 0.0
  %2052 = vmatprep.subr.mxu0 0.0
  %2053 = vmatpush1.xpose.msra.mxu0 0.0
  %2054 = vmatprep.subr.mxu0 0.0
  %2055 = vmatpush1.xpose.msra.mxu0 0.0
  %2056 = vmatprep.subr.mxu0 0.0
  %2057 = vmatpush1.xpose.msra.mxu0 0.0
  %2058 = vmatprep.subr.mxu0 0.0
  %2059 = vmatpush1.xpose.msra.mxu0 0.0
  %2060 = vmatprep.subr.mxu0 0.0
  %2061 = vmatpush1.xpose.msra.mxu0 0.0
  %2062 = vmatprep.subr.mxu0 0.0
  %2063 = vmatpush1.xpose.msra.mxu0 0.0
  %2064 = vmatprep.mubr.f32.mxu0 0.0
  %2065 = vmatmul.mubr.f32.gmra.mrb[0].mxu0 %v1996
  %v2066 = vpop.f32.mrb[0].mxu0
  %v2067 = vadd.f32 %v160, %v2066
  %v2068 = vpop.f32.mrb[0].mxu0
  %2069 = vdwg.mxu0
  %2071 = vrot.lane.b32.xlu0 %v1990, 96
  %v2072 = vpop.permute.xlu0 %2071
  %v2073 = vsel %vm170, %v1990, 0
  %v2075 = vsel %vm170, %v2072, 0
  %2077 = vmatprep.subr.mxu0 0.0
  %2078 = vmatpush1.xpose.msra.mxu0 %v2075
  %2079 = vmatprep.subr.mxu0 0.0
  %2080 = vmatpush1.xpose.msra.mxu0 0.0
  %2081 = vmatprep.subr.mxu0 0.0
  %2082 = vmatpush1.xpose.msra.mxu0 0.0
  %2083 = vmatprep.subr.mxu0 0.0
  %2084 = vmatpush1.xpose.msra.mxu0 0.0
  %2085 = vmatprep.subr.mxu0 0.0
  %2086 = vmatpush1.xpose.msra.mxu0 0.0
  %2087 = vmatprep.subr.mxu0 0.0
  %2088 = vmatpush1.xpose.msra.mxu0 0.0
  %2089 = vmatprep.subr.mxu0 0.0
  %2090 = vmatpush1.xpose.msra.mxu0 0.0
  %2091 = vmatprep.subr.mxu0 0.0
  %2092 = vmatpush1.xpose.msra.mxu0 0.0
  %2093 = vmatprep.subr.mxu0 0.0
  %2094 = vmatpush1.xpose.msra.mxu0 0.0
  %2095 = vmatprep.subr.mxu0 0.0
  %2096 = vmatpush1.xpose.msra.mxu0 0.0
  %2097 = vmatprep.subr.mxu0 0.0
  %2098 = vmatpush1.xpose.msra.mxu0 0.0
  %2099 = vmatprep.subr.mxu0 0.0
  %2100 = vmatpush1.xpose.msra.mxu0 0.0
  %2101 = vmatprep.subr.mxu0 0.0
  %2102 = vmatpush1.xpose.msra.mxu0 0.0
  %2103 = vmatprep.subr.mxu0 0.0
  %2104 = vmatpush1.xpose.msra.mxu0 0.0
  %2105 = vmatprep.subr.mxu0 0.0
  %2106 = vmatpush1.xpose.msra.mxu0 0.0
  %2107 = vmatprep.subr.mxu0 0.0
  %2108 = vmatpush1.xpose.msra.mxu0 0.0
  %2109 = vmatprep.subr.mxu0 0.0
  %2110 = vmatpush1.xpose.msra.mxu0 0.0
  %2111 = vmatprep.subr.mxu0 0.0
  %2112 = vmatpush1.xpose.msra.mxu0 0.0
  %2113 = vmatprep.subr.mxu0 0.0
  %2114 = vmatpush1.xpose.msra.mxu0 0.0
  %2115 = vmatprep.subr.mxu0 0.0
  %2116 = vmatpush1.xpose.msra.mxu0 0.0
  %2117 = vmatprep.subr.mxu0 0.0
  %2118 = vmatpush1.xpose.msra.mxu0 0.0
  %2119 = vmatprep.subr.mxu0 0.0
  %2120 = vmatpush1.xpose.msra.mxu0 0.0
  %2121 = vmatprep.subr.mxu0 0.0
  %2122 = vmatpush1.xpose.msra.mxu0 0.0
  %2123 = vmatprep.subr.mxu0 0.0
  %2124 = vmatpush1.xpose.msra.mxu0 0.0
  %2125 = vmatprep.subr.mxu0 0.0
  %2126 = vmatpush1.xpose.msra.mxu0 0.0
  %2127 = vmatprep.subr.mxu0 0.0
  %2128 = vmatpush1.xpose.msra.mxu0 0.0
  %2129 = vmatprep.subr.mxu0 0.0
  %2130 = vmatpush1.xpose.msra.mxu0 0.0
  %2131 = vmatprep.subr.mxu0 0.0
  %2132 = vmatpush1.xpose.msra.mxu0 0.0
  %2133 = vmatprep.subr.mxu0 0.0
  %2134 = vmatpush1.xpose.msra.mxu0 0.0
  %2135 = vmatprep.subr.mxu0 0.0
  %2136 = vmatpush1.xpose.msra.mxu0 0.0
  %2137 = vmatprep.subr.mxu0 0.0
  %2138 = vmatpush1.xpose.msra.mxu0 0.0
  %2139 = vmatprep.subr.mxu0 0.0
  %2140 = vmatpush1.xpose.msra.mxu0 0.0
  %2141 = vmatprep.mubr.f32.mxu0 0.0
  %2142 = vmatmul.mubr.f32.gmra.mrb[0].mxu0 %v2073
  %v2143 = vpop.f32.mrb[0].mxu0
  %v2144 = vadd.f32 %v164, %v2143
  %v2145 = vpop.f32.mrb[0].mxu0
  %2146 = vdwg.mxu0
  %v2147 = vsel %vm170, %v2067, -inf
  %2148 = vmax.xlane.f32.xlu0 %v2147
  %v2149 = vpop.xlane.xlu0 %2148
  %v2150 = vsel %vm170, %v2144, -inf
  %2151 = vmax.xlane.f32.xlu0 %v2150
  %v2152 = vpop.xlane.xlu0 %2151
  %v2153 = vsub.f32 %v2067, %v2149
  %v2154 = vsub.f32 %v2144, %v2152
  %v2155 = vmul.f32 %v2153, 1.442695
  %v2156 = vpow.pop %v2155
  %v2157 = vmul.f32 %v2154, 1.442695
  %v2158 = vpow.pop %v2157
  %v2159 = vsel %vm170, %v2156, 0.0
  %2160 = vadd.xlane.f32.xlu0 %v2159
  %v2161 = vpop.xlane.xlu0 %2160
  %v2162 = vsel %vm170, %v2158, 0.0
  %2163 = vadd.xlane.f32.xlu0 %v2162
  %v2164 = vpop.xlane.xlu0 %2163
  %v2165 = vrcp.pop %v2161
  %v2166 = vrcp.pop %v2164
  %v2167 = vmul.f32 %v2156, %v2165
  %v2168 = vmul.f32 %v2158, %v2166
  %2169 = vrot.lane.b32.xlu0 %v1985, 64
  %v2170 = vpop.permute.xlu0 %2169
  %v2173 = vsel %vm170, %v2167, 0
  %2175 = vmatprep.subr.mxu0 0.0
  %2176 = vmatpush1.msra.mxu0 %v2170
  %2177 = vmatprep.subr.mxu0 0.0
  %2178 = vmatpush1.msra.mxu0 0.0
  %2179 = vmatprep.subr.mxu0 0.0
  %2180 = vmatpush1.msra.mxu0 0.0
  %2181 = vmatprep.subr.mxu0 0.0
  %2182 = vmatpush1.msra.mxu0 0.0
  %2183 = vmatprep.subr.mxu0 0.0
  %2184 = vmatpush1.msra.mxu0 0.0
  %2185 = vmatprep.subr.mxu0 0.0
  %2186 = vmatpush1.msra.mxu0 0.0
  %2187 = vmatprep.subr.mxu0 0.0
  %2188 = vmatpush1.msra.mxu0 0.0
  %2189 = vmatprep.subr.mxu0 0.0
  %2190 = vmatpush1.msra.mxu0 0.0
  %2191 = vmatprep.subr.mxu0 0.0
  %2192 = vmatpush1.msra.mxu0 0.0
  %2193 = vmatprep.subr.mxu0 0.0
  %2194 = vmatpush1.msra.mxu0 0.0
  %2195 = vmatprep.subr.mxu0 0.0
  %2196 = vmatpush1.msra.mxu0 0.0
  %2197 = vmatprep.subr.mxu0 0.0
  %2198 = vmatpush1.msra.mxu0 0.0
  %2199 = vmatprep.subr.mxu0 0.0
  %2200 = vmatpush1.msra.mxu0 0.0
  %2201 = vmatprep.subr.mxu0 0.0
  %2202 = vmatpush1.msra.mxu0 0.0
  %2203 = vmatprep.subr.mxu0 0.0
  %2204 = vmatpush1.msra.mxu0 0.0
  %2205 = vmatprep.subr.mxu0 0.0
  %2206 = vmatpush1.msra.mxu0 0.0
  %2207 = vmatprep.subr.mxu0 0.0
  %2208 = vmatpush1.msra.mxu0 0.0
  %2209 = vmatprep.subr.mxu0 0.0
  %2210 = vmatpush1.msra.mxu0 0.0
  %2211 = vmatprep.subr.mxu0 0.0
  %2212 = vmatpush1.msra.mxu0 0.0
  %2213 = vmatprep.subr.mxu0 0.0
  %2214 = vmatpush1.msra.mxu0 0.0
  %2215 = vmatprep.subr.mxu0 0.0
  %2216 = vmatpush1.msra.mxu0 0.0
  %2217 = vmatprep.subr.mxu0 0.0
  %2218 = vmatpush1.msra.mxu0 0.0
  %2219 = vmatprep.subr.mxu0 0.0
  %2220 = vmatpush1.msra.mxu0 0.0
  %2221 = vmatprep.subr.mxu0 0.0
  %2222 = vmatpush1.msra.mxu0 0.0
  %2223 = vmatprep.subr.mxu0 0.0
  %2224 = vmatpush1.msra.mxu0 0.0
  %2225 = vmatprep.subr.mxu0 0.0
  %2226 = vmatpush1.msra.mxu0 0.0
  %2227 = vmatprep.subr.mxu0 0.0
  %2228 = vmatpush1.msra.mxu0 0.0
  %2229 = vmatprep.subr.mxu0 0.0
  %2230 = vmatpush1.msra.mxu0 0.0
  %2231 = vmatprep.subr.mxu0 0.0
  %2232 = vmatpush1.msra.mxu0 0.0
  %2233 = vmatprep.subr.mxu0 0.0
  %2234 = vmatpush1.msra.mxu0 0.0
  %2235 = vmatprep.subr.mxu0 0.0
  %2236 = vmatpush1.msra.mxu0 0.0
  %2237 = vmatprep.subr.mxu0 0.0
  %2238 = vmatpush1.msra.mxu0 0.0
  %2239 = vmatprep.mubr.f32.mxu0 0.0
  %2240 = vmatmul.mubr.f32.gmra.mrb[0].mxu0 %v2173
  %v2241 = vpop.f32.mrb[0].mxu0
  %v2242 = vadd.f32 0.0, %v2241
  %v2243 = vpop.f32.mrb[0].mxu0
  %2244 = vdwg.mxu0
  %2245 = vrot.lane.b32.xlu0 %v1990, 64
  %v2246 = vpop.permute.xlu0 %2245
  %v2249 = vsel %vm170, %v2168, 0
  %2251 = vmatprep.subr.mxu0 0.0
  %2252 = vmatpush1.msra.mxu0 %v2246
  %2253 = vmatprep.subr.mxu0 0.0
  %2254 = vmatpush1.msra.mxu0 0.0
  %2255 = vmatprep.subr.mxu0 0.0
  %2256 = vmatpush1.msra.mxu0 0.0
  %2257 = vmatprep.subr.mxu0 0.0
  %2258 = vmatpush1.msra.mxu0 0.0
  %2259 = vmatprep.subr.mxu0 0.0
  %2260 = vmatpush1.msra.mxu0 0.0
  %2261 = vmatprep.subr.mxu0 0.0
  %2262 = vmatpush1.msra.mxu0 0.0
  %2263 = vmatprep.subr.mxu0 0.0
  %2264 = vmatpush1.msra.mxu0 0.0
  %2265 = vmatprep.subr.mxu0 0.0
  %2266 = vmatpush1.msra.mxu0 0.0
  %2267 = vmatprep.subr.mxu0 0.0
  %2268 = vmatpush1.msra.mxu0 0.0
  %2269 = vmatprep.subr.mxu0 0.0
  %2270 = vmatpush1.msra.mxu0 0.0
  %2271 = vmatprep.subr.mxu0 0.0
  %2272 = vmatpush1.msra.mxu0 0.0
  %2273 = vmatprep.subr.mxu0 0.0
  %2274 = vmatpush1.msra.mxu0 0.0
  %2275 = vmatprep.subr.mxu0 0.0
  %2276 = vmatpush1.msra.mxu0 0.0
  %2277 = vmatprep.subr.mxu0 0.0
  %2278 = vmatpush1.msra.mxu0 0.0
  %2279 = vmatprep.subr.mxu0 0.0
  %2280 = vmatpush1.msra.mxu0 0.0
  %2281 = vmatprep.subr.mxu0 0.0
  %2282 = vmatpush1.msra.mxu0 0.0
  %2283 = vmatprep.subr.mxu0 0.0
  %2284 = vmatpush1.msra.mxu0 0.0
  %2285 = vmatprep.subr.mxu0 0.0
  %2286 = vmatpush1.msra.mxu0 0.0
  %2287 = vmatprep.subr.mxu0 0.0
  %2288 = vmatpush1.msra.mxu0 0.0
  %2289 = vmatprep.subr.mxu0 0.0
  %2290 = vmatpush1.msra.mxu0 0.0
  %2291 = vmatprep.subr.mxu0 0.0
  %2292 = vmatpush1.msra.mxu0 0.0
  %2293 = vmatprep.subr.mxu0 0.0
  %2294 = vmatpush1.msra.mxu0 0.0
  %2295 = vmatprep.subr.mxu0 0.0
  %2296 = vmatpush1.msra.mxu0 0.0
  %2297 = vmatprep.subr.mxu0 0.0
  %2298 = vmatpush1.msra.mxu0 0.0
  %2299 = vmatprep.subr.mxu0 0.0
  %2300 = vmatpush1.msra.mxu0 0.0
  %2301 = vmatprep.subr.mxu0 0.0
  %2302 = vmatpush1.msra.mxu0 0.0
  %2303 = vmatprep.subr.mxu0 0.0
  %2304 = vmatpush1.msra.mxu0 0.0
  %2305 = vmatprep.subr.mxu0 0.0
  %2306 = vmatpush1.msra.mxu0 0.0
  %2307 = vmatprep.subr.mxu0 0.0
  %2308 = vmatpush1.msra.mxu0 0.0
  %2309 = vmatprep.subr.mxu0 0.0
  %2310 = vmatpush1.msra.mxu0 0.0
  %2311 = vmatprep.subr.mxu0 0.0
  %2312 = vmatpush1.msra.mxu0 0.0
  %2313 = vmatprep.subr.mxu0 0.0
  %2314 = vmatpush1.msra.mxu0 0.0
  %2315 = vmatprep.mubr.f32.mxu0 0.0
  %2316 = vmatmul.mubr.f32.gmra.mrb[0].mxu0 %v2249
  %v2317 = vpop.f32.mrb[0].mxu0
  %v2318 = vadd.f32 0.0, %v2317
  %v2319 = vpop.f32.mrb[0].mxu0
  %2320 = vdwg.mxu0
  %2321 = vst.msk [vmem:[#allocation2] sm:$0xff] %vm170, %v2242
  %2322 = vst.msk [vmem:[#allocation2 + $0x8] sm:$0xff] %vm170, %v2318
  %2323 = vrot.lane.b32.xlu0 %v1985, 120
  %v2324 = vpop.permute.xlu0 %2323
  %2325 = vrot.lane.b32.xlu0 %v1985, 88
  %v2326 = vpop.permute.xlu0 %2325
  %v2327 = vsel %vm170, %v2324, 0
  %v2329 = vsel %vm170, %v2326, 0
  %2331 = vmatprep.subr.mxu0 0.0
  %2332 = vmatpush1.xpose.msra.mxu0 %v2329
  %2333 = vmatprep.subr.mxu0 0.0
  %2334 = vmatpush1.xpose.msra.mxu0 0.0
  %2335 = vmatprep.subr.mxu0 0.0
  %2336 = vmatpush1.xpose.msra.mxu0 0.0
  %2337 = vmatprep.subr.mxu0 0.0
  %2338 = vmatpush1.xpose.msra.mxu0 0.0
  %2339 = vmatprep.subr.mxu0 0.0
  %2340 = vmatpush1.xpose.msra.mxu0 0.0
  %2341 = vmatprep.subr.mxu0 0.0
  %2342 = vmatpush1.xpose.msra.mxu0 0.0
  %2343 = vmatprep.subr.mxu0 0.0
  %2344 = vmatpush1.xpose.msra.mxu0 0.0
  %2345 = vmatprep.subr.mxu0 0.0
  %2346 = vmatpush1.xpose.msra.mxu0 0.0
  %2347 = vmatprep.subr.mxu0 0.0
  %2348 = vmatpush1.xpose.msra.mxu0 0.0
  %2349 = vmatprep.subr.mxu0 0.0
  %2350 = vmatpush1.xpose.msra.mxu0 0.0
  %2351 = vmatprep.subr.mxu0 0.0
  %2352 = vmatpush1.xpose.msra.mxu0 0.0
  %2353 = vmatprep.subr.mxu0 0.0
  %2354 = vmatpush1.xpose.msra.mxu0 0.0
  %2355 = vmatprep.subr.mxu0 0.0
  %2356 = vmatpush1.xpose.msra.mxu0 0.0
  %2357 = vmatprep.subr.mxu0 0.0
  %2358 = vmatpush1.xpose.msra.mxu0 0.0
  %2359 = vmatprep.subr.mxu0 0.0
  %2360 = vmatpush1.xpose.msra.mxu0 0.0
  %2361 = vmatprep.subr.mxu0 0.0
  %2362 = vmatpush1.xpose.msra.mxu0 0.0
  %2363 = vmatprep.subr.mxu0 0.0
  %2364 = vmatpush1.xpose.msra.mxu0 0.0
  %2365 = vmatprep.subr.mxu0 0.0
  %2366 = vmatpush1.xpose.msra.mxu0 0.0
  %2367 = vmatprep.subr.mxu0 0.0
  %2368 = vmatpush1.xpose.msra.mxu0 0.0
  %2369 = vmatprep.subr.mxu0 0.0
  %2370 = vmatpush1.xpose.msra.mxu0 0.0
  %2371 = vmatprep.subr.mxu0 0.0
  %2372 = vmatpush1.xpose.msra.mxu0 0.0
  %2373 = vmatprep.subr.mxu0 0.0
  %2374 = vmatpush1.xpose.msra.mxu0 0.0
  %2375 = vmatprep.subr.mxu0 0.0
  %2376 = vmatpush1.xpose.msra.mxu0 0.0
  %2377 = vmatprep.subr.mxu0 0.0
  %2378 = vmatpush1.xpose.msra.mxu0 0.0
  %2379 = vmatprep.subr.mxu0 0.0
  %2380 = vmatpush1.xpose.msra.mxu0 0.0
  %2381 = vmatprep.subr.mxu0 0.0
  %2382 = vmatpush1.xpose.msra.mxu0 0.0
  %2383 = vmatprep.subr.mxu0 0.0
  %2384 = vmatpush1.xpose.msra.mxu0 0.0
  %2385 = vmatprep.subr.mxu0 0.0
  %2386 = vmatpush1.xpose.msra.mxu0 0.0
  %2387 = vmatprep.subr.mxu0 0.0
  %2388 = vmatpush1.xpose.msra.mxu0 0.0
  %2389 = vmatprep.subr.mxu0 0.0
  %2390 = vmatpush1.xpose.msra.mxu0 0.0
  %2391 = vmatprep.subr.mxu0 0.0
  %2392 = vmatpush1.xpose.msra.mxu0 0.0
  %2393 = vmatprep.subr.mxu0 0.0
  %2394 = vmatpush1.xpose.msra.mxu0 0.0
  %2395 = vmatprep.mubr.f32.mxu0 0.0
  %2396 = vmatmul.mubr.f32.gmra.mrb[0].mxu0 %v2327
  %v2397 = vpop.f32.mrb[0].mxu0
  %v2398 = vadd.f32 %v160, %v2397
  %v2399 = vpop.f32.mrb[0].mxu0
  %2400 = vdwg.mxu0
  %2401 = vrot.lane.b32.xlu0 %v1990, 120
  %v2402 = vpop.permute.xlu0 %2401
  %2403 = vrot.lane.b32.xlu0 %v1990, 88
  %v2404 = vpop.permute.xlu0 %2403
  %v2405 = vsel %vm170, %v2402, 0
  %v2407 = vsel %vm170, %v2404, 0
  %2409 = vmatprep.subr.mxu0 0.0
  %2410 = vmatpush1.xpose.msra.mxu0 %v2407
  %2411 = vmatprep.subr.mxu0 0.0
  %2412 = vmatpush1.xpose.msra.mxu0 0.0
  %2413 = vmatprep.subr.mxu0 0.0
  %2414 = vmatpush1.xpose.msra.mxu0 0.0
  %2415 = vmatprep.subr.mxu0 0.0
  %2416 = vmatpush1.xpose.msra.mxu0 0.0
  %2417 = vmatprep.subr.mxu0 0.0
  %2418 = vmatpush1.xpose.msra.mxu0 0.0
  %2419 = vmatprep.subr.mxu0 0.0
  %2420 = vmatpush1.xpose.msra.mxu0 0.0
  %2421 = vmatprep.subr.mxu0 0.0
  %2422 = vmatpush1.xpose.msra.mxu0 0.0
  %2423 = vmatprep.subr.mxu0 0.0
  %2424 = vmatpush1.xpose.msra.mxu0 0.0
  %2425 = vmatprep.subr.mxu0 0.0
  %2426 = vmatpush1.xpose.msra.mxu0 0.0
  %2427 = vmatprep.subr.mxu0 0.0
  %2428 = vmatpush1.xpose.msra.mxu0 0.0
  %2429 = vmatprep.subr.mxu0 0.0
  %2430 = vmatpush1.xpose.msra.mxu0 0.0
  %2431 = vmatprep.subr.mxu0 0.0
  %2432 = vmatpush1.xpose.msra.mxu0 0.0
  %2433 = vmatprep.subr.mxu0 0.0
  %2434 = vmatpush1.xpose.msra.mxu0 0.0
  %2435 = vmatprep.subr.mxu0 0.0
  %2436 = vmatpush1.xpose.msra.mxu0 0.0
  %2437 = vmatprep.subr.mxu0 0.0
  %2438 = vmatpush1.xpose.msra.mxu0 0.0
  %2439 = vmatprep.subr.mxu0 0.0
  %2440 = vmatpush1.xpose.msra.mxu0 0.0
  %2441 = vmatprep.subr.mxu0 0.0
  %2442 = vmatpush1.xpose.msra.mxu0 0.0
  %2443 = vmatprep.subr.mxu0 0.0
  %2444 = vmatpush1.xpose.msra.mxu0 0.0
  %2445 = vmatprep.subr.mxu0 0.0
  %2446 = vmatpush1.xpose.msra.mxu0 0.0
  %2447 = vmatprep.subr.mxu0 0.0
  %2448 = vmatpush1.xpose.msra.mxu0 0.0
  %2449 = vmatprep.subr.mxu0 0.0
  %2450 = vmatpush1.xpose.msra.mxu0 0.0
  %2451 = vmatprep.subr.mxu0 0.0
  %2452 = vmatpush1.xpose.msra.mxu0 0.0
  %2453 = vmatprep.subr.mxu0 0.0
  %2454 = vmatpush1.xpose.msra.mxu0 0.0
  %2455 = vmatprep.subr.mxu0 0.0
  %2456 = vmatpush1.xpose.msra.mxu0 0.0
  %2457 = vmatprep.subr.mxu0 0.0
  %2458 = vmatpush1.xpose.msra.mxu0 0.0
  %2459 = vmatprep.subr.mxu0 0.0
  %2460 = vmatpush1.xpose.msra.mxu0 0.0
  %2461 = vmatprep.subr.mxu0 0.0
  %2462 = vmatpush1.xpose.msra.mxu0 0.0
  %2463 = vmatprep.subr.mxu0 0.0
  %2464 = vmatpush1.xpose.msra.mxu0 0.0
  %2465 = vmatprep.subr.mxu0 0.0
  %2466 = vmatpush1.xpose.msra.mxu0 0.0
  %2467 = vmatprep.subr.mxu0 0.0
  %2468 = vmatpush1.xpose.msra.mxu0 0.0
  %2469 = vmatprep.subr.mxu0 0.0
  %2470 = vmatpush1.xpose.msra.mxu0 0.0
  %2471 = vmatprep.subr.mxu0 0.0
  %2472 = vmatpush1.xpose.msra.mxu0 0.0
  %2473 = vmatprep.mubr.f32.mxu0 0.0
  %2474 = vmatmul.mubr.f32.gmra.mrb[0].mxu0 %v2405
  %v2475 = vpop.f32.mrb[0].mxu0
  %v2476 = vadd.f32 %v164, %v2475
  %v2477 = vpop.f32.mrb[0].mxu0
  %2478 = vdwg.mxu0
  %v2479 = vsel %vm170, %v2398, -inf
  %2480 = vmax.xlane.f32.xlu0 %v2479
  %v2481 = vpop.xlane.xlu0 %2480
  %v2482 = vsel %vm170, %v2476, -inf
  %2483 = vmax.xlane.f32.xlu0 %v2482
  %v2484 = vpop.xlane.xlu0 %2483
  %v2485 = vsub.f32 %v2398, %v2481
  %v2486 = vsub.f32 %v2476, %v2484
  %v2487 = vmul.f32 %v2485, 1.442695
  %v2488 = vpow.pop %v2487
  %v2489 = vmul.f32 %v2486, 1.442695
  %v2490 = vpow.pop %v2489
  %v2491 = vsel %vm170, %v2488, 0.0
  %2492 = vadd.xlane.f32.xlu0 %v2491
  %v2493 = vpop.xlane.xlu0 %2492
  %v2494 = vsel %vm170, %v2490, 0.0
  %2495 = vadd.xlane.f32.xlu0 %v2494
  %v2496 = vpop.xlane.xlu0 %2495
  %v2497 = vrcp.pop %v2493
  %v2498 = vrcp.pop %v2496
  %v2499 = vmul.f32 %v2488, %v2497
  %v2500 = vmul.f32 %v2490, %v2498
  %2501 = vrot.lane.b32.xlu0 %v1985, 56
  %v2502 = vpop.permute.xlu0 %2501
  %v2505 = vsel %vm170, %v2499, 0
  %2507 = vmatprep.subr.mxu0 0.0
  %2508 = vmatpush1.msra.mxu0 %v2502
  %2509 = vmatprep.subr.mxu0 0.0
  %2510 = vmatpush1.msra.mxu0 0.0
  %2511 = vmatprep.subr.mxu0 0.0
  %2512 = vmatpush1.msra.mxu0 0.0
  %2513 = vmatprep.subr.mxu0 0.0
  %2514 = vmatpush1.msra.mxu0 0.0
  %2515 = vmatprep.subr.mxu0 0.0
  %2516 = vmatpush1.msra.mxu0 0.0
  %2517 = vmatprep.subr.mxu0 0.0
  %2518 = vmatpush1.msra.mxu0 0.0
  %2519 = vmatprep.subr.mxu0 0.0
  %2520 = vmatpush1.msra.mxu0 0.0
  %2521 = vmatprep.subr.mxu0 0.0
  %2522 = vmatpush1.msra.mxu0 0.0
  %2523 = vmatprep.subr.mxu0 0.0
  %2524 = vmatpush1.msra.mxu0 0.0
  %2525 = vmatprep.subr.mxu0 0.0
  %2526 = vmatpush1.msra.mxu0 0.0
  %2527 = vmatprep.subr.mxu0 0.0
  %2528 = vmatpush1.msra.mxu0 0.0
  %2529 = vmatprep.subr.mxu0 0.0
  %2530 = vmatpush1.msra.mxu0 0.0
  %2531 = vmatprep.subr.mxu0 0.0
  %2532 = vmatpush1.msra.mxu0 0.0
  %2533 = vmatprep.subr.mxu0 0.0
  %2534 = vmatpush1.msra.mxu0 0.0
  %2535 = vmatprep.subr.mxu0 0.0
  %2536 = vmatpush1.msra.mxu0 0.0
  %2537 = vmatprep.subr.mxu0 0.0
  %2538 = vmatpush1.msra.mxu0 0.0
  %2539 = vmatprep.subr.mxu0 0.0
  %2540 = vmatpush1.msra.mxu0 0.0
  %2541 = vmatprep.subr.mxu0 0.0
  %2542 = vmatpush1.msra.mxu0 0.0
  %2543 = vmatprep.subr.mxu0 0.0
  %2544 = vmatpush1.msra.mxu0 0.0
  %2545 = vmatprep.subr.mxu0 0.0
  %2546 = vmatpush1.msra.mxu0 0.0
  %2547 = vmatprep.subr.mxu0 0.0
  %2548 = vmatpush1.msra.mxu0 0.0
  %2549 = vmatprep.subr.mxu0 0.0
  %2550 = vmatpush1.msra.mxu0 0.0
  %2551 = vmatprep.subr.mxu0 0.0
  %2552 = vmatpush1.msra.mxu0 0.0
  %2553 = vmatprep.subr.mxu0 0.0
  %2554 = vmatpush1.msra.mxu0 0.0
  %2555 = vmatprep.subr.mxu0 0.0
  %2556 = vmatpush1.msra.mxu0 0.0
  %2557 = vmatprep.subr.mxu0 0.0
  %2558 = vmatpush1.msra.mxu0 0.0
  %2559 = vmatprep.subr.mxu0 0.0
  %2560 = vmatpush1.msra.mxu0 0.0
  %2561 = vmatprep.subr.mxu0 0.0
  %2562 = vmatpush1.msra.mxu0 0.0
  %2563 = vmatprep.subr.mxu0 0.0
  %2564 = vmatpush1.msra.mxu0 0.0
  %2565 = vmatprep.subr.mxu0 0.0
  %2566 = vmatpush1.msra.mxu0 0.0
  %2567 = vmatprep.subr.mxu0 0.0
  %2568 = vmatpush1.msra.mxu0 0.0
  %2569 = vmatprep.subr.mxu0 0.0
  %2570 = vmatpush1.msra.mxu0 0.0
  %2571 = vmatprep.mubr.f32.mxu0 0.0
  %2572 = vmatmul.mubr.f32.gmra.mrb[0].mxu0 %v2505
  %v2573 = vpop.f32.mrb[0].mxu0
  %v2574 = vadd.f32 0.0, %v2573
  %v2575 = vpop.f32.mrb[0].mxu0
  %2576 = vdwg.mxu0
  %2577 = vrot.lane.b32.xlu0 %v1990, 56
  %v2578 = vpop.permute.xlu0 %2577
  %v2581 = vsel %vm170, %v2500, 0
  %2583 = vmatprep.subr.mxu0 0.0
  %2584 = vmatpush1.msra.mxu0 %v2578
  %2585 = vmatprep.subr.mxu0 0.0
  %2586 = vmatpush1.msra.mxu0 0.0
  %2587 = vmatprep.subr.mxu0 0.0
  %2588 = vmatpush1.msra.mxu0 0.0
  %2589 = vmatprep.subr.mxu0 0.0
  %2590 = vmatpush1.msra.mxu0 0.0
  %2591 = vmatprep.subr.mxu0 0.0
  %2592 = vmatpush1.msra.mxu0 0.0
  %2593 = vmatprep.subr.mxu0 0.0
  %2594 = vmatpush1.msra.mxu0 0.0
  %2595 = vmatprep.subr.mxu0 0.0
  %2596 = vmatpush1.msra.mxu0 0.0
  %2597 = vmatprep.subr.mxu0 0.0
  %2598 = vmatpush1.msra.mxu0 0.0
  %2599 = vmatprep.subr.mxu0 0.0
  %2600 = vmatpush1.msra.mxu0 0.0
  %2601 = vmatprep.subr.mxu0 0.0
  %2602 = vmatpush1.msra.mxu0 0.0
  %2603 = vmatprep.subr.mxu0 0.0
  %2604 = vmatpush1.msra.mxu0 0.0
  %2605 = vmatprep.subr.mxu0 0.0
  %2606 = vmatpush1.msra.mxu0 0.0
  %2607 = vmatprep.subr.mxu0 0.0
  %2608 = vmatpush1.msra.mxu0 0.0
  %2609 = vmatprep.subr.mxu0 0.0
  %2610 = vmatpush1.msra.mxu0 0.0
  %2611 = vmatprep.subr.mxu0 0.0
  %2612 = vmatpush1.msra.mxu0 0.0
  %2613 = vmatprep.subr.mxu0 0.0
  %2614 = vmatpush1.msra.mxu0 0.0
  %2615 = vmatprep.subr.mxu0 0.0
  %2616 = vmatpush1.msra.mxu0 0.0
  %2617 = vmatprep.subr.mxu0 0.0
  %2618 = vmatpush1.msra.mxu0 0.0
  %2619 = vmatprep.subr.mxu0 0.0
  %2620 = vmatpush1.msra.mxu0 0.0
  %2621 = vmatprep.subr.mxu0 0.0
  %2622 = vmatpush1.msra.mxu0 0.0
  %2623 = vmatprep.subr.mxu0 0.0
  %2624 = vmatpush1.msra.mxu0 0.0
  %2625 = vmatprep.subr.mxu0 0.0
  %2626 = vmatpush1.msra.mxu0 0.0
  %2627 = vmatprep.subr.mxu0 0.0
  %2628 = vmatpush1.msra.mxu0 0.0
  %2629 = vmatprep.subr.mxu0 0.0
  %2630 = vmatpush1.msra.mxu0 0.0
  %2631 = vmatprep.subr.mxu0 0.0
  %2632 = vmatpush1.msra.mxu0 0.0
  %2633 = vmatprep.subr.mxu0 0.0
  %2634 = vmatpush1.msra.mxu0 0.0
  %2635 = vmatprep.subr.mxu0 0.0
  %2636 = vmatpush1.msra.mxu0 0.0
  %2637 = vmatprep.subr.mxu0 0.0
  %2638 = vmatpush1.msra.mxu0 0.0
  %2639 = vmatprep.subr.mxu0 0.0
  %2640 = vmatpush1.msra.mxu0 0.0
  %2641 = vmatprep.subr.mxu0 0.0
  %2642 = vmatpush1.msra.mxu0 0.0
  %2643 = vmatprep.subr.mxu0 0.0
  %2644 = vmatpush1.msra.mxu0 0.0
  %2645 = vmatprep.subr.mxu0 0.0
  %2646 = vmatpush1.msra.mxu0 0.0
  %2647 = vmatprep.mubr.f32.mxu0 0.0
  %2648 = vmatmul.mubr.f32.gmra.mrb[0].mxu0 %v2581
  %v2649 = vpop.f32.mrb[0].mxu0
  %v2650 = vadd.f32 0.0, %v2649
  %v2651 = vpop.f32.mrb[0].mxu0
  %2652 = vdwg.mxu0
  %2655 = vrot.lane.b32.xlu0 %v2574, 8
  %v2656 = vpop.permute.xlu0 %2655
  %2657 = vrot.lane.b32.xlu0 %v2650, 8
  %v2658 = vpop.permute.xlu0 %2657
  %2661 = vst.msk [vmem:[#allocation2] sm:$0xff] %vm836, %v2656
  %2662 = vst.msk [vmem:[#allocation2 + $0x8] sm:$0xff] %vm836, %v2658
  %2663 = vrot.lane.b32.xlu0 %v1985, 112
  %v2664 = vpop.permute.xlu0 %2663
  %2665 = vrot.lane.b32.xlu0 %v1985, 80
  %v2666 = vpop.permute.xlu0 %2665
  %v2667 = vsel %vm170, %v2664, 0
  %v2669 = vsel %vm170, %v2666, 0
  %2671 = vmatprep.subr.mxu0 0.0
  %2672 = vmatpush1.xpose.msra.mxu0 %v2669
  %2673 = vmatprep.subr.mxu0 0.0
  %2674 = vmatpush1.xpose.msra.mxu0 0.0
  %2675 = vmatprep.subr.mxu0 0.0
  %2676 = vmatpush1.xpose.msra.mxu0 0.0
  %2677 = vmatprep.subr.mxu0 0.0
  %2678 = vmatpush1.xpose.msra.mxu0 0.0
  %2679 = vmatprep.subr.mxu0 0.0
  %2680 = vmatpush1.xpose.msra.mxu0 0.0
  %2681 = vmatprep.subr.mxu0 0.0
  %2682 = vmatpush1.xpose.msra.mxu0 0.0
  %2683 = vmatprep.subr.mxu0 0.0
  %2684 = vmatpush1.xpose.msra.mxu0 0.0
  %2685 = vmatprep.subr.mxu0 0.0
  %2686 = vmatpush1.xpose.msra.mxu0 0.0
  %2687 = vmatprep.subr.mxu0 0.0
  %2688 = vmatpush1.xpose.msra.mxu0 0.0
  %2689 = vmatprep.subr.mxu0 0.0
  %2690 = vmatpush1.xpose.msra.mxu0 0.0
  %2691 = vmatprep.subr.mxu0 0.0
  %2692 = vmatpush1.xpose.msra.mxu0 0.0
  %2693 = vmatprep.subr.mxu0 0.0
  %2694 = vmatpush1.xpose.msra.mxu0 0.0
  %2695 = vmatprep.subr.mxu0 0.0
  %2696 = vmatpush1.xpose.msra.mxu0 0.0
  %2697 = vmatprep.subr.mxu0 0.0
  %2698 = vmatpush1.xpose.msra.mxu0 0.0
  %2699 = vmatprep.subr.mxu0 0.0
  %2700 = vmatpush1.xpose.msra.mxu0 0.0
  %2701 = vmatprep.subr.mxu0 0.0
  %2702 = vmatpush1.xpose.msra.mxu0 0.0
  %2703 = vmatprep.subr.mxu0 0.0
  %2704 = vmatpush1.xpose.msra.mxu0 0.0
  %2705 = vmatprep.subr.mxu0 0.0
  %2706 = vmatpush1.xpose.msra.mxu0 0.0
  %2707 = vmatprep.subr.mxu0 0.0
  %2708 = vmatpush1.xpose.msra.mxu0 0.0
  %2709 = vmatprep.subr.mxu0 0.0
  %2710 = vmatpush1.xpose.msra.mxu0 0.0
  %2711 = vmatprep.subr.mxu0 0.0
  %2712 = vmatpush1.xpose.msra.mxu0 0.0
  %2713 = vmatprep.subr.mxu0 0.0
  %2714 = vmatpush1.xpose.msra.mxu0 0.0
  %2715 = vmatprep.subr.mxu0 0.0
  %2716 = vmatpush1.xpose.msra.mxu0 0.0
  %2717 = vmatprep.subr.mxu0 0.0
  %2718 = vmatpush1.xpose.msra.mxu0 0.0
  %2719 = vmatprep.subr.mxu0 0.0
  %2720 = vmatpush1.xpose.msra.mxu0 0.0
  %2721 = vmatprep.subr.mxu0 0.0
  %2722 = vmatpush1.xpose.msra.mxu0 0.0
  %2723 = vmatprep.subr.mxu0 0.0
  %2724 = vmatpush1.xpose.msra.mxu0 0.0
  %2725 = vmatprep.subr.mxu0 0.0
  %2726 = vmatpush1.xpose.msra.mxu0 0.0
  %2727 = vmatprep.subr.mxu0 0.0
  %2728 = vmatpush1.xpose.msra.mxu0 0.0
  %2729 = vmatprep.subr.mxu0 0.0
  %2730 = vmatpush1.xpose.msra.mxu0 0.0
  %2731 = vmatprep.subr.mxu0 0.0
  %2732 = vmatpush1.xpose.msra.mxu0 0.0
  %2733 = vmatprep.subr.mxu0 0.0
  %2734 = vmatpush1.xpose.msra.mxu0 0.0
  %2735 = vmatprep.mubr.f32.mxu0 0.0
  %2736 = vmatmul.mubr.f32.gmra.mrb[0].mxu0 %v2667
  %v2737 = vpop.f32.mrb[0].mxu0
  %v2738 = vadd.f32 %v160, %v2737
  %v2739 = vpop.f32.mrb[0].mxu0
  %2740 = vdwg.mxu0
  %2741 = vrot.lane.b32.xlu0 %v1990, 112
  %v2742 = vpop.permute.xlu0 %2741
  %2743 = vrot.lane.b32.xlu0 %v1990, 80
  %v2744 = vpop.permute.xlu0 %2743
  %v2745 = vsel %vm170, %v2742, 0
  %v2747 = vsel %vm170, %v2744, 0
  %2749 = vmatprep.subr.mxu0 0.0
  %2750 = vmatpush1.xpose.msra.mxu0 %v2747
  %2751 = vmatprep.subr.mxu0 0.0
  %2752 = vmatpush1.xpose.msra.mxu0 0.0
  %2753 = vmatprep.subr.mxu0 0.0
  %2754 = vmatpush1.xpose.msra.mxu0 0.0
  %2755 = vmatprep.subr.mxu0 0.0
  %2756 = vmatpush1.xpose.msra.mxu0 0.0
  %2757 = vmatprep.subr.mxu0 0.0
  %2758 = vmatpush1.xpose.msra.mxu0 0.0
  %2759 = vmatprep.subr.mxu0 0.0
  %2760 = vmatpush1.xpose.msra.mxu0 0.0
  %2761 = vmatprep.subr.mxu0 0.0
  %2762 = vmatpush1.xpose.msra.mxu0 0.0
  %2763 = vmatprep.subr.mxu0 0.0
  %2764 = vmatpush1.xpose.msra.mxu0 0.0
  %2765 = vmatprep.subr.mxu0 0.0
  %2766 = vmatpush1.xpose.msra.mxu0 0.0
  %2767 = vmatprep.subr.mxu0 0.0
  %2768 = vmatpush1.xpose.msra.mxu0 0.0
  %2769 = vmatprep.subr.mxu0 0.0
  %2770 = vmatpush1.xpose.msra.mxu0 0.0
  %2771 = vmatprep.subr.mxu0 0.0
  %2772 = vmatpush1.xpose.msra.mxu0 0.0
  %2773 = vmatprep.subr.mxu0 0.0
  %2774 = vmatpush1.xpose.msra.mxu0 0.0
  %2775 = vmatprep.subr.mxu0 0.0
  %2776 = vmatpush1.xpose.msra.mxu0 0.0
  %2777 = vmatprep.subr.mxu0 0.0
  %2778 = vmatpush1.xpose.msra.mxu0 0.0
  %2779 = vmatprep.subr.mxu0 0.0
  %2780 = vmatpush1.xpose.msra.mxu0 0.0
  %2781 = vmatprep.subr.mxu0 0.0
  %2782 = vmatpush1.xpose.msra.mxu0 0.0
  %2783 = vmatprep.subr.mxu0 0.0
  %2784 = vmatpush1.xpose.msra.mxu0 0.0
  %2785 = vmatprep.subr.mxu0 0.0
  %2786 = vmatpush1.xpose.msra.mxu0 0.0
  %2787 = vmatprep.subr.mxu0 0.0
  %2788 = vmatpush1.xpose.msra.mxu0 0.0
  %2789 = vmatprep.subr.mxu0 0.0
  %2790 = vmatpush1.xpose.msra.mxu0 0.0
  %2791 = vmatprep.subr.mxu0 0.0
  %2792 = vmatpush1.xpose.msra.mxu0 0.0
  %2793 = vmatprep.subr.mxu0 0.0
  %2794 = vmatpush1.xpose.msra.mxu0 0.0
  %2795 = vmatprep.subr.mxu0 0.0
  %2796 = vmatpush1.xpose.msra.mxu0 0.0
  %2797 = vmatprep.subr.mxu0 0.0
  %2798 = vmatpush1.xpose.msra.mxu0 0.0
  %2799 = vmatprep.subr.mxu0 0.0
  %2800 = vmatpush1.xpose.msra.mxu0 0.0
  %2801 = vmatprep.subr.mxu0 0.0
  %2802 = vmatpush1.xpose.msra.mxu0 0.0
  %2803 = vmatprep.subr.mxu0 0.0
  %2804 = vmatpush1.xpose.msra.mxu0 0.0
  %2805 = vmatprep.subr.mxu0 0.0
  %2806 = vmatpush1.xpose.msra.mxu0 0.0
  %2807 = vmatprep.subr.mxu0 0.0
  %2808 = vmatpush1.xpose.msra.mxu0 0.0
  %2809 = vmatprep.subr.mxu0 0.0
  %2810 = vmatpush1.xpose.msra.mxu0 0.0
  %2811 = vmatprep.subr.mxu0 0.0
  %2812 = vmatpush1.xpose.msra.mxu0 0.0
  %2813 = vmatprep.mubr.f32.mxu0 0.0
  %2814 = vmatmul.mubr.f32.gmra.mrb[0].mxu0 %v2745
  %v2815 = vpop.f32.mrb[0].mxu0
  %v2816 = vadd.f32 %v164, %v2815
  %v2817 = vpop.f32.mrb[0].mxu0
  %2818 = vdwg.mxu0
  %v2819 = vsel %vm170, %v2738, -inf
  %2820 = vmax.xlane.f32.xlu0 %v2819
  %v2821 = vpop.xlane.xlu0 %2820
  %v2822 = vsel %vm170, %v2816, -inf
  %2823 = vmax.xlane.f32.xlu0 %v2822
  %v2824 = vpop.xlane.xlu0 %2823
  %v2825 = vsub.f32 %v2738, %v2821
  %v2826 = vsub.f32 %v2816, %v2824
  %v2827 = vmul.f32 %v2825, 1.442695
  %v2828 = vpow.pop %v2827
  %v2829 = vmul.f32 %v2826, 1.442695
  %v2830 = vpow.pop %v2829
  %v2831 = vsel %vm170, %v2828, 0.0
  %2832 = vadd.xlane.f32.xlu0 %v2831
  %v2833 = vpop.xlane.xlu0 %2832
  %v2834 = vsel %vm170, %v2830, 0.0
  %2835 = vadd.xlane.f32.xlu0 %v2834
  %v2836 = vpop.xlane.xlu0 %2835
  %v2837 = vrcp.pop %v2833
  %v2838 = vrcp.pop %v2836
  %v2839 = vmul.f32 %v2828, %v2837
  %v2840 = vmul.f32 %v2830, %v2838
  %2841 = vrot.lane.b32.xlu0 %v1985, 48
  %v2842 = vpop.permute.xlu0 %2841
  %v2845 = vsel %vm170, %v2839, 0
  %2847 = vmatprep.subr.mxu0 0.0
  %2848 = vmatpush1.msra.mxu0 %v2842
  %2849 = vmatprep.subr.mxu0 0.0
  %2850 = vmatpush1.msra.mxu0 0.0
  %2851 = vmatprep.subr.mxu0 0.0
  %2852 = vmatpush1.msra.mxu0 0.0
  %2853 = vmatprep.subr.mxu0 0.0
  %2854 = vmatpush1.msra.mxu0 0.0
  %2855 = vmatprep.subr.mxu0 0.0
  %2856 = vmatpush1.msra.mxu0 0.0
  %2857 = vmatprep.subr.mxu0 0.0
  %2858 = vmatpush1.msra.mxu0 0.0
  %2859 = vmatprep.subr.mxu0 0.0
  %2860 = vmatpush1.msra.mxu0 0.0
  %2861 = vmatprep.subr.mxu0 0.0
  %2862 = vmatpush1.msra.mxu0 0.0
  %2863 = vmatprep.subr.mxu0 0.0
  %2864 = vmatpush1.msra.mxu0 0.0
  %2865 = vmatprep.subr.mxu0 0.0
  %2866 = vmatpush1.msra.mxu0 0.0
  %2867 = vmatprep.subr.mxu0 0.0
  %2868 = vmatpush1.msra.mxu0 0.0
  %2869 = vmatprep.subr.mxu0 0.0
  %2870 = vmatpush1.msra.mxu0 0.0
  %2871 = vmatprep.subr.mxu0 0.0
  %2872 = vmatpush1.msra.mxu0 0.0
  %2873 = vmatprep.subr.mxu0 0.0
  %2874 = vmatpush1.msra.mxu0 0.0
  %2875 = vmatprep.subr.mxu0 0.0
  %2876 = vmatpush1.msra.mxu0 0.0
  %2877 = vmatprep.subr.mxu0 0.0
  %2878 = vmatpush1.msra.mxu0 0.0
  %2879 = vmatprep.subr.mxu0 0.0
  %2880 = vmatpush1.msra.mxu0 0.0
  %2881 = vmatprep.subr.mxu0 0.0
  %2882 = vmatpush1.msra.mxu0 0.0
  %2883 = vmatprep.subr.mxu0 0.0
  %2884 = vmatpush1.msra.mxu0 0.0
  %2885 = vmatprep.subr.mxu0 0.0
  %2886 = vmatpush1.msra.mxu0 0.0
  %2887 = vmatprep.subr.mxu0 0.0
  %2888 = vmatpush1.msra.mxu0 0.0
  %2889 = vmatprep.subr.mxu0 0.0
  %2890 = vmatpush1.msra.mxu0 0.0
  %2891 = vmatprep.subr.mxu0 0.0
  %2892 = vmatpush1.msra.mxu0 0.0
  %2893 = vmatprep.subr.mxu0 0.0
  %2894 = vmatpush1.msra.mxu0 0.0
  %2895 = vmatprep.subr.mxu0 0.0
  %2896 = vmatpush1.msra.mxu0 0.0
  %2897 = vmatprep.subr.mxu0 0.0
  %2898 = vmatpush1.msra.mxu0 0.0
  %2899 = vmatprep.subr.mxu0 0.0
  %2900 = vmatpush1.msra.mxu0 0.0
  %2901 = vmatprep.subr.mxu0 0.0
  %2902 = vmatpush1.msra.mxu0 0.0
  %2903 = vmatprep.subr.mxu0 0.0
  %2904 = vmatpush1.msra.mxu0 0.0
  %2905 = vmatprep.subr.mxu0 0.0
  %2906 = vmatpush1.msra.mxu0 0.0
  %2907 = vmatprep.subr.mxu0 0.0
  %2908 = vmatpush1.msra.mxu0 0.0
  %2909 = vmatprep.subr.mxu0 0.0
  %2910 = vmatpush1.msra.mxu0 0.0
  %2911 = vmatprep.mubr.f32.mxu0 0.0
  %2912 = vmatmul.mubr.f32.gmra.mrb[0].mxu0 %v2845
  %v2913 = vpop.f32.mrb[0].mxu0
  %v2914 = vadd.f32 0.0, %v2913
  %v2915 = vpop.f32.mrb[0].mxu0
  %2916 = vdwg.mxu0
  %2917 = vrot.lane.b32.xlu0 %v1990, 48
  %v2918 = vpop.permute.xlu0 %2917
  %v2921 = vsel %vm170, %v2840, 0
  %2923 = vmatprep.subr.mxu0 0.0
  %2924 = vmatpush1.msra.mxu0 %v2918
  %2925 = vmatprep.subr.mxu0 0.0
  %2926 = vmatpush1.msra.mxu0 0.0
  %2927 = vmatprep.subr.mxu0 0.0
  %2928 = vmatpush1.msra.mxu0 0.0
  %2929 = vmatprep.subr.mxu0 0.0
  %2930 = vmatpush1.msra.mxu0 0.0
  %2931 = vmatprep.subr.mxu0 0.0
  %2932 = vmatpush1.msra.mxu0 0.0
  %2933 = vmatprep.subr.mxu0 0.0
  %2934 = vmatpush1.msra.mxu0 0.0
  %2935 = vmatprep.subr.mxu0 0.0
  %2936 = vmatpush1.msra.mxu0 0.0
  %2937 = vmatprep.subr.mxu0 0.0
  %2938 = vmatpush1.msra.mxu0 0.0
  %2939 = vmatprep.subr.mxu0 0.0
  %2940 = vmatpush1.msra.mxu0 0.0
  %2941 = vmatprep.subr.mxu0 0.0
  %2942 = vmatpush1.msra.mxu0 0.0
  %2943 = vmatprep.subr.mxu0 0.0
  %2944 = vmatpush1.msra.mxu0 0.0
  %2945 = vmatprep.subr.mxu0 0.0
  %2946 = vmatpush1.msra.mxu0 0.0
  %2947 = vmatprep.subr.mxu0 0.0
  %2948 = vmatpush1.msra.mxu0 0.0
  %2949 = vmatprep.subr.mxu0 0.0
  %2950 = vmatpush1.msra.mxu0 0.0
  %2951 = vmatprep.subr.mxu0 0.0
  %2952 = vmatpush1.msra.mxu0 0.0
  %2953 = vmatprep.subr.mxu0 0.0
  %2954 = vmatpush1.msra.mxu0 0.0
  %2955 = vmatprep.subr.mxu0 0.0
  %2956 = vmatpush1.msra.mxu0 0.0
  %2957 = vmatprep.subr.mxu0 0.0
  %2958 = vmatpush1.msra.mxu0 0.0
  %2959 = vmatprep.subr.mxu0 0.0
  %2960 = vmatpush1.msra.mxu0 0.0
  %2961 = vmatprep.subr.mxu0 0.0
  %2962 = vmatpush1.msra.mxu0 0.0
  %2963 = vmatprep.subr.mxu0 0.0
  %2964 = vmatpush1.msra.mxu0 0.0
  %2965 = vmatprep.subr.mxu0 0.0
  %2966 = vmatpush1.msra.mxu0 0.0
  %2967 = vmatprep.subr.mxu0 0.0
  %2968 = vmatpush1.msra.mxu0 0.0
  %2969 = vmatprep.subr.mxu0 0.0
  %2970 = vmatpush1.msra.mxu0 0.0
  %2971 = vmatprep.subr.mxu0 0.0
  %2972 = vmatpush1.msra.mxu0 0.0
  %2973 = vmatprep.subr.mxu0 0.0
  %2974 = vmatpush1.msra.mxu0 0.0
  %2975 = vmatprep.subr.mxu0 0.0
  %2976 = vmatpush1.msra.mxu0 0.0
  %2977 = vmatprep.subr.mxu0 0.0
  %2978 = vmatpush1.msra.mxu0 0.0
  %2979 = vmatprep.subr.mxu0 0.0
  %2980 = vmatpush1.msra.mxu0 0.0
  %2981 = vmatprep.subr.mxu0 0.0
  %2982 = vmatpush1.msra.mxu0 0.0
  %2983 = vmatprep.subr.mxu0 0.0
  %2984 = vmatpush1.msra.mxu0 0.0
  %2985 = vmatprep.subr.mxu0 0.0
  %2986 = vmatpush1.msra.mxu0 0.0
  %2987 = vmatprep.mubr.f32.mxu0 0.0
  %2988 = vmatmul.mubr.f32.gmra.mrb[0].mxu0 %v2921
  %v2989 = vpop.f32.mrb[0].mxu0
  %v2990 = vadd.f32 0.0, %v2989
  %v2991 = vpop.f32.mrb[0].mxu0
  %2992 = vdwg.mxu0
  %2995 = vrot.lane.b32.xlu0 %v2914, 16
  %v2996 = vpop.permute.xlu0 %2995
  %2997 = vrot.lane.b32.xlu0 %v2990, 16
  %v2998 = vpop.permute.xlu0 %2997
  %3001 = vst.msk [vmem:[#allocation2] sm:$0xff] %vm1177, %v2996
  %3002 = vst.msk [vmem:[#allocation2 + $0x8] sm:$0xff] %vm1177, %v2998
  %3003 = vrot.lane.b32.xlu0 %v1985, 104
  %v3004 = vpop.permute.xlu0 %3003
  %3005 = vrot.lane.b32.xlu0 %v1985, 72
  %v3006 = vpop.permute.xlu0 %3005
  %v3007 = vsel %vm170, %v3004, 0
  %v3009 = vsel %vm170, %v3006, 0
  %3011 = vmatprep.subr.mxu0 0.0
  %3012 = vmatpush1.xpose.msra.mxu0 %v3009
  %3013 = vmatprep.subr.mxu0 0.0
  %3014 = vmatpush1.xpose.msra.mxu0 0.0
  %3015 = vmatprep.subr.mxu0 0.0
  %3016 = vmatpush1.xpose.msra.mxu0 0.0
  %3017 = vmatprep.subr.mxu0 0.0
  %3018 = vmatpush1.xpose.msra.mxu0 0.0
  %3019 = vmatprep.subr.mxu0 0.0
  %3020 = vmatpush1.xpose.msra.mxu0 0.0
  %3021 = vmatprep.subr.mxu0 0.0
  %3022 = vmatpush1.xpose.msra.mxu0 0.0
  %3023 = vmatprep.subr.mxu0 0.0
  %3024 = vmatpush1.xpose.msra.mxu0 0.0
  %3025 = vmatprep.subr.mxu0 0.0
  %3026 = vmatpush1.xpose.msra.mxu0 0.0
  %3027 = vmatprep.subr.mxu0 0.0
  %3028 = vmatpush1.xpose.msra.mxu0 0.0
  %3029 = vmatprep.subr.mxu0 0.0
  %3030 = vmatpush1.xpose.msra.mxu0 0.0
  %3031 = vmatprep.subr.mxu0 0.0
  %3032 = vmatpush1.xpose.msra.mxu0 0.0
  %3033 = vmatprep.subr.mxu0 0.0
  %3034 = vmatpush1.xpose.msra.mxu0 0.0
  %3035 = vmatprep.subr.mxu0 0.0
  %3036 = vmatpush1.xpose.msra.mxu0 0.0
  %3037 = vmatprep.subr.mxu0 0.0
  %3038 = vmatpush1.xpose.msra.mxu0 0.0
  %3039 = vmatprep.subr.mxu0 0.0
  %3040 = vmatpush1.xpose.msra.mxu0 0.0
  %3041 = vmatprep.subr.mxu0 0.0
  %3042 = vmatpush1.xpose.msra.mxu0 0.0
  %3043 = vmatprep.subr.mxu0 0.0
  %3044 = vmatpush1.xpose.msra.mxu0 0.0
  %3045 = vmatprep.subr.mxu0 0.0
  %3046 = vmatpush1.xpose.msra.mxu0 0.0
  %3047 = vmatprep.subr.mxu0 0.0
  %3048 = vmatpush1.xpose.msra.mxu0 0.0
  %3049 = vmatprep.subr.mxu0 0.0
  %3050 = vmatpush1.xpose.msra.mxu0 0.0
  %3051 = vmatprep.subr.mxu0 0.0
  %3052 = vmatpush1.xpose.msra.mxu0 0.0
  %3053 = vmatprep.subr.mxu0 0.0
  %3054 = vmatpush1.xpose.msra.mxu0 0.0
  %3055 = vmatprep.subr.mxu0 0.0
  %3056 = vmatpush1.xpose.msra.mxu0 0.0
  %3057 = vmatprep.subr.mxu0 0.0
  %3058 = vmatpush1.xpose.msra.mxu0 0.0
  %3059 = vmatprep.subr.mxu0 0.0
  %3060 = vmatpush1.xpose.msra.mxu0 0.0
  %3061 = vmatprep.subr.mxu0 0.0
  %3062 = vmatpush1.xpose.msra.mxu0 0.0
  %3063 = vmatprep.subr.mxu0 0.0
  %3064 = vmatpush1.xpose.msra.mxu0 0.0
  %3065 = vmatprep.subr.mxu0 0.0
  %3066 = vmatpush1.xpose.msra.mxu0 0.0
  %3067 = vmatprep.subr.mxu0 0.0
  %3068 = vmatpush1.xpose.msra.mxu0 0.0
  %3069 = vmatprep.subr.mxu0 0.0
  %3070 = vmatpush1.xpose.msra.mxu0 0.0
  %3071 = vmatprep.subr.mxu0 0.0
  %3072 = vmatpush1.xpose.msra.mxu0 0.0
  %3073 = vmatprep.subr.mxu0 0.0
  %3074 = vmatpush1.xpose.msra.mxu0 0.0
  %3075 = vmatprep.mubr.f32.mxu0 0.0
  %3076 = vmatmul.mubr.f32.gmra.mrb[0].mxu0 %v3007
  %v3077 = vpop.f32.mrb[0].mxu0
  %v3078 = vadd.f32 %v160, %v3077
  %v3079 = vpop.f32.mrb[0].mxu0
  %3080 = vdwg.mxu0
  %3081 = vrot.lane.b32.xlu0 %v1990, 104
  %v3082 = vpop.permute.xlu0 %3081
  %3083 = vrot.lane.b32.xlu0 %v1990, 72
  %v3084 = vpop.permute.xlu0 %3083
  %v3085 = vsel %vm170, %v3082, 0
  %v3087 = vsel %vm170, %v3084, 0
  %3089 = vmatprep.subr.mxu0 0.0
  %3090 = vmatpush1.xpose.msra.mxu0 %v3087
  %3091 = vmatprep.subr.mxu0 0.0
  %3092 = vmatpush1.xpose.msra.mxu0 0.0
  %3093 = vmatprep.subr.mxu0 0.0
  %3094 = vmatpush1.xpose.msra.mxu0 0.0
  %3095 = vmatprep.subr.mxu0 0.0
  %3096 = vmatpush1.xpose.msra.mxu0 0.0
  %3097 = vmatprep.subr.mxu0 0.0
  %3098 = vmatpush1.xpose.msra.mxu0 0.0
  %3099 = vmatprep.subr.mxu0 0.0
  %3100 = vmatpush1.xpose.msra.mxu0 0.0
  %3101 = vmatprep.subr.mxu0 0.0
  %3102 = vmatpush1.xpose.msra.mxu0 0.0
  %3103 = vmatprep.subr.mxu0 0.0
  %3104 = vmatpush1.xpose.msra.mxu0 0.0
  %3105 = vmatprep.subr.mxu0 0.0
  %3106 = vmatpush1.xpose.msra.mxu0 0.0
  %3107 = vmatprep.subr.mxu0 0.0
  %3108 = vmatpush1.xpose.msra.mxu0 0.0
  %3109 = vmatprep.subr.mxu0 0.0
  %3110 = vmatpush1.xpose.msra.mxu0 0.0
  %3111 = vmatprep.subr.mxu0 0.0
  %3112 = vmatpush1.xpose.msra.mxu0 0.0
  %3113 = vmatprep.subr.mxu0 0.0
  %3114 = vmatpush1.xpose.msra.mxu0 0.0
  %3115 = vmatprep.subr.mxu0 0.0
  %3116 = vmatpush1.xpose.msra.mxu0 0.0
  %3117 = vmatprep.subr.mxu0 0.0
  %3118 = vmatpush1.xpose.msra.mxu0 0.0
  %3119 = vmatprep.subr.mxu0 0.0
  %3120 = vmatpush1.xpose.msra.mxu0 0.0
  %3121 = vmatprep.subr.mxu0 0.0
  %3122 = vmatpush1.xpose.msra.mxu0 0.0
  %3123 = vmatprep.subr.mxu0 0.0
  %3124 = vmatpush1.xpose.msra.mxu0 0.0
  %3125 = vmatprep.subr.mxu0 0.0
  %3126 = vmatpush1.xpose.msra.mxu0 0.0
  %3127 = vmatprep.subr.mxu0 0.0
  %3128 = vmatpush1.xpose.msra.mxu0 0.0
  %3129 = vmatprep.subr.mxu0 0.0
  %3130 = vmatpush1.xpose.msra.mxu0 0.0
  %3131 = vmatprep.subr.mxu0 0.0
  %3132 = vmatpush1.xpose.msra.mxu0 0.0
  %3133 = vmatprep.subr.mxu0 0.0
  %3134 = vmatpush1.xpose.msra.mxu0 0.0
  %3135 = vmatprep.subr.mxu0 0.0
  %3136 = vmatpush1.xpose.msra.mxu0 0.0
  %3137 = vmatprep.subr.mxu0 0.0
  %3138 = vmatpush1.xpose.msra.mxu0 0.0
  %3139 = vmatprep.subr.mxu0 0.0
  %3140 = vmatpush1.xpose.msra.mxu0 0.0
  %3141 = vmatprep.subr.mxu0 0.0
  %3142 = vmatpush1.xpose.msra.mxu0 0.0
  %3143 = vmatprep.subr.mxu0 0.0
  %3144 = vmatpush1.xpose.msra.mxu0 0.0
  %3145 = vmatprep.subr.mxu0 0.0
  %3146 = vmatpush1.xpose.msra.mxu0 0.0
  %3147 = vmatprep.subr.mxu0 0.0
  %3148 = vmatpush1.xpose.msra.mxu0 0.0
  %3149 = vmatprep.subr.mxu0 0.0
  %3150 = vmatpush1.xpose.msra.mxu0 0.0
  %3151 = vmatprep.subr.mxu0 0.0
  %3152 = vmatpush1.xpose.msra.mxu0 0.0
  %3153 = vmatprep.mubr.f32.mxu0 0.0
  %3154 = vmatmul.mubr.f32.gmra.mrb[0].mxu0 %v3085
  %v3155 = vpop.f32.mrb[0].mxu0
  %v3156 = vadd.f32 %v164, %v3155
  %v3157 = vpop.f32.mrb[0].mxu0
  %3158 = vdwg.mxu0
  %v3159 = vsel %vm170, %v3078, -inf
  %3160 = vmax.xlane.f32.xlu0 %v3159
  %v3161 = vpop.xlane.xlu0 %3160
  %v3162 = vsel %vm170, %v3156, -inf
  %3163 = vmax.xlane.f32.xlu0 %v3162
  %v3164 = vpop.xlane.xlu0 %3163
  %v3165 = vsub.f32 %v3078, %v3161
  %v3166 = vsub.f32 %v3156, %v3164
  %v3167 = vmul.f32 %v3165, 1.442695
  %v3168 = vpow.pop %v3167
  %v3169 = vmul.f32 %v3166, 1.442695
  %v3170 = vpow.pop %v3169
  %v3171 = vsel %vm170, %v3168, 0.0
  %3172 = vadd.xlane.f32.xlu0 %v3171
  %v3173 = vpop.xlane.xlu0 %3172
  %v3174 = vsel %vm170, %v3170, 0.0
  %3175 = vadd.xlane.f32.xlu0 %v3174
  %v3176 = vpop.xlane.xlu0 %3175
  %v3177 = vrcp.pop %v3173
  %v3178 = vrcp.pop %v3176
  %v3179 = vmul.f32 %v3168, %v3177
  %v3180 = vmul.f32 %v3170, %v3178
  %3181 = vrot.lane.b32.xlu0 %v1985, 40
  %v3182 = vpop.permute.xlu0 %3181
  %v3185 = vsel %vm170, %v3179, 0
  %3187 = vmatprep.subr.mxu0 0.0
  %3188 = vmatpush1.msra.mxu0 %v3182
  %3189 = vmatprep.subr.mxu0 0.0
  %3190 = vmatpush1.msra.mxu0 0.0
  %3191 = vmatprep.subr.mxu0 0.0
  %3192 = vmatpush1.msra.mxu0 0.0
  %3193 = vmatprep.subr.mxu0 0.0
  %3194 = vmatpush1.msra.mxu0 0.0
  %3195 = vmatprep.subr.mxu0 0.0
  %3196 = vmatpush1.msra.mxu0 0.0
  %3197 = vmatprep.subr.mxu0 0.0
  %3198 = vmatpush1.msra.mxu0 0.0
  %3199 = vmatprep.subr.mxu0 0.0
  %3200 = vmatpush1.msra.mxu0 0.0
  %3201 = vmatprep.subr.mxu0 0.0
  %3202 = vmatpush1.msra.mxu0 0.0
  %3203 = vmatprep.subr.mxu0 0.0
  %3204 = vmatpush1.msra.mxu0 0.0
  %3205 = vmatprep.subr.mxu0 0.0
  %3206 = vmatpush1.msra.mxu0 0.0
  %3207 = vmatprep.subr.mxu0 0.0
  %3208 = vmatpush1.msra.mxu0 0.0
  %3209 = vmatprep.subr.mxu0 0.0
  %3210 = vmatpush1.msra.mxu0 0.0
  %3211 = vmatprep.subr.mxu0 0.0
  %3212 = vmatpush1.msra.mxu0 0.0
  %3213 = vmatprep.subr.mxu0 0.0
  %3214 = vmatpush1.msra.mxu0 0.0
  %3215 = vmatprep.subr.mxu0 0.0
  %3216 = vmatpush1.msra.mxu0 0.0
  %3217 = vmatprep.subr.mxu0 0.0
  %3218 = vmatpush1.msra.mxu0 0.0
  %3219 = vmatprep.subr.mxu0 0.0
  %3220 = vmatpush1.msra.mxu0 0.0
  %3221 = vmatprep.subr.mxu0 0.0
  %3222 = vmatpush1.msra.mxu0 0.0
  %3223 = vmatprep.subr.mxu0 0.0
  %3224 = vmatpush1.msra.mxu0 0.0
  %3225 = vmatprep.subr.mxu0 0.0
  %3226 = vmatpush1.msra.mxu0 0.0
  %3227 = vmatprep.subr.mxu0 0.0
  %3228 = vmatpush1.msra.mxu0 0.0
  %3229 = vmatprep.subr.mxu0 0.0
  %3230 = vmatpush1.msra.mxu0 0.0
  %3231 = vmatprep.subr.mxu0 0.0
  %3232 = vmatpush1.msra.mxu0 0.0
  %3233 = vmatprep.subr.mxu0 0.0
  %3234 = vmatpush1.msra.mxu0 0.0
  %3235 = vmatprep.subr.mxu0 0.0
  %3236 = vmatpush1.msra.mxu0 0.0
  %3237 = vmatprep.subr.mxu0 0.0
  %3238 = vmatpush1.msra.mxu0 0.0
  %3239 = vmatprep.subr.mxu0 0.0
  %3240 = vmatpush1.msra.mxu0 0.0
  %3241 = vmatprep.subr.mxu0 0.0
  %3242 = vmatpush1.msra.mxu0 0.0
  %3243 = vmatprep.subr.mxu0 0.0
  %3244 = vmatpush1.msra.mxu0 0.0
  %3245 = vmatprep.subr.mxu0 0.0
  %3246 = vmatpush1.msra.mxu0 0.0
  %3247 = vmatprep.subr.mxu0 0.0
  %3248 = vmatpush1.msra.mxu0 0.0
  %3249 = vmatprep.subr.mxu0 0.0
  %3250 = vmatpush1.msra.mxu0 0.0
  %3251 = vmatprep.mubr.f32.mxu0 0.0
  %3252 = vmatmul.mubr.f32.gmra.mrb[0].mxu0 %v3185
  %v3253 = vpop.f32.mrb[0].mxu0
  %v3254 = vadd.f32 0.0, %v3253
  %v3255 = vpop.f32.mrb[0].mxu0
  %3256 = vdwg.mxu0
  %3257 = vrot.lane.b32.xlu0 %v1990, 40
  %v3258 = vpop.permute.xlu0 %3257
  %v3261 = vsel %vm170, %v3180, 0
  %3263 = vmatprep.subr.mxu0 0.0
  %3264 = vmatpush1.msra.mxu0 %v3258
  %3265 = vmatprep.subr.mxu0 0.0
  %3266 = vmatpush1.msra.mxu0 0.0
  %3267 = vmatprep.subr.mxu0 0.0
  %3268 = vmatpush1.msra.mxu0 0.0
  %3269 = vmatprep.subr.mxu0 0.0
  %3270 = vmatpush1.msra.mxu0 0.0
  %3271 = vmatprep.subr.mxu0 0.0
  %3272 = vmatpush1.msra.mxu0 0.0
  %3273 = vmatprep.subr.mxu0 0.0
  %3274 = vmatpush1.msra.mxu0 0.0
  %3275 = vmatprep.subr.mxu0 0.0
  %3276 = vmatpush1.msra.mxu0 0.0
  %3277 = vmatprep.subr.mxu0 0.0
  %3278 = vmatpush1.msra.mxu0 0.0
  %3279 = vmatprep.subr.mxu0 0.0
  %3280 = vmatpush1.msra.mxu0 0.0
  %3281 = vmatprep.subr.mxu0 0.0
  %3282 = vmatpush1.msra.mxu0 0.0
  %3283 = vmatprep.subr.mxu0 0.0
  %3284 = vmatpush1.msra.mxu0 0.0
  %3285 = vmatprep.subr.mxu0 0.0
  %3286 = vmatpush1.msra.mxu0 0.0
  %3287 = vmatprep.subr.mxu0 0.0
  %3288 = vmatpush1.msra.mxu0 0.0
  %3289 = vmatprep.subr.mxu0 0.0
  %3290 = vmatpush1.msra.mxu0 0.0
  %3291 = vmatprep.subr.mxu0 0.0
  %3292 = vmatpush1.msra.mxu0 0.0
  %3293 = vmatprep.subr.mxu0 0.0
  %3294 = vmatpush1.msra.mxu0 0.0
  %3295 = vmatprep.subr.mxu0 0.0
  %3296 = vmatpush1.msra.mxu0 0.0
  %3297 = vmatprep.subr.mxu0 0.0
  %3298 = vmatpush1.msra.mxu0 0.0
  %3299 = vmatprep.subr.mxu0 0.0
  %3300 = vmatpush1.msra.mxu0 0.0
  %3301 = vmatprep.subr.mxu0 0.0
  %3302 = vmatpush1.msra.mxu0 0.0
  %3303 = vmatprep.subr.mxu0 0.0
  %3304 = vmatpush1.msra.mxu0 0.0
  %3305 = vmatprep.subr.mxu0 0.0
  %3306 = vmatpush1.msra.mxu0 0.0
  %3307 = vmatprep.subr.mxu0 0.0
  %3308 = vmatpush1.msra.mxu0 0.0
  %3309 = vmatprep.subr.mxu0 0.0
  %3310 = vmatpush1.msra.mxu0 0.0
  %3311 = vmatprep.subr.mxu0 0.0
  %3312 = vmatpush1.msra.mxu0 0.0
  %3313 = vmatprep.subr.mxu0 0.0
  %3314 = vmatpush1.msra.mxu0 0.0
  %3315 = vmatprep.subr.mxu0 0.0
  %3316 = vmatpush1.msra.mxu0 0.0
  %3317 = vmatprep.subr.mxu0 0.0
  %3318 = vmatpush1.msra.mxu0 0.0
  %3319 = vmatprep.subr.mxu0 0.0
  %3320 = vmatpush1.msra.mxu0 0.0
  %3321 = vmatprep.subr.mxu0 0.0
  %3322 = vmatpush1.msra.mxu0 0.0
  %3323 = vmatprep.subr.mxu0 0.0
  %3324 = vmatpush1.msra.mxu0 0.0
  %3325 = vmatprep.subr.mxu0 0.0
  %3326 = vmatpush1.msra.mxu0 0.0
  %3327 = vmatprep.mubr.f32.mxu0 0.0
  %3328 = vmatmul.mubr.f32.gmra.mrb[0].mxu0 %v3261
  %v3329 = vpop.f32.mrb[0].mxu0
  %v3330 = vadd.f32 0.0, %v3329
  %v3331 = vpop.f32.mrb[0].mxu0
  %3332 = vdwg.mxu0
  %3335 = vrot.lane.b32.xlu0 %v3254, 24
  %v3336 = vpop.permute.xlu0 %3335
  %3337 = vrot.lane.b32.xlu0 %v3330, 24
  %v3338 = vpop.permute.xlu0 %3337
  %3341 = vst.msk [vmem:[#allocation2] sm:$0xff] %vm1518, %v3336
  %3342 = vst.msk [vmem:[#allocation2 + $0x8] sm:$0xff] %vm1518, %v3338
  %v3343 = vld [vmem:[#allocation2] sm:$0xff]
  %v3344 = vld [vmem:[#allocation2 + $0x8] sm:$0xff]
  %s3345 = scalar_lea.vmem %s5, 32
  %v3346 = vld [vmem:[%s3345] sm:$0xff]
  %v3347 = vld [vmem:[%s3345 + $0x8] sm:$0xff]
  %v3348 = vld [vmem:[%s3345 + $0x10] sm:$0xff]
  %v3349 = vld [vmem:[%s3345 + $0x18] sm:$0xff]
  %s3350 = scalar_lea.vmem %s6, 1
  %v3351 = vld [vmem:[%s3350] sm:$0x1]
  %v3353 = vlaneseq
  %v3354 = vshrl.u32 %v3353, 7
  %v3355 = vsub.s32 0, %v3354
  %v3356 = vrot.slane %v3351, %v3355
  %v3359 = vsel %vm73, %v3343, 0
  %v3362 = vsel %vm73, %v3344, 0
  %3364 = vmatprep.subr.mxu0 0.0
  %3365 = vmatpush1.msra.mxu0 %v3346
  %3366 = vmatprep.subr.mxu0 0.0
  %3367 = vmatpush1.msra.mxu0 %v3347
  %3368 = vmatprep.subr.mxu0 0.0
  %3369 = vmatpush1.msra.mxu0 %v3348
  %3370 = vmatprep.subr.mxu0 0.0
  %3371 = vmatpush1.msra.mxu0 %v3349
  %3372 = vmatprep.subr.mxu0 0.0
  %3373 = vmatpush1.msra.mxu0 0.0
  %3374 = vmatprep.subr.mxu0 0.0
  %3375 = vmatpush1.msra.mxu0 0.0
  %3376 = vmatprep.subr.mxu0 0.0
  %3377 = vmatpush1.msra.mxu0 0.0
  %3378 = vmatprep.subr.mxu0 0.0
  %3379 = vmatpush1.msra.mxu0 0.0
  %3380 = vmatprep.subr.mxu0 0.0
  %3381 = vmatpush1.msra.mxu0 0.0
  %3382 = vmatprep.subr.mxu0 0.0
  %3383 = vmatpush1.msra.mxu0 0.0
  %3384 = vmatprep.subr.mxu0 0.0
  %3385 = vmatpush1.msra.mxu0 0.0
  %3386 = vmatprep.subr.mxu0 0.0
  %3387 = vmatpush1.msra.mxu0 0.0
  %3388 = vmatprep.subr.mxu0 0.0
  %3389 = vmatpush1.msra.mxu0 0.0
  %3390 = vmatprep.subr.mxu0 0.0
  %3391 = vmatpush1.msra.mxu0 0.0
  %3392 = vmatprep.subr.mxu0 0.0
  %3393 = vmatpush1.msra.mxu0 0.0
  %3394 = vmatprep.subr.mxu0 0.0
  %3395 = vmatpush1.msra.mxu0 0.0
  %3396 = vmatprep.subr.mxu0 0.0
  %3397 = vmatpush1.msra.mxu0 0.0
  %3398 = vmatprep.subr.mxu0 0.0
  %3399 = vmatpush1.msra.mxu0 0.0
  %3400 = vmatprep.subr.mxu0 0.0
  %3401 = vmatpush1.msra.mxu0 0.0
  %3402 = vmatprep.subr.mxu0 0.0
  %3403 = vmatpush1.msra.mxu0 0.0
  %3404 = vmatprep.subr.mxu0 0.0
  %3405 = vmatpush1.msra.mxu0 0.0
  %3406 = vmatprep.subr.mxu0 0.0
  %3407 = vmatpush1.msra.mxu0 0.0
  %3408 = vmatprep.subr.mxu0 0.0
  %3409 = vmatpush1.msra.mxu0 0.0
  %3410 = vmatprep.subr.mxu0 0.0
  %3411 = vmatpush1.msra.mxu0 0.0
  %3412 = vmatprep.subr.mxu0 0.0
  %3413 = vmatpush1.msra.mxu0 0.0
  %3414 = vmatprep.subr.mxu0 0.0
  %3415 = vmatpush1.msra.mxu0 0.0
  %3416 = vmatprep.subr.mxu0 0.0
  %3417 = vmatpush1.msra.mxu0 0.0
  %3418 = vmatprep.subr.mxu0 0.0
  %3419 = vmatpush1.msra.mxu0 0.0
  %3420 = vmatprep.subr.mxu0 0.0
  %3421 = vmatpush1.msra.mxu0 0.0
  %3422 = vmatprep.subr.mxu0 0.0
  %3423 = vmatpush1.msra.mxu0 0.0
  %3424 = vmatprep.subr.mxu0 0.0
  %3425 = vmatpush1.msra.mxu0 0.0
  %3426 = vmatprep.subr.mxu0 0.0
  %3427 = vmatpush1.msra.mxu0 0.0
  %3428 = vmatprep.mubr.f32.mxu0 0.0
  %3429 = vmatmul.mubr.f32.gmra.mrb[0].mxu0 %v3359
  %v3430 = vpop.f32.mrb[0].mxu0
  %v3431 = vadd.f32 %v3356, %v3430
  %v3432 = vpop.f32.mrb[0].mxu0
  %3433 = vmatprep.mubr.f32.mxu0 0.0
  %3434 = vmatmul.mubr.f32.gmra.mrb[0].mxu0 %v3362
  %v3435 = vpop.f32.mrb[0].mxu0
  %v3436 = vadd.f32 %v3356, %v3435
  %v3437 = vpop.f32.mrb[0].mxu0
  %3438 = vdwg.mxu0
  %v3439 = vadd.f32 %v1897, %v3431
  %v3440 = vadd.f32 %v1898, %v3436
  %s3441 = scalar_lea.vmem %s7, 1
  %v3442 = vld [vmem:[%s3441] sm:$0x1]
  %s3443 = scalar_lea.vmem %s8, 1
  %v3444 = vld [vmem:[%s3443] sm:$0x1]
  %v3445 = vsel %vm73, %v3439, 0.0
  %3446 = vadd.xlane.f32.xlu0 %v3445
  %v3447 = vpop.xlane.xlu0 %3446
  %v3448 = vsel %vm73, %v3440, 0.0
  %3449 = vadd.xlane.f32.xlu0 %v3448
  %v3450 = vpop.xlane.xlu0 %3449
  %v3451 = vmul.f32 %v3447, %v1625
  %v3452 = vmul.f32 %v3450, %v1625
  %v3453 = vsub.f32 %v3439, %v3451
  %v3454 = vsub.f32 %v3440, %v3452
  %v3455 = vmul.f32 %v3453, %v3453
  %v3456 = vmul.f32 %v3454, %v3454
  %v3457 = vsel %vm73, %v3455, 0.0
  %3458 = vadd.xlane.f32.xlu0 %v3457
  %v3459 = vpop.xlane.xlu0 %3458
  %v3460 = vsel %vm73, %v3456, 0.0
  %3461 = vadd.xlane.f32.xlu0 %v3460
  %v3462 = vpop.xlane.xlu0 %3461
  %v3463 = vmul.f32 %v3459, %v1625
  %v3464 = vmul.f32 %v3462, %v1625
  %v3465 = vadd.f32 %v3463, 1e-05
  %v3466 = vadd.f32 %v3464, 1e-05
  %v3467 = vrsqrt.pop %v3465
  %v3468 = vrsqrt.pop %v3466
  %v3469 = vmul.f32 %v3453, %v3467
  %v3470 = vmul.f32 %v3454, %v3468
  %v3472 = vlaneseq
  %v3473 = vshrl.u32 %v3472, 7
  %v3474 = vsub.s32 0, %v3473
  %v3475 = vrot.slane %v3442, %v3474
  %v3477 = vmul.f32 %v3469, %v3475
  %v3478 = vmul.f32 %v3470, %v3475
  %v3480 = vlaneseq
  %v3481 = vshrl.u32 %v3480, 7
  %v3482 = vsub.s32 0, %v3481
  %v3483 = vrot.slane %v3444, %v3482
  %v3485 = vadd.f32 %v3477, %v3483
  %v3486 = vadd.f32 %v3478, %v3483
  %s3487 = scalar_lea.vmem %s9, 32
  %v3488 = vld [vmem:[%s3487] sm:$0xff]
  %v3489 = vld [vmem:[%s3487 + $0x8] sm:$0xff]
  %v3490 = vld [vmem:[%s3487 + $0x10] sm:$0xff]
  %v3491 = vld [vmem:[%s3487 + $0x18] sm:$0xff]
  %s3492 = scalar_lea.vmem %s10, 1
  %v3493 = vld [vmem:[%s3492] sm:$0x1]
  %v3495 = vlaneseq
  %v3496 = vshrl.u32 %v3495, 7
  %v3497 = vsub.s32 0, %v3496
  %v3498 = vrot.slane %v3493, %v3497
  %v3501 = vsel %vm73, %v3485, 0
  %v3504 = vsel %vm73, %v3486, 0
  %3506 = vmatprep.subr.mxu0 0.0
  %3507 = vmatpush1.msra.mxu0 %v3488
  %3508 = vmatprep.subr.mxu0 0.0
  %3509 = vmatpush1.msra.mxu0 %v3489
  %3510 = vmatprep.subr.mxu0 0.0
  %3511 = vmatpush1.msra.mxu0 %v3490
  %3512 = vmatprep.subr.mxu0 0.0
  %3513 = vmatpush1.msra.mxu0 %v3491
  %3514 = vmatprep.subr.mxu0 0.0
  %3515 = vmatpush1.msra.mxu0 0.0
  %3516 = vmatprep.subr.mxu0 0.0
  %3517 = vmatpush1.msra.mxu0 0.0
  %3518 = vmatprep.subr.mxu0 0.0
  %3519 = vmatpush1.msra.mxu0 0.0
  %3520 = vmatprep.subr.mxu0 0.0
  %3521 = vmatpush1.msra.mxu0 0.0
  %3522 = vmatprep.subr.mxu0 0.0
  %3523 = vmatpush1.msra.mxu0 0.0
  %3524 = vmatprep.subr.mxu0 0.0
  %3525 = vmatpush1.msra.mxu0 0.0
  %3526 = vmatprep.subr.mxu0 0.0
  %3527 = vmatpush1.msra.mxu0 0.0
  %3528 = vmatprep.subr.mxu0 0.0
  %3529 = vmatpush1.msra.mxu0 0.0
  %3530 = vmatprep.subr.mxu0 0.0
  %3531 = vmatpush1.msra.mxu0 0.0
  %3532 = vmatprep.subr.mxu0 0.0
  %3533 = vmatpush1.msra.mxu0 0.0
  %3534 = vmatprep.subr.mxu0 0.0
  %3535 = vmatpush1.msra.mxu0 0.0
  %3536 = vmatprep.subr.mxu0 0.0
  %3537 = vmatpush1.msra.mxu0 0.0
  %3538 = vmatprep.subr.mxu0 0.0
  %3539 = vmatpush1.msra.mxu0 0.0
  %3540 = vmatprep.subr.mxu0 0.0
  %3541 = vmatpush1.msra.mxu0 0.0
  %3542 = vmatprep.subr.mxu0 0.0
  %3543 = vmatpush1.msra.mxu0 0.0
  %3544 = vmatprep.subr.mxu0 0.0
  %3545 = vmatpush1.msra.mxu0 0.0
  %3546 = vmatprep.subr.mxu0 0.0
  %3547 = vmatpush1.msra.mxu0 0.0
  %3548 = vmatprep.subr.mxu0 0.0
  %3549 = vmatpush1.msra.mxu0 0.0
  %3550 = vmatprep.subr.mxu0 0.0
  %3551 = vmatpush1.msra.mxu0 0.0
  %3552 = vmatprep.subr.mxu0 0.0
  %3553 = vmatpush1.msra.mxu0 0.0
  %3554 = vmatprep.subr.mxu0 0.0
  %3555 = vmatpush1.msra.mxu0 0.0
  %3556 = vmatprep.subr.mxu0 0.0
  %3557 = vmatpush1.msra.mxu0 0.0
  %3558 = vmatprep.subr.mxu0 0.0
  %3559 = vmatpush1.msra.mxu0 0.0
  %3560 = vmatprep.subr.mxu0 0.0
  %3561 = vmatpush1.msra.mxu0 0.0
  %3562 = vmatprep.subr.mxu0 0.0
  %3563 = vmatpush1.msra.mxu0 0.0
  %3564 = vmatprep.subr.mxu0 0.0
  %3565 = vmatpush1.msra.mxu0 0.0
  %3566 = vmatprep.subr.mxu0 0.0
  %3567 = vmatpush1.msra.mxu0 0.0
  %3568 = vmatprep.subr.mxu0 0.0
  %3569 = vmatpush1.msra.mxu0 0.0
  %3570 = vmatprep.mubr.f32.mxu0 0.0
  %3571 = vmatmul.mubr.f32.gmra.mrb[0].mxu0 %v3501
  %v3572 = vpop.f32.mrb[0].mxu0
  %v3573 = vadd.f32 %v3498, %v3572
  %v3574 = vpop.f32.mrb[0].mxu0
  %3575 = vmatprep.mubr.f32.mxu0 0.0
  %3576 = vmatmul.mubr.f32.gmra.mrb[0].mxu0 %v3504
  %v3577 = vpop.f32.mrb[0].mxu0
  %v3578 = vadd.f32 %v3498, %v3577
  %v3579 = vpop.f32.mrb[0].mxu0
  %3580 = vdwg.mxu0
  %v3581 = vmax.f32 %v3573, 0.0
  %v3582 = vmax.f32 %v3578, 0.0
  %s3583 = scalar_lea.vmem %s11, 64
  %v3584 = vld [vmem:[%s3583] sm:$0xff]
  %v3585 = vld [vmem:[%s3583 + $0x8] sm:$0xff]
  %v3586 = vld [vmem:[%s3583 + $0x10] sm:$0xff]
  %v3587 = vld [vmem:[%s3583 + $0x18] sm:$0xff]
  %v3588 = vld [vmem:[%s3583 + $0x20] sm:$0xff]
  %v3589 = vld [vmem:[%s3583 + $0x28] sm:$0xff]
  %v3590 = vld [vmem:[%s3583 + $0x30] sm:$0xff]
  %v3591 = vld [vmem:[%s3583 + $0x38] sm:$0xff]
  %s3592 = scalar_lea.vmem %s12, 1
  %v3593 = vld [vmem:[%s3592] sm:$0x1]
  %v3595 = vlaneseq
  %v3596 = vshrl.u32 %v3595, 7
  %v3597 = vsub.s32 0, %v3596
  %v3598 = vrot.slane %v3593, %v3597
  %v3601 = vsel %vm1771, %v3581, 0
  %v3604 = vsel %vm1771, %v3582, 0
  %3606 = vmatprep.subr.mxu0 0.0
  %3607 = vmatpush1.msra.mxu0 %v3584
  %3608 = vmatprep.subr.mxu0 0.0
  %3609 = vmatpush1.msra.mxu0 %v3585
  %3610 = vmatprep.subr.mxu0 0.0
  %3611 = vmatpush1.msra.mxu0 %v3586
  %3612 = vmatprep.subr.mxu0 0.0
  %3613 = vmatpush1.msra.mxu0 %v3587
  %3614 = vmatprep.subr.mxu0 0.0
  %3615 = vmatpush1.msra.mxu0 %v3588
  %3616 = vmatprep.subr.mxu0 0.0
  %3617 = vmatpush1.msra.mxu0 %v3589
  %3618 = vmatprep.subr.mxu0 0.0
  %3619 = vmatpush1.msra.mxu0 %v3590
  %3620 = vmatprep.subr.mxu0 0.0
  %3621 = vmatpush1.msra.mxu0 %v3591
  %3622 = vmatprep.subr.mxu0 0.0
  %3623 = vmatpush1.msra.mxu0 0.0
  %3624 = vmatprep.subr.mxu0 0.0
  %3625 = vmatpush1.msra.mxu0 0.0
  %3626 = vmatprep.subr.mxu0 0.0
  %3627 = vmatpush1.msra.mxu0 0.0
  %3628 = vmatprep.subr.mxu0 0.0
  %3629 = vmatpush1.msra.mxu0 0.0
  %3630 = vmatprep.subr.mxu0 0.0
  %3631 = vmatpush1.msra.mxu0 0.0
  %3632 = vmatprep.subr.mxu0 0.0
  %3633 = vmatpush1.msra.mxu0 0.0
  %3634 = vmatprep.subr.mxu0 0.0
  %3635 = vmatpush1.msra.mxu0 0.0
  %3636 = vmatprep.subr.mxu0 0.0
  %3637 = vmatpush1.msra.mxu0 0.0
  %3638 = vmatprep.subr.mxu0 0.0
  %3639 = vmatpush1.msra.mxu0 0.0
  %3640 = vmatprep.subr.mxu0 0.0
  %3641 = vmatpush1.msra.mxu0 0.0
  %3642 = vmatprep.subr.mxu0 0.0
  %3643 = vmatpush1.msra.mxu0 0.0
  %3644 = vmatprep.subr.mxu0 0.0
  %3645 = vmatpush1.msra.mxu0 0.0
  %3646 = vmatprep.subr.mxu0 0.0
  %3647 = vmatpush1.msra.mxu0 0.0
  %3648 = vmatprep.subr.mxu0 0.0
  %3649 = vmatpush1.msra.mxu0 0.0
  %3650 = vmatprep.subr.mxu0 0.0
  %3651 = vmatpush1.msra.mxu0 0.0
  %3652 = vmatprep.subr.mxu0 0.0
  %3653 = vmatpush1.msra.mxu0 0.0
  %3654 = vmatprep.subr.mxu0 0.0
  %3655 = vmatpush1.msra.mxu0 0.0
  %3656 = vmatprep.subr.mxu0 0.0
  %3657 = vmatpush1.msra.mxu0 0.0
  %3658 = vmatprep.subr.mxu0 0.0
  %3659 = vmatpush1.msra.mxu0 0.0
  %3660 = vmatprep.subr.mxu0 0.0
  %3661 = vmatpush1.msra.mxu0 0.0
  %3662 = vmatprep.subr.mxu0 0.0
  %3663 = vmatpush1.msra.mxu0 0.0
  %3664 = vmatprep.subr.mxu0 0.0
  %3665 = vmatpush1.msra.mxu0 0.0
  %3666 = vmatprep.subr.mxu0 0.0
  %3667 = vmatpush1.msra.mxu0 0.0
  %3668 = vmatprep.subr.mxu0 0.0
  %3669 = vmatpush1.msra.mxu0 0.0
  %3670 = vmatprep.mubr.f32.mxu0 0.0
  %3671 = vmatmul.mubr.f32.gmra.mrb[0].mxu0 %v3601
  %v3672 = vpop.f32.mrb[0].mxu0
  %v3673 = vadd.f32 %v3598, %v3672
  %v3674 = vpop.f32.mrb[0].mxu0
  %3675 = vmatprep.mubr.f32.mxu0 0.0
  %3676 = vmatmul.mubr.f32.gmra.mrb[0].mxu0 %v3604
  %v3677 = vpop.f32.mrb[0].mxu0
  %v3678 = vadd.f32 %v3598, %v3677
  %v3679 = vpop.f32.mrb[0].mxu0
  %3680 = vdwg.mxu0
  %v3681 = vadd.f32 %v3485, %v3673
  %v3682 = vadd.f32 %v3486, %v3678
  %s3683 = scalar_lea.vmem %s13, 1
  %v3684 = vld [vmem:[%s3683] sm:$0x1]
  %s3685 = scalar_lea.vmem %s14, 1
  %v3686 = vld [vmem:[%s3685] sm:$0x1]
  %v3687 = vsel %vm73, %v3681, 0.0
  %3688 = vadd.xlane.f32.xlu0 %v3687
  %v3689 = vpop.xlane.xlu0 %3688
  %v3690 = vsel %vm73, %v3682, 0.0
  %3691 = vadd.xlane.f32.xlu0 %v3690
  %v3692 = vpop.xlane.xlu0 %3691
  %v3693 = vmul.f32 %v3689, %v1625
  %v3694 = vmul.f32 %v3692, %v1625
  %v3695 = vsub.f32 %v3681, %v3693
  %v3696 = vsub.f32 %v3682, %v3694
  %v3697 = vmul.f32 %v3695, %v3695
  %v3698 = vmul.f32 %v3696, %v3696
  %v3699 = vsel %vm73, %v3697, 0.0
  %3700 = vadd.xlane.f32.xlu0 %v3699
  %v3701 = vpop.xlane.xlu0 %3700
  %v3702 = vsel %vm73, %v3698, 0.0
  %3703 = vadd.xlane.f32.xlu0 %v3702
  %v3704 = vpop.xlane.xlu0 %3703
  %v3705 = vmul.f32 %v3701, %v1625
  %v3706 = vmul.f32 %v3704, %v1625
  %v3707 = vadd.f32 %v3705, 1e-05
  %v3708 = vadd.f32 %v3706, 1e-05
  %v3709 = vrsqrt.pop %v3707
  %v3710 = vrsqrt.pop %v3708
  %v3711 = vmul.f32 %v3695, %v3709
  %v3712 = vmul.f32 %v3696, %v3710
  %v3714 = vlaneseq
  %v3715 = vshrl.u32 %v3714, 7
  %v3716 = vsub.s32 0, %v3715
  %v3717 = vrot.slane %v3684, %v3716
  %v3719 = vmul.f32 %v3711, %v3717
  %v3720 = vmul.f32 %v3712, %v3717
  %v3722 = vlaneseq
  %v3723 = vshrl.u32 %v3722, 7
  %v3724 = vsub.s32 0, %v3723
  %v3725 = vrot.slane %v3686, %v3724
  %v3727 = vadd.f32 %v3719, %v3725
  %v3728 = vadd.f32 %v3720, %v3725
  %s3729 = scalar_lea.vmem %s3, 64
  %v3730 = vld [vmem:[%s3729] sm:$0xff]
  %v3731 = vld [vmem:[%s3729 + $0x8] sm:$0xff]
  %v3732 = vld [vmem:[%s3729 + $0x10] sm:$0xff]
  %v3733 = vld [vmem:[%s3729 + $0x18] sm:$0xff]
  %s3734 = scalar_lea.vmem %s4, 2
  %v3735 = vld [vmem:[%s3734] sm:$0x1]
  %v3737 = vlaneseq
  %v3738 = vshrl.u32 %v3737, 7
  %v3739 = vsub.s32 0, %v3738
  %v3740 = vrot.slane %v3735, %v3739
  %v3743 = vsel %vm73, %v3727, 0
  %v3746 = vsel %vm73, %v3728, 0
  %3748 = vmatprep.subr.mxu0 0.0
  %3749 = vmatpush1.msra.mxu0 %v3730
  %3750 = vmatprep.subr.mxu0 0.0
  %3751 = vmatpush1.msra.mxu0 %v3731
  %3752 = vmatprep.subr.mxu0 0.0
  %3753 = vmatpush1.msra.mxu0 %v3732
  %3754 = vmatprep.subr.mxu0 0.0
  %3755 = vmatpush1.msra.mxu0 %v3733
  %3756 = vmatprep.subr.mxu0 0.0
  %3757 = vmatpush1.msra.mxu0 0.0
  %3758 = vmatprep.subr.mxu0 0.0
  %3759 = vmatpush1.msra.mxu0 0.0
  %3760 = vmatprep.subr.mxu0 0.0
  %3761 = vmatpush1.msra.mxu0 0.0
  %3762 = vmatprep.subr.mxu0 0.0
  %3763 = vmatpush1.msra.mxu0 0.0
  %3764 = vmatprep.subr.mxu0 0.0
  %3765 = vmatpush1.msra.mxu0 0.0
  %3766 = vmatprep.subr.mxu0 0.0
  %3767 = vmatpush1.msra.mxu0 0.0
  %3768 = vmatprep.subr.mxu0 0.0
  %3769 = vmatpush1.msra.mxu0 0.0
  %3770 = vmatprep.subr.mxu0 0.0
  %3771 = vmatpush1.msra.mxu0 0.0
  %3772 = vmatprep.subr.mxu0 0.0
  %3773 = vmatpush1.msra.mxu0 0.0
  %3774 = vmatprep.subr.mxu0 0.0
  %3775 = vmatpush1.msra.mxu0 0.0
  %3776 = vmatprep.subr.mxu0 0.0
  %3777 = vmatpush1.msra.mxu0 0.0
  %3778 = vmatprep.subr.mxu0 0.0
  %3779 = vmatpush1.msra.mxu0 0.0
  %3780 = vmatprep.subr.mxu0 0.0
  %3781 = vmatpush1.msra.mxu0 0.0
  %3782 = vmatprep.subr.mxu0 0.0
  %3783 = vmatpush1.msra.mxu0 0.0
  %3784 = vmatprep.subr.mxu0 0.0
  %3785 = vmatpush1.msra.mxu0 0.0
  %3786 = vmatprep.subr.mxu0 0.0
  %3787 = vmatpush1.msra.mxu0 0.0
  %3788 = vmatprep.subr.mxu0 0.0
  %3789 = vmatpush1.msra.mxu0 0.0
  %3790 = vmatprep.subr.mxu0 0.0
  %3791 = vmatpush1.msra.mxu0 0.0
  %3792 = vmatprep.subr.mxu0 0.0
  %3793 = vmatpush1.msra.mxu0 0.0
  %3794 = vmatprep.subr.mxu0 0.0
  %3795 = vmatpush1.msra.mxu0 0.0
  %3796 = vmatprep.subr.mxu0 0.0
  %3797 = vmatpush1.msra.mxu0 0.0
  %3798 = vmatprep.subr.mxu0 0.0
  %3799 = vmatpush1.msra.mxu0 0.0
  %3800 = vmatprep.subr.mxu0 0.0
  %3801 = vmatpush1.msra.mxu0 0.0
  %3802 = vmatprep.subr.mxu0 0.0
  %3803 = vmatpush1.msra.mxu0 0.0
  %3804 = vmatprep.subr.mxu0 0.0
  %3805 = vmatpush1.msra.mxu0 0.0
  %3806 = vmatprep.subr.mxu0 0.0
  %3807 = vmatpush1.msra.mxu0 0.0
  %3808 = vmatprep.subr.mxu0 0.0
  %3809 = vmatpush1.msra.mxu0 0.0
  %3810 = vmatprep.subr.mxu0 0.0
  %3811 = vmatpush1.msra.mxu0 0.0
  %3812 = vmatprep.mubr.f32.mxu0 0.0
  %3813 = vmatmul.mubr.f32.gmra.mrb[0].mxu0 %v3743
  %v3814 = vpop.f32.mrb[0].mxu0
  %v3815 = vadd.f32 %v3740, %v3814
  %v3816 = vpop.f32.mrb[0].mxu0
  %3817 = vmatprep.mubr.f32.mxu0 0.0
  %3818 = vmatmul.mubr.f32.gmra.mrb[0].mxu0 %v3746
  %v3819 = vpop.f32.mrb[0].mxu0
  %v3820 = vadd.f32 %v3740, %v3819
  %v3821 = vpop.f32.mrb[0].mxu0
  %3822 = vdwg.mxu0
  %3824 = vrot.lane.b32.xlu0 %v3815, 96
  %v3825 = vpop.permute.xlu0 %3824
  %v3826 = vsel %vm170, %v3815, 0
  %v3828 = vsel %vm170, %v3825, 0
  %3830 = vmatprep.subr.mxu0 0.0
  %3831 = vmatpush1.xpose.msra.mxu0 %v3828
  %3832 = vmatprep.subr.mxu0 0.0
  %3833 = vmatpush1.xpose.msra.mxu0 0.0
  %3834 = vmatprep.subr.mxu0 0.0
  %3835 = vmatpush1.xpose.msra.mxu0 0.0
  %3836 = vmatprep.subr.mxu0 0.0
  %3837 = vmatpush1.xpose.msra.mxu0 0.0
  %3838 = vmatprep.subr.mxu0 0.0
  %3839 = vmatpush1.xpose.msra.mxu0 0.0
  %3840 = vmatprep.subr.mxu0 0.0
  %3841 = vmatpush1.xpose.msra.mxu0 0.0
  %3842 = vmatprep.subr.mxu0 0.0
  %3843 = vmatpush1.xpose.msra.mxu0 0.0
  %3844 = vmatprep.subr.mxu0 0.0
  %3845 = vmatpush1.xpose.msra.mxu0 0.0
  %3846 = vmatprep.subr.mxu0 0.0
  %3847 = vmatpush1.xpose.msra.mxu0 0.0
  %3848 = vmatprep.subr.mxu0 0.0
  %3849 = vmatpush1.xpose.msra.mxu0 0.0
  %3850 = vmatprep.subr.mxu0 0.0
  %3851 = vmatpush1.xpose.msra.mxu0 0.0
  %3852 = vmatprep.subr.mxu0 0.0
  %3853 = vmatpush1.xpose.msra.mxu0 0.0
  %3854 = vmatprep.subr.mxu0 0.0
  %3855 = vmatpush1.xpose.msra.mxu0 0.0
  %3856 = vmatprep.subr.mxu0 0.0
  %3857 = vmatpush1.xpose.msra.mxu0 0.0
  %3858 = vmatprep.subr.mxu0 0.0
  %3859 = vmatpush1.xpose.msra.mxu0 0.0
  %3860 = vmatprep.subr.mxu0 0.0
  %3861 = vmatpush1.xpose.msra.mxu0 0.0
  %3862 = vmatprep.subr.mxu0 0.0
  %3863 = vmatpush1.xpose.msra.mxu0 0.0
  %3864 = vmatprep.subr.mxu0 0.0
  %3865 = vmatpush1.xpose.msra.mxu0 0.0
  %3866 = vmatprep.subr.mxu0 0.0
  %3867 = vmatpush1.xpose.msra.mxu0 0.0
  %3868 = vmatprep.subr.mxu0 0.0
  %3869 = vmatpush1.xpose.msra.mxu0 0.0
  %3870 = vmatprep.subr.mxu0 0.0
  %3871 = vmatpush1.xpose.msra.mxu0 0.0
  %3872 = vmatprep.subr.mxu0 0.0
  %3873 = vmatpush1.xpose.msra.mxu0 0.0
  %3874 = vmatprep.subr.mxu0 0.0
  %3875 = vmatpush1.xpose.msra.mxu0 0.0
  %3876 = vmatprep.subr.mxu0 0.0
  %3877 = vmatpush1.xpose.msra.mxu0 0.0
  %3878 = vmatprep.subr.mxu0 0.0
  %3879 = vmatpush1.xpose.msra.mxu0 0.0
  %3880 = vmatprep.subr.mxu0 0.0
  %3881 = vmatpush1.xpose.msra.mxu0 0.0
  %3882 = vmatprep.subr.mxu0 0.0
  %3883 = vmatpush1.xpose.msra.mxu0 0.0
  %3884 = vmatprep.subr.mxu0 0.0
  %3885 = vmatpush1.xpose.msra.mxu0 0.0
  %3886 = vmatprep.subr.mxu0 0.0
  %3887 = vmatpush1.xpose.msra.mxu0 0.0
  %3888 = vmatprep.subr.mxu0 0.0
  %3889 = vmatpush1.xpose.msra.mxu0 0.0
  %3890 = vmatprep.subr.mxu0 0.0
  %3891 = vmatpush1.xpose.msra.mxu0 0.0
  %3892 = vmatprep.subr.mxu0 0.0
  %3893 = vmatpush1.xpose.msra.mxu0 0.0
  %3894 = vmatprep.mubr.f32.mxu0 0.0
  %3895 = vmatmul.mubr.f32.gmra.mrb[0].mxu0 %v3826
  %v3896 = vpop.f32.mrb[0].mxu0
  %v3897 = vadd.f32 %v160, %v3896
  %v3898 = vpop.f32.mrb[0].mxu0
  %3899 = vdwg.mxu0
  %3901 = vrot.lane.b32.xlu0 %v3820, 96
  %v3902 = vpop.permute.xlu0 %3901
  %v3903 = vsel %vm170, %v3820, 0
  %v3905 = vsel %vm170, %v3902, 0
  %3907 = vmatprep.subr.mxu0 0.0
  %3908 = vmatpush1.xpose.msra.mxu0 %v3905
  %3909 = vmatprep.subr.mxu0 0.0
  %3910 = vmatpush1.xpose.msra.mxu0 0.0
  %3911 = vmatprep.subr.mxu0 0.0
  %3912 = vmatpush1.xpose.msra.mxu0 0.0
  %3913 = vmatprep.subr.mxu0 0.0
  %3914 = vmatpush1.xpose.msra.mxu0 0.0
  %3915 = vmatprep.subr.mxu0 0.0
  %3916 = vmatpush1.xpose.msra.mxu0 0.0
  %3917 = vmatprep.subr.mxu0 0.0
  %3918 = vmatpush1.xpose.msra.mxu0 0.0
  %3919 = vmatprep.subr.mxu0 0.0
  %3920 = vmatpush1.xpose.msra.mxu0 0.0
  %3921 = vmatprep.subr.mxu0 0.0
  %3922 = vmatpush1.xpose.msra.mxu0 0.0
  %3923 = vmatprep.subr.mxu0 0.0
  %3924 = vmatpush1.xpose.msra.mxu0 0.0
  %3925 = vmatprep.subr.mxu0 0.0
  %3926 = vmatpush1.xpose.msra.mxu0 0.0
  %3927 = vmatprep.subr.mxu0 0.0
  %3928 = vmatpush1.xpose.msra.mxu0 0.0
  %3929 = vmatprep.subr.mxu0 0.0
  %3930 = vmatpush1.xpose.msra.mxu0 0.0
  %3931 = vmatprep.subr.mxu0 0.0
  %3932 = vmatpush1.xpose.msra.mxu0 0.0
  %3933 = vmatprep.subr.mxu0 0.0
  %3934 = vmatpush1.xpose.msra.mxu0 0.0
  %3935 = vmatprep.subr.mxu0 0.0
  %3936 = vmatpush1.xpose.msra.mxu0 0.0
  %3937 = vmatprep.subr.mxu0 0.0
  %3938 = vmatpush1.xpose.msra.mxu0 0.0
  %3939 = vmatprep.subr.mxu0 0.0
  %3940 = vmatpush1.xpose.msra.mxu0 0.0
  %3941 = vmatprep.subr.mxu0 0.0
  %3942 = vmatpush1.xpose.msra.mxu0 0.0
  %3943 = vmatprep.subr.mxu0 0.0
  %3944 = vmatpush1.xpose.msra.mxu0 0.0
  %3945 = vmatprep.subr.mxu0 0.0
  %3946 = vmatpush1.xpose.msra.mxu0 0.0
  %3947 = vmatprep.subr.mxu0 0.0
  %3948 = vmatpush1.xpose.msra.mxu0 0.0
  %3949 = vmatprep.subr.mxu0 0.0
  %3950 = vmatpush1.xpose.msra.mxu0 0.0
  %3951 = vmatprep.subr.mxu0 0.0
  %3952 = vmatpush1.xpose.msra.mxu0 0.0
  %3953 = vmatprep.subr.mxu0 0.0
  %3954 = vmatpush1.xpose.msra.mxu0 0.0
  %3955 = vmatprep.subr.mxu0 0.0
  %3956 = vmatpush1.xpose.msra.mxu0 0.0
  %3957 = vmatprep.subr.mxu0 0.0
  %3958 = vmatpush1.xpose.msra.mxu0 0.0
  %3959 = vmatprep.subr.mxu0 0.0
  %3960 = vmatpush1.xpose.msra.mxu0 0.0
  %3961 = vmatprep.subr.mxu0 0.0
  %3962 = vmatpush1.xpose.msra.mxu0 0.0
  %3963 = vmatprep.subr.mxu0 0.0
  %3964 = vmatpush1.xpose.msra.mxu0 0.0
  %3965 = vmatprep.subr.mxu0 0.0
  %3966 = vmatpush1.xpose.msra.mxu0 0.0
  %3967 = vmatprep.subr.mxu0 0.0
  %3968 = vmatpush1.xpose.msra.mxu0 0.0
  %3969 = vmatprep.subr.mxu0 0.0
  %3970 = vmatpush1.xpose.msra.mxu0 0.0
  %3971 = vmatprep.mubr.f32.mxu0 0.0
  %3972 = vmatmul.mubr.f32.gmra.mrb[0].mxu0 %v3903
  %v3973 = vpop.f32.mrb[0].mxu0
  %v3974 = vadd.f32 %v164, %v3973
  %v3975 = vpop.f32.mrb[0].mxu0
  %3976 = vdwg.mxu0
  %v3977 = vsel %vm170, %v3897, -inf
  %3978 = vmax.xlane.f32.xlu0 %v3977
  %v3979 = vpop.xlane.xlu0 %3978
  %v3980 = vsel %vm170, %v3974, -inf
  %3981 = vmax.xlane.f32.xlu0 %v3980
  %v3982 = vpop.xlane.xlu0 %3981
  %v3983 = vsub.f32 %v3897, %v3979
  %v3984 = vsub.f32 %v3974, %v3982
  %v3985 = vmul.f32 %v3983, 1.442695
  %v3986 = vpow.pop %v3985
  %v3987 = vmul.f32 %v3984, 1.442695
  %v3988 = vpow.pop %v3987
  %v3989 = vsel %vm170, %v3986, 0.0
  %3990 = vadd.xlane.f32.xlu0 %v3989
  %v3991 = vpop.xlane.xlu0 %3990
  %v3992 = vsel %vm170, %v3988, 0.0
  %3993 = vadd.xlane.f32.xlu0 %v3992
  %v3994 = vpop.xlane.xlu0 %3993
  %v3995 = vrcp.pop %v3991
  %v3996 = vrcp.pop %v3994
  %v3997 = vmul.f32 %v3986, %v3995
  %v3998 = vmul.f32 %v3988, %v3996
  %3999 = vrot.lane.b32.xlu0 %v3815, 64
  %v4000 = vpop.permute.xlu0 %3999
  %v4003 = vsel %vm170, %v3997, 0
  %4005 = vmatprep.subr.mxu0 0.0
  %4006 = vmatpush1.msra.mxu0 %v4000
  %4007 = vmatprep.subr.mxu0 0.0
  %4008 = vmatpush1.msra.mxu0 0.0
  %4009 = vmatprep.subr.mxu0 0.0
  %4010 = vmatpush1.msra.mxu0 0.0
  %4011 = vmatprep.subr.mxu0 0.0
  %4012 = vmatpush1.msra.mxu0 0.0
  %4013 = vmatprep.subr.mxu0 0.0
  %4014 = vmatpush1.msra.mxu0 0.0
  %4015 = vmatprep.subr.mxu0 0.0
  %4016 = vmatpush1.msra.mxu0 0.0
  %4017 = vmatprep.subr.mxu0 0.0
  %4018 = vmatpush1.msra.mxu0 0.0
  %4019 = vmatprep.subr.mxu0 0.0
  %4020 = vmatpush1.msra.mxu0 0.0
  %4021 = vmatprep.subr.mxu0 0.0
  %4022 = vmatpush1.msra.mxu0 0.0
  %4023 = vmatprep.subr.mxu0 0.0
  %4024 = vmatpush1.msra.mxu0 0.0
  %4025 = vmatprep.subr.mxu0 0.0
  %4026 = vmatpush1.msra.mxu0 0.0
  %4027 = vmatprep.subr.mxu0 0.0
  %4028 = vmatpush1.msra.mxu0 0.0
  %4029 = vmatprep.subr.mxu0 0.0
  %4030 = vmatpush1.msra.mxu0 0.0
  %4031 = vmatprep.subr.mxu0 0.0
  %4032 = vmatpush1.msra.mxu0 0.0
  %4033 = vmatprep.subr.mxu0 0.0
  %4034 = vmatpush1.msra.mxu0 0.0
  %4035 = vmatprep.subr.mxu0 0.0
  %4036 = vmatpush1.msra.mxu0 0.0
  %4037 = vmatprep.subr.mxu0 0.0
  %4038 = vmatpush1.msra.mxu0 0.0
  %4039 = vmatprep.subr.mxu0 0.0
  %4040 = vmatpush1.msra.mxu0 0.0
  %4041 = vmatprep.subr.mxu0 0.0
  %4042 = vmatpush1.msra.mxu0 0.0
  %4043 = vmatprep.subr.mxu0 0.0
  %4044 = vmatpush1.msra.mxu0 0.0
  %4045 = vmatprep.subr.mxu0 0.0
  %4046 = vmatpush1.msra.mxu0 0.0
  %4047 = vmatprep.subr.mxu0 0.0
  %4048 = vmatpush1.msra.mxu0 0.0
  %4049 = vmatprep.subr.mxu0 0.0
  %4050 = vmatpush1.msra.mxu0 0.0
  %4051 = vmatprep.subr.mxu0 0.0
  %4052 = vmatpush1.msra.mxu0 0.0
  %4053 = vmatprep.subr.mxu0 0.0
  %4054 = vmatpush1.msra.mxu0 0.0
  %4055 = vmatprep.subr.mxu0 0.0
  %4056 = vmatpush1.msra.mxu0 0.0
  %4057 = vmatprep.subr.mxu0 0.0
  %4058 = vmatpush1.msra.mxu0 0.0
  %4059 = vmatprep.subr.mxu0 0.0
  %4060 = vmatpush1.msra.mxu0 0.0
  %4061 = vmatprep.subr.mxu0 0.0
  %4062 = vmatpush1.msra.mxu0 0.0
  %4063 = vmatprep.subr.mxu0 0.0
  %4064 = vmatpush1.msra.mxu0 0.0
  %4065 = vmatprep.subr.mxu0 0.0
  %4066 = vmatpush1.msra.mxu0 0.0
  %4067 = vmatprep.subr.mxu0 0.0
  %4068 = vmatpush1.msra.mxu0 0.0
  %4069 = vmatprep.mubr.f32.mxu0 0.0
  %4070 = vmatmul.mubr.f32.gmra.mrb[0].mxu0 %v4003
  %v4071 = vpop.f32.mrb[0].mxu0
  %v4072 = vadd.f32 0.0, %v4071
  %v4073 = vpop.f32.mrb[0].mxu0
  %4074 = vdwg.mxu0
  %4075 = vrot.lane.b32.xlu0 %v3820, 64
  %v4076 = vpop.permute.xlu0 %4075
  %v4079 = vsel %vm170, %v3998, 0
  %4081 = vmatprep.subr.mxu0 0.0
  %4082 = vmatpush1.msra.mxu0 %v4076
  %4083 = vmatprep.subr.mxu0 0.0
  %4084 = vmatpush1.msra.mxu0 0.0
  %4085 = vmatprep.subr.mxu0 0.0
  %4086 = vmatpush1.msra.mxu0 0.0
  %4087 = vmatprep.subr.mxu0 0.0
  %4088 = vmatpush1.msra.mxu0 0.0
  %4089 = vmatprep.subr.mxu0 0.0
  %4090 = vmatpush1.msra.mxu0 0.0
  %4091 = vmatprep.subr.mxu0 0.0
  %4092 = vmatpush1.msra.mxu0 0.0
  %4093 = vmatprep.subr.mxu0 0.0
  %4094 = vmatpush1.msra.mxu0 0.0
  %4095 = vmatprep.subr.mxu0 0.0
  %4096 = vmatpush1.msra.mxu0 0.0
  %4097 = vmatprep.subr.mxu0 0.0
  %4098 = vmatpush1.msra.mxu0 0.0
  %4099 = vmatprep.subr.mxu0 0.0
  %4100 = vmatpush1.msra.mxu0 0.0
  %4101 = vmatprep.subr.mxu0 0.0
  %4102 = vmatpush1.msra.mxu0 0.0
  %4103 = vmatprep.subr.mxu0 0.0
  %4104 = vmatpush1.msra.mxu0 0.0
  %4105 = vmatprep.subr.mxu0 0.0
  %4106 = vmatpush1.msra.mxu0 0.0
  %4107 = vmatprep.subr.mxu0 0.0
  %4108 = vmatpush1.msra.mxu0 0.0
  %4109 = vmatprep.subr.mxu0 0.0
  %4110 = vmatpush1.msra.mxu0 0.0
  %4111 = vmatprep.subr.mxu0 0.0
  %4112 = vmatpush1.msra.mxu0 0.0
  %4113 = vmatprep.subr.mxu0 0.0
  %4114 = vmatpush1.msra.mxu0 0.0
  %4115 = vmatprep.subr.mxu0 0.0
  %4116 = vmatpush1.msra.mxu0 0.0
  %4117 = vmatprep.subr.mxu0 0.0
  %4118 = vmatpush1.msra.mxu0 0.0
  %4119 = vmatprep.subr.mxu0 0.0
  %4120 = vmatpush1.msra.mxu0 0.0
  %4121 = vmatprep.subr.mxu0 0.0
  %4122 = vmatpush1.msra.mxu0 0.0
  %4123 = vmatprep.subr.mxu0 0.0
  %4124 = vmatpush1.msra.mxu0 0.0
  %4125 = vmatprep.subr.mxu0 0.0
  %4126 = vmatpush1.msra.mxu0 0.0
  %4127 = vmatprep.subr.mxu0 0.0
  %4128 = vmatpush1.msra.mxu0 0.0
  %4129 = vmatprep.subr.mxu0 0.0
  %4130 = vmatpush1.msra.mxu0 0.0
  %4131 = vmatprep.subr.mxu0 0.0
  %4132 = vmatpush1.msra.mxu0 0.0
  %4133 = vmatprep.subr.mxu0 0.0
  %4134 = vmatpush1.msra.mxu0 0.0
  %4135 = vmatprep.subr.mxu0 0.0
  %4136 = vmatpush1.msra.mxu0 0.0
  %4137 = vmatprep.subr.mxu0 0.0
  %4138 = vmatpush1.msra.mxu0 0.0
  %4139 = vmatprep.subr.mxu0 0.0
  %4140 = vmatpush1.msra.mxu0 0.0
  %4141 = vmatprep.subr.mxu0 0.0
  %4142 = vmatpush1.msra.mxu0 0.0
  %4143 = vmatprep.subr.mxu0 0.0
  %4144 = vmatpush1.msra.mxu0 0.0
  %4145 = vmatprep.mubr.f32.mxu0 0.0
  %4146 = vmatmul.mubr.f32.gmra.mrb[0].mxu0 %v4079
  %v4147 = vpop.f32.mrb[0].mxu0
  %v4148 = vadd.f32 0.0, %v4147
  %v4149 = vpop.f32.mrb[0].mxu0
  %4150 = vdwg.mxu0
  %4151 = vst.msk [vmem:[#allocation2] sm:$0xff] %vm170, %v4072
  %4152 = vst.msk [vmem:[#allocation2 + $0x8] sm:$0xff] %vm170, %v4148
  %4153 = vrot.lane.b32.xlu0 %v3815, 120
  %v4154 = vpop.permute.xlu0 %4153
  %4155 = vrot.lane.b32.xlu0 %v3815, 88
  %v4156 = vpop.permute.xlu0 %4155
  %v4157 = vsel %vm170, %v4154, 0
  %v4159 = vsel %vm170, %v4156, 0
  %4161 = vmatprep.subr.mxu0 0.0
  %4162 = vmatpush1.xpose.msra.mxu0 %v4159
  %4163 = vmatprep.subr.mxu0 0.0
  %4164 = vmatpush1.xpose.msra.mxu0 0.0
  %4165 = vmatprep.subr.mxu0 0.0
  %4166 = vmatpush1.xpose.msra.mxu0 0.0
  %4167 = vmatprep.subr.mxu0 0.0
  %4168 = vmatpush1.xpose.msra.mxu0 0.0
  %4169 = vmatprep.subr.mxu0 0.0
  %4170 = vmatpush1.xpose.msra.mxu0 0.0
  %4171 = vmatprep.subr.mxu0 0.0
  %4172 = vmatpush1.xpose.msra.mxu0 0.0
  %4173 = vmatprep.subr.mxu0 0.0
  %4174 = vmatpush1.xpose.msra.mxu0 0.0
  %4175 = vmatprep.subr.mxu0 0.0
  %4176 = vmatpush1.xpose.msra.mxu0 0.0
  %4177 = vmatprep.subr.mxu0 0.0
  %4178 = vmatpush1.xpose.msra.mxu0 0.0
  %4179 = vmatprep.subr.mxu0 0.0
  %4180 = vmatpush1.xpose.msra.mxu0 0.0
  %4181 = vmatprep.subr.mxu0 0.0
  %4182 = vmatpush1.xpose.msra.mxu0 0.0
  %4183 = vmatprep.subr.mxu0 0.0
  %4184 = vmatpush1.xpose.msra.mxu0 0.0
  %4185 = vmatprep.subr.mxu0 0.0
  %4186 = vmatpush1.xpose.msra.mxu0 0.0
  %4187 = vmatprep.subr.mxu0 0.0
  %4188 = vmatpush1.xpose.msra.mxu0 0.0
  %4189 = vmatprep.subr.mxu0 0.0
  %4190 = vmatpush1.xpose.msra.mxu0 0.0
  %4191 = vmatprep.subr.mxu0 0.0
  %4192 = vmatpush1.xpose.msra.mxu0 0.0
  %4193 = vmatprep.subr.mxu0 0.0
  %4194 = vmatpush1.xpose.msra.mxu0 0.0
  %4195 = vmatprep.subr.mxu0 0.0
  %4196 = vmatpush1.xpose.msra.mxu0 0.0
  %4197 = vmatprep.subr.mxu0 0.0
  %4198 = vmatpush1.xpose.msra.mxu0 0.0
  %4199 = vmatprep.subr.mxu0 0.0
  %4200 = vmatpush1.xpose.msra.mxu0 0.0
  %4201 = vmatprep.subr.mxu0 0.0
  %4202 = vmatpush1.xpose.msra.mxu0 0.0
  %4203 = vmatprep.subr.mxu0 0.0
  %4204 = vmatpush1.xpose.msra.mxu0 0.0
  %4205 = vmatprep.subr.mxu0 0.0
  %4206 = vmatpush1.xpose.msra.mxu0 0.0
  %4207 = vmatprep.subr.mxu0 0.0
  %4208 = vmatpush1.xpose.msra.mxu0 0.0
  %4209 = vmatprep.subr.mxu0 0.0
  %4210 = vmatpush1.xpose.msra.mxu0 0.0
  %4211 = vmatprep.subr.mxu0 0.0
  %4212 = vmatpush1.xpose.msra.mxu0 0.0
  %4213 = vmatprep.subr.mxu0 0.0
  %4214 = vmatpush1.xpose.msra.mxu0 0.0
  %4215 = vmatprep.subr.mxu0 0.0
  %4216 = vmatpush1.xpose.msra.mxu0 0.0
  %4217 = vmatprep.subr.mxu0 0.0
  %4218 = vmatpush1.xpose.msra.mxu0 0.0
  %4219 = vmatprep.subr.mxu0 0.0
  %4220 = vmatpush1.xpose.msra.mxu0 0.0
  %4221 = vmatprep.subr.mxu0 0.0
  %4222 = vmatpush1.xpose.msra.mxu0 0.0
  %4223 = vmatprep.subr.mxu0 0.0
  %4224 = vmatpush1.xpose.msra.mxu0 0.0
  %4225 = vmatprep.mubr.f32.mxu0 0.0
  %4226 = vmatmul.mubr.f32.gmra.mrb[0].mxu0 %v4157
  %v4227 = vpop.f32.mrb[0].mxu0
  %v4228 = vadd.f32 %v160, %v4227
  %v4229 = vpop.f32.mrb[0].mxu0
  %4230 = vdwg.mxu0
  %4231 = vrot.lane.b32.xlu0 %v3820, 120
  %v4232 = vpop.permute.xlu0 %4231
  %4233 = vrot.lane.b32.xlu0 %v3820, 88
  %v4234 = vpop.permute.xlu0 %4233
  %v4235 = vsel %vm170, %v4232, 0
  %v4237 = vsel %vm170, %v4234, 0
  %4239 = vmatprep.subr.mxu0 0.0
  %4240 = vmatpush1.xpose.msra.mxu0 %v4237
  %4241 = vmatprep.subr.mxu0 0.0
  %4242 = vmatpush1.xpose.msra.mxu0 0.0
  %4243 = vmatprep.subr.mxu0 0.0
  %4244 = vmatpush1.xpose.msra.mxu0 0.0
  %4245 = vmatprep.subr.mxu0 0.0
  %4246 = vmatpush1.xpose.msra.mxu0 0.0
  %4247 = vmatprep.subr.mxu0 0.0
  %4248 = vmatpush1.xpose.msra.mxu0 0.0
  %4249 = vmatprep.subr.mxu0 0.0
  %4250 = vmatpush1.xpose.msra.mxu0 0.0
  %4251 = vmatprep.subr.mxu0 0.0
  %4252 = vmatpush1.xpose.msra.mxu0 0.0
  %4253 = vmatprep.subr.mxu0 0.0
  %4254 = vmatpush1.xpose.msra.mxu0 0.0
  %4255 = vmatprep.subr.mxu0 0.0
  %4256 = vmatpush1.xpose.msra.mxu0 0.0
  %4257 = vmatprep.subr.mxu0 0.0
  %4258 = vmatpush1.xpose.msra.mxu0 0.0
  %4259 = vmatprep.subr.mxu0 0.0
  %4260 = vmatpush1.xpose.msra.mxu0 0.0
  %4261 = vmatprep.subr.mxu0 0.0
  %4262 = vmatpush1.xpose.msra.mxu0 0.0
  %4263 = vmatprep.subr.mxu0 0.0
  %4264 = vmatpush1.xpose.msra.mxu0 0.0
  %4265 = vmatprep.subr.mxu0 0.0
  %4266 = vmatpush1.xpose.msra.mxu0 0.0
  %4267 = vmatprep.subr.mxu0 0.0
  %4268 = vmatpush1.xpose.msra.mxu0 0.0
  %4269 = vmatprep.subr.mxu0 0.0
  %4270 = vmatpush1.xpose.msra.mxu0 0.0
  %4271 = vmatprep.subr.mxu0 0.0
  %4272 = vmatpush1.xpose.msra.mxu0 0.0
  %4273 = vmatprep.subr.mxu0 0.0
  %4274 = vmatpush1.xpose.msra.mxu0 0.0
  %4275 = vmatprep.subr.mxu0 0.0
  %4276 = vmatpush1.xpose.msra.mxu0 0.0
  %4277 = vmatprep.subr.mxu0 0.0
  %4278 = vmatpush1.xpose.msra.mxu0 0.0
  %4279 = vmatprep.subr.mxu0 0.0
  %4280 = vmatpush1.xpose.msra.mxu0 0.0
  %4281 = vmatprep.subr.mxu0 0.0
  %4282 = vmatpush1.xpose.msra.mxu0 0.0
  %4283 = vmatprep.subr.mxu0 0.0
  %4284 = vmatpush1.xpose.msra.mxu0 0.0
  %4285 = vmatprep.subr.mxu0 0.0
  %4286 = vmatpush1.xpose.msra.mxu0 0.0
  %4287 = vmatprep.subr.mxu0 0.0
  %4288 = vmatpush1.xpose.msra.mxu0 0.0
  %4289 = vmatprep.subr.mxu0 0.0
  %4290 = vmatpush1.xpose.msra.mxu0 0.0
  %4291 = vmatprep.subr.mxu0 0.0
  %4292 = vmatpush1.xpose.msra.mxu0 0.0
  %4293 = vmatprep.subr.mxu0 0.0
  %4294 = vmatpush1.xpose.msra.mxu0 0.0
  %4295 = vmatprep.subr.mxu0 0.0
  %4296 = vmatpush1.xpose.msra.mxu0 0.0
  %4297 = vmatprep.subr.mxu0 0.0
  %4298 = vmatpush1.xpose.msra.mxu0 0.0
  %4299 = vmatprep.subr.mxu0 0.0
  %4300 = vmatpush1.xpose.msra.mxu0 0.0
  %4301 = vmatprep.subr.mxu0 0.0
  %4302 = vmatpush1.xpose.msra.mxu0 0.0
  %4303 = vmatprep.mubr.f32.mxu0 0.0
  %4304 = vmatmul.mubr.f32.gmra.mrb[0].mxu0 %v4235
  %v4305 = vpop.f32.mrb[0].mxu0
  %v4306 = vadd.f32 %v164, %v4305
  %v4307 = vpop.f32.mrb[0].mxu0
  %4308 = vdwg.mxu0
  %v4309 = vsel %vm170, %v4228, -inf
  %4310 = vmax.xlane.f32.xlu0 %v4309
  %v4311 = vpop.xlane.xlu0 %4310
  %v4312 = vsel %vm170, %v4306, -inf
  %4313 = vmax.xlane.f32.xlu0 %v4312
  %v4314 = vpop.xlane.xlu0 %4313
  %v4315 = vsub.f32 %v4228, %v4311
  %v4316 = vsub.f32 %v4306, %v4314
  %v4317 = vmul.f32 %v4315, 1.442695
  %v4318 = vpow.pop %v4317
  %v4319 = vmul.f32 %v4316, 1.442695
  %v4320 = vpow.pop %v4319
  %v4321 = vsel %vm170, %v4318, 0.0
  %4322 = vadd.xlane.f32.xlu0 %v4321
  %v4323 = vpop.xlane.xlu0 %4322
  %v4324 = vsel %vm170, %v4320, 0.0
  %4325 = vadd.xlane.f32.xlu0 %v4324
  %v4326 = vpop.xlane.xlu0 %4325
  %v4327 = vrcp.pop %v4323
  %v4328 = vrcp.pop %v4326
  %v4329 = vmul.f32 %v4318, %v4327
  %v4330 = vmul.f32 %v4320, %v4328
  %4331 = vrot.lane.b32.xlu0 %v3815, 56
  %v4332 = vpop.permute.xlu0 %4331
  %v4335 = vsel %vm170, %v4329, 0
  %4337 = vmatprep.subr.mxu0 0.0
  %4338 = vmatpush1.msra.mxu0 %v4332
  %4339 = vmatprep.subr.mxu0 0.0
  %4340 = vmatpush1.msra.mxu0 0.0
  %4341 = vmatprep.subr.mxu0 0.0
  %4342 = vmatpush1.msra.mxu0 0.0
  %4343 = vmatprep.subr.mxu0 0.0
  %4344 = vmatpush1.msra.mxu0 0.0
  %4345 = vmatprep.subr.mxu0 0.0
  %4346 = vmatpush1.msra.mxu0 0.0
  %4347 = vmatprep.subr.mxu0 0.0
  %4348 = vmatpush1.msra.mxu0 0.0
  %4349 = vmatprep.subr.mxu0 0.0
  %4350 = vmatpush1.msra.mxu0 0.0
  %4351 = vmatprep.subr.mxu0 0.0
  %4352 = vmatpush1.msra.mxu0 0.0
  %4353 = vmatprep.subr.mxu0 0.0
  %4354 = vmatpush1.msra.mxu0 0.0
  %4355 = vmatprep.subr.mxu0 0.0
  %4356 = vmatpush1.msra.mxu0 0.0
  %4357 = vmatprep.subr.mxu0 0.0
  %4358 = vmatpush1.msra.mxu0 0.0
  %4359 = vmatprep.subr.mxu0 0.0
  %4360 = vmatpush1.msra.mxu0 0.0
  %4361 = vmatprep.subr.mxu0 0.0
  %4362 = vmatpush1.msra.mxu0 0.0
  %4363 = vmatprep.subr.mxu0 0.0
  %4364 = vmatpush1.msra.mxu0 0.0
  %4365 = vmatprep.subr.mxu0 0.0
  %4366 = vmatpush1.msra.mxu0 0.0
  %4367 = vmatprep.subr.mxu0 0.0
  %4368 = vmatpush1.msra.mxu0 0.0
  %4369 = vmatprep.subr.mxu0 0.0
  %4370 = vmatpush1.msra.mxu0 0.0
  %4371 = vmatprep.subr.mxu0 0.0
  %4372 = vmatpush1.msra.mxu0 0.0
  %4373 = vmatprep.subr.mxu0 0.0
  %4374 = vmatpush1.msra.mxu0 0.0
  %4375 = vmatprep.subr.mxu0 0.0
  %4376 = vmatpush1.msra.mxu0 0.0
  %4377 = vmatprep.subr.mxu0 0.0
  %4378 = vmatpush1.msra.mxu0 0.0
  %4379 = vmatprep.subr.mxu0 0.0
  %4380 = vmatpush1.msra.mxu0 0.0
  %4381 = vmatprep.subr.mxu0 0.0
  %4382 = vmatpush1.msra.mxu0 0.0
  %4383 = vmatprep.subr.mxu0 0.0
  %4384 = vmatpush1.msra.mxu0 0.0
  %4385 = vmatprep.subr.mxu0 0.0
  %4386 = vmatpush1.msra.mxu0 0.0
  %4387 = vmatprep.subr.mxu0 0.0
  %4388 = vmatpush1.msra.mxu0 0.0
  %4389 = vmatprep.subr.mxu0 0.0
  %4390 = vmatpush1.msra.mxu0 0.0
  %4391 = vmatprep.subr.mxu0 0.0
  %4392 = vmatpush1.msra.mxu0 0.0
  %4393 = vmatprep.subr.mxu0 0.0
  %4394 = vmatpush1.msra.mxu0 0.0
  %4395 = vmatprep.subr.mxu0 0.0
  %4396 = vmatpush1.msra.mxu0 0.0
  %4397 = vmatprep.subr.mxu0 0.0
  %4398 = vmatpush1.msra.mxu0 0.0
  %4399 = vmatprep.subr.mxu0 0.0
  %4400 = vmatpush1.msra.mxu0 0.0
  %4401 = vmatprep.mubr.f32.mxu0 0.0
  %4402 = vmatmul.mubr.f32.gmra.mrb[0].mxu0 %v4335
  %v4403 = vpop.f32.mrb[0].mxu0
  %v4404 = vadd.f32 0.0, %v4403
  %v4405 = vpop.f32.mrb[0].mxu0
  %4406 = vdwg.mxu0
  %4407 = vrot.lane.b32.xlu0 %v3820, 56
  %v4408 = vpop.permute.xlu0 %4407
  %v4411 = vsel %vm170, %v4330, 0
  %4413 = vmatprep.subr.mxu0 0.0
  %4414 = vmatpush1.msra.mxu0 %v4408
  %4415 = vmatprep.subr.mxu0 0.0
  %4416 = vmatpush1.msra.mxu0 0.0
  %4417 = vmatprep.subr.mxu0 0.0
  %4418 = vmatpush1.msra.mxu0 0.0
  %4419 = vmatprep.subr.mxu0 0.0
  %4420 = vmatpush1.msra.mxu0 0.0
  %4421 = vmatprep.subr.mxu0 0.0
  %4422 = vmatpush1.msra.mxu0 0.0
  %4423 = vmatprep.subr.mxu0 0.0
  %4424 = vmatpush1.msra.mxu0 0.0
  %4425 = vmatprep.subr.mxu0 0.0
  %4426 = vmatpush1.msra.mxu0 0.0
  %4427 = vmatprep.subr.mxu0 0.0
  %4428 = vmatpush1.msra.mxu0 0.0
  %4429 = vmatprep.subr.mxu0 0.0
  %4430 = vmatpush1.msra.mxu0 0.0
  %4431 = vmatprep.subr.mxu0 0.0
  %4432 = vmatpush1.msra.mxu0 0.0
  %4433 = vmatprep.subr.mxu0 0.0
  %4434 = vmatpush1.msra.mxu0 0.0
  %4435 = vmatprep.subr.mxu0 0.0
  %4436 = vmatpush1.msra.mxu0 0.0
  %4437 = vmatprep.subr.mxu0 0.0
  %4438 = vmatpush1.msra.mxu0 0.0
  %4439 = vmatprep.subr.mxu0 0.0
  %4440 = vmatpush1.msra.mxu0 0.0
  %4441 = vmatprep.subr.mxu0 0.0
  %4442 = vmatpush1.msra.mxu0 0.0
  %4443 = vmatprep.subr.mxu0 0.0
  %4444 = vmatpush1.msra.mxu0 0.0
  %4445 = vmatprep.subr.mxu0 0.0
  %4446 = vmatpush1.msra.mxu0 0.0
  %4447 = vmatprep.subr.mxu0 0.0
  %4448 = vmatpush1.msra.mxu0 0.0
  %4449 = vmatprep.subr.mxu0 0.0
  %4450 = vmatpush1.msra.mxu0 0.0
  %4451 = vmatprep.subr.mxu0 0.0
  %4452 = vmatpush1.msra.mxu0 0.0
  %4453 = vmatprep.subr.mxu0 0.0
  %4454 = vmatpush1.msra.mxu0 0.0
  %4455 = vmatprep.subr.mxu0 0.0
  %4456 = vmatpush1.msra.mxu0 0.0
  %4457 = vmatprep.subr.mxu0 0.0
  %4458 = vmatpush1.msra.mxu0 0.0
  %4459 = vmatprep.subr.mxu0 0.0
  %4460 = vmatpush1.msra.mxu0 0.0
  %4461 = vmatprep.subr.mxu0 0.0
  %4462 = vmatpush1.msra.mxu0 0.0
  %4463 = vmatprep.subr.mxu0 0.0
  %4464 = vmatpush1.msra.mxu0 0.0
  %4465 = vmatprep.subr.mxu0 0.0
  %4466 = vmatpush1.msra.mxu0 0.0
  %4467 = vmatprep.subr.mxu0 0.0
  %4468 = vmatpush1.msra.mxu0 0.0
  %4469 = vmatprep.subr.mxu0 0.0
  %4470 = vmatpush1.msra.mxu0 0.0
  %4471 = vmatprep.subr.mxu0 0.0
  %4472 = vmatpush1.msra.mxu0 0.0
  %4473 = vmatprep.subr.mxu0 0.0
  %4474 = vmatpush1.msra.mxu0 0.0
  %4475 = vmatprep.subr.mxu0 0.0
  %4476 = vmatpush1.msra.mxu0 0.0
  %4477 = vmatprep.mubr.f32.mxu0 0.0
  %4478 = vmatmul.mubr.f32.gmra.mrb[0].mxu0 %v4411
  %v4479 = vpop.f32.mrb[0].mxu0
  %v4480 = vadd.f32 0.0, %v4479
  %v4481 = vpop.f32.mrb[0].mxu0
  %4482 = vdwg.mxu0
  %4485 = vrot.lane.b32.xlu0 %v4404, 8
  %v4486 = vpop.permute.xlu0 %4485
  %4487 = vrot.lane.b32.xlu0 %v4480, 8
  %v4488 = vpop.permute.xlu0 %4487
  %4491 = vst.msk [vmem:[#allocation2] sm:$0xff] %vm836, %v4486
  %4492 = vst.msk [vmem:[#allocation2 + $0x8] sm:$0xff] %vm836, %v4488
  %4493 = vrot.lane.b32.xlu0 %v3815, 112
  %v4494 = vpop.permute.xlu0 %4493
  %4495 = vrot.lane.b32.xlu0 %v3815, 80
  %v4496 = vpop.permute.xlu0 %4495
  %v4497 = vsel %vm170, %v4494, 0
  %v4499 = vsel %vm170, %v4496, 0
  %4501 = vmatprep.subr.mxu0 0.0
  %4502 = vmatpush1.xpose.msra.mxu0 %v4499
  %4503 = vmatprep.subr.mxu0 0.0
  %4504 = vmatpush1.xpose.msra.mxu0 0.0
  %4505 = vmatprep.subr.mxu0 0.0
  %4506 = vmatpush1.xpose.msra.mxu0 0.0
  %4507 = vmatprep.subr.mxu0 0.0
  %4508 = vmatpush1.xpose.msra.mxu0 0.0
  %4509 = vmatprep.subr.mxu0 0.0
  %4510 = vmatpush1.xpose.msra.mxu0 0.0
  %4511 = vmatprep.subr.mxu0 0.0
  %4512 = vmatpush1.xpose.msra.mxu0 0.0
  %4513 = vmatprep.subr.mxu0 0.0
  %4514 = vmatpush1.xpose.msra.mxu0 0.0
  %4515 = vmatprep.subr.mxu0 0.0
  %4516 = vmatpush1.xpose.msra.mxu0 0.0
  %4517 = vmatprep.subr.mxu0 0.0
  %4518 = vmatpush1.xpose.msra.mxu0 0.0
  %4519 = vmatprep.subr.mxu0 0.0
  %4520 = vmatpush1.xpose.msra.mxu0 0.0
  %4521 = vmatprep.subr.mxu0 0.0
  %4522 = vmatpush1.xpose.msra.mxu0 0.0
  %4523 = vmatprep.subr.mxu0 0.0
  %4524 = vmatpush1.xpose.msra.mxu0 0.0
  %4525 = vmatprep.subr.mxu0 0.0
  %4526 = vmatpush1.xpose.msra.mxu0 0.0
  %4527 = vmatprep.subr.mxu0 0.0
  %4528 = vmatpush1.xpose.msra.mxu0 0.0
  %4529 = vmatprep.subr.mxu0 0.0
  %4530 = vmatpush1.xpose.msra.mxu0 0.0
  %4531 = vmatprep.subr.mxu0 0.0
  %4532 = vmatpush1.xpose.msra.mxu0 0.0
  %4533 = vmatprep.subr.mxu0 0.0
  %4534 = vmatpush1.xpose.msra.mxu0 0.0
  %4535 = vmatprep.subr.mxu0 0.0
  %4536 = vmatpush1.xpose.msra.mxu0 0.0
  %4537 = vmatprep.subr.mxu0 0.0
  %4538 = vmatpush1.xpose.msra.mxu0 0.0
  %4539 = vmatprep.subr.mxu0 0.0
  %4540 = vmatpush1.xpose.msra.mxu0 0.0
  %4541 = vmatprep.subr.mxu0 0.0
  %4542 = vmatpush1.xpose.msra.mxu0 0.0
  %4543 = vmatprep.subr.mxu0 0.0
  %4544 = vmatpush1.xpose.msra.mxu0 0.0
  %4545 = vmatprep.subr.mxu0 0.0
  %4546 = vmatpush1.xpose.msra.mxu0 0.0
  %4547 = vmatprep.subr.mxu0 0.0
  %4548 = vmatpush1.xpose.msra.mxu0 0.0
  %4549 = vmatprep.subr.mxu0 0.0
  %4550 = vmatpush1.xpose.msra.mxu0 0.0
  %4551 = vmatprep.subr.mxu0 0.0
  %4552 = vmatpush1.xpose.msra.mxu0 0.0
  %4553 = vmatprep.subr.mxu0 0.0
  %4554 = vmatpush1.xpose.msra.mxu0 0.0
  %4555 = vmatprep.subr.mxu0 0.0
  %4556 = vmatpush1.xpose.msra.mxu0 0.0
  %4557 = vmatprep.subr.mxu0 0.0
  %4558 = vmatpush1.xpose.msra.mxu0 0.0
  %4559 = vmatprep.subr.mxu0 0.0
  %4560 = vmatpush1.xpose.msra.mxu0 0.0
  %4561 = vmatprep.subr.mxu0 0.0
  %4562 = vmatpush1.xpose.msra.mxu0 0.0
  %4563 = vmatprep.subr.mxu0 0.0
  %4564 = vmatpush1.xpose.msra.mxu0 0.0
  %4565 = vmatprep.mubr.f32.mxu0 0.0
  %4566 = vmatmul.mubr.f32.gmra.mrb[0].mxu0 %v4497
  %v4567 = vpop.f32.mrb[0].mxu0
  %v4568 = vadd.f32 %v160, %v4567
  %v4569 = vpop.f32.mrb[0].mxu0
  %4570 = vdwg.mxu0
  %4571 = vrot.lane.b32.xlu0 %v3820, 112
  %v4572 = vpop.permute.xlu0 %4571
  %4573 = vrot.lane.b32.xlu0 %v3820, 80
  %v4574 = vpop.permute.xlu0 %4573
  %v4575 = vsel %vm170, %v4572, 0
  %v4577 = vsel %vm170, %v4574, 0
  %4579 = vmatprep.subr.mxu0 0.0
  %4580 = vmatpush1.xpose.msra.mxu0 %v4577
  %4581 = vmatprep.subr.mxu0 0.0
  %4582 = vmatpush1.xpose.msra.mxu0 0.0
  %4583 = vmatprep.subr.mxu0 0.0
  %4584 = vmatpush1.xpose.msra.mxu0 0.0
  %4585 = vmatprep.subr.mxu0 0.0
  %4586 = vmatpush1.xpose.msra.mxu0 0.0
  %4587 = vmatprep.subr.mxu0 0.0
  %4588 = vmatpush1.xpose.msra.mxu0 0.0
  %4589 = vmatprep.subr.mxu0 0.0
  %4590 = vmatpush1.xpose.msra.mxu0 0.0
  %4591 = vmatprep.subr.mxu0 0.0
  %4592 = vmatpush1.xpose.msra.mxu0 0.0
  %4593 = vmatprep.subr.mxu0 0.0
  %4594 = vmatpush1.xpose.msra.mxu0 0.0
  %4595 = vmatprep.subr.mxu0 0.0
  %4596 = vmatpush1.xpose.msra.mxu0 0.0
  %4597 = vmatprep.subr.mxu0 0.0
  %4598 = vmatpush1.xpose.msra.mxu0 0.0
  %4599 = vmatprep.subr.mxu0 0.0
  %4600 = vmatpush1.xpose.msra.mxu0 0.0
  %4601 = vmatprep.subr.mxu0 0.0
  %4602 = vmatpush1.xpose.msra.mxu0 0.0
  %4603 = vmatprep.subr.mxu0 0.0
  %4604 = vmatpush1.xpose.msra.mxu0 0.0
  %4605 = vmatprep.subr.mxu0 0.0
  %4606 = vmatpush1.xpose.msra.mxu0 0.0
  %4607 = vmatprep.subr.mxu0 0.0
  %4608 = vmatpush1.xpose.msra.mxu0 0.0
  %4609 = vmatprep.subr.mxu0 0.0
  %4610 = vmatpush1.xpose.msra.mxu0 0.0
  %4611 = vmatprep.subr.mxu0 0.0
  %4612 = vmatpush1.xpose.msra.mxu0 0.0
  %4613 = vmatprep.subr.mxu0 0.0
  %4614 = vmatpush1.xpose.msra.mxu0 0.0
  %4615 = vmatprep.subr.mxu0 0.0
  %4616 = vmatpush1.xpose.msra.mxu0 0.0
  %4617 = vmatprep.subr.mxu0 0.0
  %4618 = vmatpush1.xpose.msra.mxu0 0.0
  %4619 = vmatprep.subr.mxu0 0.0
  %4620 = vmatpush1.xpose.msra.mxu0 0.0
  %4621 = vmatprep.subr.mxu0 0.0
  %4622 = vmatpush1.xpose.msra.mxu0 0.0
  %4623 = vmatprep.subr.mxu0 0.0
  %4624 = vmatpush1.xpose.msra.mxu0 0.0
  %4625 = vmatprep.subr.mxu0 0.0
  %4626 = vmatpush1.xpose.msra.mxu0 0.0
  %4627 = vmatprep.subr.mxu0 0.0
  %4628 = vmatpush1.xpose.msra.mxu0 0.0
  %4629 = vmatprep.subr.mxu0 0.0
  %4630 = vmatpush1.xpose.msra.mxu0 0.0
  %4631 = vmatprep.subr.mxu0 0.0
  %4632 = vmatpush1.xpose.msra.mxu0 0.0
  %4633 = vmatprep.subr.mxu0 0.0
  %4634 = vmatpush1.xpose.msra.mxu0 0.0
  %4635 = vmatprep.subr.mxu0 0.0
  %4636 = vmatpush1.xpose.msra.mxu0 0.0
  %4637 = vmatprep.subr.mxu0 0.0
  %4638 = vmatpush1.xpose.msra.mxu0 0.0
  %4639 = vmatprep.subr.mxu0 0.0
  %4640 = vmatpush1.xpose.msra.mxu0 0.0
  %4641 = vmatprep.subr.mxu0 0.0
  %4642 = vmatpush1.xpose.msra.mxu0 0.0
  %4643 = vmatprep.mubr.f32.mxu0 0.0
  %4644 = vmatmul.mubr.f32.gmra.mrb[0].mxu0 %v4575
  %v4645 = vpop.f32.mrb[0].mxu0
  %v4646 = vadd.f32 %v164, %v4645
  %v4647 = vpop.f32.mrb[0].mxu0
  %4648 = vdwg.mxu0
  %v4649 = vsel %vm170, %v4568, -inf
  %4650 = vmax.xlane.f32.xlu0 %v4649
  %v4651 = vpop.xlane.xlu0 %4650
  %v4652 = vsel %vm170, %v4646, -inf
  %4653 = vmax.xlane.f32.xlu0 %v4652
  %v4654 = vpop.xlane.xlu0 %4653
  %v4655 = vsub.f32 %v4568, %v4651
  %v4656 = vsub.f32 %v4646, %v4654
  %v4657 = vmul.f32 %v4655, 1.442695
  %v4658 = vpow.pop %v4657
  %v4659 = vmul.f32 %v4656, 1.442695
  %v4660 = vpow.pop %v4659
  %v4661 = vsel %vm170, %v4658, 0.0
  %4662 = vadd.xlane.f32.xlu0 %v4661
  %v4663 = vpop.xlane.xlu0 %4662
  %v4664 = vsel %vm170, %v4660, 0.0
  %4665 = vadd.xlane.f32.xlu0 %v4664
  %v4666 = vpop.xlane.xlu0 %4665
  %v4667 = vrcp.pop %v4663
  %v4668 = vrcp.pop %v4666
  %v4669 = vmul.f32 %v4658, %v4667
  %v4670 = vmul.f32 %v4660, %v4668
  %4671 = vrot.lane.b32.xlu0 %v3815, 48
  %v4672 = vpop.permute.xlu0 %4671
  %v4675 = vsel %vm170, %v4669, 0
  %4677 = vmatprep.subr.mxu0 0.0
  %4678 = vmatpush1.msra.mxu0 %v4672
  %4679 = vmatprep.subr.mxu0 0.0
  %4680 = vmatpush1.msra.mxu0 0.0
  %4681 = vmatprep.subr.mxu0 0.0
  %4682 = vmatpush1.msra.mxu0 0.0
  %4683 = vmatprep.subr.mxu0 0.0
  %4684 = vmatpush1.msra.mxu0 0.0
  %4685 = vmatprep.subr.mxu0 0.0
  %4686 = vmatpush1.msra.mxu0 0.0
  %4687 = vmatprep.subr.mxu0 0.0
  %4688 = vmatpush1.msra.mxu0 0.0
  %4689 = vmatprep.subr.mxu0 0.0
  %4690 = vmatpush1.msra.mxu0 0.0
  %4691 = vmatprep.subr.mxu0 0.0
  %4692 = vmatpush1.msra.mxu0 0.0
  %4693 = vmatprep.subr.mxu0 0.0
  %4694 = vmatpush1.msra.mxu0 0.0
  %4695 = vmatprep.subr.mxu0 0.0
  %4696 = vmatpush1.msra.mxu0 0.0
  %4697 = vmatprep.subr.mxu0 0.0
  %4698 = vmatpush1.msra.mxu0 0.0
  %4699 = vmatprep.subr.mxu0 0.0
  %4700 = vmatpush1.msra.mxu0 0.0
  %4701 = vmatprep.subr.mxu0 0.0
  %4702 = vmatpush1.msra.mxu0 0.0
  %4703 = vmatprep.subr.mxu0 0.0
  %4704 = vmatpush1.msra.mxu0 0.0
  %4705 = vmatprep.subr.mxu0 0.0
  %4706 = vmatpush1.msra.mxu0 0.0
  %4707 = vmatprep.subr.mxu0 0.0
  %4708 = vmatpush1.msra.mxu0 0.0
  %4709 = vmatprep.subr.mxu0 0.0
  %4710 = vmatpush1.msra.mxu0 0.0
  %4711 = vmatprep.subr.mxu0 0.0
  %4712 = vmatpush1.msra.mxu0 0.0
  %4713 = vmatprep.subr.mxu0 0.0
  %4714 = vmatpush1.msra.mxu0 0.0
  %4715 = vmatprep.subr.mxu0 0.0
  %4716 = vmatpush1.msra.mxu0 0.0
  %4717 = vmatprep.subr.mxu0 0.0
  %4718 = vmatpush1.msra.mxu0 0.0
  %4719 = vmatprep.subr.mxu0 0.0
  %4720 = vmatpush1.msra.mxu0 0.0
  %4721 = vmatprep.subr.mxu0 0.0
  %4722 = vmatpush1.msra.mxu0 0.0
  %4723 = vmatprep.subr.mxu0 0.0
  %4724 = vmatpush1.msra.mxu0 0.0
  %4725 = vmatprep.subr.mxu0 0.0
  %4726 = vmatpush1.msra.mxu0 0.0
  %4727 = vmatprep.subr.mxu0 0.0
  %4728 = vmatpush1.msra.mxu0 0.0
  %4729 = vmatprep.subr.mxu0 0.0
  %4730 = vmatpush1.msra.mxu0 0.0
  %4731 = vmatprep.subr.mxu0 0.0
  %4732 = vmatpush1.msra.mxu0 0.0
  %4733 = vmatprep.subr.mxu0 0.0
  %4734 = vmatpush1.msra.mxu0 0.0
  %4735 = vmatprep.subr.mxu0 0.0
  %4736 = vmatpush1.msra.mxu0 0.0
  %4737 = vmatprep.subr.mxu0 0.0
  %4738 = vmatpush1.msra.mxu0 0.0
  %4739 = vmatprep.subr.mxu0 0.0
  %4740 = vmatpush1.msra.mxu0 0.0
  %4741 = vmatprep.mubr.f32.mxu0 0.0
  %4742 = vmatmul.mubr.f32.gmra.mrb[0].mxu0 %v4675
  %v4743 = vpop.f32.mrb[0].mxu0
  %v4744 = vadd.f32 0.0, %v4743
  %v4745 = vpop.f32.mrb[0].mxu0
  %4746 = vdwg.mxu0
  %4747 = vrot.lane.b32.xlu0 %v3820, 48
  %v4748 = vpop.permute.xlu0 %4747
  %v4751 = vsel %vm170, %v4670, 0
  %4753 = vmatprep.subr.mxu0 0.0
  %4754 = vmatpush1.msra.mxu0 %v4748
  %4755 = vmatprep.subr.mxu0 0.0
  %4756 = vmatpush1.msra.mxu0 0.0
  %4757 = vmatprep.subr.mxu0 0.0
  %4758 = vmatpush1.msra.mxu0 0.0
  %4759 = vmatprep.subr.mxu0 0.0
  %4760 = vmatpush1.msra.mxu0 0.0
  %4761 = vmatprep.subr.mxu0 0.0
  %4762 = vmatpush1.msra.mxu0 0.0
  %4763 = vmatprep.subr.mxu0 0.0
  %4764 = vmatpush1.msra.mxu0 0.0
  %4765 = vmatprep.subr.mxu0 0.0
  %4766 = vmatpush1.msra.mxu0 0.0
  %4767 = vmatprep.subr.mxu0 0.0
  %4768 = vmatpush1.msra.mxu0 0.0
  %4769 = vmatprep.subr.mxu0 0.0
  %4770 = vmatpush1.msra.mxu0 0.0
  %4771 = vmatprep.subr.mxu0 0.0
  %4772 = vmatpush1.msra.mxu0 0.0
  %4773 = vmatprep.subr.mxu0 0.0
  %4774 = vmatpush1.msra.mxu0 0.0
  %4775 = vmatprep.subr.mxu0 0.0
  %4776 = vmatpush1.msra.mxu0 0.0
  %4777 = vmatprep.subr.mxu0 0.0
  %4778 = vmatpush1.msra.mxu0 0.0
  %4779 = vmatprep.subr.mxu0 0.0
  %4780 = vmatpush1.msra.mxu0 0.0
  %4781 = vmatprep.subr.mxu0 0.0
  %4782 = vmatpush1.msra.mxu0 0.0
  %4783 = vmatprep.subr.mxu0 0.0
  %4784 = vmatpush1.msra.mxu0 0.0
  %4785 = vmatprep.subr.mxu0 0.0
  %4786 = vmatpush1.msra.mxu0 0.0
  %4787 = vmatprep.subr.mxu0 0.0
  %4788 = vmatpush1.msra.mxu0 0.0
  %4789 = vmatprep.subr.mxu0 0.0
  %4790 = vmatpush1.msra.mxu0 0.0
  %4791 = vmatprep.subr.mxu0 0.0
  %4792 = vmatpush1.msra.mxu0 0.0
  %4793 = vmatprep.subr.mxu0 0.0
  %4794 = vmatpush1.msra.mxu0 0.0
  %4795 = vmatprep.subr.mxu0 0.0
  %4796 = vmatpush1.msra.mxu0 0.0
  %4797 = vmatprep.subr.mxu0 0.0
  %4798 = vmatpush1.msra.mxu0 0.0
  %4799 = vmatprep.subr.mxu0 0.0
  %4800 = vmatpush1.msra.mxu0 0.0
  %4801 = vmatprep.subr.mxu0 0.0
  %4802 = vmatpush1.msra.mxu0 0.0
  %4803 = vmatprep.subr.mxu0 0.0
  %4804 = vmatpush1.msra.mxu0 0.0
  %4805 = vmatprep.subr.mxu0 0.0
  %4806 = vmatpush1.msra.mxu0 0.0
  %4807 = vmatprep.subr.mxu0 0.0
  %4808 = vmatpush1.msra.mxu0 0.0
  %4809 = vmatprep.subr.mxu0 0.0
  %4810 = vmatpush1.msra.mxu0 0.0
  %4811 = vmatprep.subr.mxu0 0.0
  %4812 = vmatpush1.msra.mxu0 0.0
  %4813 = vmatprep.subr.mxu0 0.0
  %4814 = vmatpush1.msra.mxu0 0.0
  %4815 = vmatprep.subr.mxu0 0.0
  %4816 = vmatpush1.msra.mxu0 0.0
  %4817 = vmatprep.mubr.f32.mxu0 0.0
  %4818 = vmatmul.mubr.f32.gmra.mrb[0].mxu0 %v4751
  %v4819 = vpop.f32.mrb[0].mxu0
  %v4820 = vadd.f32 0.0, %v4819
  %v4821 = vpop.f32.mrb[0].mxu0
  %4822 = vdwg.mxu0
  %4825 = vrot.lane.b32.xlu0 %v4744, 16
  %v4826 = vpop.permute.xlu0 %4825
  %4827 = vrot.lane.b32.xlu0 %v4820, 16
  %v4828 = vpop.permute.xlu0 %4827
  %4831 = vst.msk [vmem:[#allocation2] sm:$0xff] %vm1177, %v4826
  %4832 = vst.msk [vmem:[#allocation2 + $0x8] sm:$0xff] %vm1177, %v4828
  %4833 = vrot.lane.b32.xlu0 %v3815, 104
  %v4834 = vpop.permute.xlu0 %4833
  %4835 = vrot.lane.b32.xlu0 %v3815, 72
  %v4836 = vpop.permute.xlu0 %4835
  %v4837 = vsel %vm170, %v4834, 0
  %v4839 = vsel %vm170, %v4836, 0
  %4841 = vmatprep.subr.mxu0 0.0
  %4842 = vmatpush1.xpose.msra.mxu0 %v4839
  %4843 = vmatprep.subr.mxu0 0.0
  %4844 = vmatpush1.xpose.msra.mxu0 0.0
  %4845 = vmatprep.subr.mxu0 0.0
  %4846 = vmatpush1.xpose.msra.mxu0 0.0
  %4847 = vmatprep.subr.mxu0 0.0
  %4848 = vmatpush1.xpose.msra.mxu0 0.0
  %4849 = vmatprep.subr.mxu0 0.0
  %4850 = vmatpush1.xpose.msra.mxu0 0.0
  %4851 = vmatprep.subr.mxu0 0.0
  %4852 = vmatpush1.xpose.msra.mxu0 0.0
  %4853 = vmatprep.subr.mxu0 0.0
  %4854 = vmatpush1.xpose.msra.mxu0 0.0
  %4855 = vmatprep.subr.mxu0 0.0
  %4856 = vmatpush1.xpose.msra.mxu0 0.0
  %4857 = vmatprep.subr.mxu0 0.0
  %4858 = vmatpush1.xpose.msra.mxu0 0.0
  %4859 = vmatprep.subr.mxu0 0.0
  %4860 = vmatpush1.xpose.msra.mxu0 0.0
  %4861 = vmatprep.subr.mxu0 0.0
  %4862 = vmatpush1.xpose.msra.mxu0 0.0
  %4863 = vmatprep.subr.mxu0 0.0
  %4864 = vmatpush1.xpose.msra.mxu0 0.0
  %4865 = vmatprep.subr.mxu0 0.0
  %4866 = vmatpush1.xpose.msra.mxu0 0.0
  %4867 = vmatprep.subr.mxu0 0.0
  %4868 = vmatpush1.xpose.msra.mxu0 0.0
  %4869 = vmatprep.subr.mxu0 0.0
  %4870 = vmatpush1.xpose.msra.mxu0 0.0
  %4871 = vmatprep.subr.mxu0 0.0
  %4872 = vmatpush1.xpose.msra.mxu0 0.0
  %4873 = vmatprep.subr.mxu0 0.0
  %4874 = vmatpush1.xpose.msra.mxu0 0.0
  %4875 = vmatprep.subr.mxu0 0.0
  %4876 = vmatpush1.xpose.msra.mxu0 0.0
  %4877 = vmatprep.subr.mxu0 0.0
  %4878 = vmatpush1.xpose.msra.mxu0 0.0
  %4879 = vmatprep.subr.mxu0 0.0
  %4880 = vmatpush1.xpose.msra.mxu0 0.0
  %4881 = vmatprep.subr.mxu0 0.0
  %4882 = vmatpush1.xpose.msra.mxu0 0.0
  %4883 = vmatprep.subr.mxu0 0.0
  %4884 = vmatpush1.xpose.msra.mxu0 0.0
  %4885 = vmatprep.subr.mxu0 0.0
  %4886 = vmatpush1.xpose.msra.mxu0 0.0
  %4887 = vmatprep.subr.mxu0 0.0
  %4888 = vmatpush1.xpose.msra.mxu0 0.0
  %4889 = vmatprep.subr.mxu0 0.0
  %4890 = vmatpush1.xpose.msra.mxu0 0.0
  %4891 = vmatprep.subr.mxu0 0.0
  %4892 = vmatpush1.xpose.msra.mxu0 0.0
  %4893 = vmatprep.subr.mxu0 0.0
  %4894 = vmatpush1.xpose.msra.mxu0 0.0
  %4895 = vmatprep.subr.mxu0 0.0
  %4896 = vmatpush1.xpose.msra.mxu0 0.0
  %4897 = vmatprep.subr.mxu0 0.0
  %4898 = vmatpush1.xpose.msra.mxu0 0.0
  %4899 = vmatprep.subr.mxu0 0.0
  %4900 = vmatpush1.xpose.msra.mxu0 0.0
  %4901 = vmatprep.subr.mxu0 0.0
  %4902 = vmatpush1.xpose.msra.mxu0 0.0
  %4903 = vmatprep.subr.mxu0 0.0
  %4904 = vmatpush1.xpose.msra.mxu0 0.0
  %4905 = vmatprep.mubr.f32.mxu0 0.0
  %4906 = vmatmul.mubr.f32.gmra.mrb[0].mxu0 %v4837
  %v4907 = vpop.f32.mrb[0].mxu0
  %v4908 = vadd.f32 %v160, %v4907
  %v4909 = vpop.f32.mrb[0].mxu0
  %4910 = vdwg.mxu0
  %4911 = vrot.lane.b32.xlu0 %v3820, 104
  %v4912 = vpop.permute.xlu0 %4911
  %4913 = vrot.lane.b32.xlu0 %v3820, 72
  %v4914 = vpop.permute.xlu0 %4913
  %v4915 = vsel %vm170, %v4912, 0
  %v4917 = vsel %vm170, %v4914, 0
  %4919 = vmatprep.subr.mxu0 0.0
  %4920 = vmatpush1.xpose.msra.mxu0 %v4917
  %4921 = vmatprep.subr.mxu0 0.0
  %4922 = vmatpush1.xpose.msra.mxu0 0.0
  %4923 = vmatprep.subr.mxu0 0.0
  %4924 = vmatpush1.xpose.msra.mxu0 0.0
  %4925 = vmatprep.subr.mxu0 0.0
  %4926 = vmatpush1.xpose.msra.mxu0 0.0
  %4927 = vmatprep.subr.mxu0 0.0
  %4928 = vmatpush1.xpose.msra.mxu0 0.0
  %4929 = vmatprep.subr.mxu0 0.0
  %4930 = vmatpush1.xpose.msra.mxu0 0.0
  %4931 = vmatprep.subr.mxu0 0.0
  %4932 = vmatpush1.xpose.msra.mxu0 0.0
  %4933 = vmatprep.subr.mxu0 0.0
  %4934 = vmatpush1.xpose.msra.mxu0 0.0
  %4935 = vmatprep.subr.mxu0 0.0
  %4936 = vmatpush1.xpose.msra.mxu0 0.0
  %4937 = vmatprep.subr.mxu0 0.0
  %4938 = vmatpush1.xpose.msra.mxu0 0.0
  %4939 = vmatprep.subr.mxu0 0.0
  %4940 = vmatpush1.xpose.msra.mxu0 0.0
  %4941 = vmatprep.subr.mxu0 0.0
  %4942 = vmatpush1.xpose.msra.mxu0 0.0
  %4943 = vmatprep.subr.mxu0 0.0
  %4944 = vmatpush1.xpose.msra.mxu0 0.0
  %4945 = vmatprep.subr.mxu0 0.0
  %4946 = vmatpush1.xpose.msra.mxu0 0.0
  %4947 = vmatprep.subr.mxu0 0.0
  %4948 = vmatpush1.xpose.msra.mxu0 0.0
  %4949 = vmatprep.subr.mxu0 0.0
  %4950 = vmatpush1.xpose.msra.mxu0 0.0
  %4951 = vmatprep.subr.mxu0 0.0
  %4952 = vmatpush1.xpose.msra.mxu0 0.0
  %4953 = vmatprep.subr.mxu0 0.0
  %4954 = vmatpush1.xpose.msra.mxu0 0.0
  %4955 = vmatprep.subr.mxu0 0.0
  %4956 = vmatpush1.xpose.msra.mxu0 0.0
  %4957 = vmatprep.subr.mxu0 0.0
  %4958 = vmatpush1.xpose.msra.mxu0 0.0
  %4959 = vmatprep.subr.mxu0 0.0
  %4960 = vmatpush1.xpose.msra.mxu0 0.0
  %4961 = vmatprep.subr.mxu0 0.0
  %4962 = vmatpush1.xpose.msra.mxu0 0.0
  %4963 = vmatprep.subr.mxu0 0.0
  %4964 = vmatpush1.xpose.msra.mxu0 0.0
  %4965 = vmatprep.subr.mxu0 0.0
  %4966 = vmatpush1.xpose.msra.mxu0 0.0
  %4967 = vmatprep.subr.mxu0 0.0
  %4968 = vmatpush1.xpose.msra.mxu0 0.0
  %4969 = vmatprep.subr.mxu0 0.0
  %4970 = vmatpush1.xpose.msra.mxu0 0.0
  %4971 = vmatprep.subr.mxu0 0.0
  %4972 = vmatpush1.xpose.msra.mxu0 0.0
  %4973 = vmatprep.subr.mxu0 0.0
  %4974 = vmatpush1.xpose.msra.mxu0 0.0
  %4975 = vmatprep.subr.mxu0 0.0
  %4976 = vmatpush1.xpose.msra.mxu0 0.0
  %4977 = vmatprep.subr.mxu0 0.0
  %4978 = vmatpush1.xpose.msra.mxu0 0.0
  %4979 = vmatprep.subr.mxu0 0.0
  %4980 = vmatpush1.xpose.msra.mxu0 0.0
  %4981 = vmatprep.subr.mxu0 0.0
  %4982 = vmatpush1.xpose.msra.mxu0 0.0
  %4983 = vmatprep.mubr.f32.mxu0 0.0
  %4984 = vmatmul.mubr.f32.gmra.mrb[0].mxu0 %v4915
  %v4985 = vpop.f32.mrb[0].mxu0
  %v4986 = vadd.f32 %v164, %v4985
  %v4987 = vpop.f32.mrb[0].mxu0
  %4988 = vdwg.mxu0
  %v4989 = vsel %vm170, %v4908, -inf
  %4990 = vmax.xlane.f32.xlu0 %v4989
  %v4991 = vpop.xlane.xlu0 %4990
  %v4992 = vsel %vm170, %v4986, -inf
  %4993 = vmax.xlane.f32.xlu0 %v4992
  %v4994 = vpop.xlane.xlu0 %4993
  %v4995 = vsub.f32 %v4908, %v4991
  %v4996 = vsub.f32 %v4986, %v4994
  %v4997 = vmul.f32 %v4995, 1.442695
  %v4998 = vpow.pop %v4997
  %v4999 = vmul.f32 %v4996, 1.442695
  %v5000 = vpow.pop %v4999
  %v5001 = vsel %vm170, %v4998, 0.0
  %5002 = vadd.xlane.f32.xlu0 %v5001
  %v5003 = vpop.xlane.xlu0 %5002
  %v5004 = vsel %vm170, %v5000, 0.0
  %5005 = vadd.xlane.f32.xlu0 %v5004
  %v5006 = vpop.xlane.xlu0 %5005
  %v5007 = vrcp.pop %v5003
  %v5008 = vrcp.pop %v5006
  %v5009 = vmul.f32 %v4998, %v5007
  %v5010 = vmul.f32 %v5000, %v5008
  %5011 = vrot.lane.b32.xlu0 %v3815, 40
  %v5012 = vpop.permute.xlu0 %5011
  %v5015 = vsel %vm170, %v5009, 0
  %5017 = vmatprep.subr.mxu0 0.0
  %5018 = vmatpush1.msra.mxu0 %v5012
  %5019 = vmatprep.subr.mxu0 0.0
  %5020 = vmatpush1.msra.mxu0 0.0
  %5021 = vmatprep.subr.mxu0 0.0
  %5022 = vmatpush1.msra.mxu0 0.0
  %5023 = vmatprep.subr.mxu0 0.0
  %5024 = vmatpush1.msra.mxu0 0.0
  %5025 = vmatprep.subr.mxu0 0.0
  %5026 = vmatpush1.msra.mxu0 0.0
  %5027 = vmatprep.subr.mxu0 0.0
  %5028 = vmatpush1.msra.mxu0 0.0
  %5029 = vmatprep.subr.mxu0 0.0
  %5030 = vmatpush1.msra.mxu0 0.0
  %5031 = vmatprep.subr.mxu0 0.0
  %5032 = vmatpush1.msra.mxu0 0.0
  %5033 = vmatprep.subr.mxu0 0.0
  %5034 = vmatpush1.msra.mxu0 0.0
  %5035 = vmatprep.subr.mxu0 0.0
  %5036 = vmatpush1.msra.mxu0 0.0
  %5037 = vmatprep.subr.mxu0 0.0
  %5038 = vmatpush1.msra.mxu0 0.0
  %5039 = vmatprep.subr.mxu0 0.0
  %5040 = vmatpush1.msra.mxu0 0.0
  %5041 = vmatprep.subr.mxu0 0.0
  %5042 = vmatpush1.msra.mxu0 0.0
  %5043 = vmatprep.subr.mxu0 0.0
  %5044 = vmatpush1.msra.mxu0 0.0
  %5045 = vmatprep.subr.mxu0 0.0
  %5046 = vmatpush1.msra.mxu0 0.0
  %5047 = vmatprep.subr.mxu0 0.0
  %5048 = vmatpush1.msra.mxu0 0.0
  %5049 = vmatprep.subr.mxu0 0.0
  %5050 = vmatpush1.msra.mxu0 0.0
  %5051 = vmatprep.subr.mxu0 0.0
  %5052 = vmatpush1.msra.mxu0 0.0
  %5053 = vmatprep.subr.mxu0 0.0
  %5054 = vmatpush1.msra.mxu0 0.0
  %5055 = vmatprep.subr.mxu0 0.0
  %5056 = vmatpush1.msra.mxu0 0.0
  %5057 = vmatprep.subr.mxu0 0.0
  %5058 = vmatpush1.msra.mxu0 0.0
  %5059 = vmatprep.subr.mxu0 0.0
  %5060 = vmatpush1.msra.mxu0 0.0
  %5061 = vmatprep.subr.mxu0 0.0
  %5062 = vmatpush1.msra.mxu0 0.0
  %5063 = vmatprep.subr.mxu0 0.0
  %5064 = vmatpush1.msra.mxu0 0.0
  %5065 = vmatprep.subr.mxu0 0.0
  %5066 = vmatpush1.msra.mxu0 0.0
  %5067 = vmatprep.subr.mxu0 0.0
  %5068 = vmatpush1.msra.mxu0 0.0
  %5069 = vmatprep.subr.mxu0 0.0
  %5070 = vmatpush1.msra.mxu0 0.0
  %5071 = vmatprep.subr.mxu0 0.0
  %5072 = vmatpush1.msra.mxu0 0.0
  %5073 = vmatprep.subr.mxu0 0.0
  %5074 = vmatpush1.msra.mxu0 0.0
  %5075 = vmatprep.subr.mxu0 0.0
  %5076 = vmatpush1.msra.mxu0 0.0
  %5077 = vmatprep.subr.mxu0 0.0
  %5078 = vmatpush1.msra.mxu0 0.0
  %5079 = vmatprep.subr.mxu0 0.0
  %5080 = vmatpush1.msra.mxu0 0.0
  %5081 = vmatprep.mubr.f32.mxu0 0.0
  %5082 = vmatmul.mubr.f32.gmra.mrb[0].mxu0 %v5015
  %v5083 = vpop.f32.mrb[0].mxu0
  %v5084 = vadd.f32 0.0, %v5083
  %v5085 = vpop.f32.mrb[0].mxu0
  %5086 = vdwg.mxu0
  %5087 = vrot.lane.b32.xlu0 %v3820, 40
  %v5088 = vpop.permute.xlu0 %5087
  %v5091 = vsel %vm170, %v5010, 0
  %5093 = vmatprep.subr.mxu0 0.0
  %5094 = vmatpush1.msra.mxu0 %v5088
  %5095 = vmatprep.subr.mxu0 0.0
  %5096 = vmatpush1.msra.mxu0 0.0
  %5097 = vmatprep.subr.mxu0 0.0
  %5098 = vmatpush1.msra.mxu0 0.0
  %5099 = vmatprep.subr.mxu0 0.0
  %5100 = vmatpush1.msra.mxu0 0.0
  %5101 = vmatprep.subr.mxu0 0.0
  %5102 = vmatpush1.msra.mxu0 0.0
  %5103 = vmatprep.subr.mxu0 0.0
  %5104 = vmatpush1.msra.mxu0 0.0
  %5105 = vmatprep.subr.mxu0 0.0
  %5106 = vmatpush1.msra.mxu0 0.0
  %5107 = vmatprep.subr.mxu0 0.0
  %5108 = vmatpush1.msra.mxu0 0.0
  %5109 = vmatprep.subr.mxu0 0.0
  %5110 = vmatpush1.msra.mxu0 0.0
  %5111 = vmatprep.subr.mxu0 0.0
  %5112 = vmatpush1.msra.mxu0 0.0
  %5113 = vmatprep.subr.mxu0 0.0
  %5114 = vmatpush1.msra.mxu0 0.0
  %5115 = vmatprep.subr.mxu0 0.0
  %5116 = vmatpush1.msra.mxu0 0.0
  %5117 = vmatprep.subr.mxu0 0.0
  %5118 = vmatpush1.msra.mxu0 0.0
  %5119 = vmatprep.subr.mxu0 0.0
  %5120 = vmatpush1.msra.mxu0 0.0
  %5121 = vmatprep.subr.mxu0 0.0
  %5122 = vmatpush1.msra.mxu0 0.0
  %5123 = vmatprep.subr.mxu0 0.0
  %5124 = vmatpush1.msra.mxu0 0.0
  %5125 = vmatprep.subr.mxu0 0.0
  %5126 = vmatpush1.msra.mxu0 0.0
  %5127 = vmatprep.subr.mxu0 0.0
  %5128 = vmatpush1.msra.mxu0 0.0
  %5129 = vmatprep.subr.mxu0 0.0
  %5130 = vmatpush1.msra.mxu0 0.0
  %5131 = vmatprep.subr.mxu0 0.0
  %5132 = vmatpush1.msra.mxu0 0.0
  %5133 = vmatprep.subr.mxu0 0.0
  %5134 = vmatpush1.msra.mxu0 0.0
  %5135 = vmatprep.subr.mxu0 0.0
  %5136 = vmatpush1.msra.mxu0 0.0
  %5137 = vmatprep.subr.mxu0 0.0
  %5138 = vmatpush1.msra.mxu0 0.0
  %5139 = vmatprep.subr.mxu0 0.0
  %5140 = vmatpush1.msra.mxu0 0.0
  %5141 = vmatprep.subr.mxu0 0.0
  %5142 = vmatpush1.msra.mxu0 0.0
  %5143 = vmatprep.subr.mxu0 0.0
  %5144 = vmatpush1.msra.mxu0 0.0
  %5145 = vmatprep.subr.mxu0 0.0
  %5146 = vmatpush1.msra.mxu0 0.0
  %5147 = vmatprep.subr.mxu0 0.0
  %5148 = vmatpush1.msra.mxu0 0.0
  %5149 = vmatprep.subr.mxu0 0.0
  %5150 = vmatpush1.msra.mxu0 0.0
  %5151 = vmatprep.subr.mxu0 0.0
  %5152 = vmatpush1.msra.mxu0 0.0
  %5153 = vmatprep.subr.mxu0 0.0
  %5154 = vmatpush1.msra.mxu0 0.0
  %5155 = vmatprep.subr.mxu0 0.0
  %5156 = vmatpush1.msra.mxu0 0.0
  %5157 = vmatprep.mubr.f32.mxu0 0.0
  %5158 = vmatmul.mubr.f32.gmra.mrb[0].mxu0 %v5091
  %v5159 = vpop.f32.mrb[0].mxu0
  %v5160 = vadd.f32 0.0, %v5159
  %v5161 = vpop.f32.mrb[0].mxu0
  %5162 = vdwg.mxu0
  %5165 = vrot.lane.b32.xlu0 %v5084, 24
  %v5166 = vpop.permute.xlu0 %5165
  %5167 = vrot.lane.b32.xlu0 %v5160, 24
  %v5168 = vpop.permute.xlu0 %5167
  %5171 = vst.msk [vmem:[#allocation2] sm:$0xff] %vm1518, %v5166
  %5172 = vst.msk [vmem:[#allocation2 + $0x8] sm:$0xff] %vm1518, %v5168
  %v5173 = vld [vmem:[#allocation2] sm:$0xff]
  %v5174 = vld [vmem:[#allocation2 + $0x8] sm:$0xff]
  %s5175 = scalar_lea.vmem %s5, 64
  %v5176 = vld [vmem:[%s5175] sm:$0xff]
  %v5177 = vld [vmem:[%s5175 + $0x8] sm:$0xff]
  %v5178 = vld [vmem:[%s5175 + $0x10] sm:$0xff]
  %v5179 = vld [vmem:[%s5175 + $0x18] sm:$0xff]
  %s5180 = scalar_lea.vmem %s6, 2
  %v5181 = vld [vmem:[%s5180] sm:$0x1]
  %v5183 = vlaneseq
  %v5184 = vshrl.u32 %v5183, 7
  %v5185 = vsub.s32 0, %v5184
  %v5186 = vrot.slane %v5181, %v5185
  %v5189 = vsel %vm73, %v5173, 0
  %v5192 = vsel %vm73, %v5174, 0
  %5194 = vmatprep.subr.mxu0 0.0
  %5195 = vmatpush1.msra.mxu0 %v5176
  %5196 = vmatprep.subr.mxu0 0.0
  %5197 = vmatpush1.msra.mxu0 %v5177
  %5198 = vmatprep.subr.mxu0 0.0
  %5199 = vmatpush1.msra.mxu0 %v5178
  %5200 = vmatprep.subr.mxu0 0.0
  %5201 = vmatpush1.msra.mxu0 %v5179
  %5202 = vmatprep.subr.mxu0 0.0
  %5203 = vmatpush1.msra.mxu0 0.0
  %5204 = vmatprep.subr.mxu0 0.0
  %5205 = vmatpush1.msra.mxu0 0.0
  %5206 = vmatprep.subr.mxu0 0.0
  %5207 = vmatpush1.msra.mxu0 0.0
  %5208 = vmatprep.subr.mxu0 0.0
  %5209 = vmatpush1.msra.mxu0 0.0
  %5210 = vmatprep.subr.mxu0 0.0
  %5211 = vmatpush1.msra.mxu0 0.0
  %5212 = vmatprep.subr.mxu0 0.0
  %5213 = vmatpush1.msra.mxu0 0.0
  %5214 = vmatprep.subr.mxu0 0.0
  %5215 = vmatpush1.msra.mxu0 0.0
  %5216 = vmatprep.subr.mxu0 0.0
  %5217 = vmatpush1.msra.mxu0 0.0
  %5218 = vmatprep.subr.mxu0 0.0
  %5219 = vmatpush1.msra.mxu0 0.0
  %5220 = vmatprep.subr.mxu0 0.0
  %5221 = vmatpush1.msra.mxu0 0.0
  %5222 = vmatprep.subr.mxu0 0.0
  %5223 = vmatpush1.msra.mxu0 0.0
  %5224 = vmatprep.subr.mxu0 0.0
  %5225 = vmatpush1.msra.mxu0 0.0
  %5226 = vmatprep.subr.mxu0 0.0
  %5227 = vmatpush1.msra.mxu0 0.0
  %5228 = vmatprep.subr.mxu0 0.0
  %5229 = vmatpush1.msra.mxu0 0.0
  %5230 = vmatprep.subr.mxu0 0.0
  %5231 = vmatpush1.msra.mxu0 0.0
  %5232 = vmatprep.subr.mxu0 0.0
  %5233 = vmatpush1.msra.mxu0 0.0
  %5234 = vmatprep.subr.mxu0 0.0
  %5235 = vmatpush1.msra.mxu0 0.0
  %5236 = vmatprep.subr.mxu0 0.0
  %5237 = vmatpush1.msra.mxu0 0.0
  %5238 = vmatprep.subr.mxu0 0.0
  %5239 = vmatpush1.msra.mxu0 0.0
  %5240 = vmatprep.subr.mxu0 0.0
  %5241 = vmatpush1.msra.mxu0 0.0
  %5242 = vmatprep.subr.mxu0 0.0
  %5243 = vmatpush1.msra.mxu0 0.0
  %5244 = vmatprep.subr.mxu0 0.0
  %5245 = vmatpush1.msra.mxu0 0.0
  %5246 = vmatprep.subr.mxu0 0.0
  %5247 = vmatpush1.msra.mxu0 0.0
  %5248 = vmatprep.subr.mxu0 0.0
  %5249 = vmatpush1.msra.mxu0 0.0
  %5250 = vmatprep.subr.mxu0 0.0
  %5251 = vmatpush1.msra.mxu0 0.0
  %5252 = vmatprep.subr.mxu0 0.0
  %5253 = vmatpush1.msra.mxu0 0.0
  %5254 = vmatprep.subr.mxu0 0.0
  %5255 = vmatpush1.msra.mxu0 0.0
  %5256 = vmatprep.subr.mxu0 0.0
  %5257 = vmatpush1.msra.mxu0 0.0
  %5258 = vmatprep.mubr.f32.mxu0 0.0
  %5259 = vmatmul.mubr.f32.gmra.mrb[0].mxu0 %v5189
  %v5260 = vpop.f32.mrb[0].mxu0
  %v5261 = vadd.f32 %v5186, %v5260
  %v5262 = vpop.f32.mrb[0].mxu0
  %5263 = vmatprep.mubr.f32.mxu0 0.0
  %5264 = vmatmul.mubr.f32.gmra.mrb[0].mxu0 %v5192
  %v5265 = vpop.f32.mrb[0].mxu0
  %v5266 = vadd.f32 %v5186, %v5265
  %v5267 = vpop.f32.mrb[0].mxu0
  %5268 = vdwg.mxu0
  %v5269 = vadd.f32 %v3727, %v5261
  %v5270 = vadd.f32 %v3728, %v5266
  %s5271 = scalar_lea.vmem %s7, 2
  %v5272 = vld [vmem:[%s5271] sm:$0x1]
  %s5273 = scalar_lea.vmem %s8, 2
  %v5274 = vld [vmem:[%s5273] sm:$0x1]
  %v5275 = vsel %vm73, %v5269, 0.0
  %5276 = vadd.xlane.f32.xlu0 %v5275
  %v5277 = vpop.xlane.xlu0 %5276
  %v5278 = vsel %vm73, %v5270, 0.0
  %5279 = vadd.xlane.f32.xlu0 %v5278
  %v5280 = vpop.xlane.xlu0 %5279
  %v5281 = vmul.f32 %v5277, %v1625
  %v5282 = vmul.f32 %v5280, %v1625
  %v5283 = vsub.f32 %v5269, %v5281
  %v5284 = vsub.f32 %v5270, %v5282
  %v5285 = vmul.f32 %v5283, %v5283
  %v5286 = vmul.f32 %v5284, %v5284
  %v5287 = vsel %vm73, %v5285, 0.0
  %5288 = vadd.xlane.f32.xlu0 %v5287
  %v5289 = vpop.xlane.xlu0 %5288
  %v5290 = vsel %vm73, %v5286, 0.0
  %5291 = vadd.xlane.f32.xlu0 %v5290
  %v5292 = vpop.xlane.xlu0 %5291
  %v5293 = vmul.f32 %v5289, %v1625
  %v5294 = vmul.f32 %v5292, %v1625
  %v5295 = vadd.f32 %v5293, 1e-05
  %v5296 = vadd.f32 %v5294, 1e-05
  %v5297 = vrsqrt.pop %v5295
  %v5298 = vrsqrt.pop %v5296
  %v5299 = vmul.f32 %v5283, %v5297
  %v5300 = vmul.f32 %v5284, %v5298
  %v5302 = vlaneseq
  %v5303 = vshrl.u32 %v5302, 7
  %v5304 = vsub.s32 0, %v5303
  %v5305 = vrot.slane %v5272, %v5304
  %v5307 = vmul.f32 %v5299, %v5305
  %v5308 = vmul.f32 %v5300, %v5305
  %v5310 = vlaneseq
  %v5311 = vshrl.u32 %v5310, 7
  %v5312 = vsub.s32 0, %v5311
  %v5313 = vrot.slane %v5274, %v5312
  %v5315 = vadd.f32 %v5307, %v5313
  %v5316 = vadd.f32 %v5308, %v5313
  %s5317 = scalar_lea.vmem %s9, 64
  %v5318 = vld [vmem:[%s5317] sm:$0xff]
  %v5319 = vld [vmem:[%s5317 + $0x8] sm:$0xff]
  %v5320 = vld [vmem:[%s5317 + $0x10] sm:$0xff]
  %v5321 = vld [vmem:[%s5317 + $0x18] sm:$0xff]
  %s5322 = scalar_lea.vmem %s10, 2
  %v5323 = vld [vmem:[%s5322] sm:$0x1]
  %v5325 = vlaneseq
  %v5326 = vshrl.u32 %v5325, 7
  %v5327 = vsub.s32 0, %v5326
  %v5328 = vrot.slane %v5323, %v5327
  %v5331 = vsel %vm73, %v5315, 0
  %v5334 = vsel %vm73, %v5316, 0
  %5336 = vmatprep.subr.mxu0 0.0
  %5337 = vmatpush1.msra.mxu0 %v5318
  %5338 = vmatprep.subr.mxu0 0.0
  %5339 = vmatpush1.msra.mxu0 %v5319
  %5340 = vmatprep.subr.mxu0 0.0
  %5341 = vmatpush1.msra.mxu0 %v5320
  %5342 = vmatprep.subr.mxu0 0.0
  %5343 = vmatpush1.msra.mxu0 %v5321
  %5344 = vmatprep.subr.mxu0 0.0
  %5345 = vmatpush1.msra.mxu0 0.0
  %5346 = vmatprep.subr.mxu0 0.0
  %5347 = vmatpush1.msra.mxu0 0.0
  %5348 = vmatprep.subr.mxu0 0.0
  %5349 = vmatpush1.msra.mxu0 0.0
  %5350 = vmatprep.subr.mxu0 0.0
  %5351 = vmatpush1.msra.mxu0 0.0
  %5352 = vmatprep.subr.mxu0 0.0
  %5353 = vmatpush1.msra.mxu0 0.0
  %5354 = vmatprep.subr.mxu0 0.0
  %5355 = vmatpush1.msra.mxu0 0.0
  %5356 = vmatprep.subr.mxu0 0.0
  %5357 = vmatpush1.msra.mxu0 0.0
  %5358 = vmatprep.subr.mxu0 0.0
  %5359 = vmatpush1.msra.mxu0 0.0
  %5360 = vmatprep.subr.mxu0 0.0
  %5361 = vmatpush1.msra.mxu0 0.0
  %5362 = vmatprep.subr.mxu0 0.0
  %5363 = vmatpush1.msra.mxu0 0.0
  %5364 = vmatprep.subr.mxu0 0.0
  %5365 = vmatpush1.msra.mxu0 0.0
  %5366 = vmatprep.subr.mxu0 0.0
  %5367 = vmatpush1.msra.mxu0 0.0
  %5368 = vmatprep.subr.mxu0 0.0
  %5369 = vmatpush1.msra.mxu0 0.0
  %5370 = vmatprep.subr.mxu0 0.0
  %5371 = vmatpush1.msra.mxu0 0.0
  %5372 = vmatprep.subr.mxu0 0.0
  %5373 = vmatpush1.msra.mxu0 0.0
  %5374 = vmatprep.subr.mxu0 0.0
  %5375 = vmatpush1.msra.mxu0 0.0
  %5376 = vmatprep.subr.mxu0 0.0
  %5377 = vmatpush1.msra.mxu0 0.0
  %5378 = vmatprep.subr.mxu0 0.0
  %5379 = vmatpush1.msra.mxu0 0.0
  %5380 = vmatprep.subr.mxu0 0.0
  %5381 = vmatpush1.msra.mxu0 0.0
  %5382 = vmatprep.subr.mxu0 0.0
  %5383 = vmatpush1.msra.mxu0 0.0
  %5384 = vmatprep.subr.mxu0 0.0
  %5385 = vmatpush1.msra.mxu0 0.0
  %5386 = vmatprep.subr.mxu0 0.0
  %5387 = vmatpush1.msra.mxu0 0.0
  %5388 = vmatprep.subr.mxu0 0.0
  %5389 = vmatpush1.msra.mxu0 0.0
  %5390 = vmatprep.subr.mxu0 0.0
  %5391 = vmatpush1.msra.mxu0 0.0
  %5392 = vmatprep.subr.mxu0 0.0
  %5393 = vmatpush1.msra.mxu0 0.0
  %5394 = vmatprep.subr.mxu0 0.0
  %5395 = vmatpush1.msra.mxu0 0.0
  %5396 = vmatprep.subr.mxu0 0.0
  %5397 = vmatpush1.msra.mxu0 0.0
  %5398 = vmatprep.subr.mxu0 0.0
  %5399 = vmatpush1.msra.mxu0 0.0
  %5400 = vmatprep.mubr.f32.mxu0 0.0
  %5401 = vmatmul.mubr.f32.gmra.mrb[0].mxu0 %v5331
  %v5402 = vpop.f32.mrb[0].mxu0
  %v5403 = vadd.f32 %v5328, %v5402
  %v5404 = vpop.f32.mrb[0].mxu0
  %5405 = vmatprep.mubr.f32.mxu0 0.0
  %5406 = vmatmul.mubr.f32.gmra.mrb[0].mxu0 %v5334
  %v5407 = vpop.f32.mrb[0].mxu0
  %v5408 = vadd.f32 %v5328, %v5407
  %v5409 = vpop.f32.mrb[0].mxu0
  %5410 = vdwg.mxu0
  %v5411 = vmax.f32 %v5403, 0.0
  %v5412 = vmax.f32 %v5408, 0.0
  %s5413 = scalar_lea.vmem %s11, 128
  %v5414 = vld [vmem:[%s5413] sm:$0xff]
  %v5415 = vld [vmem:[%s5413 + $0x8] sm:$0xff]
  %v5416 = vld [vmem:[%s5413 + $0x10] sm:$0xff]
  %v5417 = vld [vmem:[%s5413 + $0x18] sm:$0xff]
  %v5418 = vld [vmem:[%s5413 + $0x20] sm:$0xff]
  %v5419 = vld [vmem:[%s5413 + $0x28] sm:$0xff]
  %v5420 = vld [vmem:[%s5413 + $0x30] sm:$0xff]
  %v5421 = vld [vmem:[%s5413 + $0x38] sm:$0xff]
  %s5422 = scalar_lea.vmem %s12, 2
  %v5423 = vld [vmem:[%s5422] sm:$0x1]
  %v5425 = vlaneseq
  %v5426 = vshrl.u32 %v5425, 7
  %v5427 = vsub.s32 0, %v5426
  %v5428 = vrot.slane %v5423, %v5427
  %v5431 = vsel %vm1771, %v5411, 0
  %v5434 = vsel %vm1771, %v5412, 0
  %5436 = vmatprep.subr.mxu0 0.0
  %5437 = vmatpush1.msra.mxu0 %v5414
  %5438 = vmatprep.subr.mxu0 0.0
  %5439 = vmatpush1.msra.mxu0 %v5415
  %5440 = vmatprep.subr.mxu0 0.0
  %5441 = vmatpush1.msra.mxu0 %v5416
  %5442 = vmatprep.subr.mxu0 0.0
  %5443 = vmatpush1.msra.mxu0 %v5417
  %5444 = vmatprep.subr.mxu0 0.0
  %5445 = vmatpush1.msra.mxu0 %v5418
  %5446 = vmatprep.subr.mxu0 0.0
  %5447 = vmatpush1.msra.mxu0 %v5419
  %5448 = vmatprep.subr.mxu0 0.0
  %5449 = vmatpush1.msra.mxu0 %v5420
  %5450 = vmatprep.subr.mxu0 0.0
  %5451 = vmatpush1.msra.mxu0 %v5421
  %5452 = vmatprep.subr.mxu0 0.0
  %5453 = vmatpush1.msra.mxu0 0.0
  %5454 = vmatprep.subr.mxu0 0.0
  %5455 = vmatpush1.msra.mxu0 0.0
  %5456 = vmatprep.subr.mxu0 0.0
  %5457 = vmatpush1.msra.mxu0 0.0
  %5458 = vmatprep.subr.mxu0 0.0
  %5459 = vmatpush1.msra.mxu0 0.0
  %5460 = vmatprep.subr.mxu0 0.0
  %5461 = vmatpush1.msra.mxu0 0.0
  %5462 = vmatprep.subr.mxu0 0.0
  %5463 = vmatpush1.msra.mxu0 0.0
  %5464 = vmatprep.subr.mxu0 0.0
  %5465 = vmatpush1.msra.mxu0 0.0
  %5466 = vmatprep.subr.mxu0 0.0
  %5467 = vmatpush1.msra.mxu0 0.0
  %5468 = vmatprep.subr.mxu0 0.0
  %5469 = vmatpush1.msra.mxu0 0.0
  %5470 = vmatprep.subr.mxu0 0.0
  %5471 = vmatpush1.msra.mxu0 0.0
  %5472 = vmatprep.subr.mxu0 0.0
  %5473 = vmatpush1.msra.mxu0 0.0
  %5474 = vmatprep.subr.mxu0 0.0
  %5475 = vmatpush1.msra.mxu0 0.0
  %5476 = vmatprep.subr.mxu0 0.0
  %5477 = vmatpush1.msra.mxu0 0.0
  %5478 = vmatprep.subr.mxu0 0.0
  %5479 = vmatpush1.msra.mxu0 0.0
  %5480 = vmatprep.subr.mxu0 0.0
  %5481 = vmatpush1.msra.mxu0 0.0
  %5482 = vmatprep.subr.mxu0 0.0
  %5483 = vmatpush1.msra.mxu0 0.0
  %5484 = vmatprep.subr.mxu0 0.0
  %5485 = vmatpush1.msra.mxu0 0.0
  %5486 = vmatprep.subr.mxu0 0.0
  %5487 = vmatpush1.msra.mxu0 0.0
  %5488 = vmatprep.subr.mxu0 0.0
  %5489 = vmatpush1.msra.mxu0 0.0
  %5490 = vmatprep.subr.mxu0 0.0
  %5491 = vmatpush1.msra.mxu0 0.0
  %5492 = vmatprep.subr.mxu0 0.0
  %5493 = vmatpush1.msra.mxu0 0.0
  %5494 = vmatprep.subr.mxu0 0.0
  %5495 = vmatpush1.msra.mxu0 0.0
  %5496 = vmatprep.subr.mxu0 0.0
  %5497 = vmatpush1.msra.mxu0 0.0
  %5498 = vmatprep.subr.mxu0 0.0
  %5499 = vmatpush1.msra.mxu0 0.0
  %5500 = vmatprep.mubr.f32.mxu0 0.0
  %5501 = vmatmul.mubr.f32.gmra.mrb[0].mxu0 %v5431
  %v5502 = vpop.f32.mrb[0].mxu0
  %v5503 = vadd.f32 %v5428, %v5502
  %v5504 = vpop.f32.mrb[0].mxu0
  %5505 = vmatprep.mubr.f32.mxu0 0.0
  %5506 = vmatmul.mubr.f32.gmra.mrb[0].mxu0 %v5434
  %v5507 = vpop.f32.mrb[0].mxu0
  %v5508 = vadd.f32 %v5428, %v5507
  %v5509 = vpop.f32.mrb[0].mxu0
  %5510 = vdwg.mxu0
  %v5511 = vadd.f32 %v5315, %v5503
  %v5512 = vadd.f32 %v5316, %v5508
  %s5513 = scalar_lea.vmem %s13, 2
  %v5514 = vld [vmem:[%s5513] sm:$0x1]
  %s5515 = scalar_lea.vmem %s14, 2
  %v5516 = vld [vmem:[%s5515] sm:$0x1]
  %v5517 = vsel %vm73, %v5511, 0.0
  %5518 = vadd.xlane.f32.xlu0 %v5517
  %v5519 = vpop.xlane.xlu0 %5518
  %v5520 = vsel %vm73, %v5512, 0.0
  %5521 = vadd.xlane.f32.xlu0 %v5520
  %v5522 = vpop.xlane.xlu0 %5521
  %v5523 = vmul.f32 %v5519, %v1625
  %v5524 = vmul.f32 %v5522, %v1625
  %v5525 = vsub.f32 %v5511, %v5523
  %v5526 = vsub.f32 %v5512, %v5524
  %v5527 = vmul.f32 %v5525, %v5525
  %v5528 = vmul.f32 %v5526, %v5526
  %v5529 = vsel %vm73, %v5527, 0.0
  %5530 = vadd.xlane.f32.xlu0 %v5529
  %v5531 = vpop.xlane.xlu0 %5530
  %v5532 = vsel %vm73, %v5528, 0.0
  %5533 = vadd.xlane.f32.xlu0 %v5532
  %v5534 = vpop.xlane.xlu0 %5533
  %v5535 = vmul.f32 %v5531, %v1625
  %v5536 = vmul.f32 %v5534, %v1625
  %v5537 = vadd.f32 %v5535, 1e-05
  %v5538 = vadd.f32 %v5536, 1e-05
  %v5539 = vrsqrt.pop %v5537
  %v5540 = vrsqrt.pop %v5538
  %v5541 = vmul.f32 %v5525, %v5539
  %v5542 = vmul.f32 %v5526, %v5540
  %v5544 = vlaneseq
  %v5545 = vshrl.u32 %v5544, 7
  %v5546 = vsub.s32 0, %v5545
  %v5547 = vrot.slane %v5514, %v5546
  %v5549 = vmul.f32 %v5541, %v5547
  %v5550 = vmul.f32 %v5542, %v5547
  %v5552 = vlaneseq
  %v5553 = vshrl.u32 %v5552, 7
  %v5554 = vsub.s32 0, %v5553
  %v5555 = vrot.slane %v5516, %v5554
  %v5557 = vadd.f32 %v5549, %v5555
  %v5558 = vadd.f32 %v5550, %v5555
  %v5559 = vmax.f32 %v5557, 0.0
  %v5560 = vmax.f32 %v5558, 0.0
  %v5561 = vld [vmem:[%s2] sm:$0xff]
  %v5562 = vld [vmem:[%s2 + $0x8] sm:$0xff]
  %5564 = vset.pattern.permute.xlu0 0
  %5565 = vperm.xlu0 %5564, %v5561
  %v5566 = vpop.permute.xlu0 %5565
  %5569 = vset.pattern.permute.xlu0 0
  %5570 = vperm.xlu0 %5569, %v5562
  %v5571 = vpop.permute.xlu0 %5570
  %v5573 = vmul.f32 %v5559, %v5566
  %v5574 = vmul.f32 %v5560, %v5571
  %v5575 = vld [vmem:[%s15] sm:$0xff]
  %v5576 = vmul.f32 %v5573, %v5575
  %v5577 = vmul.f32 %v5574, %v5575
  %v5578 = vsel %vm73, %v5576, 0.0
  %5579 = vadd.xlane.f32.xlu0 %v5578
  %v5580 = vpop.xlane.xlu0 %5579
  %v5581 = vsel %vm73, %v5577, 0.0
  %5582 = vadd.xlane.f32.xlu0 %v5581
  %v5583 = vpop.xlane.xlu0 %5582
  %v5586 = vlaneseq
  %v5587 = vand.u32 %v5586, 127
  %v5588 = vlaneseq
  %v5589 = vshrl.u32 %v5588, 7
  %v5590 = vsub.s32 %v5587, %v5589
  %v5591 = vrot.slane %v5580, %v5590
  %v5592 = vlaneseq
  %v5593 = vshrl.u32 %v5592, 7
  %v5594 = vsub.s32 %v5587, %v5593
  %v5595 = vrot.slane %v5583, %v5594
  %vm5596 = vcmask 1041409
  %v5597 = vsel %vm5596, %v5595, %v5591
  %vm5599 = vcmask 58368
  %v5600 = vsel %vm5599, %v5597, 0.0
  %5601 = vadd.xlane.f32.xlu0 %v5600
  %v5602 = vpop.xlane.xlu0 %5601
  %v5603 = vld [vmem:[#allocation3] sm:$0x1]
  %v5605 = vlaneseq
  %v5606 = vshrl.u32 %v5605, 7
  %v5607 = vsub.s32 0, %v5606
  %v5608 = vrot.slane %v5603, %v5607
  %v5610 = vadd.f32 %v5602, %v5608
  %v5611 = vmax.f32 %v5610, 0.0
  %vm5612 = vcmask 1024
  %5613 = vst.msk [vmem:[%s17] sm:$0x3] %vm5612, %v5611
  // Predicated region
  $region70: #{swe_former_forward.1} parent=0 // pred_check
    _
  $region71: #{swe_former_forward.1} parent=0 // pred_check_branch
    %5615 = sbr.rel (0) target = $region73
  $region72: #{swe_former_forward.1} parent=0 // pred_region
    _
  $region73: #{swe_former_forward.1} parent=0 // pred_fallthru
    _
  // Predicated region
  $region74: #{swe_former_forward.1} parent=0 // pred_check
    _
  $region75: #{swe_former_forward.1} parent=0 // pred_check_branch
    %5617 = sbr.rel (0) target = $region77
  $region76: #{swe_former_forward.1} parent=0 // pred_region
    _
  $region77: #{swe_former_forward.1} parent=0 // pred_fallthru
    _

</llo_original>
